<compile_context>
chip_gen: v7x
topology: tpu7x:2x2x1
jax: 0.10.0
libtpu: 0.0.40
codegen_flags: <defaults>
</compile_context>

<pallas_src>
import jax
import jax.numpy as jnp
from jax.experimental import pallas as pl
from jax.experimental.pallas import tpu as pltpu


def _round_up(x, m):
    return ((x + m - 1) // m) * m


def _is_multicore_tpu():
    """True only for TPU generations with >1 TensorCore per chip (v7x)."""
    try:
        kind = jax.devices()[0].device_kind.lower()
    except Exception:
        return False
    return ("v7" in kind) or ("7x" in kind)


# ----------------------------- Pallas kernel --------------------------------

def _projection_kernel(x_ref, w_ref, b_ref, o_ref):
    # x: (B, K) f32, w: (K, TN) bf16, b: (1, TN) f32  ->  o: (B, TN) f32
    acc = jnp.dot(x_ref[...].astype(jnp.bfloat16), w_ref[...],
                  preferred_element_type=jnp.float32)
    o_ref[...] = acc + b_ref[...]


# ------------------------------- wrapper -------------------------------------

def projection_forward(x, w_pad, b_pad, out_dim, *, n_tiles=1):
    """y = x @ W + b where W/b are zero-padded along the output-feature axis."""
    B, K = x.shape
    K_w, n_pad = w_pad.shape
    assert K_w == K and n_pad % n_tiles == 0
    tile_n = n_pad // n_tiles
    assert tile_n % 128 == 0, tile_n

    # Double-buffered resident blocks + headroom; cap at 32 MiB so the request
    # is always safe on v7x (64 MiB physical VMEM) without raising limits.
    block_bytes = B * K * 4 + K * tile_n * 2 + tile_n * 4 + B * tile_n * 4
    vmem_limit = min(4 * block_bytes + (2 << 20), 32 << 20)

    cost = pl.CostEstimate(
        flops=2 * B * K * n_pad,
        transcendentals=0,
        bytes_accessed=K * n_pad * 2 + B * K * 4 + B * n_pad * 4 + n_pad * 4,
    )

    if n_tiles > 1:
        # Genuine per-core sharding of the grid axis (v7x megacore): each
        # TensorCore DMAs only its own half of the weight.
        semantics = (pltpu.CORE_PARALLEL,)
    else:
        semantics = ("arbitrary",)          # single step; semantics irrelevant

    out_pad = pl.pallas_call(
        _projection_kernel,
        out_shape=jax.ShapeDtypeStruct((B, n_pad), jnp.float32),
        grid=(n_tiles,),
        in_specs=[
            pl.BlockSpec((B, K), lambda j: (0, 0)),        # x (replicated per tile)
            pl.BlockSpec((K, tile_n), lambda j: (0, j)),   # weight column tile (bf16)
            pl.BlockSpec((1, tile_n), lambda j: (0, j)),   # bias tile (f32)
        ],
        out_specs=pl.BlockSpec((B, tile_n), lambda j: (0, j)),
        compiler_params=pltpu.CompilerParams(
            dimension_semantics=semantics,
            vmem_limit_bytes=vmem_limit,
        ),
        cost_estimate=cost,
    )(x, w_pad, b_pad)
    return out_pad[:, :out_dim]


# --------------------------- parameter init ----------------------------------

def init_projection_params(key, dim=1600, *, n_tiles=None):
    """Matches nn.Linear(dim, dim) with xavier_normal_(weight) + default bias."""
    if n_tiles is None:
        # 2-way output split only where there are 2 TensorCores to shard it.
        n_tiles = 2 if _is_multicore_tpu() else 1

    kw, kb = jax.random.split(key)
    std = (2.0 / (dim + dim)) ** 0.5                       # xavier_normal_
    w = std * jax.random.normal(kw, (dim, dim), jnp.float32)   # stored (in, out)
    bound = 1.0 / (dim ** 0.5)                             # PyTorch Linear bias default
    b = jax.random.uniform(kb, (1, dim), jnp.float32, -bound, bound)

    # Pad the output-feature axis so every tile is a multiple of 128 lanes
    # (1664 for n_tiles=1, 1792 for n_tiles=2 at dim=1600).
    tile_n = _round_up(-(-dim // n_tiles), 128)
    n_pad = tile_n * n_tiles

    # bf16 weight: intentional accuracy trade-off (DMA-bound kernel); use
    # jnp.float32 here for bit-faithful nn.Linear semantics.
    w_pad = jnp.zeros((dim, n_pad), jnp.bfloat16).at[:, :dim].set(
        w.astype(jnp.bfloat16))
    b_pad = jnp.zeros((1, n_pad), jnp.float32).at[:, :dim].set(b)
    return {"w_pad": w_pad, "b_pad": b_pad, "dim": dim, "n_tiles": n_tiles}


def projection_apply(params, x):
    n_tiles = params["n_tiles"]
    if n_tiles > 1:
        try:
            out = projection_forward(x, params["w_pad"], params["b_pad"],
                                     params["dim"], n_tiles=n_tiles)
            return jax.block_until_ready(out)
        except Exception:
            # CORE_PARALLEL path unavailable on this runtime -> single-step
            # layout (still correct; only loses the per-core DMA split).
            pass
    return projection_forward(x, params["w_pad"], params["b_pad"],
                              params["dim"], n_tiles=1)


def projection_reference(params, x):
    # pure-JAX reference using the same bf16 weight quantization / f32 accum
    dim = params["dim"]
    w = params["w_pad"][:, :dim].astype(jnp.float32)
    b = params["b_pad"][:, :dim]
    xb = x.astype(jnp.bfloat16).astype(jnp.float32)
    return jnp.dot(xb, w, preferred_element_type=jnp.float32) + b


# -------------------------------- main ---------------------------------------

if __name__ == "__main__":
    key = jax.random.PRNGKey(0)
    kx, kp = jax.random.split(key)

    batch, dim = 8, 1600                      # module default dim=1600
    x = jax.random.normal(kx, (batch, dim), dtype=jnp.float32)
    params = init_projection_params(kp, dim=dim)

    out = jax.block_until_ready(projection_apply(params, x))
    ref = projection_reference(params, x)

    assert out.shape == (batch, dim), out.shape
    max_err = float(jnp.max(jnp.abs(out - ref)))
    assert jnp.allclose(out, ref, atol=5e-3, rtol=5e-3), max_err

    print("KERNEL_OK")
</pallas_src>

<mosaic_0001>
module attributes {stable_mosaic.version = 11 : i64} {
  func.func @_projection_kernel(%arg0: i32, %arg1: memref<8x1600xf32, #tpu.memory_space<vmem>>, %arg2: memref<1600x1664xbf16, #tpu.memory_space<vmem>>, %arg3: memref<1x1664xf32, #tpu.memory_space<vmem>>, %arg4: memref<8x1664xf32, #tpu.memory_space<vmem>>) attributes {dimension_semantics = [#tpu.dimension_semantics<arbitrary>], iteration_bounds = array<i64: 1>, scalar_prefetch = 0 : i64, scratch_operands = 0 : i64, tpu.core_type = #tpu.core_type<tc>, window_params = [{pipeline_mode = #tpu.pipeline_mode<synchronous>, transform_indices = @transform_0, window_bounds = array<i64: 8, 1600>}, {transform_indices = @transform_1, window_bounds = array<i64: 1600, 1664>}, {transform_indices = @transform_2, window_bounds = array<i64: 1, 1664>}, {transform_indices = @transform_3, window_bounds = array<i64: 8, 1664>}]} {
    %c0 = arith.constant 0 : index
    %c0_0 = arith.constant 0 : index
    %0 = vector.load %arg1[%c0, %c0_0] : memref<8x1600xf32, #tpu.memory_space<vmem>>, vector<8x1600xf32>
    %1 = arith.truncf %0 : vector<8x1600xf32> to vector<8x1600xbf16>
    %c0_1 = arith.constant 0 : index
    %c0_2 = arith.constant 0 : index
    %2 = vector.load %arg2[%c0_1, %c0_2] : memref<1600x1664xbf16, #tpu.memory_space<vmem>>, vector<1600x1664xbf16>
    %cst = arith.constant dense<0.000000e+00> : vector<8x1664xf32>
    %3 = tpu.matmul %1, %2, %cst {dimension_numbers = #tpu.dot_dimension_numbers<[1], [0], [0], [1], [0, 0, 1, 1], [], []>} : vector<8x1600xbf16>, vector<1600x1664xbf16>, vector<8x1664xf32> -> vector<8x1664xf32>
    %c0_3 = arith.constant 0 : index
    %c0_4 = arith.constant 0 : index
    %4 = vector.load %arg3[%c0_3, %c0_4] : memref<1x1664xf32, #tpu.memory_space<vmem>>, vector<1x1664xf32>
    %5 = vector.broadcast %4 : vector<1x1664xf32> to vector<8x1664xf32>
    %6 = arith.addf %3, %5 : vector<8x1664xf32>
    %c0_5 = arith.constant 0 : index
    %c0_6 = arith.constant 0 : index
    %7 = vector.load %arg4[%c0_5, %c0_6] : memref<8x1664xf32, #tpu.memory_space<vmem>>, vector<8x1664xf32>
    tpu.vector_store %arg4[%c0_5, %c0_6], %6 {strides = array<i32>} : memref<8x1664xf32, #tpu.memory_space<vmem>>, vector<8x1664xf32>,
    return
  }
  func.func @transform_0(%arg0: i32) -> (i32, i32) {
    %c0_i32 = arith.constant 0 : i32
    %c0_i32_0 = arith.constant 0 : i32
    %c0_i32_1 = arith.constant 0 : i32
    return %c0_i32, %c0_i32_0 : i32, i32
  }
  func.func @transform_1(%arg0: i32) -> (i32, i32) {
    %c0_i32 = arith.constant 0 : i32
    %c0_i32_0 = arith.constant 0 : i32
    return %c0_i32, %arg0 : i32, i32
  }
  func.func @transform_2(%arg0: i32) -> (i32, i32) {
    %c0_i32 = arith.constant 0 : i32
    %c0_i32_0 = arith.constant 0 : i32
    return %c0_i32, %arg0 : i32, i32
  }
  func.func @transform_3(%arg0: i32) -> (i32, i32) {
    %c0_i32 = arith.constant 0 : i32
    %c0_i32_0 = arith.constant 0 : i32
    return %c0_i32, %arg0 : i32, i32
  }
}

</mosaic_0001>

<llo_original>
// kernel: tpu_custom_call.1
$region0: #{tpu_custom_call.1}
  #allocation0 [shape = 'u32[]', space=smem, size = 0x4, offset = 0x4, fixed_abs, tag = 'smem constant byte address 0x4 - core index']
  #allocation1 [shape = 'u32[144,128]{1,0:T(1,128)}', space=vmem, size = 0x12000, scoped, tag = 'internal scratch']
  %s0 = inlined_call_operand.hbm [shape: f32[8,1600], index: 0, kind: input, shape index: {}]
  %s1 = inlined_call_operand.hbm [shape: bf16[1600,1664], index: 1, kind: input, shape index: {}]
  %s2 = inlined_call_operand.hbm [shape: f32[1,1664], index: 2, kind: input, shape index: {}]
  %s3 = inlined_call_operand.hbm [shape: f32[8,1664], index: 3, kind: output, shape index: {}]
  %s4 = sld [smem:[#allocation0]]
  $region34: #{tpu_custom_call.1} parent=0
    _
  %s6 = ssub.s32 1, %s4
  %s7 = scalar_select 0, %s6, %s4
  $region1: #{tpu_custom_call.1} parent=0
    #allocation2 [shape = 'u8[53248]{0}', space=vmem, size = 0xd000, scoped, tag = 'input window, operand 0, single buffered']
    #allocation3 [shape = 's32[1]{0}', space=sflag, size = 0x4, scoped, tag = 'scoped memory for tpu_custom_call.1']
    #allocation4 [shape = 's32[1]{0}', space=sflag, size = 0x4, scoped, tag = 'scoped memory for tpu_custom_call.1']
    #allocation5 [shape = 'u8[5324800]{0}', space=vmem, size = 0x514000, scoped, tag = 'input window, operand 1, single buffered']
    #allocation6 [shape = 's32[1]{0}', space=sflag, size = 0x4, scoped, tag = 'scoped memory for tpu_custom_call.1']
    #allocation7 [shape = 'u8[6656]{0}', space=vmem, size = 0x1c00, scoped, tag = 'input window, operand 2, single buffered']
    #allocation8 [shape = 'u8[53248]{0}', space=vmem, size = 0xd000, scoped, tag = 'output window, operand 0, single buffered']
    %8 = vsyncpa [#allocation3], 0
    %9 = vsyncpa [#allocation6], 0
    %10 = vsyncpa [#allocation4], 0
    // Predicated region
    $region2: #{tpu_custom_call.1} parent=1 // pred_check
      _
    $region3: #{tpu_custom_call.1} parent=1 // pred_check_branch
      %12 = sbr.rel (0) target = $region5
    $region4: #{tpu_custom_call.1} parent=1 // pred_region
      %s14 = ssub.s32 1664, 1664
      %15 = vsyncadd [#allocation3], %s14
      %s17 = sshll.u32 [#allocation2], 4
      %s18 = int_to_ptr.vmem [resolvable:$true] %s17
      %20 = dma.hbm_to_vmem [thread:$0]  %s0, 1664, %s18, [#allocation3]
    $region5: #{tpu_custom_call.1} parent=1 // pred_fallthru
      _
    // Predicated region
    $region6: #{tpu_custom_call.1} parent=1 // pred_check
      _
    $region7: #{tpu_custom_call.1} parent=1 // pred_check_branch
      %22 = sbr.rel (0) target = $region9
    $region8: #{tpu_custom_call.1} parent=1 // pred_region
      %s24 = ssub.s32 166400, 166400
      %25 = vsyncadd [#allocation6], %s24
      %s26 = sshll.u32 [#allocation5], 4
      %s27 = int_to_ptr.vmem [resolvable:$true] %s26
      %32 = dma.hbm_to_vmem [thread:$0]  %s1, 166400, %s27, [#allocation6], 832, 832, 52
    $region9: #{tpu_custom_call.1} parent=1 // pred_fallthru
      _
    // Predicated region
    $region10: #{tpu_custom_call.1} parent=1 // pred_check
      _
    $region11: #{tpu_custom_call.1} parent=1 // pred_check_branch
      %34 = sbr.rel (0) target = $region13
    $region12: #{tpu_custom_call.1} parent=1 // pred_region
      %s36 = ssub.s32 208, 208
      %37 = vsyncadd [#allocation6], %s36
      %s39 = sshll.u32 [#allocation7], 4
      %s40 = int_to_ptr.vmem [resolvable:$true] %s39
      %42 = dma.hbm_to_vmem [thread:$0]  %s2, 208, %s40, [#allocation6]
    $region13: #{tpu_custom_call.1} parent=1 // pred_fallthru
      _
    // Predicated region
    $region14: #{tpu_custom_call.1} parent=1 // pred_check
      _
    $region15: #{tpu_custom_call.1} parent=1 // pred_check_branch
      %44 = sbr.rel (0) target = $region17
    $region16: #{tpu_custom_call.1} parent=1 // pred_region
      %45 = dma.done [#allocation3], 1664
    $region17: #{tpu_custom_call.1} parent=1 // pred_fallthru
      _
    // Predicated region
    $region18: #{tpu_custom_call.1} parent=1 // pred_check
      _
    $region19: #{tpu_custom_call.1} parent=1 // pred_check_branch
      %47 = sbr.rel (0) target = $region21
    $region20: #{tpu_custom_call.1} parent=1 // pred_region
      %48 = dma.done [#allocation6], 166400
    $region21: #{tpu_custom_call.1} parent=1 // pred_fallthru
      _
    // Predicated region
    $region22: #{tpu_custom_call.1} parent=1 // pred_check
      _
    $region23: #{tpu_custom_call.1} parent=1 // pred_check_branch
      %50 = sbr.rel (0) target = $region25
    $region24: #{tpu_custom_call.1} parent=1 // pred_region
      %51 = dma.done [#allocation6], 208
    $region25: #{tpu_custom_call.1} parent=1 // pred_fallthru
      _
    %v53 = vld [vmem:[#allocation2] sm:$0xff]
    %v54 = vld [vmem:[#allocation2 + $0x8] sm:$0xff]
    %v55 = vld [vmem:[#allocation2 + $0x10] sm:$0xff]
    %v56 = vld [vmem:[#allocation2 + $0x18] sm:$0xff]
    %v57 = vld [vmem:[#allocation2 + $0x20] sm:$0xff]
    %v58 = vld [vmem:[#allocation2 + $0x28] sm:$0xff]
    %v59 = vld [vmem:[#allocation2 + $0x30] sm:$0xff]
    %v60 = vld [vmem:[#allocation2 + $0x38] sm:$0xff]
    %v61 = vld [vmem:[#allocation2 + $0x40] sm:$0xff]
    %v62 = vld [vmem:[#allocation2 + $0x48] sm:$0xff]
    %v63 = vld [vmem:[#allocation2 + $0x50] sm:$0xff]
    %v64 = vld [vmem:[#allocation2 + $0x58] sm:$0xff]
    %v65 = vld [vmem:[#allocation2 + $0x60] sm:$0xff]
    %v66 = vpack.c.bf16 %v53, %v53
    %v67 = vpack.c.bf16 %v54, %v54
    %v68 = vpack.c.bf16 %v55, %v55
    %v69 = vpack.c.bf16 %v56, %v56
    %v70 = vpack.c.bf16 %v57, %v57
    %v71 = vpack.c.bf16 %v58, %v58
    %v72 = vpack.c.bf16 %v59, %v59
    %v73 = vpack.c.bf16 %v60, %v60
    %v74 = vpack.c.bf16 %v61, %v61
    %v75 = vpack.c.bf16 %v62, %v62
    %v76 = vpack.c.bf16 %v63, %v63
    %v77 = vpack.c.bf16 %v64, %v64
    %v78 = vpack.c.bf16 %v65, %v65
    %v79 = vld [vmem:[#allocation5] sm:$0xff]
    %v80 = vld [vmem:[#allocation5 + $0x8] sm:$0xff]
    %v81 = vld [vmem:[#allocation5 + $0x10] sm:$0xff]
    %v82 = vld [vmem:[#allocation5 + $0x18] sm:$0xff]
    %v83 = vld [vmem:[#allocation5 + $0x20] sm:$0xff]
    %v84 = vld [vmem:[#allocation5 + $0x28] sm:$0xff]
    %v85 = vld [vmem:[#allocation5 + $0x30] sm:$0xf]
    %v86 = vld [vmem:[#allocation5 + $0x34] sm:$0xff]
    %v87 = vld [vmem:[#allocation5 + $0x3c] sm:$0xff]
    %v88 = vld [vmem:[#allocation5 + $0x44] sm:$0xff]
    %v89 = vld [vmem:[#allocation5 + $0x4c] sm:$0xff]
    %v90 = vld [vmem:[#allocation5 + $0x54] sm:$0xff]
    %v91 = vld [vmem:[#allocation5 + $0x5c] sm:$0xff]
    %v92 = vld [vmem:[#allocation5 + $0x64] sm:$0xf]
    %v93 = vld [vmem:[#allocation5 + $0x68] sm:$0xff]
    %v94 = vld [vmem:[#allocation5 + $0x70] sm:$0xff]
    %v95 = vld [vmem:[#allocation5 + $0x78] sm:$0xff]
    %v96 = vld [vmem:[#allocation5 + $0x80] sm:$0xff]
    %v97 = vld [vmem:[#allocation5 + $0x88] sm:$0xff]
    %v98 = vld [vmem:[#allocation5 + $0x90] sm:$0xff]
    %v99 = vld [vmem:[#allocation5 + $0x98] sm:$0xf]
    %v100 = vld [vmem:[#allocation5 + $0x9c] sm:$0xff]
    %v101 = vld [vmem:[#allocation5 + $0xa4] sm:$0xff]
    %v102 = vld [vmem:[#allocation5 + $0xac] sm:$0xff]
    %v103 = vld [vmem:[#allocation5 + $0xb4] sm:$0xff]
    %v104 = vld [vmem:[#allocation5 + $0xbc] sm:$0xff]
    %v105 = vld [vmem:[#allocation5 + $0xc4] sm:$0xff]
    %v106 = vld [vmem:[#allocation5 + $0xcc] sm:$0xf]
    %v107 = vld [vmem:[#allocation5 + $0xd0] sm:$0xff]
    %v108 = vld [vmem:[#allocation5 + $0xd8] sm:$0xff]
    %v109 = vld [vmem:[#allocation5 + $0xe0] sm:$0xff]
    %v110 = vld [vmem:[#allocation5 + $0xe8] sm:$0xff]
    %v111 = vld [vmem:[#allocation5 + $0xf0] sm:$0xff]
    %v112 = vld [vmem:[#allocation5 + $0xf8] sm:$0xff]
    %v113 = vld [vmem:[#allocation5 + $0x100] sm:$0xf]
    %v114 = vld [vmem:[#allocation5 + $0x104] sm:$0xff]
    %v115 = vld [vmem:[#allocation5 + $0x10c] sm:$0xff]
    %v116 = vld [vmem:[#allocation5 + $0x114] sm:$0xff]
    %v117 = vld [vmem:[#allocation5 + $0x11c] sm:$0xff]
    %v118 = vld [vmem:[#allocation5 + $0x124] sm:$0xff]
    %v119 = vld [vmem:[#allocation5 + $0x12c] sm:$0xff]
    %v120 = vld [vmem:[#allocation5 + $0x134] sm:$0xf]
    %v121 = vld [vmem:[#allocation5 + $0x138] sm:$0xff]
    %v122 = vld [vmem:[#allocation5 + $0x140] sm:$0xff]
    %v123 = vld [vmem:[#allocation5 + $0x148] sm:$0xff]
    %v124 = vld [vmem:[#allocation5 + $0x150] sm:$0xff]
    %v125 = vld [vmem:[#allocation5 + $0x158] sm:$0xff]
    %v126 = vld [vmem:[#allocation5 + $0x160] sm:$0xff]
    %v127 = vld [vmem:[#allocation5 + $0x168] sm:$0xf]
    %v128 = vld [vmem:[#allocation5 + $0x16c] sm:$0xff]
    %v129 = vld [vmem:[#allocation5 + $0x174] sm:$0xff]
    %v130 = vld [vmem:[#allocation5 + $0x17c] sm:$0xff]
    %v131 = vld [vmem:[#allocation5 + $0x184] sm:$0xff]
    %v132 = vld [vmem:[#allocation5 + $0x18c] sm:$0xff]
    %v133 = vld [vmem:[#allocation5 + $0x194] sm:$0xff]
    %v134 = vld [vmem:[#allocation5 + $0x19c] sm:$0xf]
    %v135 = vld [vmem:[#allocation5 + $0x1a0] sm:$0xff]
    %v136 = vld [vmem:[#allocation5 + $0x1a8] sm:$0xff]
    %v137 = vld [vmem:[#allocation5 + $0x1b0] sm:$0xff]
    %v138 = vld [vmem:[#allocation5 + $0x1b8] sm:$0xff]
    %v139 = vld [vmem:[#allocation5 + $0x1c0] sm:$0xff]
    %v140 = vld [vmem:[#allocation5 + $0x1c8] sm:$0xff]
    %v141 = vld [vmem:[#allocation5 + $0x1d0] sm:$0xf]
    %v142 = vld [vmem:[#allocation5 + $0x1d4] sm:$0xff]
    %v143 = vld [vmem:[#allocation5 + $0x1dc] sm:$0xff]
    %v144 = vld [vmem:[#allocation5 + $0x1e4] sm:$0xff]
    %v145 = vld [vmem:[#allocation5 + $0x1ec] sm:$0xff]
    %v146 = vld [vmem:[#allocation5 + $0x1f4] sm:$0xff]
    %v147 = vld [vmem:[#allocation5 + $0x1fc] sm:$0xff]
    %v148 = vld [vmem:[#allocation5 + $0x204] sm:$0xf]
    %v149 = vld [vmem:[#allocation5 + $0x208] sm:$0xff]
    %v150 = vld [vmem:[#allocation5 + $0x210] sm:$0xff]
    %v151 = vld [vmem:[#allocation5 + $0x218] sm:$0xff]
    %v152 = vld [vmem:[#allocation5 + $0x220] sm:$0xff]
    %v153 = vld [vmem:[#allocation5 + $0x228] sm:$0xff]
    %v154 = vld [vmem:[#allocation5 + $0x230] sm:$0xff]
    %v155 = vld [vmem:[#allocation5 + $0x238] sm:$0xf]
    %v156 = vld [vmem:[#allocation5 + $0x23c] sm:$0xff]
    %v157 = vld [vmem:[#allocation5 + $0x244] sm:$0xff]
    %v158 = vld [vmem:[#allocation5 + $0x24c] sm:$0xff]
    %v159 = vld [vmem:[#allocation5 + $0x254] sm:$0xff]
    %v160 = vld [vmem:[#allocation5 + $0x25c] sm:$0xff]
    %v161 = vld [vmem:[#allocation5 + $0x264] sm:$0xff]
    %v162 = vld [vmem:[#allocation5 + $0x26c] sm:$0xf]
    %v163 = vld [vmem:[#allocation5 + $0x270] sm:$0xff]
    %v164 = vld [vmem:[#allocation5 + $0x278] sm:$0xff]
    %v165 = vld [vmem:[#allocation5 + $0x280] sm:$0xff]
    %v166 = vld [vmem:[#allocation5 + $0x288] sm:$0xff]
    %v167 = vld [vmem:[#allocation5 + $0x290] sm:$0xff]
    %v168 = vld [vmem:[#allocation5 + $0x298] sm:$0xff]
    %v169 = vld [vmem:[#allocation5 + $0x2a0] sm:$0xf]
    %v170 = vld [vmem:[#allocation5 + $0x2a4] sm:$0xff]
    %v171 = vld [vmem:[#allocation5 + $0x2ac] sm:$0xff]
    %v172 = vld [vmem:[#allocation5 + $0x2b4] sm:$0xff]
    %v173 = vld [vmem:[#allocation5 + $0x2bc] sm:$0xff]
    %v174 = vld [vmem:[#allocation5 + $0x2c4] sm:$0xff]
    %v175 = vld [vmem:[#allocation5 + $0x2cc] sm:$0xff]
    %v176 = vld [vmem:[#allocation5 + $0x2d4] sm:$0xf]
    %v177 = vld [vmem:[#allocation5 + $0x2d8] sm:$0xff]
    %v178 = vld [vmem:[#allocation5 + $0x2e0] sm:$0xff]
    %v179 = vld [vmem:[#allocation5 + $0x2e8] sm:$0xff]
    %v180 = vld [vmem:[#allocation5 + $0x2f0] sm:$0xff]
    %v181 = vld [vmem:[#allocation5 + $0x2f8] sm:$0xff]
    %v182 = vld [vmem:[#allocation5 + $0x300] sm:$0xff]
    %v183 = vld [vmem:[#allocation5 + $0x308] sm:$0xf]
    %v184 = vld [vmem:[#allocation5 + $0x30c] sm:$0xff]
    %v185 = vld [vmem:[#allocation5 + $0x314] sm:$0xff]
    %v186 = vld [vmem:[#allocation5 + $0x31c] sm:$0xff]
    %v187 = vld [vmem:[#allocation5 + $0x324] sm:$0xff]
    %v188 = vld [vmem:[#allocation5 + $0x32c] sm:$0xff]
    %v189 = vld [vmem:[#allocation5 + $0x334] sm:$0xff]
    %v190 = vld [vmem:[#allocation5 + $0x33c] sm:$0xf]
    %v191 = vld [vmem:[#allocation5 + $0x340] sm:$0xff]
    %v192 = vld [vmem:[#allocation5 + $0x348] sm:$0xff]
    %v193 = vld [vmem:[#allocation5 + $0x350] sm:$0xff]
    %v194 = vld [vmem:[#allocation5 + $0x358] sm:$0xff]
    %v195 = vld [vmem:[#allocation5 + $0x360] sm:$0xff]
    %v196 = vld [vmem:[#allocation5 + $0x368] sm:$0xff]
    %v197 = vld [vmem:[#allocation5 + $0x370] sm:$0xf]
    %v198 = vld [vmem:[#allocation5 + $0x374] sm:$0xff]
    %v199 = vld [vmem:[#allocation5 + $0x37c] sm:$0xff]
    %v200 = vld [vmem:[#allocation5 + $0x384] sm:$0xff]
    %v201 = vld [vmem:[#allocation5 + $0x38c] sm:$0xff]
    %v202 = vld [vmem:[#allocation5 + $0x394] sm:$0xff]
    %v203 = vld [vmem:[#allocation5 + $0x39c] sm:$0xff]
    %v204 = vld [vmem:[#allocation5 + $0x3a4] sm:$0xf]
    %v205 = vld [vmem:[#allocation5 + $0x3a8] sm:$0xff]
    %v206 = vld [vmem:[#allocation5 + $0x3b0] sm:$0xff]
    %v207 = vld [vmem:[#allocation5 + $0x3b8] sm:$0xff]
    %v208 = vld [vmem:[#allocation5 + $0x3c0] sm:$0xff]
    %v209 = vld [vmem:[#allocation5 + $0x3c8] sm:$0xff]
    %v210 = vld [vmem:[#allocation5 + $0x3d0] sm:$0xff]
    %v211 = vld [vmem:[#allocation5 + $0x3d8] sm:$0xf]
    %v212 = vld [vmem:[#allocation5 + $0x3dc] sm:$0xff]
    %v213 = vld [vmem:[#allocation5 + $0x3e4] sm:$0xff]
    %v214 = vld [vmem:[#allocation5 + $0x3ec] sm:$0xff]
    %v215 = vld [vmem:[#allocation5 + $0x3f4] sm:$0xff]
    %v216 = vld [vmem:[#allocation5 + $0x3fc] sm:$0xff]
    %v217 = vld [vmem:[#allocation5 + $0x404] sm:$0xff]
    %v218 = vld [vmem:[#allocation5 + $0x40c] sm:$0xf]
    %v219 = vld [vmem:[#allocation5 + $0x410] sm:$0xff]
    %v220 = vld [vmem:[#allocation5 + $0x418] sm:$0xff]
    %v221 = vld [vmem:[#allocation5 + $0x420] sm:$0xff]
    %v222 = vld [vmem:[#allocation5 + $0x428] sm:$0xff]
    %v223 = vld [vmem:[#allocation5 + $0x430] sm:$0xff]
    %v224 = vld [vmem:[#allocation5 + $0x438] sm:$0xff]
    %v225 = vld [vmem:[#allocation5 + $0x440] sm:$0xf]
    %v226 = vld [vmem:[#allocation5 + $0x444] sm:$0xff]
    %v227 = vld [vmem:[#allocation5 + $0x44c] sm:$0xff]
    %v228 = vld [vmem:[#allocation5 + $0x454] sm:$0xff]
    %v229 = vld [vmem:[#allocation5 + $0x45c] sm:$0xff]
    %v230 = vld [vmem:[#allocation5 + $0x464] sm:$0xff]
    %v231 = vld [vmem:[#allocation5 + $0x46c] sm:$0xff]
    %v232 = vld [vmem:[#allocation5 + $0x474] sm:$0xf]
    %v233 = vld [vmem:[#allocation5 + $0x478] sm:$0xff]
    %v234 = vld [vmem:[#allocation5 + $0x480] sm:$0xff]
    %v235 = vld [vmem:[#allocation5 + $0x488] sm:$0xff]
    %v236 = vld [vmem:[#allocation5 + $0x490] sm:$0xff]
    %v237 = vld [vmem:[#allocation5 + $0x498] sm:$0xff]
    %v238 = vld [vmem:[#allocation5 + $0x4a0] sm:$0xff]
    %v239 = vld [vmem:[#allocation5 + $0x4a8] sm:$0xf]
    %v240 = vld [vmem:[#allocation5 + $0x4ac] sm:$0xff]
    %v241 = vld [vmem:[#allocation5 + $0x4b4] sm:$0xff]
    %v242 = vld [vmem:[#allocation5 + $0x4bc] sm:$0xff]
    %v243 = vld [vmem:[#allocation5 + $0x4c4] sm:$0xff]
    %v244 = vld [vmem:[#allocation5 + $0x4cc] sm:$0xff]
    %v245 = vld [vmem:[#allocation5 + $0x4d4] sm:$0xff]
    %v246 = vld [vmem:[#allocation5 + $0x4dc] sm:$0xf]
    %v247 = vld [vmem:[#allocation5 + $0x4e0] sm:$0xff]
    %v248 = vld [vmem:[#allocation5 + $0x4e8] sm:$0xff]
    %v249 = vld [vmem:[#allocation5 + $0x4f0] sm:$0xff]
    %v250 = vld [vmem:[#allocation5 + $0x4f8] sm:$0xff]
    %v251 = vld [vmem:[#allocation5 + $0x500] sm:$0xff]
    %v252 = vld [vmem:[#allocation5 + $0x508] sm:$0xff]
    %v253 = vld [vmem:[#allocation5 + $0x510] sm:$0xf]
    %v254 = vld [vmem:[#allocation5 + $0x514] sm:$0xff]
    %v255 = vld [vmem:[#allocation5 + $0x51c] sm:$0xff]
    %v256 = vld [vmem:[#allocation5 + $0x524] sm:$0xff]
    %v257 = vld [vmem:[#allocation5 + $0x52c] sm:$0xff]
    %v258 = vld [vmem:[#allocation5 + $0x534] sm:$0xff]
    %v259 = vld [vmem:[#allocation5 + $0x53c] sm:$0xff]
    %v260 = vld [vmem:[#allocation5 + $0x544] sm:$0xf]
    %v261 = vld [vmem:[#allocation5 + $0x548] sm:$0xff]
    %v262 = vld [vmem:[#allocation5 + $0x550] sm:$0xff]
    %v263 = vld [vmem:[#allocation5 + $0x558] sm:$0xff]
    %v264 = vld [vmem:[#allocation5 + $0x560] sm:$0xff]
    %v265 = vld [vmem:[#allocation5 + $0x568] sm:$0xff]
    %v266 = vld [vmem:[#allocation5 + $0x570] sm:$0xff]
    %v267 = vld [vmem:[#allocation5 + $0x578] sm:$0xf]
    %v268 = vld [vmem:[#allocation5 + $0x57c] sm:$0xff]
    %v269 = vld [vmem:[#allocation5 + $0x584] sm:$0xff]
    %v270 = vld [vmem:[#allocation5 + $0x58c] sm:$0xff]
    %v271 = vld [vmem:[#allocation5 + $0x594] sm:$0xff]
    %v272 = vld [vmem:[#allocation5 + $0x59c] sm:$0xff]
    %v273 = vld [vmem:[#allocation5 + $0x5a4] sm:$0xff]
    %v274 = vld [vmem:[#allocation5 + $0x5ac] sm:$0xf]
    %v275 = vld [vmem:[#allocation5 + $0x5b0] sm:$0xff]
    %v276 = vld [vmem:[#allocation5 + $0x5b8] sm:$0xff]
    %v277 = vld [vmem:[#allocation5 + $0x5c0] sm:$0xff]
    %v278 = vld [vmem:[#allocation5 + $0x5c8] sm:$0xff]
    %v279 = vld [vmem:[#allocation5 + $0x5d0] sm:$0xff]
    %v280 = vld [vmem:[#allocation5 + $0x5d8] sm:$0xff]
    %v281 = vld [vmem:[#allocation5 + $0x5e0] sm:$0xf]
    %v282 = vld [vmem:[#allocation5 + $0x5e4] sm:$0xff]
    %v283 = vld [vmem:[#allocation5 + $0x5ec] sm:$0xff]
    %v284 = vld [vmem:[#allocation5 + $0x5f4] sm:$0xff]
    %v285 = vld [vmem:[#allocation5 + $0x5fc] sm:$0xff]
    %v286 = vld [vmem:[#allocation5 + $0x604] sm:$0xff]
    %v287 = vld [vmem:[#allocation5 + $0x60c] sm:$0xff]
    %v288 = vld [vmem:[#allocation5 + $0x614] sm:$0xf]
    %v289 = vld [vmem:[#allocation5 + $0x618] sm:$0xff]
    %v290 = vld [vmem:[#allocation5 + $0x620] sm:$0xff]
    %v291 = vld [vmem:[#allocation5 + $0x628] sm:$0xff]
    %v292 = vld [vmem:[#allocation5 + $0x630] sm:$0xff]
    %v293 = vld [vmem:[#allocation5 + $0x638] sm:$0xff]
    %v294 = vld [vmem:[#allocation5 + $0x640] sm:$0xff]
    %v295 = vld [vmem:[#allocation5 + $0x648] sm:$0xf]
    %v296 = vld [vmem:[#allocation5 + $0x64c] sm:$0xff]
    %v297 = vld [vmem:[#allocation5 + $0x654] sm:$0xff]
    %v298 = vld [vmem:[#allocation5 + $0x65c] sm:$0xff]
    %v299 = vld [vmem:[#allocation5 + $0x664] sm:$0xff]
    %v300 = vld [vmem:[#allocation5 + $0x66c] sm:$0xff]
    %v301 = vld [vmem:[#allocation5 + $0x674] sm:$0xff]
    %v302 = vld [vmem:[#allocation5 + $0x67c] sm:$0xf]
    %v303 = vld [vmem:[#allocation5 + $0x680] sm:$0xff]
    %v304 = vld [vmem:[#allocation5 + $0x688] sm:$0xff]
    %v305 = vld [vmem:[#allocation5 + $0x690] sm:$0xff]
    %v306 = vld [vmem:[#allocation5 + $0x698] sm:$0xff]
    %v307 = vld [vmem:[#allocation5 + $0x6a0] sm:$0xff]
    %v308 = vld [vmem:[#allocation5 + $0x6a8] sm:$0xff]
    %v309 = vld [vmem:[#allocation5 + $0x6b0] sm:$0xf]
    %v310 = vld [vmem:[#allocation5 + $0x6b4] sm:$0xff]
    %v311 = vld [vmem:[#allocation5 + $0x6bc] sm:$0xff]
    %v312 = vld [vmem:[#allocation5 + $0x6c4] sm:$0xff]
    %v313 = vld [vmem:[#allocation5 + $0x6cc] sm:$0xff]
    %v314 = vld [vmem:[#allocation5 + $0x6d4] sm:$0xff]
    %v315 = vld [vmem:[#allocation5 + $0x6dc] sm:$0xff]
    %v316 = vld [vmem:[#allocation5 + $0x6e4] sm:$0xf]
    %v317 = vld [vmem:[#allocation5 + $0x6e8] sm:$0xff]
    %v318 = vld [vmem:[#allocation5 + $0x6f0] sm:$0xff]
    %v319 = vld [vmem:[#allocation5 + $0x6f8] sm:$0xff]
    %v320 = vld [vmem:[#allocation5 + $0x700] sm:$0xff]
    %v321 = vld [vmem:[#allocation5 + $0x708] sm:$0xff]
    %v322 = vld [vmem:[#allocation5 + $0x710] sm:$0xff]
    %v323 = vld [vmem:[#allocation5 + $0x718] sm:$0xf]
    %v324 = vld [vmem:[#allocation5 + $0x71c] sm:$0xff]
    %v325 = vld [vmem:[#allocation5 + $0x724] sm:$0xff]
    %v326 = vld [vmem:[#allocation5 + $0x72c] sm:$0xff]
    %v327 = vld [vmem:[#allocation5 + $0x734] sm:$0xff]
    %v328 = vld [vmem:[#allocation5 + $0x73c] sm:$0xff]
    %v329 = vld [vmem:[#allocation5 + $0x744] sm:$0xff]
    %v330 = vld [vmem:[#allocation5 + $0x74c] sm:$0xf]
    %v331 = vld [vmem:[#allocation5 + $0x750] sm:$0xff]
    %v332 = vld [vmem:[#allocation5 + $0x758] sm:$0xff]
    %v333 = vld [vmem:[#allocation5 + $0x760] sm:$0xff]
    %v334 = vld [vmem:[#allocation5 + $0x768] sm:$0xff]
    %v335 = vld [vmem:[#allocation5 + $0x770] sm:$0xff]
    %v336 = vld [vmem:[#allocation5 + $0x778] sm:$0xff]
    %v337 = vld [vmem:[#allocation5 + $0x780] sm:$0xf]
    %v338 = vld [vmem:[#allocation5 + $0x784] sm:$0xff]
    %v339 = vld [vmem:[#allocation5 + $0x78c] sm:$0xff]
    %v340 = vld [vmem:[#allocation5 + $0x794] sm:$0xff]
    %v341 = vld [vmem:[#allocation5 + $0x79c] sm:$0xff]
    %v342 = vld [vmem:[#allocation5 + $0x7a4] sm:$0xff]
    %v343 = vld [vmem:[#allocation5 + $0x7ac] sm:$0xff]
    %v344 = vld [vmem:[#allocation5 + $0x7b4] sm:$0xf]
    %v345 = vld [vmem:[#allocation5 + $0x7b8] sm:$0xff]
    %v346 = vld [vmem:[#allocation5 + $0x7c0] sm:$0xff]
    %v347 = vld [vmem:[#allocation5 + $0x7c8] sm:$0xff]
    %v348 = vld [vmem:[#allocation5 + $0x7d0] sm:$0xff]
    %v349 = vld [vmem:[#allocation5 + $0x7d8] sm:$0xff]
    %v350 = vld [vmem:[#allocation5 + $0x7e0] sm:$0xff]
    %v351 = vld [vmem:[#allocation5 + $0x7e8] sm:$0xf]
    %v352 = vld [vmem:[#allocation5 + $0x7ec] sm:$0xff]
    %v353 = vld [vmem:[#allocation5 + $0x7f4] sm:$0xff]
    %v354 = vld [vmem:[#allocation5 + $0x7fc] sm:$0xff]
    %v355 = vld [vmem:[#allocation5 + $0x804] sm:$0xff]
    %v356 = vld [vmem:[#allocation5 + $0x80c] sm:$0xff]
    %v357 = vld [vmem:[#allocation5 + $0x814] sm:$0xff]
    %v358 = vld [vmem:[#allocation5 + $0x81c] sm:$0xf]
    %v359 = vld [vmem:[#allocation5 + $0x820] sm:$0xff]
    %v360 = vld [vmem:[#allocation5 + $0x828] sm:$0xff]
    %v361 = vld [vmem:[#allocation5 + $0x830] sm:$0xff]
    %v362 = vld [vmem:[#allocation5 + $0x838] sm:$0xff]
    %v363 = vld [vmem:[#allocation5 + $0x840] sm:$0xff]
    %v364 = vld [vmem:[#allocation5 + $0x848] sm:$0xff]
    %v365 = vld [vmem:[#allocation5 + $0x850] sm:$0xf]
    %v366 = vld [vmem:[#allocation5 + $0x854] sm:$0xff]
    %v367 = vld [vmem:[#allocation5 + $0x85c] sm:$0xff]
    %v368 = vld [vmem:[#allocation5 + $0x864] sm:$0xff]
    %v369 = vld [vmem:[#allocation5 + $0x86c] sm:$0xff]
    %v370 = vld [vmem:[#allocation5 + $0x874] sm:$0xff]
    %v371 = vld [vmem:[#allocation5 + $0x87c] sm:$0xff]
    %v372 = vld [vmem:[#allocation5 + $0x884] sm:$0xf]
    %v373 = vld [vmem:[#allocation5 + $0x888] sm:$0xff]
    %v374 = vld [vmem:[#allocation5 + $0x890] sm:$0xff]
    %v375 = vld [vmem:[#allocation5 + $0x898] sm:$0xff]
    %v376 = vld [vmem:[#allocation5 + $0x8a0] sm:$0xff]
    %v377 = vld [vmem:[#allocation5 + $0x8a8] sm:$0xff]
    %v378 = vld [vmem:[#allocation5 + $0x8b0] sm:$0xff]
    %v379 = vld [vmem:[#allocation5 + $0x8b8] sm:$0xf]
    %v380 = vld [vmem:[#allocation5 + $0x8bc] sm:$0xff]
    %v381 = vld [vmem:[#allocation5 + $0x8c4] sm:$0xff]
    %v382 = vld [vmem:[#allocation5 + $0x8cc] sm:$0xff]
    %v383 = vld [vmem:[#allocation5 + $0x8d4] sm:$0xff]
    %v384 = vld [vmem:[#allocation5 + $0x8dc] sm:$0xff]
    %v385 = vld [vmem:[#allocation5 + $0x8e4] sm:$0xff]
    %v386 = vld [vmem:[#allocation5 + $0x8ec] sm:$0xf]
    %v387 = vld [vmem:[#allocation5 + $0x8f0] sm:$0xff]
    %v388 = vld [vmem:[#allocation5 + $0x8f8] sm:$0xff]
    %v389 = vld [vmem:[#allocation5 + $0x900] sm:$0xff]
    %v390 = vld [vmem:[#allocation5 + $0x908] sm:$0xff]
    %v391 = vld [vmem:[#allocation5 + $0x910] sm:$0xff]
    %v392 = vld [vmem:[#allocation5 + $0x918] sm:$0xff]
    %v393 = vld [vmem:[#allocation5 + $0x920] sm:$0xf]
    %v394 = vld [vmem:[#allocation5 + $0x924] sm:$0xff]
    %v395 = vld [vmem:[#allocation5 + $0x92c] sm:$0xff]
    %v396 = vld [vmem:[#allocation5 + $0x934] sm:$0xff]
    %v397 = vld [vmem:[#allocation5 + $0x93c] sm:$0xff]
    %v398 = vld [vmem:[#allocation5 + $0x944] sm:$0xff]
    %v399 = vld [vmem:[#allocation5 + $0x94c] sm:$0xff]
    %v400 = vld [vmem:[#allocation5 + $0x954] sm:$0xf]
    %v401 = vld [vmem:[#allocation5 + $0x958] sm:$0xff]
    %v402 = vld [vmem:[#allocation5 + $0x960] sm:$0xff]
    %v403 = vld [vmem:[#allocation5 + $0x968] sm:$0xff]
    %v404 = vld [vmem:[#allocation5 + $0x970] sm:$0xff]
    %v405 = vld [vmem:[#allocation5 + $0x978] sm:$0xff]
    %v406 = vld [vmem:[#allocation5 + $0x980] sm:$0xff]
    %v407 = vld [vmem:[#allocation5 + $0x988] sm:$0xf]
    %v408 = vld [vmem:[#allocation5 + $0x98c] sm:$0xff]
    %v409 = vld [vmem:[#allocation5 + $0x994] sm:$0xff]
    %v410 = vld [vmem:[#allocation5 + $0x99c] sm:$0xff]
    %v411 = vld [vmem:[#allocation5 + $0x9a4] sm:$0xff]
    %v412 = vld [vmem:[#allocation5 + $0x9ac] sm:$0xff]
    %v413 = vld [vmem:[#allocation5 + $0x9b4] sm:$0xff]
    %v414 = vld [vmem:[#allocation5 + $0x9bc] sm:$0xf]
    %v415 = vld [vmem:[#allocation5 + $0x9c0] sm:$0xff]
    %v416 = vld [vmem:[#allocation5 + $0x9c8] sm:$0xff]
    %v417 = vld [vmem:[#allocation5 + $0x9d0] sm:$0xff]
    %v418 = vld [vmem:[#allocation5 + $0x9d8] sm:$0xff]
    %v419 = vld [vmem:[#allocation5 + $0x9e0] sm:$0xff]
    %v420 = vld [vmem:[#allocation5 + $0x9e8] sm:$0xff]
    %v421 = vld [vmem:[#allocation5 + $0x9f0] sm:$0xf]
    %v422 = vld [vmem:[#allocation5 + $0x9f4] sm:$0xff]
    %v423 = vld [vmem:[#allocation5 + $0x9fc] sm:$0xff]
    %v424 = vld [vmem:[#allocation5 + $0xa04] sm:$0xff]
    %v425 = vld [vmem:[#allocation5 + $0xa0c] sm:$0xff]
    %v426 = vld [vmem:[#allocation5 + $0xa14] sm:$0xff]
    %v427 = vld [vmem:[#allocation5 + $0xa1c] sm:$0xff]
    %v428 = vld [vmem:[#allocation5 + $0xa24] sm:$0xf]
    %v429 = vld [vmem:[#allocation5 + $0xa28] sm:$0xff]
    %v430 = vld [vmem:[#allocation5 + $0xa30] sm:$0xff]
    %v431 = vld [vmem:[#allocation5 + $0xa38] sm:$0xff]
    %v432 = vld [vmem:[#allocation5 + $0xa40] sm:$0xff]
    %v433 = vld [vmem:[#allocation5 + $0xa48] sm:$0xff]
    %v434 = vld [vmem:[#allocation5 + $0xa50] sm:$0xff]
    %v435 = vld [vmem:[#allocation5 + $0xa58] sm:$0xf]
    %v436 = vld [vmem:[#allocation5 + $0xa5c] sm:$0xff]
    %v437 = vld [vmem:[#allocation5 + $0xa64] sm:$0xff]
    %v438 = vld [vmem:[#allocation5 + $0xa6c] sm:$0xff]
    %v439 = vld [vmem:[#allocation5 + $0xa74] sm:$0xff]
    %v440 = vld [vmem:[#allocation5 + $0xa7c] sm:$0xff]
    %v441 = vld [vmem:[#allocation5 + $0xa84] sm:$0xff]
    %v442 = vld [vmem:[#allocation5 + $0xa8c] sm:$0xf]
    %v443 = vld [vmem:[#allocation5 + $0xa90] sm:$0xff]
    %v444 = vld [vmem:[#allocation5 + $0xa98] sm:$0xff]
    %v445 = vld [vmem:[#allocation5 + $0xaa0] sm:$0xff]
    %v446 = vld [vmem:[#allocation5 + $0xaa8] sm:$0xff]
    %v447 = vld [vmem:[#allocation5 + $0xab0] sm:$0xff]
    %v448 = vld [vmem:[#allocation5 + $0xab8] sm:$0xff]
    %v449 = vld [vmem:[#allocation5 + $0xac0] sm:$0xf]
    %v450 = vld [vmem:[#allocation5 + $0xac4] sm:$0xff]
    %v451 = vld [vmem:[#allocation5 + $0xacc] sm:$0xff]
    %v452 = vld [vmem:[#allocation5 + $0xad4] sm:$0xff]
    %v453 = vld [vmem:[#allocation5 + $0xadc] sm:$0xff]
    %v454 = vld [vmem:[#allocation5 + $0xae4] sm:$0xff]
    %v455 = vld [vmem:[#allocation5 + $0xaec] sm:$0xff]
    %v456 = vld [vmem:[#allocation5 + $0xaf4] sm:$0xf]
    %v457 = vld [vmem:[#allocation5 + $0xaf8] sm:$0xff]
    %v458 = vld [vmem:[#allocation5 + $0xb00] sm:$0xff]
    %v459 = vld [vmem:[#allocation5 + $0xb08] sm:$0xff]
    %v460 = vld [vmem:[#allocation5 + $0xb10] sm:$0xff]
    %v461 = vld [vmem:[#allocation5 + $0xb18] sm:$0xff]
    %v462 = vld [vmem:[#allocation5 + $0xb20] sm:$0xff]
    %v463 = vld [vmem:[#allocation5 + $0xb28] sm:$0xf]
    %v464 = vld [vmem:[#allocation5 + $0xb2c] sm:$0xff]
    %v465 = vld [vmem:[#allocation5 + $0xb34] sm:$0xff]
    %v466 = vld [vmem:[#allocation5 + $0xb3c] sm:$0xff]
    %v467 = vld [vmem:[#allocation5 + $0xb44] sm:$0xff]
    %v468 = vld [vmem:[#allocation5 + $0xb4c] sm:$0xff]
    %v469 = vld [vmem:[#allocation5 + $0xb54] sm:$0xff]
    %v470 = vld [vmem:[#allocation5 + $0xb5c] sm:$0xf]
    %v471 = vld [vmem:[#allocation5 + $0xb60] sm:$0xff]
    %v472 = vld [vmem:[#allocation5 + $0xb68] sm:$0xff]
    %v473 = vld [vmem:[#allocation5 + $0xb70] sm:$0xff]
    %v474 = vld [vmem:[#allocation5 + $0xb78] sm:$0xff]
    %v475 = vld [vmem:[#allocation5 + $0xb80] sm:$0xff]
    %v476 = vld [vmem:[#allocation5 + $0xb88] sm:$0xff]
    %v477 = vld [vmem:[#allocation5 + $0xb90] sm:$0xf]
    %v478 = vld [vmem:[#allocation5 + $0xb94] sm:$0xff]
    %v479 = vld [vmem:[#allocation5 + $0xb9c] sm:$0xff]
    %v480 = vld [vmem:[#allocation5 + $0xba4] sm:$0xff]
    %v481 = vld [vmem:[#allocation5 + $0xbac] sm:$0xff]
    %v482 = vld [vmem:[#allocation5 + $0xbb4] sm:$0xff]
    %v483 = vld [vmem:[#allocation5 + $0xbbc] sm:$0xff]
    %v484 = vld [vmem:[#allocation5 + $0xbc4] sm:$0xf]
    %v485 = vld [vmem:[#allocation5 + $0xbc8] sm:$0xff]
    %v486 = vld [vmem:[#allocation5 + $0xbd0] sm:$0xff]
    %v487 = vld [vmem:[#allocation5 + $0xbd8] sm:$0xff]
    %v488 = vld [vmem:[#allocation5 + $0xbe0] sm:$0xff]
    %v489 = vld [vmem:[#allocation5 + $0xbe8] sm:$0xff]
    %v490 = vld [vmem:[#allocation5 + $0xbf0] sm:$0xff]
    %v491 = vld [vmem:[#allocation5 + $0xbf8] sm:$0xf]
    %v492 = vld [vmem:[#allocation5 + $0xbfc] sm:$0xff]
    %v493 = vld [vmem:[#allocation5 + $0xc04] sm:$0xff]
    %v494 = vld [vmem:[#allocation5 + $0xc0c] sm:$0xff]
    %v495 = vld [vmem:[#allocation5 + $0xc14] sm:$0xff]
    %v496 = vld [vmem:[#allocation5 + $0xc1c] sm:$0xff]
    %v497 = vld [vmem:[#allocation5 + $0xc24] sm:$0xff]
    %v498 = vld [vmem:[#allocation5 + $0xc2c] sm:$0xf]
    %v499 = vld [vmem:[#allocation5 + $0xc30] sm:$0xff]
    %v500 = vld [vmem:[#allocation5 + $0xc38] sm:$0xff]
    %v501 = vld [vmem:[#allocation5 + $0xc40] sm:$0xff]
    %v502 = vld [vmem:[#allocation5 + $0xc48] sm:$0xff]
    %v503 = vld [vmem:[#allocation5 + $0xc50] sm:$0xff]
    %v504 = vld [vmem:[#allocation5 + $0xc58] sm:$0xff]
    %v505 = vld [vmem:[#allocation5 + $0xc60] sm:$0xf]
    %v506 = vld [vmem:[#allocation5 + $0xc64] sm:$0xff]
    %v507 = vld [vmem:[#allocation5 + $0xc6c] sm:$0xff]
    %v508 = vld [vmem:[#allocation5 + $0xc74] sm:$0xff]
    %v509 = vld [vmem:[#allocation5 + $0xc7c] sm:$0xff]
    %v510 = vld [vmem:[#allocation5 + $0xc84] sm:$0xff]
    %v511 = vld [vmem:[#allocation5 + $0xc8c] sm:$0xff]
    %v512 = vld [vmem:[#allocation5 + $0xc94] sm:$0xf]
    %v513 = vld [vmem:[#allocation5 + $0xc98] sm:$0xff]
    %v514 = vld [vmem:[#allocation5 + $0xca0] sm:$0xff]
    %v515 = vld [vmem:[#allocation5 + $0xca8] sm:$0xff]
    %v516 = vld [vmem:[#allocation5 + $0xcb0] sm:$0xff]
    %v517 = vld [vmem:[#allocation5 + $0xcb8] sm:$0xff]
    %v518 = vld [vmem:[#allocation5 + $0xcc0] sm:$0xff]
    %v519 = vld [vmem:[#allocation5 + $0xcc8] sm:$0xf]
    %v520 = vld [vmem:[#allocation5 + $0xccc] sm:$0xff]
    %v521 = vld [vmem:[#allocation5 + $0xcd4] sm:$0xff]
    %v522 = vld [vmem:[#allocation5 + $0xcdc] sm:$0xff]
    %v523 = vld [vmem:[#allocation5 + $0xce4] sm:$0xff]
    %v524 = vld [vmem:[#allocation5 + $0xcec] sm:$0xff]
    %v525 = vld [vmem:[#allocation5 + $0xcf4] sm:$0xff]
    %v526 = vld [vmem:[#allocation5 + $0xcfc] sm:$0xf]
    %v527 = vld [vmem:[#allocation5 + $0xd00] sm:$0xff]
    %v528 = vld [vmem:[#allocation5 + $0xd08] sm:$0xff]
    %v529 = vld [vmem:[#allocation5 + $0xd10] sm:$0xff]
    %v530 = vld [vmem:[#allocation5 + $0xd18] sm:$0xff]
    %v531 = vld [vmem:[#allocation5 + $0xd20] sm:$0xff]
    %v532 = vld [vmem:[#allocation5 + $0xd28] sm:$0xff]
    %v533 = vld [vmem:[#allocation5 + $0xd30] sm:$0xf]
    %v534 = vld [vmem:[#allocation5 + $0xd34] sm:$0xff]
    %v535 = vld [vmem:[#allocation5 + $0xd3c] sm:$0xff]
    %v536 = vld [vmem:[#allocation5 + $0xd44] sm:$0xff]
    %v537 = vld [vmem:[#allocation5 + $0xd4c] sm:$0xff]
    %v538 = vld [vmem:[#allocation5 + $0xd54] sm:$0xff]
    %v539 = vld [vmem:[#allocation5 + $0xd5c] sm:$0xff]
    %v540 = vld [vmem:[#allocation5 + $0xd64] sm:$0xf]
    %v541 = vld [vmem:[#allocation5 + $0xd68] sm:$0xff]
    %v542 = vld [vmem:[#allocation5 + $0xd70] sm:$0xff]
    %v543 = vld [vmem:[#allocation5 + $0xd78] sm:$0xff]
    %v544 = vld [vmem:[#allocation5 + $0xd80] sm:$0xff]
    %v545 = vld [vmem:[#allocation5 + $0xd88] sm:$0xff]
    %v546 = vld [vmem:[#allocation5 + $0xd90] sm:$0xff]
    %v547 = vld [vmem:[#allocation5 + $0xd98] sm:$0xf]
    %v548 = vld [vmem:[#allocation5 + $0xd9c] sm:$0xff]
    %v549 = vld [vmem:[#allocation5 + $0xda4] sm:$0xff]
    %v550 = vld [vmem:[#allocation5 + $0xdac] sm:$0xff]
    %v551 = vld [vmem:[#allocation5 + $0xdb4] sm:$0xff]
    %v552 = vld [vmem:[#allocation5 + $0xdbc] sm:$0xff]
    %v553 = vld [vmem:[#allocation5 + $0xdc4] sm:$0xff]
    %v554 = vld [vmem:[#allocation5 + $0xdcc] sm:$0xf]
    %v555 = vld [vmem:[#allocation5 + $0xdd0] sm:$0xff]
    %v556 = vld [vmem:[#allocation5 + $0xdd8] sm:$0xff]
    %v557 = vld [vmem:[#allocation5 + $0xde0] sm:$0xff]
    %v558 = vld [vmem:[#allocation5 + $0xde8] sm:$0xff]
    %v559 = vld [vmem:[#allocation5 + $0xdf0] sm:$0xff]
    %v560 = vld [vmem:[#allocation5 + $0xdf8] sm:$0xff]
    %v561 = vld [vmem:[#allocation5 + $0xe00] sm:$0xf]
    %v562 = vld [vmem:[#allocation5 + $0xe04] sm:$0xff]
    %v563 = vld [vmem:[#allocation5 + $0xe0c] sm:$0xff]
    %v564 = vld [vmem:[#allocation5 + $0xe14] sm:$0xff]
    %v565 = vld [vmem:[#allocation5 + $0xe1c] sm:$0xff]
    %v566 = vld [vmem:[#allocation5 + $0xe24] sm:$0xff]
    %v567 = vld [vmem:[#allocation5 + $0xe2c] sm:$0xff]
    %v568 = vld [vmem:[#allocation5 + $0xe34] sm:$0xf]
    %v569 = vld [vmem:[#allocation5 + $0xe38] sm:$0xff]
    %v570 = vld [vmem:[#allocation5 + $0xe40] sm:$0xff]
    %v571 = vld [vmem:[#allocation5 + $0xe48] sm:$0xff]
    %v572 = vld [vmem:[#allocation5 + $0xe50] sm:$0xff]
    %v573 = vld [vmem:[#allocation5 + $0xe58] sm:$0xff]
    %v574 = vld [vmem:[#allocation5 + $0xe60] sm:$0xff]
    %v575 = vld [vmem:[#allocation5 + $0xe68] sm:$0xf]
    %v576 = vld [vmem:[#allocation5 + $0xe6c] sm:$0xff]
    %v577 = vld [vmem:[#allocation5 + $0xe74] sm:$0xff]
    %v578 = vld [vmem:[#allocation5 + $0xe7c] sm:$0xff]
    %v579 = vld [vmem:[#allocation5 + $0xe84] sm:$0xff]
    %v580 = vld [vmem:[#allocation5 + $0xe8c] sm:$0xff]
    %v581 = vld [vmem:[#allocation5 + $0xe94] sm:$0xff]
    %v582 = vld [vmem:[#allocation5 + $0xe9c] sm:$0xf]
    %v583 = vld [vmem:[#allocation5 + $0xea0] sm:$0xff]
    %v584 = vld [vmem:[#allocation5 + $0xea8] sm:$0xff]
    %v585 = vld [vmem:[#allocation5 + $0xeb0] sm:$0xff]
    %v586 = vld [vmem:[#allocation5 + $0xeb8] sm:$0xff]
    %v587 = vld [vmem:[#allocation5 + $0xec0] sm:$0xff]
    %v588 = vld [vmem:[#allocation5 + $0xec8] sm:$0xff]
    %v589 = vld [vmem:[#allocation5 + $0xed0] sm:$0xf]
    %v590 = vld [vmem:[#allocation5 + $0xed4] sm:$0xff]
    %v591 = vld [vmem:[#allocation5 + $0xedc] sm:$0xff]
    %v592 = vld [vmem:[#allocation5 + $0xee4] sm:$0xff]
    %v593 = vld [vmem:[#allocation5 + $0xeec] sm:$0xff]
    %v594 = vld [vmem:[#allocation5 + $0xef4] sm:$0xff]
    %v595 = vld [vmem:[#allocation5 + $0xefc] sm:$0xff]
    %v596 = vld [vmem:[#allocation5 + $0xf04] sm:$0xf]
    %v597 = vld [vmem:[#allocation5 + $0xf08] sm:$0xff]
    %v598 = vld [vmem:[#allocation5 + $0xf10] sm:$0xff]
    %v599 = vld [vmem:[#allocation5 + $0xf18] sm:$0xff]
    %v600 = vld [vmem:[#allocation5 + $0xf20] sm:$0xff]
    %v601 = vld [vmem:[#allocation5 + $0xf28] sm:$0xff]
    %v602 = vld [vmem:[#allocation5 + $0xf30] sm:$0xff]
    %v603 = vld [vmem:[#allocation5 + $0xf38] sm:$0xf]
    %v604 = vld [vmem:[#allocation5 + $0xf3c] sm:$0xff]
    %v605 = vld [vmem:[#allocation5 + $0xf44] sm:$0xff]
    %v606 = vld [vmem:[#allocation5 + $0xf4c] sm:$0xff]
    %v607 = vld [vmem:[#allocation5 + $0xf54] sm:$0xff]
    %v608 = vld [vmem:[#allocation5 + $0xf5c] sm:$0xff]
    %v609 = vld [vmem:[#allocation5 + $0xf64] sm:$0xff]
    %v610 = vld [vmem:[#allocation5 + $0xf6c] sm:$0xf]
    %v611 = vld [vmem:[#allocation5 + $0xf70] sm:$0xff]
    %v612 = vld [vmem:[#allocation5 + $0xf78] sm:$0xff]
    %v613 = vld [vmem:[#allocation5 + $0xf80] sm:$0xff]
    %v614 = vld [vmem:[#allocation5 + $0xf88] sm:$0xff]
    %v615 = vld [vmem:[#allocation5 + $0xf90] sm:$0xff]
    %v616 = vld [vmem:[#allocation5 + $0xf98] sm:$0xff]
    %v617 = vld [vmem:[#allocation5 + $0xfa0] sm:$0xf]
    %v618 = vld [vmem:[#allocation5 + $0xfa4] sm:$0xff]
    %v619 = vld [vmem:[#allocation5 + $0xfac] sm:$0xff]
    %v620 = vld [vmem:[#allocation5 + $0xfb4] sm:$0xff]
    %v621 = vld [vmem:[#allocation5 + $0xfbc] sm:$0xff]
    %v622 = vld [vmem:[#allocation5 + $0xfc4] sm:$0xff]
    %v623 = vld [vmem:[#allocation5 + $0xfcc] sm:$0xff]
    %v624 = vld [vmem:[#allocation5 + $0xfd4] sm:$0xf]
    %v625 = vld [vmem:[#allocation5 + $0xfd8] sm:$0xff]
    %v626 = vld [vmem:[#allocation5 + $0xfe0] sm:$0xff]
    %v627 = vld [vmem:[#allocation5 + $0xfe8] sm:$0xff]
    %v628 = vld [vmem:[#allocation5 + $0xff0] sm:$0xff]
    %v629 = vld [vmem:[#allocation5 + $0xff8] sm:$0xff]
    %v630 = vld [vmem:[#allocation5 + $0x1000] sm:$0xff]
    %v631 = vld [vmem:[#allocation5 + $0x1008] sm:$0xf]
    %v632 = vld [vmem:[#allocation5 + $0x100c] sm:$0xff]
    %v633 = vld [vmem:[#allocation5 + $0x1014] sm:$0xff]
    %v634 = vld [vmem:[#allocation5 + $0x101c] sm:$0xff]
    %v635 = vld [vmem:[#allocation5 + $0x1024] sm:$0xff]
    %v636 = vld [vmem:[#allocation5 + $0x102c] sm:$0xff]
    %v637 = vld [vmem:[#allocation5 + $0x1034] sm:$0xff]
    %v638 = vld [vmem:[#allocation5 + $0x103c] sm:$0xf]
    %v639 = vld [vmem:[#allocation5 + $0x1040] sm:$0xff]
    %v640 = vld [vmem:[#allocation5 + $0x1048] sm:$0xff]
    %v641 = vld [vmem:[#allocation5 + $0x1050] sm:$0xff]
    %v642 = vld [vmem:[#allocation5 + $0x1058] sm:$0xff]
    %v643 = vld [vmem:[#allocation5 + $0x1060] sm:$0xff]
    %v644 = vld [vmem:[#allocation5 + $0x1068] sm:$0xff]
    %v645 = vld [vmem:[#allocation5 + $0x1070] sm:$0xf]
    %v646 = vld [vmem:[#allocation5 + $0x1074] sm:$0xff]
    %v647 = vld [vmem:[#allocation5 + $0x107c] sm:$0xff]
    %v648 = vld [vmem:[#allocation5 + $0x1084] sm:$0xff]
    %v649 = vld [vmem:[#allocation5 + $0x108c] sm:$0xff]
    %v650 = vld [vmem:[#allocation5 + $0x1094] sm:$0xff]
    %v651 = vld [vmem:[#allocation5 + $0x109c] sm:$0xff]
    %v652 = vld [vmem:[#allocation5 + $0x10a4] sm:$0xf]
    %v653 = vld [vmem:[#allocation5 + $0x10a8] sm:$0xff]
    %v654 = vld [vmem:[#allocation5 + $0x10b0] sm:$0xff]
    %v655 = vld [vmem:[#allocation5 + $0x10b8] sm:$0xff]
    %v656 = vld [vmem:[#allocation5 + $0x10c0] sm:$0xff]
    %v657 = vld [vmem:[#allocation5 + $0x10c8] sm:$0xff]
    %v658 = vld [vmem:[#allocation5 + $0x10d0] sm:$0xff]
    %v659 = vld [vmem:[#allocation5 + $0x10d8] sm:$0xf]
    %v660 = vld [vmem:[#allocation5 + $0x10dc] sm:$0xff]
    %v661 = vld [vmem:[#allocation5 + $0x10e4] sm:$0xff]
    %v662 = vld [vmem:[#allocation5 + $0x10ec] sm:$0xff]
    %v663 = vld [vmem:[#allocation5 + $0x10f4] sm:$0xff]
    %v664 = vld [vmem:[#allocation5 + $0x10fc] sm:$0xff]
    %v665 = vld [vmem:[#allocation5 + $0x1104] sm:$0xff]
    %v666 = vld [vmem:[#allocation5 + $0x110c] sm:$0xf]
    %v667 = vld [vmem:[#allocation5 + $0x1110] sm:$0xff]
    %v668 = vld [vmem:[#allocation5 + $0x1118] sm:$0xff]
    %v669 = vld [vmem:[#allocation5 + $0x1120] sm:$0xff]
    %v670 = vld [vmem:[#allocation5 + $0x1128] sm:$0xff]
    %v671 = vld [vmem:[#allocation5 + $0x1130] sm:$0xff]
    %v672 = vld [vmem:[#allocation5 + $0x1138] sm:$0xff]
    %v673 = vld [vmem:[#allocation5 + $0x1140] sm:$0xf]
    %v674 = vld [vmem:[#allocation5 + $0x1144] sm:$0xff]
    %v675 = vld [vmem:[#allocation5 + $0x114c] sm:$0xff]
    %v676 = vld [vmem:[#allocation5 + $0x1154] sm:$0xff]
    %v677 = vld [vmem:[#allocation5 + $0x115c] sm:$0xff]
    %v678 = vld [vmem:[#allocation5 + $0x1164] sm:$0xff]
    %v679 = vld [vmem:[#allocation5 + $0x116c] sm:$0xff]
    %v680 = vld [vmem:[#allocation5 + $0x1174] sm:$0xf]
    %v681 = vld [vmem:[#allocation5 + $0x1178] sm:$0xff]
    %v682 = vld [vmem:[#allocation5 + $0x1180] sm:$0xff]
    %v683 = vld [vmem:[#allocation5 + $0x1188] sm:$0xff]
    %v684 = vld [vmem:[#allocation5 + $0x1190] sm:$0xff]
    %v685 = vld [vmem:[#allocation5 + $0x1198] sm:$0xff]
    %v686 = vld [vmem:[#allocation5 + $0x11a0] sm:$0xff]
    %v687 = vld [vmem:[#allocation5 + $0x11a8] sm:$0xf]
    %v688 = vld [vmem:[#allocation5 + $0x11ac] sm:$0xff]
    %v689 = vld [vmem:[#allocation5 + $0x11b4] sm:$0xff]
    %v690 = vld [vmem:[#allocation5 + $0x11bc] sm:$0xff]
    %v691 = vld [vmem:[#allocation5 + $0x11c4] sm:$0xff]
    %v692 = vld [vmem:[#allocation5 + $0x11cc] sm:$0xff]
    %v693 = vld [vmem:[#allocation5 + $0x11d4] sm:$0xff]
    %v694 = vld [vmem:[#allocation5 + $0x11dc] sm:$0xf]
    %v695 = vld [vmem:[#allocation5 + $0x11e0] sm:$0xff]
    %v696 = vld [vmem:[#allocation5 + $0x11e8] sm:$0xff]
    %v697 = vld [vmem:[#allocation5 + $0x11f0] sm:$0xff]
    %v698 = vld [vmem:[#allocation5 + $0x11f8] sm:$0xff]
    %v699 = vld [vmem:[#allocation5 + $0x1200] sm:$0xff]
    %v700 = vld [vmem:[#allocation5 + $0x1208] sm:$0xff]
    %v701 = vld [vmem:[#allocation5 + $0x1210] sm:$0xf]
    %v702 = vld [vmem:[#allocation5 + $0x1214] sm:$0xff]
    %v703 = vld [vmem:[#allocation5 + $0x121c] sm:$0xff]
    %v704 = vld [vmem:[#allocation5 + $0x1224] sm:$0xff]
    %v705 = vld [vmem:[#allocation5 + $0x122c] sm:$0xff]
    %v706 = vld [vmem:[#allocation5 + $0x1234] sm:$0xff]
    %v707 = vld [vmem:[#allocation5 + $0x123c] sm:$0xff]
    %v708 = vld [vmem:[#allocation5 + $0x1244] sm:$0xf]
    %v709 = vld [vmem:[#allocation5 + $0x1248] sm:$0xff]
    %v710 = vld [vmem:[#allocation5 + $0x1250] sm:$0xff]
    %v711 = vld [vmem:[#allocation5 + $0x1258] sm:$0xff]
    %v712 = vld [vmem:[#allocation5 + $0x1260] sm:$0xff]
    %v713 = vld [vmem:[#allocation5 + $0x1268] sm:$0xff]
    %v714 = vld [vmem:[#allocation5 + $0x1270] sm:$0xff]
    %v715 = vld [vmem:[#allocation5 + $0x1278] sm:$0xf]
    %v716 = vld [vmem:[#allocation5 + $0x127c] sm:$0xff]
    %v717 = vld [vmem:[#allocation5 + $0x1284] sm:$0xff]
    %v718 = vld [vmem:[#allocation5 + $0x128c] sm:$0xff]
    %v719 = vld [vmem:[#allocation5 + $0x1294] sm:$0xff]
    %v720 = vld [vmem:[#allocation5 + $0x129c] sm:$0xff]
    %v721 = vld [vmem:[#allocation5 + $0x12a4] sm:$0xff]
    %v722 = vld [vmem:[#allocation5 + $0x12ac] sm:$0xf]
    %v723 = vld [vmem:[#allocation5 + $0x12b0] sm:$0xff]
    %v724 = vld [vmem:[#allocation5 + $0x12b8] sm:$0xff]
    %v725 = vld [vmem:[#allocation5 + $0x12c0] sm:$0xff]
    %v726 = vld [vmem:[#allocation5 + $0x12c8] sm:$0xff]
    %v727 = vld [vmem:[#allocation5 + $0x12d0] sm:$0xff]
    %v728 = vld [vmem:[#allocation5 + $0x12d8] sm:$0xff]
    %v729 = vld [vmem:[#allocation5 + $0x12e0] sm:$0xf]
    %v730 = vld [vmem:[#allocation5 + $0x12e4] sm:$0xff]
    %v731 = vld [vmem:[#allocation5 + $0x12ec] sm:$0xff]
    %v732 = vld [vmem:[#allocation5 + $0x12f4] sm:$0xff]
    %v733 = vld [vmem:[#allocation5 + $0x12fc] sm:$0xff]
    %v734 = vld [vmem:[#allocation5 + $0x1304] sm:$0xff]
    %v735 = vld [vmem:[#allocation5 + $0x130c] sm:$0xff]
    %v736 = vld [vmem:[#allocation5 + $0x1314] sm:$0xf]
    %v737 = vld [vmem:[#allocation5 + $0x1318] sm:$0xff]
    %v738 = vld [vmem:[#allocation5 + $0x1320] sm:$0xff]
    %v739 = vld [vmem:[#allocation5 + $0x1328] sm:$0xff]
    %v740 = vld [vmem:[#allocation5 + $0x1330] sm:$0xff]
    %v741 = vld [vmem:[#allocation5 + $0x1338] sm:$0xff]
    %v742 = vld [vmem:[#allocation5 + $0x1340] sm:$0xff]
    %v743 = vld [vmem:[#allocation5 + $0x1348] sm:$0xf]
    %v744 = vld [vmem:[#allocation5 + $0x134c] sm:$0xff]
    %v745 = vld [vmem:[#allocation5 + $0x1354] sm:$0xff]
    %v746 = vld [vmem:[#allocation5 + $0x135c] sm:$0xff]
    %v747 = vld [vmem:[#allocation5 + $0x1364] sm:$0xff]
    %v748 = vld [vmem:[#allocation5 + $0x136c] sm:$0xff]
    %v749 = vld [vmem:[#allocation5 + $0x1374] sm:$0xff]
    %v750 = vld [vmem:[#allocation5 + $0x137c] sm:$0xf]
    %v751 = vld [vmem:[#allocation5 + $0x1380] sm:$0xff]
    %v752 = vld [vmem:[#allocation5 + $0x1388] sm:$0xff]
    %v753 = vld [vmem:[#allocation5 + $0x1390] sm:$0xff]
    %v754 = vld [vmem:[#allocation5 + $0x1398] sm:$0xff]
    %v755 = vld [vmem:[#allocation5 + $0x13a0] sm:$0xff]
    %v756 = vld [vmem:[#allocation5 + $0x13a8] sm:$0xff]
    %v757 = vld [vmem:[#allocation5 + $0x13b0] sm:$0xf]
    %v758 = vld [vmem:[#allocation5 + $0x13b4] sm:$0xff]
    %v759 = vld [vmem:[#allocation5 + $0x13bc] sm:$0xff]
    %v760 = vld [vmem:[#allocation5 + $0x13c4] sm:$0xff]
    %v761 = vld [vmem:[#allocation5 + $0x13cc] sm:$0xff]
    %v762 = vld [vmem:[#allocation5 + $0x13d4] sm:$0xff]
    %v763 = vld [vmem:[#allocation5 + $0x13dc] sm:$0xff]
    %v764 = vld [vmem:[#allocation5 + $0x13e4] sm:$0xf]
    %v765 = vld [vmem:[#allocation5 + $0x13e8] sm:$0xff]
    %v766 = vld [vmem:[#allocation5 + $0x13f0] sm:$0xff]
    %v767 = vld [vmem:[#allocation5 + $0x13f8] sm:$0xff]
    %v768 = vld [vmem:[#allocation5 + $0x1400] sm:$0xff]
    %v769 = vld [vmem:[#allocation5 + $0x1408] sm:$0xff]
    %v770 = vld [vmem:[#allocation5 + $0x1410] sm:$0xff]
    %v771 = vld [vmem:[#allocation5 + $0x1418] sm:$0xf]
    %v772 = vld [vmem:[#allocation5 + $0x141c] sm:$0xff]
    %v773 = vld [vmem:[#allocation5 + $0x1424] sm:$0xff]
    %v774 = vld [vmem:[#allocation5 + $0x142c] sm:$0xff]
    %v775 = vld [vmem:[#allocation5 + $0x1434] sm:$0xff]
    %v776 = vld [vmem:[#allocation5 + $0x143c] sm:$0xff]
    %v777 = vld [vmem:[#allocation5 + $0x1444] sm:$0xff]
    %v778 = vld [vmem:[#allocation5 + $0x144c] sm:$0xf]
    %v779 = vld [vmem:[#allocation5 + $0x1450] sm:$0xff]
    %v780 = vld [vmem:[#allocation5 + $0x1458] sm:$0xff]
    %v781 = vld [vmem:[#allocation5 + $0x1460] sm:$0xff]
    %v782 = vld [vmem:[#allocation5 + $0x1468] sm:$0xff]
    %v783 = vld [vmem:[#allocation5 + $0x1470] sm:$0xff]
    %v784 = vld [vmem:[#allocation5 + $0x1478] sm:$0xff]
    %v785 = vld [vmem:[#allocation5 + $0x1480] sm:$0xf]
    %v786 = vld [vmem:[#allocation5 + $0x1484] sm:$0xff]
    %v787 = vld [vmem:[#allocation5 + $0x148c] sm:$0xff]
    %v788 = vld [vmem:[#allocation5 + $0x1494] sm:$0xff]
    %v789 = vld [vmem:[#allocation5 + $0x149c] sm:$0xff]
    %v790 = vld [vmem:[#allocation5 + $0x14a4] sm:$0xff]
    %v791 = vld [vmem:[#allocation5 + $0x14ac] sm:$0xff]
    %v792 = vld [vmem:[#allocation5 + $0x14b4] sm:$0xf]
    %v793 = vld [vmem:[#allocation5 + $0x14b8] sm:$0xff]
    %v794 = vld [vmem:[#allocation5 + $0x14c0] sm:$0xff]
    %v795 = vld [vmem:[#allocation5 + $0x14c8] sm:$0xff]
    %v796 = vld [vmem:[#allocation5 + $0x14d0] sm:$0xff]
    %v797 = vld [vmem:[#allocation5 + $0x14d8] sm:$0xff]
    %v798 = vld [vmem:[#allocation5 + $0x14e0] sm:$0xff]
    %v799 = vld [vmem:[#allocation5 + $0x14e8] sm:$0xf]
    %v800 = vld [vmem:[#allocation5 + $0x14ec] sm:$0xff]
    %v801 = vld [vmem:[#allocation5 + $0x14f4] sm:$0xff]
    %v802 = vld [vmem:[#allocation5 + $0x14fc] sm:$0xff]
    %v803 = vld [vmem:[#allocation5 + $0x1504] sm:$0xff]
    %v804 = vld [vmem:[#allocation5 + $0x150c] sm:$0xff]
    %v805 = vld [vmem:[#allocation5 + $0x1514] sm:$0xff]
    %v806 = vld [vmem:[#allocation5 + $0x151c] sm:$0xf]
    %v807 = vld [vmem:[#allocation5 + $0x1520] sm:$0xff]
    %v808 = vld [vmem:[#allocation5 + $0x1528] sm:$0xff]
    %v809 = vld [vmem:[#allocation5 + $0x1530] sm:$0xff]
    %v810 = vld [vmem:[#allocation5 + $0x1538] sm:$0xff]
    %v811 = vld [vmem:[#allocation5 + $0x1540] sm:$0xff]
    %v812 = vld [vmem:[#allocation5 + $0x1548] sm:$0xff]
    %v813 = vld [vmem:[#allocation5 + $0x1550] sm:$0xf]
    %v814 = vld [vmem:[#allocation5 + $0x1554] sm:$0xff]
    %v815 = vld [vmem:[#allocation5 + $0x155c] sm:$0xff]
    %v816 = vld [vmem:[#allocation5 + $0x1564] sm:$0xff]
    %v817 = vld [vmem:[#allocation5 + $0x156c] sm:$0xff]
    %v818 = vld [vmem:[#allocation5 + $0x1574] sm:$0xff]
    %v819 = vld [vmem:[#allocation5 + $0x157c] sm:$0xff]
    %v820 = vld [vmem:[#allocation5 + $0x1584] sm:$0xf]
    %v821 = vld [vmem:[#allocation5 + $0x1588] sm:$0xff]
    %v822 = vld [vmem:[#allocation5 + $0x1590] sm:$0xff]
    %v823 = vld [vmem:[#allocation5 + $0x1598] sm:$0xff]
    %v824 = vld [vmem:[#allocation5 + $0x15a0] sm:$0xff]
    %v825 = vld [vmem:[#allocation5 + $0x15a8] sm:$0xff]
    %v826 = vld [vmem:[#allocation5 + $0x15b0] sm:$0xff]
    %v827 = vld [vmem:[#allocation5 + $0x15b8] sm:$0xf]
    %v828 = vld [vmem:[#allocation5 + $0x15bc] sm:$0xff]
    %v829 = vld [vmem:[#allocation5 + $0x15c4] sm:$0xff]
    %v830 = vld [vmem:[#allocation5 + $0x15cc] sm:$0xff]
    %v831 = vld [vmem:[#allocation5 + $0x15d4] sm:$0xff]
    %v832 = vld [vmem:[#allocation5 + $0x15dc] sm:$0xff]
    %v833 = vld [vmem:[#allocation5 + $0x15e4] sm:$0xff]
    %v834 = vld [vmem:[#allocation5 + $0x15ec] sm:$0xf]
    %v835 = vld [vmem:[#allocation5 + $0x15f0] sm:$0xff]
    %v836 = vld [vmem:[#allocation5 + $0x15f8] sm:$0xff]
    %v837 = vld [vmem:[#allocation5 + $0x1600] sm:$0xff]
    %v838 = vld [vmem:[#allocation5 + $0x1608] sm:$0xff]
    %v839 = vld [vmem:[#allocation5 + $0x1610] sm:$0xff]
    %v840 = vld [vmem:[#allocation5 + $0x1618] sm:$0xff]
    %v841 = vld [vmem:[#allocation5 + $0x1620] sm:$0xf]
    %v842 = vld [vmem:[#allocation5 + $0x1624] sm:$0xff]
    %v843 = vld [vmem:[#allocation5 + $0x162c] sm:$0xff]
    %v844 = vld [vmem:[#allocation5 + $0x1634] sm:$0xff]
    %v845 = vld [vmem:[#allocation5 + $0x163c] sm:$0xff]
    %v846 = vld [vmem:[#allocation5 + $0x1644] sm:$0xff]
    %v847 = vld [vmem:[#allocation5 + $0x164c] sm:$0xff]
    %v848 = vld [vmem:[#allocation5 + $0x1654] sm:$0xf]
    %v849 = vld [vmem:[#allocation5 + $0x1658] sm:$0xff]
    %v850 = vld [vmem:[#allocation5 + $0x1660] sm:$0xff]
    %v851 = vld [vmem:[#allocation5 + $0x1668] sm:$0xff]
    %v852 = vld [vmem:[#allocation5 + $0x1670] sm:$0xff]
    %v853 = vld [vmem:[#allocation5 + $0x1678] sm:$0xff]
    %v854 = vld [vmem:[#allocation5 + $0x1680] sm:$0xff]
    %v855 = vld [vmem:[#allocation5 + $0x1688] sm:$0xf]
    %v856 = vld [vmem:[#allocation5 + $0x168c] sm:$0xff]
    %v857 = vld [vmem:[#allocation5 + $0x1694] sm:$0xff]
    %v858 = vld [vmem:[#allocation5 + $0x169c] sm:$0xff]
    %v859 = vld [vmem:[#allocation5 + $0x16a4] sm:$0xff]
    %v860 = vld [vmem:[#allocation5 + $0x16ac] sm:$0xff]
    %v861 = vld [vmem:[#allocation5 + $0x16b4] sm:$0xff]
    %v862 = vld [vmem:[#allocation5 + $0x16bc] sm:$0xf]
    %v863 = vld [vmem:[#allocation5 + $0x16c0] sm:$0xff]
    %v864 = vld [vmem:[#allocation5 + $0x16c8] sm:$0xff]
    %v865 = vld [vmem:[#allocation5 + $0x16d0] sm:$0xff]
    %v866 = vld [vmem:[#allocation5 + $0x16d8] sm:$0xff]
    %v867 = vld [vmem:[#allocation5 + $0x16e0] sm:$0xff]
    %v868 = vld [vmem:[#allocation5 + $0x16e8] sm:$0xff]
    %v869 = vld [vmem:[#allocation5 + $0x16f0] sm:$0xf]
    %v870 = vld [vmem:[#allocation5 + $0x16f4] sm:$0xff]
    %v871 = vld [vmem:[#allocation5 + $0x16fc] sm:$0xff]
    %v872 = vld [vmem:[#allocation5 + $0x1704] sm:$0xff]
    %v873 = vld [vmem:[#allocation5 + $0x170c] sm:$0xff]
    %v874 = vld [vmem:[#allocation5 + $0x1714] sm:$0xff]
    %v875 = vld [vmem:[#allocation5 + $0x171c] sm:$0xff]
    %v876 = vld [vmem:[#allocation5 + $0x1724] sm:$0xf]
    %v877 = vld [vmem:[#allocation5 + $0x1728] sm:$0xff]
    %v878 = vld [vmem:[#allocation5 + $0x1730] sm:$0xff]
    %v879 = vld [vmem:[#allocation5 + $0x1738] sm:$0xff]
    %v880 = vld [vmem:[#allocation5 + $0x1740] sm:$0xff]
    %v881 = vld [vmem:[#allocation5 + $0x1748] sm:$0xff]
    %v882 = vld [vmem:[#allocation5 + $0x1750] sm:$0xff]
    %v883 = vld [vmem:[#allocation5 + $0x1758] sm:$0xf]
    %v884 = vld [vmem:[#allocation5 + $0x175c] sm:$0xff]
    %v885 = vld [vmem:[#allocation5 + $0x1764] sm:$0xff]
    %v886 = vld [vmem:[#allocation5 + $0x176c] sm:$0xff]
    %v887 = vld [vmem:[#allocation5 + $0x1774] sm:$0xff]
    %v888 = vld [vmem:[#allocation5 + $0x177c] sm:$0xff]
    %v889 = vld [vmem:[#allocation5 + $0x1784] sm:$0xff]
    %v890 = vld [vmem:[#allocation5 + $0x178c] sm:$0xf]
    %v891 = vld [vmem:[#allocation5 + $0x1790] sm:$0xff]
    %v892 = vld [vmem:[#allocation5 + $0x1798] sm:$0xff]
    %v893 = vld [vmem:[#allocation5 + $0x17a0] sm:$0xff]
    %v894 = vld [vmem:[#allocation5 + $0x17a8] sm:$0xff]
    %v895 = vld [vmem:[#allocation5 + $0x17b0] sm:$0xff]
    %v896 = vld [vmem:[#allocation5 + $0x17b8] sm:$0xff]
    %v897 = vld [vmem:[#allocation5 + $0x17c0] sm:$0xf]
    %v898 = vld [vmem:[#allocation5 + $0x17c4] sm:$0xff]
    %v899 = vld [vmem:[#allocation5 + $0x17cc] sm:$0xff]
    %v900 = vld [vmem:[#allocation5 + $0x17d4] sm:$0xff]
    %v901 = vld [vmem:[#allocation5 + $0x17dc] sm:$0xff]
    %v902 = vld [vmem:[#allocation5 + $0x17e4] sm:$0xff]
    %v903 = vld [vmem:[#allocation5 + $0x17ec] sm:$0xff]
    %v904 = vld [vmem:[#allocation5 + $0x17f4] sm:$0xf]
    %v905 = vld [vmem:[#allocation5 + $0x17f8] sm:$0xff]
    %v906 = vld [vmem:[#allocation5 + $0x1800] sm:$0xff]
    %v907 = vld [vmem:[#allocation5 + $0x1808] sm:$0xff]
    %v908 = vld [vmem:[#allocation5 + $0x1810] sm:$0xff]
    %v909 = vld [vmem:[#allocation5 + $0x1818] sm:$0xff]
    %v910 = vld [vmem:[#allocation5 + $0x1820] sm:$0xff]
    %v911 = vld [vmem:[#allocation5 + $0x1828] sm:$0xf]
    %v912 = vld [vmem:[#allocation5 + $0x182c] sm:$0xff]
    %v913 = vld [vmem:[#allocation5 + $0x1834] sm:$0xff]
    %v914 = vld [vmem:[#allocation5 + $0x183c] sm:$0xff]
    %v915 = vld [vmem:[#allocation5 + $0x1844] sm:$0xff]
    %v916 = vld [vmem:[#allocation5 + $0x184c] sm:$0xff]
    %v917 = vld [vmem:[#allocation5 + $0x1854] sm:$0xff]
    %v918 = vld [vmem:[#allocation5 + $0x185c] sm:$0xf]
    %v919 = vld [vmem:[#allocation5 + $0x1860] sm:$0xff]
    %v920 = vld [vmem:[#allocation5 + $0x1868] sm:$0xff]
    %v921 = vld [vmem:[#allocation5 + $0x1870] sm:$0xff]
    %v922 = vld [vmem:[#allocation5 + $0x1878] sm:$0xff]
    %v923 = vld [vmem:[#allocation5 + $0x1880] sm:$0xff]
    %v924 = vld [vmem:[#allocation5 + $0x1888] sm:$0xff]
    %v925 = vld [vmem:[#allocation5 + $0x1890] sm:$0xf]
    %v926 = vld [vmem:[#allocation5 + $0x1894] sm:$0xff]
    %v927 = vld [vmem:[#allocation5 + $0x189c] sm:$0xff]
    %v928 = vld [vmem:[#allocation5 + $0x18a4] sm:$0xff]
    %v929 = vld [vmem:[#allocation5 + $0x18ac] sm:$0xff]
    %v930 = vld [vmem:[#allocation5 + $0x18b4] sm:$0xff]
    %v931 = vld [vmem:[#allocation5 + $0x18bc] sm:$0xff]
    %v932 = vld [vmem:[#allocation5 + $0x18c4] sm:$0xf]
    %v933 = vld [vmem:[#allocation5 + $0x18c8] sm:$0xff]
    %v934 = vld [vmem:[#allocation5 + $0x18d0] sm:$0xff]
    %v935 = vld [vmem:[#allocation5 + $0x18d8] sm:$0xff]
    %v936 = vld [vmem:[#allocation5 + $0x18e0] sm:$0xff]
    %v937 = vld [vmem:[#allocation5 + $0x18e8] sm:$0xff]
    %v938 = vld [vmem:[#allocation5 + $0x18f0] sm:$0xff]
    %v939 = vld [vmem:[#allocation5 + $0x18f8] sm:$0xf]
    %v940 = vld [vmem:[#allocation5 + $0x18fc] sm:$0xff]
    %v941 = vld [vmem:[#allocation5 + $0x1904] sm:$0xff]
    %v942 = vld [vmem:[#allocation5 + $0x190c] sm:$0xff]
    %v943 = vld [vmem:[#allocation5 + $0x1914] sm:$0xff]
    %v944 = vld [vmem:[#allocation5 + $0x191c] sm:$0xff]
    %v945 = vld [vmem:[#allocation5 + $0x1924] sm:$0xff]
    %v946 = vld [vmem:[#allocation5 + $0x192c] sm:$0xf]
    %v947 = vld [vmem:[#allocation5 + $0x1930] sm:$0xff]
    %v948 = vld [vmem:[#allocation5 + $0x1938] sm:$0xff]
    %v949 = vld [vmem:[#allocation5 + $0x1940] sm:$0xff]
    %v950 = vld [vmem:[#allocation5 + $0x1948] sm:$0xff]
    %v951 = vld [vmem:[#allocation5 + $0x1950] sm:$0xff]
    %v952 = vld [vmem:[#allocation5 + $0x1958] sm:$0xff]
    %v953 = vld [vmem:[#allocation5 + $0x1960] sm:$0xf]
    %v954 = vld [vmem:[#allocation5 + $0x1964] sm:$0xff]
    %v955 = vld [vmem:[#allocation5 + $0x196c] sm:$0xff]
    %v956 = vld [vmem:[#allocation5 + $0x1974] sm:$0xff]
    %v957 = vld [vmem:[#allocation5 + $0x197c] sm:$0xff]
    %v958 = vld [vmem:[#allocation5 + $0x1984] sm:$0xff]
    %v959 = vld [vmem:[#allocation5 + $0x198c] sm:$0xff]
    %v960 = vld [vmem:[#allocation5 + $0x1994] sm:$0xf]
    %v961 = vld [vmem:[#allocation5 + $0x1998] sm:$0xff]
    %v962 = vld [vmem:[#allocation5 + $0x19a0] sm:$0xff]
    %v963 = vld [vmem:[#allocation5 + $0x19a8] sm:$0xff]
    %v964 = vld [vmem:[#allocation5 + $0x19b0] sm:$0xff]
    %v965 = vld [vmem:[#allocation5 + $0x19b8] sm:$0xff]
    %v966 = vld [vmem:[#allocation5 + $0x19c0] sm:$0xff]
    %v967 = vld [vmem:[#allocation5 + $0x19c8] sm:$0xf]
    %v968 = vld [vmem:[#allocation5 + $0x19cc] sm:$0xff]
    %v969 = vld [vmem:[#allocation5 + $0x19d4] sm:$0xff]
    %v970 = vld [vmem:[#allocation5 + $0x19dc] sm:$0xff]
    %v971 = vld [vmem:[#allocation5 + $0x19e4] sm:$0xff]
    %v972 = vld [vmem:[#allocation5 + $0x19ec] sm:$0xff]
    %v973 = vld [vmem:[#allocation5 + $0x19f4] sm:$0xff]
    %v974 = vld [vmem:[#allocation5 + $0x19fc] sm:$0xf]
    %v975 = vld [vmem:[#allocation5 + $0x1a00] sm:$0xff]
    %v976 = vld [vmem:[#allocation5 + $0x1a08] sm:$0xff]
    %v977 = vld [vmem:[#allocation5 + $0x1a10] sm:$0xff]
    %v978 = vld [vmem:[#allocation5 + $0x1a18] sm:$0xff]
    %v979 = vld [vmem:[#allocation5 + $0x1a20] sm:$0xff]
    %v980 = vld [vmem:[#allocation5 + $0x1a28] sm:$0xff]
    %v981 = vld [vmem:[#allocation5 + $0x1a30] sm:$0xf]
    %v982 = vld [vmem:[#allocation5 + $0x1a34] sm:$0xff]
    %v983 = vld [vmem:[#allocation5 + $0x1a3c] sm:$0xff]
    %v984 = vld [vmem:[#allocation5 + $0x1a44] sm:$0xff]
    %v985 = vld [vmem:[#allocation5 + $0x1a4c] sm:$0xff]
    %v986 = vld [vmem:[#allocation5 + $0x1a54] sm:$0xff]
    %v987 = vld [vmem:[#allocation5 + $0x1a5c] sm:$0xff]
    %v988 = vld [vmem:[#allocation5 + $0x1a64] sm:$0xf]
    %v989 = vld [vmem:[#allocation5 + $0x1a68] sm:$0xff]
    %v990 = vld [vmem:[#allocation5 + $0x1a70] sm:$0xff]
    %v991 = vld [vmem:[#allocation5 + $0x1a78] sm:$0xff]
    %v992 = vld [vmem:[#allocation5 + $0x1a80] sm:$0xff]
    %v993 = vld [vmem:[#allocation5 + $0x1a88] sm:$0xff]
    %v994 = vld [vmem:[#allocation5 + $0x1a90] sm:$0xff]
    %v995 = vld [vmem:[#allocation5 + $0x1a98] sm:$0xf]
    %v996 = vld [vmem:[#allocation5 + $0x1a9c] sm:$0xff]
    %v997 = vld [vmem:[#allocation5 + $0x1aa4] sm:$0xff]
    %v998 = vld [vmem:[#allocation5 + $0x1aac] sm:$0xff]
    %v999 = vld [vmem:[#allocation5 + $0x1ab4] sm:$0xff]
    %v1000 = vld [vmem:[#allocation5 + $0x1abc] sm:$0xff]
    %v1001 = vld [vmem:[#allocation5 + $0x1ac4] sm:$0xff]
    %v1002 = vld [vmem:[#allocation5 + $0x1acc] sm:$0xf]
    %v1003 = vld [vmem:[#allocation5 + $0x1ad0] sm:$0xff]
    %v1004 = vld [vmem:[#allocation5 + $0x1ad8] sm:$0xff]
    %v1005 = vld [vmem:[#allocation5 + $0x1ae0] sm:$0xff]
    %v1006 = vld [vmem:[#allocation5 + $0x1ae8] sm:$0xff]
    %v1007 = vld [vmem:[#allocation5 + $0x1af0] sm:$0xff]
    %v1008 = vld [vmem:[#allocation5 + $0x1af8] sm:$0xff]
    %v1009 = vld [vmem:[#allocation5 + $0x1b00] sm:$0xf]
    %v1010 = vld [vmem:[#allocation5 + $0x1b04] sm:$0xff]
    %v1011 = vld [vmem:[#allocation5 + $0x1b0c] sm:$0xff]
    %v1012 = vld [vmem:[#allocation5 + $0x1b14] sm:$0xff]
    %v1013 = vld [vmem:[#allocation5 + $0x1b1c] sm:$0xff]
    %v1014 = vld [vmem:[#allocation5 + $0x1b24] sm:$0xff]
    %v1015 = vld [vmem:[#allocation5 + $0x1b2c] sm:$0xff]
    %v1016 = vld [vmem:[#allocation5 + $0x1b34] sm:$0xf]
    %v1017 = vld [vmem:[#allocation5 + $0x1b38] sm:$0xff]
    %v1018 = vld [vmem:[#allocation5 + $0x1b40] sm:$0xff]
    %v1019 = vld [vmem:[#allocation5 + $0x1b48] sm:$0xff]
    %v1020 = vld [vmem:[#allocation5 + $0x1b50] sm:$0xff]
    %v1021 = vld [vmem:[#allocation5 + $0x1b58] sm:$0xff]
    %v1022 = vld [vmem:[#allocation5 + $0x1b60] sm:$0xff]
    %v1023 = vld [vmem:[#allocation5 + $0x1b68] sm:$0xf]
    %v1024 = vld [vmem:[#allocation5 + $0x1b6c] sm:$0xff]
    %v1025 = vld [vmem:[#allocation5 + $0x1b74] sm:$0xff]
    %v1026 = vld [vmem:[#allocation5 + $0x1b7c] sm:$0xff]
    %v1027 = vld [vmem:[#allocation5 + $0x1b84] sm:$0xff]
    %v1028 = vld [vmem:[#allocation5 + $0x1b8c] sm:$0xff]
    %v1029 = vld [vmem:[#allocation5 + $0x1b94] sm:$0xff]
    %v1030 = vld [vmem:[#allocation5 + $0x1b9c] sm:$0xf]
    %v1031 = vld [vmem:[#allocation5 + $0x1ba0] sm:$0xff]
    %v1032 = vld [vmem:[#allocation5 + $0x1ba8] sm:$0xff]
    %v1033 = vld [vmem:[#allocation5 + $0x1bb0] sm:$0xff]
    %v1034 = vld [vmem:[#allocation5 + $0x1bb8] sm:$0xff]
    %v1035 = vld [vmem:[#allocation5 + $0x1bc0] sm:$0xff]
    %v1036 = vld [vmem:[#allocation5 + $0x1bc8] sm:$0xff]
    %v1037 = vld [vmem:[#allocation5 + $0x1bd0] sm:$0xf]
    %v1038 = vld [vmem:[#allocation5 + $0x1bd4] sm:$0xff]
    %v1039 = vld [vmem:[#allocation5 + $0x1bdc] sm:$0xff]
    %v1040 = vld [vmem:[#allocation5 + $0x1be4] sm:$0xff]
    %v1041 = vld [vmem:[#allocation5 + $0x1bec] sm:$0xff]
    %v1042 = vld [vmem:[#allocation5 + $0x1bf4] sm:$0xff]
    %v1043 = vld [vmem:[#allocation5 + $0x1bfc] sm:$0xff]
    %v1044 = vld [vmem:[#allocation5 + $0x1c04] sm:$0xf]
    %v1045 = vld [vmem:[#allocation5 + $0x1c08] sm:$0xff]
    %v1046 = vld [vmem:[#allocation5 + $0x1c10] sm:$0xff]
    %v1047 = vld [vmem:[#allocation5 + $0x1c18] sm:$0xff]
    %v1048 = vld [vmem:[#allocation5 + $0x1c20] sm:$0xff]
    %v1049 = vld [vmem:[#allocation5 + $0x1c28] sm:$0xff]
    %v1050 = vld [vmem:[#allocation5 + $0x1c30] sm:$0xff]
    %v1051 = vld [vmem:[#allocation5 + $0x1c38] sm:$0xf]
    %v1052 = vld [vmem:[#allocation5 + $0x1c3c] sm:$0xff]
    %v1053 = vld [vmem:[#allocation5 + $0x1c44] sm:$0xff]
    %v1054 = vld [vmem:[#allocation5 + $0x1c4c] sm:$0xff]
    %v1055 = vld [vmem:[#allocation5 + $0x1c54] sm:$0xff]
    %v1056 = vld [vmem:[#allocation5 + $0x1c5c] sm:$0xff]
    %v1057 = vld [vmem:[#allocation5 + $0x1c64] sm:$0xff]
    %v1058 = vld [vmem:[#allocation5 + $0x1c6c] sm:$0xf]
    %v1059 = vld [vmem:[#allocation5 + $0x1c70] sm:$0xff]
    %v1060 = vld [vmem:[#allocation5 + $0x1c78] sm:$0xff]
    %v1061 = vld [vmem:[#allocation5 + $0x1c80] sm:$0xff]
    %v1062 = vld [vmem:[#allocation5 + $0x1c88] sm:$0xff]
    %v1063 = vld [vmem:[#allocation5 + $0x1c90] sm:$0xff]
    %v1064 = vld [vmem:[#allocation5 + $0x1c98] sm:$0xff]
    %v1065 = vld [vmem:[#allocation5 + $0x1ca0] sm:$0xf]
    %v1066 = vld [vmem:[#allocation5 + $0x1ca4] sm:$0xff]
    %v1067 = vld [vmem:[#allocation5 + $0x1cac] sm:$0xff]
    %v1068 = vld [vmem:[#allocation5 + $0x1cb4] sm:$0xff]
    %v1069 = vld [vmem:[#allocation5 + $0x1cbc] sm:$0xff]
    %v1070 = vld [vmem:[#allocation5 + $0x1cc4] sm:$0xff]
    %v1071 = vld [vmem:[#allocation5 + $0x1ccc] sm:$0xff]
    %v1072 = vld [vmem:[#allocation5 + $0x1cd4] sm:$0xf]
    %v1073 = vld [vmem:[#allocation5 + $0x1cd8] sm:$0xff]
    %v1074 = vld [vmem:[#allocation5 + $0x1ce0] sm:$0xff]
    %v1075 = vld [vmem:[#allocation5 + $0x1ce8] sm:$0xff]
    %v1076 = vld [vmem:[#allocation5 + $0x1cf0] sm:$0xff]
    %v1077 = vld [vmem:[#allocation5 + $0x1cf8] sm:$0xff]
    %v1078 = vld [vmem:[#allocation5 + $0x1d00] sm:$0xff]
    %v1079 = vld [vmem:[#allocation5 + $0x1d08] sm:$0xf]
    %v1080 = vld [vmem:[#allocation5 + $0x1d0c] sm:$0xff]
    %v1081 = vld [vmem:[#allocation5 + $0x1d14] sm:$0xff]
    %v1082 = vld [vmem:[#allocation5 + $0x1d1c] sm:$0xff]
    %v1083 = vld [vmem:[#allocation5 + $0x1d24] sm:$0xff]
    %v1084 = vld [vmem:[#allocation5 + $0x1d2c] sm:$0xff]
    %v1085 = vld [vmem:[#allocation5 + $0x1d34] sm:$0xff]
    %v1086 = vld [vmem:[#allocation5 + $0x1d3c] sm:$0xf]
    %v1087 = vld [vmem:[#allocation5 + $0x1d40] sm:$0xff]
    %v1088 = vld [vmem:[#allocation5 + $0x1d48] sm:$0xff]
    %v1089 = vld [vmem:[#allocation5 + $0x1d50] sm:$0xff]
    %v1090 = vld [vmem:[#allocation5 + $0x1d58] sm:$0xff]
    %v1091 = vld [vmem:[#allocation5 + $0x1d60] sm:$0xff]
    %v1092 = vld [vmem:[#allocation5 + $0x1d68] sm:$0xff]
    %v1093 = vld [vmem:[#allocation5 + $0x1d70] sm:$0xf]
    %v1094 = vld [vmem:[#allocation5 + $0x1d74] sm:$0xff]
    %v1095 = vld [vmem:[#allocation5 + $0x1d7c] sm:$0xff]
    %v1096 = vld [vmem:[#allocation5 + $0x1d84] sm:$0xff]
    %v1097 = vld [vmem:[#allocation5 + $0x1d8c] sm:$0xff]
    %v1098 = vld [vmem:[#allocation5 + $0x1d94] sm:$0xff]
    %v1099 = vld [vmem:[#allocation5 + $0x1d9c] sm:$0xff]
    %v1100 = vld [vmem:[#allocation5 + $0x1da4] sm:$0xf]
    %v1101 = vld [vmem:[#allocation5 + $0x1da8] sm:$0xff]
    %v1102 = vld [vmem:[#allocation5 + $0x1db0] sm:$0xff]
    %v1103 = vld [vmem:[#allocation5 + $0x1db8] sm:$0xff]
    %v1104 = vld [vmem:[#allocation5 + $0x1dc0] sm:$0xff]
    %v1105 = vld [vmem:[#allocation5 + $0x1dc8] sm:$0xff]
    %v1106 = vld [vmem:[#allocation5 + $0x1dd0] sm:$0xff]
    %v1107 = vld [vmem:[#allocation5 + $0x1dd8] sm:$0xf]
    %v1108 = vld [vmem:[#allocation5 + $0x1ddc] sm:$0xff]
    %v1109 = vld [vmem:[#allocation5 + $0x1de4] sm:$0xff]
    %v1110 = vld [vmem:[#allocation5 + $0x1dec] sm:$0xff]
    %v1111 = vld [vmem:[#allocation5 + $0x1df4] sm:$0xff]
    %v1112 = vld [vmem:[#allocation5 + $0x1dfc] sm:$0xff]
    %v1113 = vld [vmem:[#allocation5 + $0x1e04] sm:$0xff]
    %v1114 = vld [vmem:[#allocation5 + $0x1e0c] sm:$0xf]
    %v1115 = vld [vmem:[#allocation5 + $0x1e10] sm:$0xff]
    %v1116 = vld [vmem:[#allocation5 + $0x1e18] sm:$0xff]
    %v1117 = vld [vmem:[#allocation5 + $0x1e20] sm:$0xff]
    %v1118 = vld [vmem:[#allocation5 + $0x1e28] sm:$0xff]
    %v1119 = vld [vmem:[#allocation5 + $0x1e30] sm:$0xff]
    %v1120 = vld [vmem:[#allocation5 + $0x1e38] sm:$0xff]
    %v1121 = vld [vmem:[#allocation5 + $0x1e40] sm:$0xf]
    %v1122 = vld [vmem:[#allocation5 + $0x1e44] sm:$0xff]
    %v1123 = vld [vmem:[#allocation5 + $0x1e4c] sm:$0xff]
    %v1124 = vld [vmem:[#allocation5 + $0x1e54] sm:$0xff]
    %v1125 = vld [vmem:[#allocation5 + $0x1e5c] sm:$0xff]
    %v1126 = vld [vmem:[#allocation5 + $0x1e64] sm:$0xff]
    %v1127 = vld [vmem:[#allocation5 + $0x1e6c] sm:$0xff]
    %v1128 = vld [vmem:[#allocation5 + $0x1e74] sm:$0xf]
    %v1129 = vld [vmem:[#allocation5 + $0x1e78] sm:$0xff]
    %v1130 = vld [vmem:[#allocation5 + $0x1e80] sm:$0xff]
    %v1131 = vld [vmem:[#allocation5 + $0x1e88] sm:$0xff]
    %v1132 = vld [vmem:[#allocation5 + $0x1e90] sm:$0xff]
    %v1133 = vld [vmem:[#allocation5 + $0x1e98] sm:$0xff]
    %v1134 = vld [vmem:[#allocation5 + $0x1ea0] sm:$0xff]
    %v1135 = vld [vmem:[#allocation5 + $0x1ea8] sm:$0xf]
    %v1136 = vld [vmem:[#allocation5 + $0x1eac] sm:$0xff]
    %v1137 = vld [vmem:[#allocation5 + $0x1eb4] sm:$0xff]
    %v1138 = vld [vmem:[#allocation5 + $0x1ebc] sm:$0xff]
    %v1139 = vld [vmem:[#allocation5 + $0x1ec4] sm:$0xff]
    %v1140 = vld [vmem:[#allocation5 + $0x1ecc] sm:$0xff]
    %v1141 = vld [vmem:[#allocation5 + $0x1ed4] sm:$0xff]
    %v1142 = vld [vmem:[#allocation5 + $0x1edc] sm:$0xf]
    %v1143 = vld [vmem:[#allocation5 + $0x1ee0] sm:$0xff]
    %v1144 = vld [vmem:[#allocation5 + $0x1ee8] sm:$0xff]
    %v1145 = vld [vmem:[#allocation5 + $0x1ef0] sm:$0xff]
    %v1146 = vld [vmem:[#allocation5 + $0x1ef8] sm:$0xff]
    %v1147 = vld [vmem:[#allocation5 + $0x1f00] sm:$0xff]
    %v1148 = vld [vmem:[#allocation5 + $0x1f08] sm:$0xff]
    %v1149 = vld [vmem:[#allocation5 + $0x1f10] sm:$0xf]
    %v1150 = vld [vmem:[#allocation5 + $0x1f14] sm:$0xff]
    %v1151 = vld [vmem:[#allocation5 + $0x1f1c] sm:$0xff]
    %v1152 = vld [vmem:[#allocation5 + $0x1f24] sm:$0xff]
    %v1153 = vld [vmem:[#allocation5 + $0x1f2c] sm:$0xff]
    %v1154 = vld [vmem:[#allocation5 + $0x1f34] sm:$0xff]
    %v1155 = vld [vmem:[#allocation5 + $0x1f3c] sm:$0xff]
    %v1156 = vld [vmem:[#allocation5 + $0x1f44] sm:$0xf]
    %v1157 = vld [vmem:[#allocation5 + $0x1f48] sm:$0xff]
    %v1158 = vld [vmem:[#allocation5 + $0x1f50] sm:$0xff]
    %v1159 = vld [vmem:[#allocation5 + $0x1f58] sm:$0xff]
    %v1160 = vld [vmem:[#allocation5 + $0x1f60] sm:$0xff]
    %v1161 = vld [vmem:[#allocation5 + $0x1f68] sm:$0xff]
    %v1162 = vld [vmem:[#allocation5 + $0x1f70] sm:$0xff]
    %v1163 = vld [vmem:[#allocation5 + $0x1f78] sm:$0xf]
    %v1164 = vld [vmem:[#allocation5 + $0x1f7c] sm:$0xff]
    %v1165 = vld [vmem:[#allocation5 + $0x1f84] sm:$0xff]
    %v1166 = vld [vmem:[#allocation5 + $0x1f8c] sm:$0xff]
    %v1167 = vld [vmem:[#allocation5 + $0x1f94] sm:$0xff]
    %v1168 = vld [vmem:[#allocation5 + $0x1f9c] sm:$0xff]
    %v1169 = vld [vmem:[#allocation5 + $0x1fa4] sm:$0xff]
    %v1170 = vld [vmem:[#allocation5 + $0x1fac] sm:$0xf]
    %v1171 = vld [vmem:[#allocation5 + $0x1fb0] sm:$0xff]
    %v1172 = vld [vmem:[#allocation5 + $0x1fb8] sm:$0xff]
    %v1173 = vld [vmem:[#allocation5 + $0x1fc0] sm:$0xff]
    %v1174 = vld [vmem:[#allocation5 + $0x1fc8] sm:$0xff]
    %v1175 = vld [vmem:[#allocation5 + $0x1fd0] sm:$0xff]
    %v1176 = vld [vmem:[#allocation5 + $0x1fd8] sm:$0xff]
    %v1177 = vld [vmem:[#allocation5 + $0x1fe0] sm:$0xf]
    %v1178 = vld [vmem:[#allocation5 + $0x1fe4] sm:$0xff]
    %v1179 = vld [vmem:[#allocation5 + $0x1fec] sm:$0xff]
    %v1180 = vld [vmem:[#allocation5 + $0x1ff4] sm:$0xff]
    %v1181 = vld [vmem:[#allocation5 + $0x1ffc] sm:$0xff]
    %v1182 = vld [vmem:[#allocation5 + $0x2004] sm:$0xff]
    %v1183 = vld [vmem:[#allocation5 + $0x200c] sm:$0xff]
    %v1184 = vld [vmem:[#allocation5 + $0x2014] sm:$0xf]
    %v1185 = vld [vmem:[#allocation5 + $0x2018] sm:$0xff]
    %v1186 = vld [vmem:[#allocation5 + $0x2020] sm:$0xff]
    %v1187 = vld [vmem:[#allocation5 + $0x2028] sm:$0xff]
    %v1188 = vld [vmem:[#allocation5 + $0x2030] sm:$0xff]
    %v1189 = vld [vmem:[#allocation5 + $0x2038] sm:$0xff]
    %v1190 = vld [vmem:[#allocation5 + $0x2040] sm:$0xff]
    %v1191 = vld [vmem:[#allocation5 + $0x2048] sm:$0xf]
    %v1192 = vld [vmem:[#allocation5 + $0x204c] sm:$0xff]
    %v1193 = vld [vmem:[#allocation5 + $0x2054] sm:$0xff]
    %v1194 = vld [vmem:[#allocation5 + $0x205c] sm:$0xff]
    %v1195 = vld [vmem:[#allocation5 + $0x2064] sm:$0xff]
    %v1196 = vld [vmem:[#allocation5 + $0x206c] sm:$0xff]
    %v1197 = vld [vmem:[#allocation5 + $0x2074] sm:$0xff]
    %v1198 = vld [vmem:[#allocation5 + $0x207c] sm:$0xf]
    %v1199 = vld [vmem:[#allocation5 + $0x2080] sm:$0xff]
    %v1200 = vld [vmem:[#allocation5 + $0x2088] sm:$0xff]
    %v1201 = vld [vmem:[#allocation5 + $0x2090] sm:$0xff]
    %v1202 = vld [vmem:[#allocation5 + $0x2098] sm:$0xff]
    %v1203 = vld [vmem:[#allocation5 + $0x20a0] sm:$0xff]
    %v1204 = vld [vmem:[#allocation5 + $0x20a8] sm:$0xff]
    %v1205 = vld [vmem:[#allocation5 + $0x20b0] sm:$0xf]
    %v1206 = vld [vmem:[#allocation5 + $0x20b4] sm:$0xff]
    %v1207 = vld [vmem:[#allocation5 + $0x20bc] sm:$0xff]
    %v1208 = vld [vmem:[#allocation5 + $0x20c4] sm:$0xff]
    %v1209 = vld [vmem:[#allocation5 + $0x20cc] sm:$0xff]
    %v1210 = vld [vmem:[#allocation5 + $0x20d4] sm:$0xff]
    %v1211 = vld [vmem:[#allocation5 + $0x20dc] sm:$0xff]
    %v1212 = vld [vmem:[#allocation5 + $0x20e4] sm:$0xf]
    %v1213 = vld [vmem:[#allocation5 + $0x20e8] sm:$0xff]
    %v1214 = vld [vmem:[#allocation5 + $0x20f0] sm:$0xff]
    %v1215 = vld [vmem:[#allocation5 + $0x20f8] sm:$0xff]
    %v1216 = vld [vmem:[#allocation5 + $0x2100] sm:$0xff]
    %v1217 = vld [vmem:[#allocation5 + $0x2108] sm:$0xff]
    %v1218 = vld [vmem:[#allocation5 + $0x2110] sm:$0xff]
    %v1219 = vld [vmem:[#allocation5 + $0x2118] sm:$0xf]
    %v1220 = vld [vmem:[#allocation5 + $0x211c] sm:$0xff]
    %v1221 = vld [vmem:[#allocation5 + $0x2124] sm:$0xff]
    %v1222 = vld [vmem:[#allocation5 + $0x212c] sm:$0xff]
    %v1223 = vld [vmem:[#allocation5 + $0x2134] sm:$0xff]
    %v1224 = vld [vmem:[#allocation5 + $0x213c] sm:$0xff]
    %v1225 = vld [vmem:[#allocation5 + $0x2144] sm:$0xff]
    %v1226 = vld [vmem:[#allocation5 + $0x214c] sm:$0xf]
    %v1227 = vld [vmem:[#allocation5 + $0x2150] sm:$0xff]
    %v1228 = vld [vmem:[#allocation5 + $0x2158] sm:$0xff]
    %v1229 = vld [vmem:[#allocation5 + $0x2160] sm:$0xff]
    %v1230 = vld [vmem:[#allocation5 + $0x2168] sm:$0xff]
    %v1231 = vld [vmem:[#allocation5 + $0x2170] sm:$0xff]
    %v1232 = vld [vmem:[#allocation5 + $0x2178] sm:$0xff]
    %v1233 = vld [vmem:[#allocation5 + $0x2180] sm:$0xf]
    %v1234 = vld [vmem:[#allocation5 + $0x2184] sm:$0xff]
    %v1235 = vld [vmem:[#allocation5 + $0x218c] sm:$0xff]
    %v1236 = vld [vmem:[#allocation5 + $0x2194] sm:$0xff]
    %v1237 = vld [vmem:[#allocation5 + $0x219c] sm:$0xff]
    %v1238 = vld [vmem:[#allocation5 + $0x21a4] sm:$0xff]
    %v1239 = vld [vmem:[#allocation5 + $0x21ac] sm:$0xff]
    %v1240 = vld [vmem:[#allocation5 + $0x21b4] sm:$0xf]
    %v1241 = vld [vmem:[#allocation5 + $0x21b8] sm:$0xff]
    %v1242 = vld [vmem:[#allocation5 + $0x21c0] sm:$0xff]
    %v1243 = vld [vmem:[#allocation5 + $0x21c8] sm:$0xff]
    %v1244 = vld [vmem:[#allocation5 + $0x21d0] sm:$0xff]
    %v1245 = vld [vmem:[#allocation5 + $0x21d8] sm:$0xff]
    %v1246 = vld [vmem:[#allocation5 + $0x21e0] sm:$0xff]
    %v1247 = vld [vmem:[#allocation5 + $0x21e8] sm:$0xf]
    %v1248 = vld [vmem:[#allocation5 + $0x21ec] sm:$0xff]
    %v1249 = vld [vmem:[#allocation5 + $0x21f4] sm:$0xff]
    %v1250 = vld [vmem:[#allocation5 + $0x21fc] sm:$0xff]
    %v1251 = vld [vmem:[#allocation5 + $0x2204] sm:$0xff]
    %v1252 = vld [vmem:[#allocation5 + $0x220c] sm:$0xff]
    %v1253 = vld [vmem:[#allocation5 + $0x2214] sm:$0xff]
    %v1254 = vld [vmem:[#allocation5 + $0x221c] sm:$0xf]
    %v1255 = vld [vmem:[#allocation5 + $0x2220] sm:$0xff]
    %v1256 = vld [vmem:[#allocation5 + $0x2228] sm:$0xff]
    %v1257 = vld [vmem:[#allocation5 + $0x2230] sm:$0xff]
    %v1258 = vld [vmem:[#allocation5 + $0x2238] sm:$0xff]
    %v1259 = vld [vmem:[#allocation5 + $0x2240] sm:$0xff]
    %v1260 = vld [vmem:[#allocation5 + $0x2248] sm:$0xff]
    %v1261 = vld [vmem:[#allocation5 + $0x2250] sm:$0xf]
    %v1262 = vld [vmem:[#allocation5 + $0x2254] sm:$0xff]
    %v1263 = vld [vmem:[#allocation5 + $0x225c] sm:$0xff]
    %v1264 = vld [vmem:[#allocation5 + $0x2264] sm:$0xff]
    %v1265 = vld [vmem:[#allocation5 + $0x226c] sm:$0xff]
    %v1266 = vld [vmem:[#allocation5 + $0x2274] sm:$0xff]
    %v1267 = vld [vmem:[#allocation5 + $0x227c] sm:$0xff]
    %v1268 = vld [vmem:[#allocation5 + $0x2284] sm:$0xf]
    %v1269 = vld [vmem:[#allocation5 + $0x2288] sm:$0xff]
    %v1270 = vld [vmem:[#allocation5 + $0x2290] sm:$0xff]
    %v1271 = vld [vmem:[#allocation5 + $0x2298] sm:$0xff]
    %v1272 = vld [vmem:[#allocation5 + $0x22a0] sm:$0xff]
    %v1273 = vld [vmem:[#allocation5 + $0x22a8] sm:$0xff]
    %v1274 = vld [vmem:[#allocation5 + $0x22b0] sm:$0xff]
    %v1275 = vld [vmem:[#allocation5 + $0x22b8] sm:$0xf]
    %v1276 = vld [vmem:[#allocation5 + $0x22bc] sm:$0xff]
    %v1277 = vld [vmem:[#allocation5 + $0x22c4] sm:$0xff]
    %v1278 = vld [vmem:[#allocation5 + $0x22cc] sm:$0xff]
    %v1279 = vld [vmem:[#allocation5 + $0x22d4] sm:$0xff]
    %v1280 = vld [vmem:[#allocation5 + $0x22dc] sm:$0xff]
    %v1281 = vld [vmem:[#allocation5 + $0x22e4] sm:$0xff]
    %v1282 = vld [vmem:[#allocation5 + $0x22ec] sm:$0xf]
    %v1283 = vld [vmem:[#allocation5 + $0x22f0] sm:$0xff]
    %v1284 = vld [vmem:[#allocation5 + $0x22f8] sm:$0xff]
    %v1285 = vld [vmem:[#allocation5 + $0x2300] sm:$0xff]
    %v1286 = vld [vmem:[#allocation5 + $0x2308] sm:$0xff]
    %v1287 = vld [vmem:[#allocation5 + $0x2310] sm:$0xff]
    %v1288 = vld [vmem:[#allocation5 + $0x2318] sm:$0xff]
    %v1289 = vld [vmem:[#allocation5 + $0x2320] sm:$0xf]
    %v1290 = vld [vmem:[#allocation5 + $0x2324] sm:$0xff]
    %v1291 = vld [vmem:[#allocation5 + $0x232c] sm:$0xff]
    %v1292 = vld [vmem:[#allocation5 + $0x2334] sm:$0xff]
    %v1293 = vld [vmem:[#allocation5 + $0x233c] sm:$0xff]
    %v1294 = vld [vmem:[#allocation5 + $0x2344] sm:$0xff]
    %v1295 = vld [vmem:[#allocation5 + $0x234c] sm:$0xff]
    %v1296 = vld [vmem:[#allocation5 + $0x2354] sm:$0xf]
    %v1297 = vld [vmem:[#allocation5 + $0x2358] sm:$0xff]
    %v1298 = vld [vmem:[#allocation5 + $0x2360] sm:$0xff]
    %v1299 = vld [vmem:[#allocation5 + $0x2368] sm:$0xff]
    %v1300 = vld [vmem:[#allocation5 + $0x2370] sm:$0xff]
    %v1301 = vld [vmem:[#allocation5 + $0x2378] sm:$0xff]
    %v1302 = vld [vmem:[#allocation5 + $0x2380] sm:$0xff]
    %v1303 = vld [vmem:[#allocation5 + $0x2388] sm:$0xf]
    %v1304 = vld [vmem:[#allocation5 + $0x238c] sm:$0xff]
    %v1305 = vld [vmem:[#allocation5 + $0x2394] sm:$0xff]
    %v1306 = vld [vmem:[#allocation5 + $0x239c] sm:$0xff]
    %v1307 = vld [vmem:[#allocation5 + $0x23a4] sm:$0xff]
    %v1308 = vld [vmem:[#allocation5 + $0x23ac] sm:$0xff]
    %v1309 = vld [vmem:[#allocation5 + $0x23b4] sm:$0xff]
    %v1310 = vld [vmem:[#allocation5 + $0x23bc] sm:$0xf]
    %v1311 = vld [vmem:[#allocation5 + $0x23c0] sm:$0xff]
    %v1312 = vld [vmem:[#allocation5 + $0x23c8] sm:$0xff]
    %v1313 = vld [vmem:[#allocation5 + $0x23d0] sm:$0xff]
    %v1314 = vld [vmem:[#allocation5 + $0x23d8] sm:$0xff]
    %v1315 = vld [vmem:[#allocation5 + $0x23e0] sm:$0xff]
    %v1316 = vld [vmem:[#allocation5 + $0x23e8] sm:$0xff]
    %v1317 = vld [vmem:[#allocation5 + $0x23f0] sm:$0xf]
    %v1318 = vld [vmem:[#allocation5 + $0x23f4] sm:$0xff]
    %v1319 = vld [vmem:[#allocation5 + $0x23fc] sm:$0xff]
    %v1320 = vld [vmem:[#allocation5 + $0x2404] sm:$0xff]
    %v1321 = vld [vmem:[#allocation5 + $0x240c] sm:$0xff]
    %v1322 = vld [vmem:[#allocation5 + $0x2414] sm:$0xff]
    %v1323 = vld [vmem:[#allocation5 + $0x241c] sm:$0xff]
    %v1324 = vld [vmem:[#allocation5 + $0x2424] sm:$0xf]
    %v1325 = vld [vmem:[#allocation5 + $0x2428] sm:$0xff]
    %v1326 = vld [vmem:[#allocation5 + $0x2430] sm:$0xff]
    %v1327 = vld [vmem:[#allocation5 + $0x2438] sm:$0xff]
    %v1328 = vld [vmem:[#allocation5 + $0x2440] sm:$0xff]
    %v1329 = vld [vmem:[#allocation5 + $0x2448] sm:$0xff]
    %v1330 = vld [vmem:[#allocation5 + $0x2450] sm:$0xff]
    %v1331 = vld [vmem:[#allocation5 + $0x2458] sm:$0xf]
    %v1332 = vld [vmem:[#allocation5 + $0x245c] sm:$0xff]
    %v1333 = vld [vmem:[#allocation5 + $0x2464] sm:$0xff]
    %v1334 = vld [vmem:[#allocation5 + $0x246c] sm:$0xff]
    %v1335 = vld [vmem:[#allocation5 + $0x2474] sm:$0xff]
    %v1336 = vld [vmem:[#allocation5 + $0x247c] sm:$0xff]
    %v1337 = vld [vmem:[#allocation5 + $0x2484] sm:$0xff]
    %v1338 = vld [vmem:[#allocation5 + $0x248c] sm:$0xf]
    %v1339 = vld [vmem:[#allocation5 + $0x2490] sm:$0xff]
    %v1340 = vld [vmem:[#allocation5 + $0x2498] sm:$0xff]
    %v1341 = vld [vmem:[#allocation5 + $0x24a0] sm:$0xff]
    %v1342 = vld [vmem:[#allocation5 + $0x24a8] sm:$0xff]
    %v1343 = vld [vmem:[#allocation5 + $0x24b0] sm:$0xff]
    %v1344 = vld [vmem:[#allocation5 + $0x24b8] sm:$0xff]
    %v1345 = vld [vmem:[#allocation5 + $0x24c0] sm:$0xf]
    %v1346 = vld [vmem:[#allocation5 + $0x24c4] sm:$0xff]
    %v1347 = vld [vmem:[#allocation5 + $0x24cc] sm:$0xff]
    %v1348 = vld [vmem:[#allocation5 + $0x24d4] sm:$0xff]
    %v1349 = vld [vmem:[#allocation5 + $0x24dc] sm:$0xff]
    %v1350 = vld [vmem:[#allocation5 + $0x24e4] sm:$0xff]
    %v1351 = vld [vmem:[#allocation5 + $0x24ec] sm:$0xff]
    %v1352 = vld [vmem:[#allocation5 + $0x24f4] sm:$0xf]
    %v1353 = vld [vmem:[#allocation5 + $0x24f8] sm:$0xff]
    %v1354 = vld [vmem:[#allocation5 + $0x2500] sm:$0xff]
    %v1355 = vld [vmem:[#allocation5 + $0x2508] sm:$0xff]
    %v1356 = vld [vmem:[#allocation5 + $0x2510] sm:$0xff]
    %v1357 = vld [vmem:[#allocation5 + $0x2518] sm:$0xff]
    %v1358 = vld [vmem:[#allocation5 + $0x2520] sm:$0xff]
    %v1359 = vld [vmem:[#allocation5 + $0x2528] sm:$0xf]
    %v1360 = vld [vmem:[#allocation5 + $0x252c] sm:$0xff]
    %v1361 = vld [vmem:[#allocation5 + $0x2534] sm:$0xff]
    %v1362 = vld [vmem:[#allocation5 + $0x253c] sm:$0xff]
    %v1363 = vld [vmem:[#allocation5 + $0x2544] sm:$0xff]
    %v1364 = vld [vmem:[#allocation5 + $0x254c] sm:$0xff]
    %v1365 = vld [vmem:[#allocation5 + $0x2554] sm:$0xff]
    %v1366 = vld [vmem:[#allocation5 + $0x255c] sm:$0xf]
    %v1367 = vld [vmem:[#allocation5 + $0x2560] sm:$0xff]
    %v1368 = vld [vmem:[#allocation5 + $0x2568] sm:$0xff]
    %v1369 = vld [vmem:[#allocation5 + $0x2570] sm:$0xff]
    %v1370 = vld [vmem:[#allocation5 + $0x2578] sm:$0xff]
    %v1371 = vld [vmem:[#allocation5 + $0x2580] sm:$0xff]
    %v1372 = vld [vmem:[#allocation5 + $0x2588] sm:$0xff]
    %v1373 = vld [vmem:[#allocation5 + $0x2590] sm:$0xf]
    %v1374 = vld [vmem:[#allocation5 + $0x2594] sm:$0xff]
    %v1375 = vld [vmem:[#allocation5 + $0x259c] sm:$0xff]
    %v1376 = vld [vmem:[#allocation5 + $0x25a4] sm:$0xff]
    %v1377 = vld [vmem:[#allocation5 + $0x25ac] sm:$0xff]
    %v1378 = vld [vmem:[#allocation5 + $0x25b4] sm:$0xff]
    %v1379 = vld [vmem:[#allocation5 + $0x25bc] sm:$0xff]
    %v1380 = vld [vmem:[#allocation5 + $0x25c4] sm:$0xf]
    %v1381 = vld [vmem:[#allocation5 + $0x25c8] sm:$0xff]
    %v1382 = vld [vmem:[#allocation5 + $0x25d0] sm:$0xff]
    %v1383 = vld [vmem:[#allocation5 + $0x25d8] sm:$0xff]
    %v1384 = vld [vmem:[#allocation5 + $0x25e0] sm:$0xff]
    %v1385 = vld [vmem:[#allocation5 + $0x25e8] sm:$0xff]
    %v1386 = vld [vmem:[#allocation5 + $0x25f0] sm:$0xff]
    %v1387 = vld [vmem:[#allocation5 + $0x25f8] sm:$0xf]
    %v1388 = vld [vmem:[#allocation5 + $0x25fc] sm:$0xff]
    %v1389 = vld [vmem:[#allocation5 + $0x2604] sm:$0xff]
    %v1390 = vld [vmem:[#allocation5 + $0x260c] sm:$0xff]
    %v1391 = vld [vmem:[#allocation5 + $0x2614] sm:$0xff]
    %v1392 = vld [vmem:[#allocation5 + $0x261c] sm:$0xff]
    %v1393 = vld [vmem:[#allocation5 + $0x2624] sm:$0xff]
    %v1394 = vld [vmem:[#allocation5 + $0x262c] sm:$0xf]
    %v1395 = vld [vmem:[#allocation5 + $0x2630] sm:$0xff]
    %v1396 = vld [vmem:[#allocation5 + $0x2638] sm:$0xff]
    %v1397 = vld [vmem:[#allocation5 + $0x2640] sm:$0xff]
    %v1398 = vld [vmem:[#allocation5 + $0x2648] sm:$0xff]
    %v1399 = vld [vmem:[#allocation5 + $0x2650] sm:$0xff]
    %v1400 = vld [vmem:[#allocation5 + $0x2658] sm:$0xff]
    %v1401 = vld [vmem:[#allocation5 + $0x2660] sm:$0xf]
    %v1402 = vld [vmem:[#allocation5 + $0x2664] sm:$0xff]
    %v1403 = vld [vmem:[#allocation5 + $0x266c] sm:$0xff]
    %v1404 = vld [vmem:[#allocation5 + $0x2674] sm:$0xff]
    %v1405 = vld [vmem:[#allocation5 + $0x267c] sm:$0xff]
    %v1406 = vld [vmem:[#allocation5 + $0x2684] sm:$0xff]
    %v1407 = vld [vmem:[#allocation5 + $0x268c] sm:$0xff]
    %v1408 = vld [vmem:[#allocation5 + $0x2694] sm:$0xf]
    %v1409 = vld [vmem:[#allocation5 + $0x2698] sm:$0xff]
    %v1410 = vld [vmem:[#allocation5 + $0x26a0] sm:$0xff]
    %v1411 = vld [vmem:[#allocation5 + $0x26a8] sm:$0xff]
    %v1412 = vld [vmem:[#allocation5 + $0x26b0] sm:$0xff]
    %v1413 = vld [vmem:[#allocation5 + $0x26b8] sm:$0xff]
    %v1414 = vld [vmem:[#allocation5 + $0x26c0] sm:$0xff]
    %v1415 = vld [vmem:[#allocation5 + $0x26c8] sm:$0xf]
    %v1416 = vld [vmem:[#allocation5 + $0x26cc] sm:$0xff]
    %v1417 = vld [vmem:[#allocation5 + $0x26d4] sm:$0xff]
    %v1418 = vld [vmem:[#allocation5 + $0x26dc] sm:$0xff]
    %v1419 = vld [vmem:[#allocation5 + $0x26e4] sm:$0xff]
    %v1420 = vld [vmem:[#allocation5 + $0x26ec] sm:$0xff]
    %v1421 = vld [vmem:[#allocation5 + $0x26f4] sm:$0xff]
    %v1422 = vld [vmem:[#allocation5 + $0x26fc] sm:$0xf]
    %v1423 = vld [vmem:[#allocation5 + $0x2700] sm:$0xff]
    %v1424 = vld [vmem:[#allocation5 + $0x2708] sm:$0xff]
    %v1425 = vld [vmem:[#allocation5 + $0x2710] sm:$0xff]
    %v1426 = vld [vmem:[#allocation5 + $0x2718] sm:$0xff]
    %v1427 = vld [vmem:[#allocation5 + $0x2720] sm:$0xff]
    %v1428 = vld [vmem:[#allocation5 + $0x2728] sm:$0xff]
    %v1429 = vld [vmem:[#allocation5 + $0x2730] sm:$0xf]
    %v1430 = vld [vmem:[#allocation5 + $0x2734] sm:$0xff]
    %v1431 = vld [vmem:[#allocation5 + $0x273c] sm:$0xff]
    %v1432 = vld [vmem:[#allocation5 + $0x2744] sm:$0xff]
    %v1433 = vld [vmem:[#allocation5 + $0x274c] sm:$0xff]
    %v1434 = vld [vmem:[#allocation5 + $0x2754] sm:$0xff]
    %v1435 = vld [vmem:[#allocation5 + $0x275c] sm:$0xff]
    %v1436 = vld [vmem:[#allocation5 + $0x2764] sm:$0xf]
    %v1437 = vld [vmem:[#allocation5 + $0x2768] sm:$0xff]
    %v1438 = vld [vmem:[#allocation5 + $0x2770] sm:$0xff]
    %v1439 = vld [vmem:[#allocation5 + $0x2778] sm:$0xff]
    %v1440 = vld [vmem:[#allocation5 + $0x2780] sm:$0xff]
    %v1441 = vld [vmem:[#allocation5 + $0x2788] sm:$0xff]
    %v1442 = vld [vmem:[#allocation5 + $0x2790] sm:$0xff]
    %v1443 = vld [vmem:[#allocation5 + $0x2798] sm:$0xf]
    %v1444 = vld [vmem:[#allocation5 + $0x279c] sm:$0xff]
    %v1445 = vld [vmem:[#allocation5 + $0x27a4] sm:$0xff]
    %v1446 = vld [vmem:[#allocation5 + $0x27ac] sm:$0xff]
    %v1447 = vld [vmem:[#allocation5 + $0x27b4] sm:$0xff]
    %v1448 = vld [vmem:[#allocation5 + $0x27bc] sm:$0xff]
    %v1449 = vld [vmem:[#allocation5 + $0x27c4] sm:$0xff]
    %v1450 = vld [vmem:[#allocation5 + $0x27cc] sm:$0xf]
    %v1451 = vld [vmem:[#allocation5 + $0x27d0] sm:$0xff]
    %v1452 = vld [vmem:[#allocation5 + $0x27d8] sm:$0xff]
    %v1453 = vld [vmem:[#allocation5 + $0x27e0] sm:$0xff]
    %v1454 = vld [vmem:[#allocation5 + $0x27e8] sm:$0xff]
    %v1455 = vld [vmem:[#allocation5 + $0x27f0] sm:$0xff]
    %v1456 = vld [vmem:[#allocation5 + $0x27f8] sm:$0xff]
    %v1457 = vld [vmem:[#allocation5 + $0x2800] sm:$0xf]
    %v1458 = vld [vmem:[#allocation5 + $0x2804] sm:$0xff]
    %v1459 = vld [vmem:[#allocation5 + $0x280c] sm:$0xff]
    %v1460 = vld [vmem:[#allocation5 + $0x2814] sm:$0xff]
    %v1461 = vld [vmem:[#allocation5 + $0x281c] sm:$0xff]
    %v1462 = vld [vmem:[#allocation5 + $0x2824] sm:$0xff]
    %v1463 = vld [vmem:[#allocation5 + $0x282c] sm:$0xff]
    %v1464 = vld [vmem:[#allocation5 + $0x2834] sm:$0xf]
    %v1465 = vld [vmem:[#allocation5 + $0x2838] sm:$0xff]
    %v1466 = vld [vmem:[#allocation5 + $0x2840] sm:$0xff]
    %v1467 = vld [vmem:[#allocation5 + $0x2848] sm:$0xff]
    %v1468 = vld [vmem:[#allocation5 + $0x2850] sm:$0xff]
    %v1469 = vld [vmem:[#allocation5 + $0x2858] sm:$0xff]
    %v1470 = vld [vmem:[#allocation5 + $0x2860] sm:$0xff]
    %v1471 = vld [vmem:[#allocation5 + $0x2868] sm:$0xf]
    %v1472 = vld [vmem:[#allocation5 + $0x286c] sm:$0xff]
    %v1473 = vld [vmem:[#allocation5 + $0x2874] sm:$0xff]
    %v1474 = vld [vmem:[#allocation5 + $0x287c] sm:$0xff]
    %v1475 = vld [vmem:[#allocation5 + $0x2884] sm:$0xff]
    %v1476 = vld [vmem:[#allocation5 + $0x288c] sm:$0xff]
    %v1477 = vld [vmem:[#allocation5 + $0x2894] sm:$0xff]
    %v1478 = vld [vmem:[#allocation5 + $0x289c] sm:$0xf]
    %v1479 = vld [vmem:[#allocation7] sm:$0xff]
    %v1480 = vld [vmem:[#allocation7 + $0x8] sm:$0x1f]
    %v1483 = vlaneseq
    %v1484 = vshrl.u32 %v1483, 7
    %v1485 = vsub.s32 0, %v1484
    %v1486 = vrot.slane %v1479, %v1485
    %v1487 = vlaneseq
    %v1488 = vshrl.u32 %v1487, 7
    %v1489 = vsub.s32 1, %v1488
    %v1490 = vrot.slane %v1479, %v1489
    %v1491 = vlaneseq
    %v1492 = vshrl.u32 %v1491, 7
    %v1493 = vsub.s32 2, %v1492
    %v1494 = vrot.slane %v1479, %v1493
    %v1495 = vlaneseq
    %v1496 = vshrl.u32 %v1495, 7
    %v1497 = vsub.s32 3, %v1496
    %v1498 = vrot.slane %v1479, %v1497
    %v1499 = vlaneseq
    %v1500 = vshrl.u32 %v1499, 7
    %v1501 = vsub.s32 4, %v1500
    %v1502 = vrot.slane %v1479, %v1501
    %v1503 = vlaneseq
    %v1504 = vshrl.u32 %v1503, 7
    %v1505 = vsub.s32 5, %v1504
    %v1506 = vrot.slane %v1479, %v1505
    %v1507 = vlaneseq
    %v1508 = vshrl.u32 %v1507, 7
    %v1509 = vsub.s32 6, %v1508
    %v1510 = vrot.slane %v1479, %v1509
    %v1511 = vlaneseq
    %v1512 = vshrl.u32 %v1511, 7
    %v1513 = vsub.s32 7, %v1512
    %v1514 = vrot.slane %v1479, %v1513
    %v1515 = vlaneseq
    %v1516 = vshrl.u32 %v1515, 7
    %v1517 = vsub.s32 0, %v1516
    %v1518 = vrot.slane %v1480, %v1517
    %v1519 = vlaneseq
    %v1520 = vshrl.u32 %v1519, 7
    %v1521 = vsub.s32 1, %v1520
    %v1522 = vrot.slane %v1480, %v1521
    %v1523 = vlaneseq
    %v1524 = vshrl.u32 %v1523, 7
    %v1525 = vsub.s32 2, %v1524
    %v1526 = vrot.slane %v1480, %v1525
    %v1527 = vlaneseq
    %v1528 = vshrl.u32 %v1527, 7
    %v1529 = vsub.s32 3, %v1528
    %v1530 = vrot.slane %v1480, %v1529
    %v1531 = vlaneseq
    %v1532 = vshrl.u32 %v1531, 7
    %v1533 = vsub.s32 4, %v1532
    %v1534 = vrot.slane %v1480, %v1533
    %v2948 = vunpack.c.l.b16 %v79
    %v2949 = vunpack.c.h.b16 %v79
    %v2950 = vunpack.c.l.b16 %v80
    %v2951 = vunpack.c.h.b16 %v80
    %v2952 = vunpack.c.l.b16 %v81
    %v2953 = vunpack.c.h.b16 %v81
    %v2954 = vunpack.c.l.b16 %v82
    %v2955 = vunpack.c.h.b16 %v82
    %v2956 = vunpack.c.l.b16 %v83
    %v2957 = vunpack.c.h.b16 %v83
    %v2958 = vunpack.c.l.b16 %v84
    %v2959 = vunpack.c.h.b16 %v84
    %v2960 = vunpack.c.l.b16 %v85
    %v2961 = vunpack.c.l.b16 %v86
    %v2962 = vunpack.c.h.b16 %v86
    %v2963 = vunpack.c.l.b16 %v87
    %v2964 = vunpack.c.h.b16 %v87
    %v2965 = vunpack.c.l.b16 %v88
    %v2966 = vunpack.c.h.b16 %v88
    %v2967 = vunpack.c.l.b16 %v89
    %v2968 = vunpack.c.h.b16 %v89
    %v2969 = vunpack.c.l.b16 %v90
    %v2970 = vunpack.c.h.b16 %v90
    %v2971 = vunpack.c.l.b16 %v91
    %v2972 = vunpack.c.h.b16 %v91
    %v2973 = vunpack.c.l.b16 %v92
    %v2974 = vunpack.c.l.b16 %v93
    %v2975 = vunpack.c.h.b16 %v93
    %v2976 = vunpack.c.l.b16 %v94
    %v2977 = vunpack.c.h.b16 %v94
    %v2978 = vunpack.c.l.b16 %v95
    %v2979 = vunpack.c.h.b16 %v95
    %v2980 = vunpack.c.l.b16 %v96
    %v2981 = vunpack.c.h.b16 %v96
    %v2982 = vunpack.c.l.b16 %v97
    %v2983 = vunpack.c.h.b16 %v97
    %v2984 = vunpack.c.l.b16 %v98
    %v2985 = vunpack.c.h.b16 %v98
    %v2986 = vunpack.c.l.b16 %v99
    %v2987 = vunpack.c.l.b16 %v100
    %v2988 = vunpack.c.h.b16 %v100
    %v2989 = vunpack.c.l.b16 %v101
    %v2990 = vunpack.c.h.b16 %v101
    %v2991 = vunpack.c.l.b16 %v102
    %v2992 = vunpack.c.h.b16 %v102
    %v2993 = vunpack.c.l.b16 %v103
    %v2994 = vunpack.c.h.b16 %v103
    %v2995 = vunpack.c.l.b16 %v104
    %v2996 = vunpack.c.h.b16 %v104
    %v2997 = vunpack.c.l.b16 %v105
    %v2998 = vunpack.c.h.b16 %v105
    %v2999 = vunpack.c.l.b16 %v106
    %v3000 = vunpack.c.l.b16 %v107
    %v3001 = vunpack.c.h.b16 %v107
    %v3002 = vunpack.c.l.b16 %v108
    %v3003 = vunpack.c.h.b16 %v108
    %v3004 = vunpack.c.l.b16 %v109
    %v3005 = vunpack.c.h.b16 %v109
    %v3006 = vunpack.c.l.b16 %v110
    %v3007 = vunpack.c.h.b16 %v110
    %v3008 = vunpack.c.l.b16 %v111
    %v3009 = vunpack.c.h.b16 %v111
    %v3010 = vunpack.c.l.b16 %v112
    %v3011 = vunpack.c.h.b16 %v112
    %v3012 = vunpack.c.l.b16 %v113
    %v3013 = vunpack.c.l.b16 %v114
    %v3014 = vunpack.c.h.b16 %v114
    %v3015 = vunpack.c.l.b16 %v115
    %v3016 = vunpack.c.h.b16 %v115
    %v3017 = vunpack.c.l.b16 %v116
    %v3018 = vunpack.c.h.b16 %v116
    %v3019 = vunpack.c.l.b16 %v117
    %v3020 = vunpack.c.h.b16 %v117
    %v3021 = vunpack.c.l.b16 %v118
    %v3022 = vunpack.c.h.b16 %v118
    %v3023 = vunpack.c.l.b16 %v119
    %v3024 = vunpack.c.h.b16 %v119
    %v3025 = vunpack.c.l.b16 %v120
    %v3026 = vunpack.c.l.b16 %v121
    %v3027 = vunpack.c.h.b16 %v121
    %v3028 = vunpack.c.l.b16 %v122
    %v3029 = vunpack.c.h.b16 %v122
    %v3030 = vunpack.c.l.b16 %v123
    %v3031 = vunpack.c.h.b16 %v123
    %v3032 = vunpack.c.l.b16 %v124
    %v3033 = vunpack.c.h.b16 %v124
    %v3034 = vunpack.c.l.b16 %v125
    %v3035 = vunpack.c.h.b16 %v125
    %v3036 = vunpack.c.l.b16 %v126
    %v3037 = vunpack.c.h.b16 %v126
    %v3038 = vunpack.c.l.b16 %v127
    %v3039 = vunpack.c.l.b16 %v128
    %v3040 = vunpack.c.h.b16 %v128
    %v3041 = vunpack.c.l.b16 %v129
    %v3042 = vunpack.c.h.b16 %v129
    %v3043 = vunpack.c.l.b16 %v130
    %v3044 = vunpack.c.h.b16 %v130
    %v3045 = vunpack.c.l.b16 %v131
    %v3046 = vunpack.c.h.b16 %v131
    %v3047 = vunpack.c.l.b16 %v132
    %v3048 = vunpack.c.h.b16 %v132
    %v3049 = vunpack.c.l.b16 %v133
    %v3050 = vunpack.c.h.b16 %v133
    %v3051 = vunpack.c.l.b16 %v134
    %v3052 = vunpack.c.l.b16 %v135
    %v3053 = vunpack.c.h.b16 %v135
    %v3054 = vunpack.c.l.b16 %v136
    %v3055 = vunpack.c.h.b16 %v136
    %v3056 = vunpack.c.l.b16 %v137
    %v3057 = vunpack.c.h.b16 %v137
    %v3058 = vunpack.c.l.b16 %v138
    %v3059 = vunpack.c.h.b16 %v138
    %v3060 = vunpack.c.l.b16 %v139
    %v3061 = vunpack.c.h.b16 %v139
    %v3062 = vunpack.c.l.b16 %v140
    %v3063 = vunpack.c.h.b16 %v140
    %v3064 = vunpack.c.l.b16 %v141
    %v3065 = vunpack.c.l.b16 %v142
    %v3066 = vunpack.c.h.b16 %v142
    %v3067 = vunpack.c.l.b16 %v143
    %v3068 = vunpack.c.h.b16 %v143
    %v3069 = vunpack.c.l.b16 %v144
    %v3070 = vunpack.c.h.b16 %v144
    %v3071 = vunpack.c.l.b16 %v145
    %v3072 = vunpack.c.h.b16 %v145
    %v3073 = vunpack.c.l.b16 %v146
    %v3074 = vunpack.c.h.b16 %v146
    %v3075 = vunpack.c.l.b16 %v147
    %v3076 = vunpack.c.h.b16 %v147
    %v3077 = vunpack.c.l.b16 %v148
    %v3078 = vunpack.c.l.b16 %v149
    %v3079 = vunpack.c.h.b16 %v149
    %v3080 = vunpack.c.l.b16 %v150
    %v3081 = vunpack.c.h.b16 %v150
    %v3082 = vunpack.c.l.b16 %v151
    %v3083 = vunpack.c.h.b16 %v151
    %v3084 = vunpack.c.l.b16 %v152
    %v3085 = vunpack.c.h.b16 %v152
    %v3086 = vunpack.c.l.b16 %v153
    %v3087 = vunpack.c.h.b16 %v153
    %v3088 = vunpack.c.l.b16 %v154
    %v3089 = vunpack.c.h.b16 %v154
    %v3090 = vunpack.c.l.b16 %v155
    %v3091 = vunpack.c.l.b16 %v156
    %v3092 = vunpack.c.h.b16 %v156
    %v3093 = vunpack.c.l.b16 %v157
    %v3094 = vunpack.c.h.b16 %v157
    %v3095 = vunpack.c.l.b16 %v158
    %v3096 = vunpack.c.h.b16 %v158
    %v3097 = vunpack.c.l.b16 %v159
    %v3098 = vunpack.c.h.b16 %v159
    %v3099 = vunpack.c.l.b16 %v160
    %v3100 = vunpack.c.h.b16 %v160
    %v3101 = vunpack.c.l.b16 %v161
    %v3102 = vunpack.c.h.b16 %v161
    %v3103 = vunpack.c.l.b16 %v162
    %v3104 = vunpack.c.l.b16 %v163
    %v3105 = vunpack.c.h.b16 %v163
    %v3106 = vunpack.c.l.b16 %v164
    %v3107 = vunpack.c.h.b16 %v164
    %v3108 = vunpack.c.l.b16 %v165
    %v3109 = vunpack.c.h.b16 %v165
    %v3110 = vunpack.c.l.b16 %v166
    %v3111 = vunpack.c.h.b16 %v166
    %v3112 = vunpack.c.l.b16 %v167
    %v3113 = vunpack.c.h.b16 %v167
    %v3114 = vunpack.c.l.b16 %v168
    %v3115 = vunpack.c.h.b16 %v168
    %v3116 = vunpack.c.l.b16 %v169
    %v3117 = vunpack.c.l.b16 %v170
    %v3118 = vunpack.c.h.b16 %v170
    %v3119 = vunpack.c.l.b16 %v171
    %v3120 = vunpack.c.h.b16 %v171
    %v3121 = vunpack.c.l.b16 %v172
    %v3122 = vunpack.c.h.b16 %v172
    %v3123 = vunpack.c.l.b16 %v173
    %v3124 = vunpack.c.h.b16 %v173
    %v3125 = vunpack.c.l.b16 %v174
    %v3126 = vunpack.c.h.b16 %v174
    %v3127 = vunpack.c.l.b16 %v175
    %v3128 = vunpack.c.h.b16 %v175
    %v3129 = vunpack.c.l.b16 %v176
    %v3130 = vunpack.c.l.b16 %v177
    %v3131 = vunpack.c.h.b16 %v177
    %v3132 = vunpack.c.l.b16 %v178
    %v3133 = vunpack.c.h.b16 %v178
    %v3134 = vunpack.c.l.b16 %v179
    %v3135 = vunpack.c.h.b16 %v179
    %v3136 = vunpack.c.l.b16 %v180
    %v3137 = vunpack.c.h.b16 %v180
    %v3138 = vunpack.c.l.b16 %v181
    %v3139 = vunpack.c.h.b16 %v181
    %v3140 = vunpack.c.l.b16 %v182
    %v3141 = vunpack.c.h.b16 %v182
    %v3142 = vunpack.c.l.b16 %v183
    %v3143 = vunpack.c.l.b16 %v184
    %v3144 = vunpack.c.h.b16 %v184
    %v3145 = vunpack.c.l.b16 %v185
    %v3146 = vunpack.c.h.b16 %v185
    %v3147 = vunpack.c.l.b16 %v186
    %v3148 = vunpack.c.h.b16 %v186
    %v3149 = vunpack.c.l.b16 %v187
    %v3150 = vunpack.c.h.b16 %v187
    %v3151 = vunpack.c.l.b16 %v188
    %v3152 = vunpack.c.h.b16 %v188
    %v3153 = vunpack.c.l.b16 %v189
    %v3154 = vunpack.c.h.b16 %v189
    %v3155 = vunpack.c.l.b16 %v190
    %v3156 = vunpack.c.l.b16 %v191
    %v3157 = vunpack.c.h.b16 %v191
    %v3158 = vunpack.c.l.b16 %v192
    %v3159 = vunpack.c.h.b16 %v192
    %v3160 = vunpack.c.l.b16 %v193
    %v3161 = vunpack.c.h.b16 %v193
    %v3162 = vunpack.c.l.b16 %v194
    %v3163 = vunpack.c.h.b16 %v194
    %v3164 = vunpack.c.l.b16 %v195
    %v3165 = vunpack.c.h.b16 %v195
    %v3166 = vunpack.c.l.b16 %v196
    %v3167 = vunpack.c.h.b16 %v196
    %v3168 = vunpack.c.l.b16 %v197
    %v3169 = vunpack.c.l.b16 %v198
    %v3170 = vunpack.c.h.b16 %v198
    %v3171 = vunpack.c.l.b16 %v199
    %v3172 = vunpack.c.h.b16 %v199
    %v3173 = vunpack.c.l.b16 %v200
    %v3174 = vunpack.c.h.b16 %v200
    %v3175 = vunpack.c.l.b16 %v201
    %v3176 = vunpack.c.h.b16 %v201
    %v3177 = vunpack.c.l.b16 %v202
    %v3178 = vunpack.c.h.b16 %v202
    %v3179 = vunpack.c.l.b16 %v203
    %v3180 = vunpack.c.h.b16 %v203
    %v3181 = vunpack.c.l.b16 %v204
    %v3182 = vunpack.c.l.b16 %v205
    %v3183 = vunpack.c.h.b16 %v205
    %v3184 = vunpack.c.l.b16 %v206
    %v3185 = vunpack.c.h.b16 %v206
    %v3186 = vunpack.c.l.b16 %v207
    %v3187 = vunpack.c.h.b16 %v207
    %v3188 = vunpack.c.l.b16 %v208
    %v3189 = vunpack.c.h.b16 %v208
    %v3190 = vunpack.c.l.b16 %v209
    %v3191 = vunpack.c.h.b16 %v209
    %v3192 = vunpack.c.l.b16 %v210
    %v3193 = vunpack.c.h.b16 %v210
    %v3194 = vunpack.c.l.b16 %v211
    %v3195 = vunpack.c.l.b16 %v212
    %v3196 = vunpack.c.h.b16 %v212
    %v3197 = vunpack.c.l.b16 %v213
    %v3198 = vunpack.c.h.b16 %v213
    %v3199 = vunpack.c.l.b16 %v214
    %v3200 = vunpack.c.h.b16 %v214
    %v3201 = vunpack.c.l.b16 %v215
    %v3202 = vunpack.c.h.b16 %v215
    %v3203 = vunpack.c.l.b16 %v216
    %v3204 = vunpack.c.h.b16 %v216
    %v3205 = vunpack.c.l.b16 %v217
    %v3206 = vunpack.c.h.b16 %v217
    %v3207 = vunpack.c.l.b16 %v218
    %v3208 = vunpack.c.l.b16 %v219
    %v3209 = vunpack.c.h.b16 %v219
    %v3210 = vunpack.c.l.b16 %v220
    %v3211 = vunpack.c.h.b16 %v220
    %v3212 = vunpack.c.l.b16 %v221
    %v3213 = vunpack.c.h.b16 %v221
    %v3214 = vunpack.c.l.b16 %v222
    %v3215 = vunpack.c.h.b16 %v222
    %v3216 = vunpack.c.l.b16 %v223
    %v3217 = vunpack.c.h.b16 %v223
    %v3218 = vunpack.c.l.b16 %v224
    %v3219 = vunpack.c.h.b16 %v224
    %v3220 = vunpack.c.l.b16 %v225
    %v3221 = vunpack.c.l.b16 %v226
    %v3222 = vunpack.c.h.b16 %v226
    %v3223 = vunpack.c.l.b16 %v227
    %v3224 = vunpack.c.h.b16 %v227
    %v3225 = vunpack.c.l.b16 %v228
    %v3226 = vunpack.c.h.b16 %v228
    %v3227 = vunpack.c.l.b16 %v229
    %v3228 = vunpack.c.h.b16 %v229
    %v3229 = vunpack.c.l.b16 %v230
    %v3230 = vunpack.c.h.b16 %v230
    %v3231 = vunpack.c.l.b16 %v231
    %v3232 = vunpack.c.h.b16 %v231
    %v3233 = vunpack.c.l.b16 %v232
    %v3234 = vunpack.c.l.b16 %v233
    %v3235 = vunpack.c.h.b16 %v233
    %v3236 = vunpack.c.l.b16 %v234
    %v3237 = vunpack.c.h.b16 %v234
    %v3238 = vunpack.c.l.b16 %v235
    %v3239 = vunpack.c.h.b16 %v235
    %v3240 = vunpack.c.l.b16 %v236
    %v3241 = vunpack.c.h.b16 %v236
    %v3242 = vunpack.c.l.b16 %v237
    %v3243 = vunpack.c.h.b16 %v237
    %v3244 = vunpack.c.l.b16 %v238
    %v3245 = vunpack.c.h.b16 %v238
    %v3246 = vunpack.c.l.b16 %v239
    %v3247 = vunpack.c.l.b16 %v240
    %v3248 = vunpack.c.h.b16 %v240
    %v3249 = vunpack.c.l.b16 %v241
    %v3250 = vunpack.c.h.b16 %v241
    %v3251 = vunpack.c.l.b16 %v242
    %v3252 = vunpack.c.h.b16 %v242
    %v3253 = vunpack.c.l.b16 %v243
    %v3254 = vunpack.c.h.b16 %v243
    %v3255 = vunpack.c.l.b16 %v244
    %v3256 = vunpack.c.h.b16 %v244
    %v3257 = vunpack.c.l.b16 %v245
    %v3258 = vunpack.c.h.b16 %v245
    %v3259 = vunpack.c.l.b16 %v246
    %v3260 = vunpack.c.l.b16 %v247
    %v3261 = vunpack.c.h.b16 %v247
    %v3262 = vunpack.c.l.b16 %v248
    %v3263 = vunpack.c.h.b16 %v248
    %v3264 = vunpack.c.l.b16 %v249
    %v3265 = vunpack.c.h.b16 %v249
    %v3266 = vunpack.c.l.b16 %v250
    %v3267 = vunpack.c.h.b16 %v250
    %v3268 = vunpack.c.l.b16 %v251
    %v3269 = vunpack.c.h.b16 %v251
    %v3270 = vunpack.c.l.b16 %v252
    %v3271 = vunpack.c.h.b16 %v252
    %v3272 = vunpack.c.l.b16 %v253
    %v3273 = vunpack.c.l.b16 %v254
    %v3274 = vunpack.c.h.b16 %v254
    %v3275 = vunpack.c.l.b16 %v255
    %v3276 = vunpack.c.h.b16 %v255
    %v3277 = vunpack.c.l.b16 %v256
    %v3278 = vunpack.c.h.b16 %v256
    %v3279 = vunpack.c.l.b16 %v257
    %v3280 = vunpack.c.h.b16 %v257
    %v3281 = vunpack.c.l.b16 %v258
    %v3282 = vunpack.c.h.b16 %v258
    %v3283 = vunpack.c.l.b16 %v259
    %v3284 = vunpack.c.h.b16 %v259
    %v3285 = vunpack.c.l.b16 %v260
    %v3286 = vunpack.c.l.b16 %v261
    %v3287 = vunpack.c.h.b16 %v261
    %v3288 = vunpack.c.l.b16 %v262
    %v3289 = vunpack.c.h.b16 %v262
    %v3290 = vunpack.c.l.b16 %v263
    %v3291 = vunpack.c.h.b16 %v263
    %v3292 = vunpack.c.l.b16 %v264
    %v3293 = vunpack.c.h.b16 %v264
    %v3294 = vunpack.c.l.b16 %v265
    %v3295 = vunpack.c.h.b16 %v265
    %v3296 = vunpack.c.l.b16 %v266
    %v3297 = vunpack.c.h.b16 %v266
    %v3298 = vunpack.c.l.b16 %v267
    %v3299 = vunpack.c.l.b16 %v268
    %v3300 = vunpack.c.h.b16 %v268
    %v3301 = vunpack.c.l.b16 %v269
    %v3302 = vunpack.c.h.b16 %v269
    %v3303 = vunpack.c.l.b16 %v270
    %v3304 = vunpack.c.h.b16 %v270
    %v3305 = vunpack.c.l.b16 %v271
    %v3306 = vunpack.c.h.b16 %v271
    %v3307 = vunpack.c.l.b16 %v272
    %v3308 = vunpack.c.h.b16 %v272
    %v3309 = vunpack.c.l.b16 %v273
    %v3310 = vunpack.c.h.b16 %v273
    %v3311 = vunpack.c.l.b16 %v274
    %v3312 = vunpack.c.l.b16 %v275
    %v3313 = vunpack.c.h.b16 %v275
    %v3314 = vunpack.c.l.b16 %v276
    %v3315 = vunpack.c.h.b16 %v276
    %v3316 = vunpack.c.l.b16 %v277
    %v3317 = vunpack.c.h.b16 %v277
    %v3318 = vunpack.c.l.b16 %v278
    %v3319 = vunpack.c.h.b16 %v278
    %v3320 = vunpack.c.l.b16 %v279
    %v3321 = vunpack.c.h.b16 %v279
    %v3322 = vunpack.c.l.b16 %v280
    %v3323 = vunpack.c.h.b16 %v280
    %v3324 = vunpack.c.l.b16 %v281
    %v3325 = vunpack.c.l.b16 %v282
    %v3326 = vunpack.c.h.b16 %v282
    %v3327 = vunpack.c.l.b16 %v283
    %v3328 = vunpack.c.h.b16 %v283
    %v3329 = vunpack.c.l.b16 %v284
    %v3330 = vunpack.c.h.b16 %v284
    %v3331 = vunpack.c.l.b16 %v285
    %v3332 = vunpack.c.h.b16 %v285
    %v3333 = vunpack.c.l.b16 %v286
    %v3334 = vunpack.c.h.b16 %v286
    %v3335 = vunpack.c.l.b16 %v287
    %v3336 = vunpack.c.h.b16 %v287
    %v3337 = vunpack.c.l.b16 %v288
    %v3338 = vunpack.c.l.b16 %v289
    %v3339 = vunpack.c.h.b16 %v289
    %v3340 = vunpack.c.l.b16 %v290
    %v3341 = vunpack.c.h.b16 %v290
    %v3342 = vunpack.c.l.b16 %v291
    %v3343 = vunpack.c.h.b16 %v291
    %v3344 = vunpack.c.l.b16 %v292
    %v3345 = vunpack.c.h.b16 %v292
    %v3346 = vunpack.c.l.b16 %v293
    %v3347 = vunpack.c.h.b16 %v293
    %v3348 = vunpack.c.l.b16 %v294
    %v3349 = vunpack.c.h.b16 %v294
    %v3350 = vunpack.c.l.b16 %v295
    %v3351 = vunpack.c.l.b16 %v296
    %v3352 = vunpack.c.h.b16 %v296
    %v3353 = vunpack.c.l.b16 %v297
    %v3354 = vunpack.c.h.b16 %v297
    %v3355 = vunpack.c.l.b16 %v298
    %v3356 = vunpack.c.h.b16 %v298
    %v3357 = vunpack.c.l.b16 %v299
    %v3358 = vunpack.c.h.b16 %v299
    %v3359 = vunpack.c.l.b16 %v300
    %v3360 = vunpack.c.h.b16 %v300
    %v3361 = vunpack.c.l.b16 %v301
    %v3362 = vunpack.c.h.b16 %v301
    %v3363 = vunpack.c.l.b16 %v302
    %v3364 = vunpack.c.l.b16 %v303
    %v3365 = vunpack.c.h.b16 %v303
    %v3366 = vunpack.c.l.b16 %v304
    %v3367 = vunpack.c.h.b16 %v304
    %v3368 = vunpack.c.l.b16 %v305
    %v3369 = vunpack.c.h.b16 %v305
    %v3370 = vunpack.c.l.b16 %v306
    %v3371 = vunpack.c.h.b16 %v306
    %v3372 = vunpack.c.l.b16 %v307
    %v3373 = vunpack.c.h.b16 %v307
    %v3374 = vunpack.c.l.b16 %v308
    %v3375 = vunpack.c.h.b16 %v308
    %v3376 = vunpack.c.l.b16 %v309
    %v3377 = vunpack.c.l.b16 %v310
    %v3378 = vunpack.c.h.b16 %v310
    %v3379 = vunpack.c.l.b16 %v311
    %v3380 = vunpack.c.h.b16 %v311
    %v3381 = vunpack.c.l.b16 %v312
    %v3382 = vunpack.c.h.b16 %v312
    %v3383 = vunpack.c.l.b16 %v313
    %v3384 = vunpack.c.h.b16 %v313
    %v3385 = vunpack.c.l.b16 %v314
    %v3386 = vunpack.c.h.b16 %v314
    %v3387 = vunpack.c.l.b16 %v315
    %v3388 = vunpack.c.h.b16 %v315
    %v3389 = vunpack.c.l.b16 %v316
    %v3390 = vunpack.c.l.b16 %v317
    %v3391 = vunpack.c.h.b16 %v317
    %v3392 = vunpack.c.l.b16 %v318
    %v3393 = vunpack.c.h.b16 %v318
    %v3394 = vunpack.c.l.b16 %v319
    %v3395 = vunpack.c.h.b16 %v319
    %v3396 = vunpack.c.l.b16 %v320
    %v3397 = vunpack.c.h.b16 %v320
    %v3398 = vunpack.c.l.b16 %v321
    %v3399 = vunpack.c.h.b16 %v321
    %v3400 = vunpack.c.l.b16 %v322
    %v3401 = vunpack.c.h.b16 %v322
    %v3402 = vunpack.c.l.b16 %v323
    %v3403 = vunpack.c.l.b16 %v324
    %v3404 = vunpack.c.h.b16 %v324
    %v3405 = vunpack.c.l.b16 %v325
    %v3406 = vunpack.c.h.b16 %v325
    %v3407 = vunpack.c.l.b16 %v326
    %v3408 = vunpack.c.h.b16 %v326
    %v3409 = vunpack.c.l.b16 %v327
    %v3410 = vunpack.c.h.b16 %v327
    %v3411 = vunpack.c.l.b16 %v328
    %v3412 = vunpack.c.h.b16 %v328
    %v3413 = vunpack.c.l.b16 %v329
    %v3414 = vunpack.c.h.b16 %v329
    %v3415 = vunpack.c.l.b16 %v330
    %v3416 = vunpack.c.l.b16 %v331
    %v3417 = vunpack.c.h.b16 %v331
    %v3418 = vunpack.c.l.b16 %v332
    %v3419 = vunpack.c.h.b16 %v332
    %v3420 = vunpack.c.l.b16 %v333
    %v3421 = vunpack.c.h.b16 %v333
    %v3422 = vunpack.c.l.b16 %v334
    %v3423 = vunpack.c.h.b16 %v334
    %v3424 = vunpack.c.l.b16 %v335
    %v3425 = vunpack.c.h.b16 %v335
    %v3426 = vunpack.c.l.b16 %v336
    %v3427 = vunpack.c.h.b16 %v336
    %v3428 = vunpack.c.l.b16 %v337
    %v3429 = vunpack.c.l.b16 %v338
    %v3430 = vunpack.c.h.b16 %v338
    %v3431 = vunpack.c.l.b16 %v339
    %v3432 = vunpack.c.h.b16 %v339
    %v3433 = vunpack.c.l.b16 %v340
    %v3434 = vunpack.c.h.b16 %v340
    %v3435 = vunpack.c.l.b16 %v341
    %v3436 = vunpack.c.h.b16 %v341
    %v3437 = vunpack.c.l.b16 %v342
    %v3438 = vunpack.c.h.b16 %v342
    %v3439 = vunpack.c.l.b16 %v343
    %v3440 = vunpack.c.h.b16 %v343
    %v3441 = vunpack.c.l.b16 %v344
    %v3442 = vunpack.c.l.b16 %v345
    %v3443 = vunpack.c.h.b16 %v345
    %v3444 = vunpack.c.l.b16 %v346
    %v3445 = vunpack.c.h.b16 %v346
    %v3446 = vunpack.c.l.b16 %v347
    %v3447 = vunpack.c.h.b16 %v347
    %v3448 = vunpack.c.l.b16 %v348
    %v3449 = vunpack.c.h.b16 %v348
    %v3450 = vunpack.c.l.b16 %v349
    %v3451 = vunpack.c.h.b16 %v349
    %v3452 = vunpack.c.l.b16 %v350
    %v3453 = vunpack.c.h.b16 %v350
    %v3454 = vunpack.c.l.b16 %v351
    %v3455 = vunpack.c.l.b16 %v352
    %v3456 = vunpack.c.h.b16 %v352
    %v3457 = vunpack.c.l.b16 %v353
    %v3458 = vunpack.c.h.b16 %v353
    %v3459 = vunpack.c.l.b16 %v354
    %v3460 = vunpack.c.h.b16 %v354
    %v3461 = vunpack.c.l.b16 %v355
    %v3462 = vunpack.c.h.b16 %v355
    %v3463 = vunpack.c.l.b16 %v356
    %v3464 = vunpack.c.h.b16 %v356
    %v3465 = vunpack.c.l.b16 %v357
    %v3466 = vunpack.c.h.b16 %v357
    %v3467 = vunpack.c.l.b16 %v358
    %v3468 = vunpack.c.l.b16 %v359
    %v3469 = vunpack.c.h.b16 %v359
    %v3470 = vunpack.c.l.b16 %v360
    %v3471 = vunpack.c.h.b16 %v360
    %v3472 = vunpack.c.l.b16 %v361
    %v3473 = vunpack.c.h.b16 %v361
    %v3474 = vunpack.c.l.b16 %v362
    %v3475 = vunpack.c.h.b16 %v362
    %v3476 = vunpack.c.l.b16 %v363
    %v3477 = vunpack.c.h.b16 %v363
    %v3478 = vunpack.c.l.b16 %v364
    %v3479 = vunpack.c.h.b16 %v364
    %v3480 = vunpack.c.l.b16 %v365
    %v3481 = vunpack.c.l.b16 %v366
    %v3482 = vunpack.c.h.b16 %v366
    %v3483 = vunpack.c.l.b16 %v367
    %v3484 = vunpack.c.h.b16 %v367
    %v3485 = vunpack.c.l.b16 %v368
    %v3486 = vunpack.c.h.b16 %v368
    %v3487 = vunpack.c.l.b16 %v369
    %v3488 = vunpack.c.h.b16 %v369
    %v3489 = vunpack.c.l.b16 %v370
    %v3490 = vunpack.c.h.b16 %v370
    %v3491 = vunpack.c.l.b16 %v371
    %v3492 = vunpack.c.h.b16 %v371
    %v3493 = vunpack.c.l.b16 %v372
    %v3494 = vunpack.c.l.b16 %v373
    %v3495 = vunpack.c.h.b16 %v373
    %v3496 = vunpack.c.l.b16 %v374
    %v3497 = vunpack.c.h.b16 %v374
    %v3498 = vunpack.c.l.b16 %v375
    %v3499 = vunpack.c.h.b16 %v375
    %v3500 = vunpack.c.l.b16 %v376
    %v3501 = vunpack.c.h.b16 %v376
    %v3502 = vunpack.c.l.b16 %v377
    %v3503 = vunpack.c.h.b16 %v377
    %v3504 = vunpack.c.l.b16 %v378
    %v3505 = vunpack.c.h.b16 %v378
    %v3506 = vunpack.c.l.b16 %v379
    %v3507 = vunpack.c.l.b16 %v380
    %v3508 = vunpack.c.h.b16 %v380
    %v3509 = vunpack.c.l.b16 %v381
    %v3510 = vunpack.c.h.b16 %v381
    %v3511 = vunpack.c.l.b16 %v382
    %v3512 = vunpack.c.h.b16 %v382
    %v3513 = vunpack.c.l.b16 %v383
    %v3514 = vunpack.c.h.b16 %v383
    %v3515 = vunpack.c.l.b16 %v384
    %v3516 = vunpack.c.h.b16 %v384
    %v3517 = vunpack.c.l.b16 %v385
    %v3518 = vunpack.c.h.b16 %v385
    %v3519 = vunpack.c.l.b16 %v386
    %v3520 = vunpack.c.l.b16 %v387
    %v3521 = vunpack.c.h.b16 %v387
    %v3522 = vunpack.c.l.b16 %v388
    %v3523 = vunpack.c.h.b16 %v388
    %v3524 = vunpack.c.l.b16 %v389
    %v3525 = vunpack.c.h.b16 %v389
    %v3526 = vunpack.c.l.b16 %v390
    %v3527 = vunpack.c.h.b16 %v390
    %v3528 = vunpack.c.l.b16 %v391
    %v3529 = vunpack.c.h.b16 %v391
    %v3530 = vunpack.c.l.b16 %v392
    %v3531 = vunpack.c.h.b16 %v392
    %v3532 = vunpack.c.l.b16 %v393
    %v3533 = vunpack.c.l.b16 %v394
    %v3534 = vunpack.c.h.b16 %v394
    %v3535 = vunpack.c.l.b16 %v395
    %v3536 = vunpack.c.h.b16 %v395
    %v3537 = vunpack.c.l.b16 %v396
    %v3538 = vunpack.c.h.b16 %v396
    %v3539 = vunpack.c.l.b16 %v397
    %v3540 = vunpack.c.h.b16 %v397
    %v3541 = vunpack.c.l.b16 %v398
    %v3542 = vunpack.c.h.b16 %v398
    %v3543 = vunpack.c.l.b16 %v399
    %v3544 = vunpack.c.h.b16 %v399
    %v3545 = vunpack.c.l.b16 %v400
    %v3546 = vunpack.c.l.b16 %v401
    %v3547 = vunpack.c.h.b16 %v401
    %v3548 = vunpack.c.l.b16 %v402
    %v3549 = vunpack.c.h.b16 %v402
    %v3550 = vunpack.c.l.b16 %v403
    %v3551 = vunpack.c.h.b16 %v403
    %v3552 = vunpack.c.l.b16 %v404
    %v3553 = vunpack.c.h.b16 %v404
    %v3554 = vunpack.c.l.b16 %v405
    %v3555 = vunpack.c.h.b16 %v405
    %v3556 = vunpack.c.l.b16 %v406
    %v3557 = vunpack.c.h.b16 %v406
    %v3558 = vunpack.c.l.b16 %v407
    %v3559 = vunpack.c.l.b16 %v408
    %v3560 = vunpack.c.h.b16 %v408
    %v3561 = vunpack.c.l.b16 %v409
    %v3562 = vunpack.c.h.b16 %v409
    %v3563 = vunpack.c.l.b16 %v410
    %v3564 = vunpack.c.h.b16 %v410
    %v3565 = vunpack.c.l.b16 %v411
    %v3566 = vunpack.c.h.b16 %v411
    %v3567 = vunpack.c.l.b16 %v412
    %v3568 = vunpack.c.h.b16 %v412
    %v3569 = vunpack.c.l.b16 %v413
    %v3570 = vunpack.c.h.b16 %v413
    %v3571 = vunpack.c.l.b16 %v414
    %v3572 = vunpack.c.l.b16 %v415
    %v3573 = vunpack.c.h.b16 %v415
    %v3574 = vunpack.c.l.b16 %v416
    %v3575 = vunpack.c.h.b16 %v416
    %v3576 = vunpack.c.l.b16 %v417
    %v3577 = vunpack.c.h.b16 %v417
    %v3578 = vunpack.c.l.b16 %v418
    %v3579 = vunpack.c.h.b16 %v418
    %v3580 = vunpack.c.l.b16 %v419
    %v3581 = vunpack.c.h.b16 %v419
    %v3582 = vunpack.c.l.b16 %v420
    %v3583 = vunpack.c.h.b16 %v420
    %v3584 = vunpack.c.l.b16 %v421
    %v3585 = vunpack.c.l.b16 %v422
    %v3586 = vunpack.c.h.b16 %v422
    %v3587 = vunpack.c.l.b16 %v423
    %v3588 = vunpack.c.h.b16 %v423
    %v3589 = vunpack.c.l.b16 %v424
    %v3590 = vunpack.c.h.b16 %v424
    %v3591 = vunpack.c.l.b16 %v425
    %v3592 = vunpack.c.h.b16 %v425
    %v3593 = vunpack.c.l.b16 %v426
    %v3594 = vunpack.c.h.b16 %v426
    %v3595 = vunpack.c.l.b16 %v427
    %v3596 = vunpack.c.h.b16 %v427
    %v3597 = vunpack.c.l.b16 %v428
    %v3598 = vunpack.c.l.b16 %v429
    %v3599 = vunpack.c.h.b16 %v429
    %v3600 = vunpack.c.l.b16 %v430
    %v3601 = vunpack.c.h.b16 %v430
    %v3602 = vunpack.c.l.b16 %v431
    %v3603 = vunpack.c.h.b16 %v431
    %v3604 = vunpack.c.l.b16 %v432
    %v3605 = vunpack.c.h.b16 %v432
    %v3606 = vunpack.c.l.b16 %v433
    %v3607 = vunpack.c.h.b16 %v433
    %v3608 = vunpack.c.l.b16 %v434
    %v3609 = vunpack.c.h.b16 %v434
    %v3610 = vunpack.c.l.b16 %v435
    %v3611 = vunpack.c.l.b16 %v436
    %v3612 = vunpack.c.h.b16 %v436
    %v3613 = vunpack.c.l.b16 %v437
    %v3614 = vunpack.c.h.b16 %v437
    %v3615 = vunpack.c.l.b16 %v438
    %v3616 = vunpack.c.h.b16 %v438
    %v3617 = vunpack.c.l.b16 %v439
    %v3618 = vunpack.c.h.b16 %v439
    %v3619 = vunpack.c.l.b16 %v440
    %v3620 = vunpack.c.h.b16 %v440
    %v3621 = vunpack.c.l.b16 %v441
    %v3622 = vunpack.c.h.b16 %v441
    %v3623 = vunpack.c.l.b16 %v442
    %v3624 = vunpack.c.l.b16 %v443
    %v3625 = vunpack.c.h.b16 %v443
    %v3626 = vunpack.c.l.b16 %v444
    %v3627 = vunpack.c.h.b16 %v444
    %v3628 = vunpack.c.l.b16 %v445
    %v3629 = vunpack.c.h.b16 %v445
    %v3630 = vunpack.c.l.b16 %v446
    %v3631 = vunpack.c.h.b16 %v446
    %v3632 = vunpack.c.l.b16 %v447
    %v3633 = vunpack.c.h.b16 %v447
    %v3634 = vunpack.c.l.b16 %v448
    %v3635 = vunpack.c.h.b16 %v448
    %v3636 = vunpack.c.l.b16 %v449
    %v3637 = vunpack.c.l.b16 %v450
    %v3638 = vunpack.c.h.b16 %v450
    %v3639 = vunpack.c.l.b16 %v451
    %v3640 = vunpack.c.h.b16 %v451
    %v3641 = vunpack.c.l.b16 %v452
    %v3642 = vunpack.c.h.b16 %v452
    %v3643 = vunpack.c.l.b16 %v453
    %v3644 = vunpack.c.h.b16 %v453
    %v3645 = vunpack.c.l.b16 %v454
    %v3646 = vunpack.c.h.b16 %v454
    %v3647 = vunpack.c.l.b16 %v455
    %v3648 = vunpack.c.h.b16 %v455
    %v3649 = vunpack.c.l.b16 %v456
    %v3650 = vunpack.c.l.b16 %v457
    %v3651 = vunpack.c.h.b16 %v457
    %v3652 = vunpack.c.l.b16 %v458
    %v3653 = vunpack.c.h.b16 %v458
    %v3654 = vunpack.c.l.b16 %v459
    %v3655 = vunpack.c.h.b16 %v459
    %v3656 = vunpack.c.l.b16 %v460
    %v3657 = vunpack.c.h.b16 %v460
    %v3658 = vunpack.c.l.b16 %v461
    %v3659 = vunpack.c.h.b16 %v461
    %v3660 = vunpack.c.l.b16 %v462
    %v3661 = vunpack.c.h.b16 %v462
    %v3662 = vunpack.c.l.b16 %v463
    %v3663 = vunpack.c.l.b16 %v464
    %v3664 = vunpack.c.h.b16 %v464
    %v3665 = vunpack.c.l.b16 %v465
    %v3666 = vunpack.c.h.b16 %v465
    %v3667 = vunpack.c.l.b16 %v466
    %v3668 = vunpack.c.h.b16 %v466
    %v3669 = vunpack.c.l.b16 %v467
    %v3670 = vunpack.c.h.b16 %v467
    %v3671 = vunpack.c.l.b16 %v468
    %v3672 = vunpack.c.h.b16 %v468
    %v3673 = vunpack.c.l.b16 %v469
    %v3674 = vunpack.c.h.b16 %v469
    %v3675 = vunpack.c.l.b16 %v470
    %v3676 = vunpack.c.l.b16 %v471
    %v3677 = vunpack.c.h.b16 %v471
    %v3678 = vunpack.c.l.b16 %v472
    %v3679 = vunpack.c.h.b16 %v472
    %v3680 = vunpack.c.l.b16 %v473
    %v3681 = vunpack.c.h.b16 %v473
    %v3682 = vunpack.c.l.b16 %v474
    %v3683 = vunpack.c.h.b16 %v474
    %v3684 = vunpack.c.l.b16 %v475
    %v3685 = vunpack.c.h.b16 %v475
    %v3686 = vunpack.c.l.b16 %v476
    %v3687 = vunpack.c.h.b16 %v476
    %v3688 = vunpack.c.l.b16 %v477
    %v3689 = vunpack.c.l.b16 %v478
    %v3690 = vunpack.c.h.b16 %v478
    %v3691 = vunpack.c.l.b16 %v479
    %v3692 = vunpack.c.h.b16 %v479
    %v3693 = vunpack.c.l.b16 %v480
    %v3694 = vunpack.c.h.b16 %v480
    %v3695 = vunpack.c.l.b16 %v481
    %v3696 = vunpack.c.h.b16 %v481
    %v3697 = vunpack.c.l.b16 %v482
    %v3698 = vunpack.c.h.b16 %v482
    %v3699 = vunpack.c.l.b16 %v483
    %v3700 = vunpack.c.h.b16 %v483
    %v3701 = vunpack.c.l.b16 %v484
    %v3702 = vunpack.c.l.b16 %v485
    %v3703 = vunpack.c.h.b16 %v485
    %v3704 = vunpack.c.l.b16 %v486
    %v3705 = vunpack.c.h.b16 %v486
    %v3706 = vunpack.c.l.b16 %v487
    %v3707 = vunpack.c.h.b16 %v487
    %v3708 = vunpack.c.l.b16 %v488
    %v3709 = vunpack.c.h.b16 %v488
    %v3710 = vunpack.c.l.b16 %v489
    %v3711 = vunpack.c.h.b16 %v489
    %v3712 = vunpack.c.l.b16 %v490
    %v3713 = vunpack.c.h.b16 %v490
    %v3714 = vunpack.c.l.b16 %v491
    %v3715 = vunpack.c.l.b16 %v492
    %v3716 = vunpack.c.h.b16 %v492
    %v3717 = vunpack.c.l.b16 %v493
    %v3718 = vunpack.c.h.b16 %v493
    %v3719 = vunpack.c.l.b16 %v494
    %v3720 = vunpack.c.h.b16 %v494
    %v3721 = vunpack.c.l.b16 %v495
    %v3722 = vunpack.c.h.b16 %v495
    %v3723 = vunpack.c.l.b16 %v496
    %v3724 = vunpack.c.h.b16 %v496
    %v3725 = vunpack.c.l.b16 %v497
    %v3726 = vunpack.c.h.b16 %v497
    %v3727 = vunpack.c.l.b16 %v498
    %v3728 = vunpack.c.l.b16 %v499
    %v3729 = vunpack.c.h.b16 %v499
    %v3730 = vunpack.c.l.b16 %v500
    %v3731 = vunpack.c.h.b16 %v500
    %v3732 = vunpack.c.l.b16 %v501
    %v3733 = vunpack.c.h.b16 %v501
    %v3734 = vunpack.c.l.b16 %v502
    %v3735 = vunpack.c.h.b16 %v502
    %v3736 = vunpack.c.l.b16 %v503
    %v3737 = vunpack.c.h.b16 %v503
    %v3738 = vunpack.c.l.b16 %v504
    %v3739 = vunpack.c.h.b16 %v504
    %v3740 = vunpack.c.l.b16 %v505
    %v3741 = vunpack.c.l.b16 %v506
    %v3742 = vunpack.c.h.b16 %v506
    %v3743 = vunpack.c.l.b16 %v507
    %v3744 = vunpack.c.h.b16 %v507
    %v3745 = vunpack.c.l.b16 %v508
    %v3746 = vunpack.c.h.b16 %v508
    %v3747 = vunpack.c.l.b16 %v509
    %v3748 = vunpack.c.h.b16 %v509
    %v3749 = vunpack.c.l.b16 %v510
    %v3750 = vunpack.c.h.b16 %v510
    %v3751 = vunpack.c.l.b16 %v511
    %v3752 = vunpack.c.h.b16 %v511
    %v3753 = vunpack.c.l.b16 %v512
    %v3754 = vunpack.c.l.b16 %v513
    %v3755 = vunpack.c.h.b16 %v513
    %v3756 = vunpack.c.l.b16 %v514
    %v3757 = vunpack.c.h.b16 %v514
    %v3758 = vunpack.c.l.b16 %v515
    %v3759 = vunpack.c.h.b16 %v515
    %v3760 = vunpack.c.l.b16 %v516
    %v3761 = vunpack.c.h.b16 %v516
    %v3762 = vunpack.c.l.b16 %v517
    %v3763 = vunpack.c.h.b16 %v517
    %v3764 = vunpack.c.l.b16 %v518
    %v3765 = vunpack.c.h.b16 %v518
    %v3766 = vunpack.c.l.b16 %v519
    %v3767 = vunpack.c.l.b16 %v520
    %v3768 = vunpack.c.h.b16 %v520
    %v3769 = vunpack.c.l.b16 %v521
    %v3770 = vunpack.c.h.b16 %v521
    %v3771 = vunpack.c.l.b16 %v522
    %v3772 = vunpack.c.h.b16 %v522
    %v3773 = vunpack.c.l.b16 %v523
    %v3774 = vunpack.c.h.b16 %v523
    %v3775 = vunpack.c.l.b16 %v524
    %v3776 = vunpack.c.h.b16 %v524
    %v3777 = vunpack.c.l.b16 %v525
    %v3778 = vunpack.c.h.b16 %v525
    %v3779 = vunpack.c.l.b16 %v526
    %v3780 = vunpack.c.l.b16 %v527
    %v3781 = vunpack.c.h.b16 %v527
    %v3782 = vunpack.c.l.b16 %v528
    %v3783 = vunpack.c.h.b16 %v528
    %v3784 = vunpack.c.l.b16 %v529
    %v3785 = vunpack.c.h.b16 %v529
    %v3786 = vunpack.c.l.b16 %v530
    %v3787 = vunpack.c.h.b16 %v530
    %v3788 = vunpack.c.l.b16 %v531
    %v3789 = vunpack.c.h.b16 %v531
    %v3790 = vunpack.c.l.b16 %v532
    %v3791 = vunpack.c.h.b16 %v532
    %v3792 = vunpack.c.l.b16 %v533
    %v3793 = vunpack.c.l.b16 %v534
    %v3794 = vunpack.c.h.b16 %v534
    %v3795 = vunpack.c.l.b16 %v535
    %v3796 = vunpack.c.h.b16 %v535
    %v3797 = vunpack.c.l.b16 %v536
    %v3798 = vunpack.c.h.b16 %v536
    %v3799 = vunpack.c.l.b16 %v537
    %v3800 = vunpack.c.h.b16 %v537
    %v3801 = vunpack.c.l.b16 %v538
    %v3802 = vunpack.c.h.b16 %v538
    %v3803 = vunpack.c.l.b16 %v539
    %v3804 = vunpack.c.h.b16 %v539
    %v3805 = vunpack.c.l.b16 %v540
    %v3806 = vunpack.c.l.b16 %v541
    %v3807 = vunpack.c.h.b16 %v541
    %v3808 = vunpack.c.l.b16 %v542
    %v3809 = vunpack.c.h.b16 %v542
    %v3810 = vunpack.c.l.b16 %v543
    %v3811 = vunpack.c.h.b16 %v543
    %v3812 = vunpack.c.l.b16 %v544
    %v3813 = vunpack.c.h.b16 %v544
    %v3814 = vunpack.c.l.b16 %v545
    %v3815 = vunpack.c.h.b16 %v545
    %v3816 = vunpack.c.l.b16 %v546
    %v3817 = vunpack.c.h.b16 %v546
    %v3818 = vunpack.c.l.b16 %v547
    %v3819 = vunpack.c.l.b16 %v548
    %v3820 = vunpack.c.h.b16 %v548
    %v3821 = vunpack.c.l.b16 %v549
    %v3822 = vunpack.c.h.b16 %v549
    %v3823 = vunpack.c.l.b16 %v550
    %v3824 = vunpack.c.h.b16 %v550
    %v3825 = vunpack.c.l.b16 %v551
    %v3826 = vunpack.c.h.b16 %v551
    %v3827 = vunpack.c.l.b16 %v552
    %v3828 = vunpack.c.h.b16 %v552
    %v3829 = vunpack.c.l.b16 %v553
    %v3830 = vunpack.c.h.b16 %v553
    %v3831 = vunpack.c.l.b16 %v554
    %v3832 = vunpack.c.l.b16 %v555
    %v3833 = vunpack.c.h.b16 %v555
    %v3834 = vunpack.c.l.b16 %v556
    %v3835 = vunpack.c.h.b16 %v556
    %v3836 = vunpack.c.l.b16 %v557
    %v3837 = vunpack.c.h.b16 %v557
    %v3838 = vunpack.c.l.b16 %v558
    %v3839 = vunpack.c.h.b16 %v558
    %v3840 = vunpack.c.l.b16 %v559
    %v3841 = vunpack.c.h.b16 %v559
    %v3842 = vunpack.c.l.b16 %v560
    %v3843 = vunpack.c.h.b16 %v560
    %v3844 = vunpack.c.l.b16 %v561
    %v3845 = vunpack.c.l.b16 %v562
    %v3846 = vunpack.c.h.b16 %v562
    %v3847 = vunpack.c.l.b16 %v563
    %v3848 = vunpack.c.h.b16 %v563
    %v3849 = vunpack.c.l.b16 %v564
    %v3850 = vunpack.c.h.b16 %v564
    %v3851 = vunpack.c.l.b16 %v565
    %v3852 = vunpack.c.h.b16 %v565
    %v3853 = vunpack.c.l.b16 %v566
    %v3854 = vunpack.c.h.b16 %v566
    %v3855 = vunpack.c.l.b16 %v567
    %v3856 = vunpack.c.h.b16 %v567
    %v3857 = vunpack.c.l.b16 %v568
    %v3858 = vunpack.c.l.b16 %v569
    %v3859 = vunpack.c.h.b16 %v569
    %v3860 = vunpack.c.l.b16 %v570
    %v3861 = vunpack.c.h.b16 %v570
    %v3862 = vunpack.c.l.b16 %v571
    %v3863 = vunpack.c.h.b16 %v571
    %v3864 = vunpack.c.l.b16 %v572
    %v3865 = vunpack.c.h.b16 %v572
    %v3866 = vunpack.c.l.b16 %v573
    %v3867 = vunpack.c.h.b16 %v573
    %v3868 = vunpack.c.l.b16 %v574
    %v3869 = vunpack.c.h.b16 %v574
    %v3870 = vunpack.c.l.b16 %v575
    %v3871 = vunpack.c.l.b16 %v576
    %v3872 = vunpack.c.h.b16 %v576
    %v3873 = vunpack.c.l.b16 %v577
    %v3874 = vunpack.c.h.b16 %v577
    %v3875 = vunpack.c.l.b16 %v578
    %v3876 = vunpack.c.h.b16 %v578
    %v3877 = vunpack.c.l.b16 %v579
    %v3878 = vunpack.c.h.b16 %v579
    %v3879 = vunpack.c.l.b16 %v580
    %v3880 = vunpack.c.h.b16 %v580
    %v3881 = vunpack.c.l.b16 %v581
    %v3882 = vunpack.c.h.b16 %v581
    %v3883 = vunpack.c.l.b16 %v582
    %v3884 = vunpack.c.l.b16 %v583
    %v3885 = vunpack.c.h.b16 %v583
    %v3886 = vunpack.c.l.b16 %v584
    %v3887 = vunpack.c.h.b16 %v584
    %v3888 = vunpack.c.l.b16 %v585
    %v3889 = vunpack.c.h.b16 %v585
    %v3890 = vunpack.c.l.b16 %v586
    %v3891 = vunpack.c.h.b16 %v586
    %v3892 = vunpack.c.l.b16 %v587
    %v3893 = vunpack.c.h.b16 %v587
    %v3894 = vunpack.c.l.b16 %v588
    %v3895 = vunpack.c.h.b16 %v588
    %v3896 = vunpack.c.l.b16 %v589
    %v3897 = vunpack.c.l.b16 %v590
    %v3898 = vunpack.c.h.b16 %v590
    %v3899 = vunpack.c.l.b16 %v591
    %v3900 = vunpack.c.h.b16 %v591
    %v3901 = vunpack.c.l.b16 %v592
    %v3902 = vunpack.c.h.b16 %v592
    %v3903 = vunpack.c.l.b16 %v593
    %v3904 = vunpack.c.h.b16 %v593
    %v3905 = vunpack.c.l.b16 %v594
    %v3906 = vunpack.c.h.b16 %v594
    %v3907 = vunpack.c.l.b16 %v595
    %v3908 = vunpack.c.h.b16 %v595
    %v3909 = vunpack.c.l.b16 %v596
    %v3910 = vunpack.c.l.b16 %v597
    %v3911 = vunpack.c.h.b16 %v597
    %v3912 = vunpack.c.l.b16 %v598
    %v3913 = vunpack.c.h.b16 %v598
    %v3914 = vunpack.c.l.b16 %v599
    %v3915 = vunpack.c.h.b16 %v599
    %v3916 = vunpack.c.l.b16 %v600
    %v3917 = vunpack.c.h.b16 %v600
    %v3918 = vunpack.c.l.b16 %v601
    %v3919 = vunpack.c.h.b16 %v601
    %v3920 = vunpack.c.l.b16 %v602
    %v3921 = vunpack.c.h.b16 %v602
    %v3922 = vunpack.c.l.b16 %v603
    %v3923 = vunpack.c.l.b16 %v604
    %v3924 = vunpack.c.h.b16 %v604
    %v3925 = vunpack.c.l.b16 %v605
    %v3926 = vunpack.c.h.b16 %v605
    %v3927 = vunpack.c.l.b16 %v606
    %v3928 = vunpack.c.h.b16 %v606
    %v3929 = vunpack.c.l.b16 %v607
    %v3930 = vunpack.c.h.b16 %v607
    %v3931 = vunpack.c.l.b16 %v608
    %v3932 = vunpack.c.h.b16 %v608
    %v3933 = vunpack.c.l.b16 %v609
    %v3934 = vunpack.c.h.b16 %v609
    %v3935 = vunpack.c.l.b16 %v610
    %v3936 = vunpack.c.l.b16 %v611
    %v3937 = vunpack.c.h.b16 %v611
    %v3938 = vunpack.c.l.b16 %v612
    %v3939 = vunpack.c.h.b16 %v612
    %v3940 = vunpack.c.l.b16 %v613
    %v3941 = vunpack.c.h.b16 %v613
    %v3942 = vunpack.c.l.b16 %v614
    %v3943 = vunpack.c.h.b16 %v614
    %v3944 = vunpack.c.l.b16 %v615
    %v3945 = vunpack.c.h.b16 %v615
    %v3946 = vunpack.c.l.b16 %v616
    %v3947 = vunpack.c.h.b16 %v616
    %v3948 = vunpack.c.l.b16 %v617
    %v3949 = vunpack.c.l.b16 %v618
    %v3950 = vunpack.c.h.b16 %v618
    %v3951 = vunpack.c.l.b16 %v619
    %v3952 = vunpack.c.h.b16 %v619
    %v3953 = vunpack.c.l.b16 %v620
    %v3954 = vunpack.c.h.b16 %v620
    %v3955 = vunpack.c.l.b16 %v621
    %v3956 = vunpack.c.h.b16 %v621
    %v3957 = vunpack.c.l.b16 %v622
    %v3958 = vunpack.c.h.b16 %v622
    %v3959 = vunpack.c.l.b16 %v623
    %v3960 = vunpack.c.h.b16 %v623
    %v3961 = vunpack.c.l.b16 %v624
    %v3962 = vunpack.c.l.b16 %v625
    %v3963 = vunpack.c.h.b16 %v625
    %v3964 = vunpack.c.l.b16 %v626
    %v3965 = vunpack.c.h.b16 %v626
    %v3966 = vunpack.c.l.b16 %v627
    %v3967 = vunpack.c.h.b16 %v627
    %v3968 = vunpack.c.l.b16 %v628
    %v3969 = vunpack.c.h.b16 %v628
    %v3970 = vunpack.c.l.b16 %v629
    %v3971 = vunpack.c.h.b16 %v629
    %v3972 = vunpack.c.l.b16 %v630
    %v3973 = vunpack.c.h.b16 %v630
    %v3974 = vunpack.c.l.b16 %v631
    %v3975 = vunpack.c.l.b16 %v632
    %v3976 = vunpack.c.h.b16 %v632
    %v3977 = vunpack.c.l.b16 %v633
    %v3978 = vunpack.c.h.b16 %v633
    %v3979 = vunpack.c.l.b16 %v634
    %v3980 = vunpack.c.h.b16 %v634
    %v3981 = vunpack.c.l.b16 %v635
    %v3982 = vunpack.c.h.b16 %v635
    %v3983 = vunpack.c.l.b16 %v636
    %v3984 = vunpack.c.h.b16 %v636
    %v3985 = vunpack.c.l.b16 %v637
    %v3986 = vunpack.c.h.b16 %v637
    %v3987 = vunpack.c.l.b16 %v638
    %v3988 = vunpack.c.l.b16 %v639
    %v3989 = vunpack.c.h.b16 %v639
    %v3990 = vunpack.c.l.b16 %v640
    %v3991 = vunpack.c.h.b16 %v640
    %v3992 = vunpack.c.l.b16 %v641
    %v3993 = vunpack.c.h.b16 %v641
    %v3994 = vunpack.c.l.b16 %v642
    %v3995 = vunpack.c.h.b16 %v642
    %v3996 = vunpack.c.l.b16 %v643
    %v3997 = vunpack.c.h.b16 %v643
    %v3998 = vunpack.c.l.b16 %v644
    %v3999 = vunpack.c.h.b16 %v644
    %v4000 = vunpack.c.l.b16 %v645
    %v4001 = vunpack.c.l.b16 %v646
    %v4002 = vunpack.c.h.b16 %v646
    %v4003 = vunpack.c.l.b16 %v647
    %v4004 = vunpack.c.h.b16 %v647
    %v4005 = vunpack.c.l.b16 %v648
    %v4006 = vunpack.c.h.b16 %v648
    %v4007 = vunpack.c.l.b16 %v649
    %v4008 = vunpack.c.h.b16 %v649
    %v4009 = vunpack.c.l.b16 %v650
    %v4010 = vunpack.c.h.b16 %v650
    %v4011 = vunpack.c.l.b16 %v651
    %v4012 = vunpack.c.h.b16 %v651
    %v4013 = vunpack.c.l.b16 %v652
    %v4014 = vunpack.c.l.b16 %v653
    %v4015 = vunpack.c.h.b16 %v653
    %v4016 = vunpack.c.l.b16 %v654
    %v4017 = vunpack.c.h.b16 %v654
    %v4018 = vunpack.c.l.b16 %v655
    %v4019 = vunpack.c.h.b16 %v655
    %v4020 = vunpack.c.l.b16 %v656
    %v4021 = vunpack.c.h.b16 %v656
    %v4022 = vunpack.c.l.b16 %v657
    %v4023 = vunpack.c.h.b16 %v657
    %v4024 = vunpack.c.l.b16 %v658
    %v4025 = vunpack.c.h.b16 %v658
    %v4026 = vunpack.c.l.b16 %v659
    %v4027 = vunpack.c.l.b16 %v660
    %v4028 = vunpack.c.h.b16 %v660
    %v4029 = vunpack.c.l.b16 %v661
    %v4030 = vunpack.c.h.b16 %v661
    %v4031 = vunpack.c.l.b16 %v662
    %v4032 = vunpack.c.h.b16 %v662
    %v4033 = vunpack.c.l.b16 %v663
    %v4034 = vunpack.c.h.b16 %v663
    %v4035 = vunpack.c.l.b16 %v664
    %v4036 = vunpack.c.h.b16 %v664
    %v4037 = vunpack.c.l.b16 %v665
    %v4038 = vunpack.c.h.b16 %v665
    %v4039 = vunpack.c.l.b16 %v666
    %v4040 = vunpack.c.l.b16 %v667
    %v4041 = vunpack.c.h.b16 %v667
    %v4042 = vunpack.c.l.b16 %v668
    %v4043 = vunpack.c.h.b16 %v668
    %v4044 = vunpack.c.l.b16 %v669
    %v4045 = vunpack.c.h.b16 %v669
    %v4046 = vunpack.c.l.b16 %v670
    %v4047 = vunpack.c.h.b16 %v670
    %v4048 = vunpack.c.l.b16 %v671
    %v4049 = vunpack.c.h.b16 %v671
    %v4050 = vunpack.c.l.b16 %v672
    %v4051 = vunpack.c.h.b16 %v672
    %v4052 = vunpack.c.l.b16 %v673
    %v4053 = vunpack.c.l.b16 %v674
    %v4054 = vunpack.c.h.b16 %v674
    %v4055 = vunpack.c.l.b16 %v675
    %v4056 = vunpack.c.h.b16 %v675
    %v4057 = vunpack.c.l.b16 %v676
    %v4058 = vunpack.c.h.b16 %v676
    %v4059 = vunpack.c.l.b16 %v677
    %v4060 = vunpack.c.h.b16 %v677
    %v4061 = vunpack.c.l.b16 %v678
    %v4062 = vunpack.c.h.b16 %v678
    %v4063 = vunpack.c.l.b16 %v679
    %v4064 = vunpack.c.h.b16 %v679
    %v4065 = vunpack.c.l.b16 %v680
    %v4066 = vunpack.c.l.b16 %v681
    %v4067 = vunpack.c.h.b16 %v681
    %v4068 = vunpack.c.l.b16 %v682
    %v4069 = vunpack.c.h.b16 %v682
    %v4070 = vunpack.c.l.b16 %v683
    %v4071 = vunpack.c.h.b16 %v683
    %v4072 = vunpack.c.l.b16 %v684
    %v4073 = vunpack.c.h.b16 %v684
    %v4074 = vunpack.c.l.b16 %v685
    %v4075 = vunpack.c.h.b16 %v685
    %v4076 = vunpack.c.l.b16 %v686
    %v4077 = vunpack.c.h.b16 %v686
    %v4078 = vunpack.c.l.b16 %v687
    %v4079 = vunpack.c.l.b16 %v688
    %v4080 = vunpack.c.h.b16 %v688
    %v4081 = vunpack.c.l.b16 %v689
    %v4082 = vunpack.c.h.b16 %v689
    %v4083 = vunpack.c.l.b16 %v690
    %v4084 = vunpack.c.h.b16 %v690
    %v4085 = vunpack.c.l.b16 %v691
    %v4086 = vunpack.c.h.b16 %v691
    %v4087 = vunpack.c.l.b16 %v692
    %v4088 = vunpack.c.h.b16 %v692
    %v4089 = vunpack.c.l.b16 %v693
    %v4090 = vunpack.c.h.b16 %v693
    %v4091 = vunpack.c.l.b16 %v694
    %v4092 = vunpack.c.l.b16 %v695
    %v4093 = vunpack.c.h.b16 %v695
    %v4094 = vunpack.c.l.b16 %v696
    %v4095 = vunpack.c.h.b16 %v696
    %v4096 = vunpack.c.l.b16 %v697
    %v4097 = vunpack.c.h.b16 %v697
    %v4098 = vunpack.c.l.b16 %v698
    %v4099 = vunpack.c.h.b16 %v698
    %v4100 = vunpack.c.l.b16 %v699
    %v4101 = vunpack.c.h.b16 %v699
    %v4102 = vunpack.c.l.b16 %v700
    %v4103 = vunpack.c.h.b16 %v700
    %v4104 = vunpack.c.l.b16 %v701
    %v4105 = vunpack.c.l.b16 %v702
    %v4106 = vunpack.c.h.b16 %v702
    %v4107 = vunpack.c.l.b16 %v703
    %v4108 = vunpack.c.h.b16 %v703
    %v4109 = vunpack.c.l.b16 %v704
    %v4110 = vunpack.c.h.b16 %v704
    %v4111 = vunpack.c.l.b16 %v705
    %v4112 = vunpack.c.h.b16 %v705
    %v4113 = vunpack.c.l.b16 %v706
    %v4114 = vunpack.c.h.b16 %v706
    %v4115 = vunpack.c.l.b16 %v707
    %v4116 = vunpack.c.h.b16 %v707
    %v4117 = vunpack.c.l.b16 %v708
    %v4118 = vunpack.c.l.b16 %v709
    %v4119 = vunpack.c.h.b16 %v709
    %v4120 = vunpack.c.l.b16 %v710
    %v4121 = vunpack.c.h.b16 %v710
    %v4122 = vunpack.c.l.b16 %v711
    %v4123 = vunpack.c.h.b16 %v711
    %v4124 = vunpack.c.l.b16 %v712
    %v4125 = vunpack.c.h.b16 %v712
    %v4126 = vunpack.c.l.b16 %v713
    %v4127 = vunpack.c.h.b16 %v713
    %v4128 = vunpack.c.l.b16 %v714
    %v4129 = vunpack.c.h.b16 %v714
    %v4130 = vunpack.c.l.b16 %v715
    %v4131 = vunpack.c.l.b16 %v716
    %v4132 = vunpack.c.h.b16 %v716
    %v4133 = vunpack.c.l.b16 %v717
    %v4134 = vunpack.c.h.b16 %v717
    %v4135 = vunpack.c.l.b16 %v718
    %v4136 = vunpack.c.h.b16 %v718
    %v4137 = vunpack.c.l.b16 %v719
    %v4138 = vunpack.c.h.b16 %v719
    %v4139 = vunpack.c.l.b16 %v720
    %v4140 = vunpack.c.h.b16 %v720
    %v4141 = vunpack.c.l.b16 %v721
    %v4142 = vunpack.c.h.b16 %v721
    %v4143 = vunpack.c.l.b16 %v722
    %v4144 = vunpack.c.l.b16 %v723
    %v4145 = vunpack.c.h.b16 %v723
    %v4146 = vunpack.c.l.b16 %v724
    %v4147 = vunpack.c.h.b16 %v724
    %v4148 = vunpack.c.l.b16 %v725
    %v4149 = vunpack.c.h.b16 %v725
    %v4150 = vunpack.c.l.b16 %v726
    %v4151 = vunpack.c.h.b16 %v726
    %v4152 = vunpack.c.l.b16 %v727
    %v4153 = vunpack.c.h.b16 %v727
    %v4154 = vunpack.c.l.b16 %v728
    %v4155 = vunpack.c.h.b16 %v728
    %v4156 = vunpack.c.l.b16 %v729
    %v4157 = vunpack.c.l.b16 %v730
    %v4158 = vunpack.c.h.b16 %v730
    %v4159 = vunpack.c.l.b16 %v731
    %v4160 = vunpack.c.h.b16 %v731
    %v4161 = vunpack.c.l.b16 %v732
    %v4162 = vunpack.c.h.b16 %v732
    %v4163 = vunpack.c.l.b16 %v733
    %v4164 = vunpack.c.h.b16 %v733
    %v4165 = vunpack.c.l.b16 %v734
    %v4166 = vunpack.c.h.b16 %v734
    %v4167 = vunpack.c.l.b16 %v735
    %v4168 = vunpack.c.h.b16 %v735
    %v4169 = vunpack.c.l.b16 %v736
    %v4170 = vunpack.c.l.b16 %v737
    %v4171 = vunpack.c.h.b16 %v737
    %v4172 = vunpack.c.l.b16 %v738
    %v4173 = vunpack.c.h.b16 %v738
    %v4174 = vunpack.c.l.b16 %v739
    %v4175 = vunpack.c.h.b16 %v739
    %v4176 = vunpack.c.l.b16 %v740
    %v4177 = vunpack.c.h.b16 %v740
    %v4178 = vunpack.c.l.b16 %v741
    %v4179 = vunpack.c.h.b16 %v741
    %v4180 = vunpack.c.l.b16 %v742
    %v4181 = vunpack.c.h.b16 %v742
    %v4182 = vunpack.c.l.b16 %v743
    %v4183 = vunpack.c.l.b16 %v744
    %v4184 = vunpack.c.h.b16 %v744
    %v4185 = vunpack.c.l.b16 %v745
    %v4186 = vunpack.c.h.b16 %v745
    %v4187 = vunpack.c.l.b16 %v746
    %v4188 = vunpack.c.h.b16 %v746
    %v4189 = vunpack.c.l.b16 %v747
    %v4190 = vunpack.c.h.b16 %v747
    %v4191 = vunpack.c.l.b16 %v748
    %v4192 = vunpack.c.h.b16 %v748
    %v4193 = vunpack.c.l.b16 %v749
    %v4194 = vunpack.c.h.b16 %v749
    %v4195 = vunpack.c.l.b16 %v750
    %v4196 = vunpack.c.l.b16 %v751
    %v4197 = vunpack.c.h.b16 %v751
    %v4198 = vunpack.c.l.b16 %v752
    %v4199 = vunpack.c.h.b16 %v752
    %v4200 = vunpack.c.l.b16 %v753
    %v4201 = vunpack.c.h.b16 %v753
    %v4202 = vunpack.c.l.b16 %v754
    %v4203 = vunpack.c.h.b16 %v754
    %v4204 = vunpack.c.l.b16 %v755
    %v4205 = vunpack.c.h.b16 %v755
    %v4206 = vunpack.c.l.b16 %v756
    %v4207 = vunpack.c.h.b16 %v756
    %v4208 = vunpack.c.l.b16 %v757
    %v4209 = vunpack.c.l.b16 %v758
    %v4210 = vunpack.c.h.b16 %v758
    %v4211 = vunpack.c.l.b16 %v759
    %v4212 = vunpack.c.h.b16 %v759
    %v4213 = vunpack.c.l.b16 %v760
    %v4214 = vunpack.c.h.b16 %v760
    %v4215 = vunpack.c.l.b16 %v761
    %v4216 = vunpack.c.h.b16 %v761
    %v4217 = vunpack.c.l.b16 %v762
    %v4218 = vunpack.c.h.b16 %v762
    %v4219 = vunpack.c.l.b16 %v763
    %v4220 = vunpack.c.h.b16 %v763
    %v4221 = vunpack.c.l.b16 %v764
    %v4222 = vunpack.c.l.b16 %v765
    %v4223 = vunpack.c.h.b16 %v765
    %v4224 = vunpack.c.l.b16 %v766
    %v4225 = vunpack.c.h.b16 %v766
    %v4226 = vunpack.c.l.b16 %v767
    %v4227 = vunpack.c.h.b16 %v767
    %v4228 = vunpack.c.l.b16 %v768
    %v4229 = vunpack.c.h.b16 %v768
    %v4230 = vunpack.c.l.b16 %v769
    %v4231 = vunpack.c.h.b16 %v769
    %v4232 = vunpack.c.l.b16 %v770
    %v4233 = vunpack.c.h.b16 %v770
    %v4234 = vunpack.c.l.b16 %v771
    %v4235 = vunpack.c.l.b16 %v772
    %v4236 = vunpack.c.h.b16 %v772
    %v4237 = vunpack.c.l.b16 %v773
    %v4238 = vunpack.c.h.b16 %v773
    %v4239 = vunpack.c.l.b16 %v774
    %v4240 = vunpack.c.h.b16 %v774
    %v4241 = vunpack.c.l.b16 %v775
    %v4242 = vunpack.c.h.b16 %v775
    %v4243 = vunpack.c.l.b16 %v776
    %v4244 = vunpack.c.h.b16 %v776
    %v4245 = vunpack.c.l.b16 %v777
    %v4246 = vunpack.c.h.b16 %v777
    %v4247 = vunpack.c.l.b16 %v778
    %v4248 = vunpack.c.l.b16 %v779
    %v4249 = vunpack.c.h.b16 %v779
    %v4250 = vunpack.c.l.b16 %v780
    %v4251 = vunpack.c.h.b16 %v780
    %v4252 = vunpack.c.l.b16 %v781
    %v4253 = vunpack.c.h.b16 %v781
    %v4254 = vunpack.c.l.b16 %v782
    %v4255 = vunpack.c.h.b16 %v782
    %v4256 = vunpack.c.l.b16 %v783
    %v4257 = vunpack.c.h.b16 %v783
    %v4258 = vunpack.c.l.b16 %v784
    %v4259 = vunpack.c.h.b16 %v784
    %v4260 = vunpack.c.l.b16 %v785
    %v4261 = vunpack.c.l.b16 %v786
    %v4262 = vunpack.c.h.b16 %v786
    %v4263 = vunpack.c.l.b16 %v787
    %v4264 = vunpack.c.h.b16 %v787
    %v4265 = vunpack.c.l.b16 %v788
    %v4266 = vunpack.c.h.b16 %v788
    %v4267 = vunpack.c.l.b16 %v789
    %v4268 = vunpack.c.h.b16 %v789
    %v4269 = vunpack.c.l.b16 %v790
    %v4270 = vunpack.c.h.b16 %v790
    %v4271 = vunpack.c.l.b16 %v791
    %v4272 = vunpack.c.h.b16 %v791
    %v4273 = vunpack.c.l.b16 %v792
    %v4274 = vunpack.c.l.b16 %v793
    %v4275 = vunpack.c.h.b16 %v793
    %v4276 = vunpack.c.l.b16 %v794
    %v4277 = vunpack.c.h.b16 %v794
    %v4278 = vunpack.c.l.b16 %v795
    %v4279 = vunpack.c.h.b16 %v795
    %v4280 = vunpack.c.l.b16 %v796
    %v4281 = vunpack.c.h.b16 %v796
    %v4282 = vunpack.c.l.b16 %v797
    %v4283 = vunpack.c.h.b16 %v797
    %v4284 = vunpack.c.l.b16 %v798
    %v4285 = vunpack.c.h.b16 %v798
    %v4286 = vunpack.c.l.b16 %v799
    %v4287 = vunpack.c.l.b16 %v800
    %v4288 = vunpack.c.h.b16 %v800
    %v4289 = vunpack.c.l.b16 %v801
    %v4290 = vunpack.c.h.b16 %v801
    %v4291 = vunpack.c.l.b16 %v802
    %v4292 = vunpack.c.h.b16 %v802
    %v4293 = vunpack.c.l.b16 %v803
    %v4294 = vunpack.c.h.b16 %v803
    %v4295 = vunpack.c.l.b16 %v804
    %v4296 = vunpack.c.h.b16 %v804
    %v4297 = vunpack.c.l.b16 %v805
    %v4298 = vunpack.c.h.b16 %v805
    %v4299 = vunpack.c.l.b16 %v806
    %v4300 = vunpack.c.l.b16 %v807
    %v4301 = vunpack.c.h.b16 %v807
    %v4302 = vunpack.c.l.b16 %v808
    %v4303 = vunpack.c.h.b16 %v808
    %v4304 = vunpack.c.l.b16 %v809
    %v4305 = vunpack.c.h.b16 %v809
    %v4306 = vunpack.c.l.b16 %v810
    %v4307 = vunpack.c.h.b16 %v810
    %v4308 = vunpack.c.l.b16 %v811
    %v4309 = vunpack.c.h.b16 %v811
    %v4310 = vunpack.c.l.b16 %v812
    %v4311 = vunpack.c.h.b16 %v812
    %v4312 = vunpack.c.l.b16 %v813
    %v4313 = vunpack.c.l.b16 %v814
    %v4314 = vunpack.c.h.b16 %v814
    %v4315 = vunpack.c.l.b16 %v815
    %v4316 = vunpack.c.h.b16 %v815
    %v4317 = vunpack.c.l.b16 %v816
    %v4318 = vunpack.c.h.b16 %v816
    %v4319 = vunpack.c.l.b16 %v817
    %v4320 = vunpack.c.h.b16 %v817
    %v4321 = vunpack.c.l.b16 %v818
    %v4322 = vunpack.c.h.b16 %v818
    %v4323 = vunpack.c.l.b16 %v819
    %v4324 = vunpack.c.h.b16 %v819
    %v4325 = vunpack.c.l.b16 %v820
    %v4326 = vunpack.c.l.b16 %v821
    %v4327 = vunpack.c.h.b16 %v821
    %v4328 = vunpack.c.l.b16 %v822
    %v4329 = vunpack.c.h.b16 %v822
    %v4330 = vunpack.c.l.b16 %v823
    %v4331 = vunpack.c.h.b16 %v823
    %v4332 = vunpack.c.l.b16 %v824
    %v4333 = vunpack.c.h.b16 %v824
    %v4334 = vunpack.c.l.b16 %v825
    %v4335 = vunpack.c.h.b16 %v825
    %v4336 = vunpack.c.l.b16 %v826
    %v4337 = vunpack.c.h.b16 %v826
    %v4338 = vunpack.c.l.b16 %v827
    %v4339 = vunpack.c.l.b16 %v828
    %v4340 = vunpack.c.h.b16 %v828
    %v4341 = vunpack.c.l.b16 %v829
    %v4342 = vunpack.c.h.b16 %v829
    %v4343 = vunpack.c.l.b16 %v830
    %v4344 = vunpack.c.h.b16 %v830
    %v4345 = vunpack.c.l.b16 %v831
    %v4346 = vunpack.c.h.b16 %v831
    %v4347 = vunpack.c.l.b16 %v832
    %v4348 = vunpack.c.h.b16 %v832
    %v4349 = vunpack.c.l.b16 %v833
    %v4350 = vunpack.c.h.b16 %v833
    %v4351 = vunpack.c.l.b16 %v834
    %v4352 = vunpack.c.l.b16 %v835
    %v4353 = vunpack.c.h.b16 %v835
    %v4354 = vunpack.c.l.b16 %v836
    %v4355 = vunpack.c.h.b16 %v836
    %v4356 = vunpack.c.l.b16 %v837
    %v4357 = vunpack.c.h.b16 %v837
    %v4358 = vunpack.c.l.b16 %v838
    %v4359 = vunpack.c.h.b16 %v838
    %v4360 = vunpack.c.l.b16 %v839
    %v4361 = vunpack.c.h.b16 %v839
    %v4362 = vunpack.c.l.b16 %v840
    %v4363 = vunpack.c.h.b16 %v840
    %v4364 = vunpack.c.l.b16 %v841
    %v4365 = vunpack.c.l.b16 %v842
    %v4366 = vunpack.c.h.b16 %v842
    %v4367 = vunpack.c.l.b16 %v843
    %v4368 = vunpack.c.h.b16 %v843
    %v4369 = vunpack.c.l.b16 %v844
    %v4370 = vunpack.c.h.b16 %v844
    %v4371 = vunpack.c.l.b16 %v845
    %v4372 = vunpack.c.h.b16 %v845
    %v4373 = vunpack.c.l.b16 %v846
    %v4374 = vunpack.c.h.b16 %v846
    %v4375 = vunpack.c.l.b16 %v847
    %v4376 = vunpack.c.h.b16 %v847
    %v4377 = vunpack.c.l.b16 %v848
    %v4378 = vunpack.c.l.b16 %v849
    %v4379 = vunpack.c.h.b16 %v849
    %v4380 = vunpack.c.l.b16 %v850
    %v4381 = vunpack.c.h.b16 %v850
    %v4382 = vunpack.c.l.b16 %v851
    %v4383 = vunpack.c.h.b16 %v851
    %v4384 = vunpack.c.l.b16 %v852
    %v4385 = vunpack.c.h.b16 %v852
    %v4386 = vunpack.c.l.b16 %v853
    %v4387 = vunpack.c.h.b16 %v853
    %v4388 = vunpack.c.l.b16 %v854
    %v4389 = vunpack.c.h.b16 %v854
    %v4390 = vunpack.c.l.b16 %v855
    %v4391 = vunpack.c.l.b16 %v856
    %v4392 = vunpack.c.h.b16 %v856
    %v4393 = vunpack.c.l.b16 %v857
    %v4394 = vunpack.c.h.b16 %v857
    %v4395 = vunpack.c.l.b16 %v858
    %v4396 = vunpack.c.h.b16 %v858
    %v4397 = vunpack.c.l.b16 %v859
    %v4398 = vunpack.c.h.b16 %v859
    %v4399 = vunpack.c.l.b16 %v860
    %v4400 = vunpack.c.h.b16 %v860
    %v4401 = vunpack.c.l.b16 %v861
    %v4402 = vunpack.c.h.b16 %v861
    %v4403 = vunpack.c.l.b16 %v862
    %v4404 = vunpack.c.l.b16 %v863
    %v4405 = vunpack.c.h.b16 %v863
    %v4406 = vunpack.c.l.b16 %v864
    %v4407 = vunpack.c.h.b16 %v864
    %v4408 = vunpack.c.l.b16 %v865
    %v4409 = vunpack.c.h.b16 %v865
    %v4410 = vunpack.c.l.b16 %v866
    %v4411 = vunpack.c.h.b16 %v866
    %v4412 = vunpack.c.l.b16 %v867
    %v4413 = vunpack.c.h.b16 %v867
    %v4414 = vunpack.c.l.b16 %v868
    %v4415 = vunpack.c.h.b16 %v868
    %v4416 = vunpack.c.l.b16 %v869
    %v4417 = vunpack.c.l.b16 %v870
    %v4418 = vunpack.c.h.b16 %v870
    %v4419 = vunpack.c.l.b16 %v871
    %v4420 = vunpack.c.h.b16 %v871
    %v4421 = vunpack.c.l.b16 %v872
    %v4422 = vunpack.c.h.b16 %v872
    %v4423 = vunpack.c.l.b16 %v873
    %v4424 = vunpack.c.h.b16 %v873
    %v4425 = vunpack.c.l.b16 %v874
    %v4426 = vunpack.c.h.b16 %v874
    %v4427 = vunpack.c.l.b16 %v875
    %v4428 = vunpack.c.h.b16 %v875
    %v4429 = vunpack.c.l.b16 %v876
    %v4430 = vunpack.c.l.b16 %v877
    %v4431 = vunpack.c.h.b16 %v877
    %v4432 = vunpack.c.l.b16 %v878
    %v4433 = vunpack.c.h.b16 %v878
    %v4434 = vunpack.c.l.b16 %v879
    %v4435 = vunpack.c.h.b16 %v879
    %v4436 = vunpack.c.l.b16 %v880
    %v4437 = vunpack.c.h.b16 %v880
    %v4438 = vunpack.c.l.b16 %v881
    %v4439 = vunpack.c.h.b16 %v881
    %v4440 = vunpack.c.l.b16 %v882
    %v4441 = vunpack.c.h.b16 %v882
    %v4442 = vunpack.c.l.b16 %v883
    %v4443 = vunpack.c.l.b16 %v884
    %v4444 = vunpack.c.h.b16 %v884
    %v4445 = vunpack.c.l.b16 %v885
    %v4446 = vunpack.c.h.b16 %v885
    %v4447 = vunpack.c.l.b16 %v886
    %v4448 = vunpack.c.h.b16 %v886
    %v4449 = vunpack.c.l.b16 %v887
    %v4450 = vunpack.c.h.b16 %v887
    %v4451 = vunpack.c.l.b16 %v888
    %v4452 = vunpack.c.h.b16 %v888
    %v4453 = vunpack.c.l.b16 %v889
    %v4454 = vunpack.c.h.b16 %v889
    %v4455 = vunpack.c.l.b16 %v890
    %v4456 = vunpack.c.l.b16 %v891
    %v4457 = vunpack.c.h.b16 %v891
    %v4458 = vunpack.c.l.b16 %v892
    %v4459 = vunpack.c.h.b16 %v892
    %v4460 = vunpack.c.l.b16 %v893
    %v4461 = vunpack.c.h.b16 %v893
    %v4462 = vunpack.c.l.b16 %v894
    %v4463 = vunpack.c.h.b16 %v894
    %v4464 = vunpack.c.l.b16 %v895
    %v4465 = vunpack.c.h.b16 %v895
    %v4466 = vunpack.c.l.b16 %v896
    %v4467 = vunpack.c.h.b16 %v896
    %v4468 = vunpack.c.l.b16 %v897
    %v4469 = vunpack.c.l.b16 %v898
    %v4470 = vunpack.c.h.b16 %v898
    %v4471 = vunpack.c.l.b16 %v899
    %v4472 = vunpack.c.h.b16 %v899
    %v4473 = vunpack.c.l.b16 %v900
    %v4474 = vunpack.c.h.b16 %v900
    %v4475 = vunpack.c.l.b16 %v901
    %v4476 = vunpack.c.h.b16 %v901
    %v4477 = vunpack.c.l.b16 %v902
    %v4478 = vunpack.c.h.b16 %v902
    %v4479 = vunpack.c.l.b16 %v903
    %v4480 = vunpack.c.h.b16 %v903
    %v4481 = vunpack.c.l.b16 %v904
    %v4482 = vunpack.c.l.b16 %v905
    %v4483 = vunpack.c.h.b16 %v905
    %v4484 = vunpack.c.l.b16 %v906
    %v4485 = vunpack.c.h.b16 %v906
    %v4486 = vunpack.c.l.b16 %v907
    %v4487 = vunpack.c.h.b16 %v907
    %v4488 = vunpack.c.l.b16 %v908
    %v4489 = vunpack.c.h.b16 %v908
    %v4490 = vunpack.c.l.b16 %v909
    %v4491 = vunpack.c.h.b16 %v909
    %v4492 = vunpack.c.l.b16 %v910
    %v4493 = vunpack.c.h.b16 %v910
    %v4494 = vunpack.c.l.b16 %v911
    %v4495 = vunpack.c.l.b16 %v912
    %v4496 = vunpack.c.h.b16 %v912
    %v4497 = vunpack.c.l.b16 %v913
    %v4498 = vunpack.c.h.b16 %v913
    %v4499 = vunpack.c.l.b16 %v914
    %v4500 = vunpack.c.h.b16 %v914
    %v4501 = vunpack.c.l.b16 %v915
    %v4502 = vunpack.c.h.b16 %v915
    %v4503 = vunpack.c.l.b16 %v916
    %v4504 = vunpack.c.h.b16 %v916
    %v4505 = vunpack.c.l.b16 %v917
    %v4506 = vunpack.c.h.b16 %v917
    %v4507 = vunpack.c.l.b16 %v918
    %v4508 = vunpack.c.l.b16 %v919
    %v4509 = vunpack.c.h.b16 %v919
    %v4510 = vunpack.c.l.b16 %v920
    %v4511 = vunpack.c.h.b16 %v920
    %v4512 = vunpack.c.l.b16 %v921
    %v4513 = vunpack.c.h.b16 %v921
    %v4514 = vunpack.c.l.b16 %v922
    %v4515 = vunpack.c.h.b16 %v922
    %v4516 = vunpack.c.l.b16 %v923
    %v4517 = vunpack.c.h.b16 %v923
    %v4518 = vunpack.c.l.b16 %v924
    %v4519 = vunpack.c.h.b16 %v924
    %v4520 = vunpack.c.l.b16 %v925
    %v4521 = vunpack.c.l.b16 %v926
    %v4522 = vunpack.c.h.b16 %v926
    %v4523 = vunpack.c.l.b16 %v927
    %v4524 = vunpack.c.h.b16 %v927
    %v4525 = vunpack.c.l.b16 %v928
    %v4526 = vunpack.c.h.b16 %v928
    %v4527 = vunpack.c.l.b16 %v929
    %v4528 = vunpack.c.h.b16 %v929
    %v4529 = vunpack.c.l.b16 %v930
    %v4530 = vunpack.c.h.b16 %v930
    %v4531 = vunpack.c.l.b16 %v931
    %v4532 = vunpack.c.h.b16 %v931
    %v4533 = vunpack.c.l.b16 %v932
    %v4534 = vunpack.c.l.b16 %v933
    %v4535 = vunpack.c.h.b16 %v933
    %v4536 = vunpack.c.l.b16 %v934
    %v4537 = vunpack.c.h.b16 %v934
    %v4538 = vunpack.c.l.b16 %v935
    %v4539 = vunpack.c.h.b16 %v935
    %v4540 = vunpack.c.l.b16 %v936
    %v4541 = vunpack.c.h.b16 %v936
    %v4542 = vunpack.c.l.b16 %v937
    %v4543 = vunpack.c.h.b16 %v937
    %v4544 = vunpack.c.l.b16 %v938
    %v4545 = vunpack.c.h.b16 %v938
    %v4546 = vunpack.c.l.b16 %v939
    %v4547 = vunpack.c.l.b16 %v940
    %v4548 = vunpack.c.h.b16 %v940
    %v4549 = vunpack.c.l.b16 %v941
    %v4550 = vunpack.c.h.b16 %v941
    %v4551 = vunpack.c.l.b16 %v942
    %v4552 = vunpack.c.h.b16 %v942
    %v4553 = vunpack.c.l.b16 %v943
    %v4554 = vunpack.c.h.b16 %v943
    %v4555 = vunpack.c.l.b16 %v944
    %v4556 = vunpack.c.h.b16 %v944
    %v4557 = vunpack.c.l.b16 %v945
    %v4558 = vunpack.c.h.b16 %v945
    %v4559 = vunpack.c.l.b16 %v946
    %v4560 = vunpack.c.l.b16 %v947
    %v4561 = vunpack.c.h.b16 %v947
    %v4562 = vunpack.c.l.b16 %v948
    %v4563 = vunpack.c.h.b16 %v948
    %v4564 = vunpack.c.l.b16 %v949
    %v4565 = vunpack.c.h.b16 %v949
    %v4566 = vunpack.c.l.b16 %v950
    %v4567 = vunpack.c.h.b16 %v950
    %v4568 = vunpack.c.l.b16 %v951
    %v4569 = vunpack.c.h.b16 %v951
    %v4570 = vunpack.c.l.b16 %v952
    %v4571 = vunpack.c.h.b16 %v952
    %v4572 = vunpack.c.l.b16 %v953
    %v4573 = vunpack.c.l.b16 %v954
    %v4574 = vunpack.c.h.b16 %v954
    %v4575 = vunpack.c.l.b16 %v955
    %v4576 = vunpack.c.h.b16 %v955
    %v4577 = vunpack.c.l.b16 %v956
    %v4578 = vunpack.c.h.b16 %v956
    %v4579 = vunpack.c.l.b16 %v957
    %v4580 = vunpack.c.h.b16 %v957
    %v4581 = vunpack.c.l.b16 %v958
    %v4582 = vunpack.c.h.b16 %v958
    %v4583 = vunpack.c.l.b16 %v959
    %v4584 = vunpack.c.h.b16 %v959
    %v4585 = vunpack.c.l.b16 %v960
    %v4586 = vunpack.c.l.b16 %v961
    %v4587 = vunpack.c.h.b16 %v961
    %v4588 = vunpack.c.l.b16 %v962
    %v4589 = vunpack.c.h.b16 %v962
    %v4590 = vunpack.c.l.b16 %v963
    %v4591 = vunpack.c.h.b16 %v963
    %v4592 = vunpack.c.l.b16 %v964
    %v4593 = vunpack.c.h.b16 %v964
    %v4594 = vunpack.c.l.b16 %v965
    %v4595 = vunpack.c.h.b16 %v965
    %v4596 = vunpack.c.l.b16 %v966
    %v4597 = vunpack.c.h.b16 %v966
    %v4598 = vunpack.c.l.b16 %v967
    %v4599 = vunpack.c.l.b16 %v968
    %v4600 = vunpack.c.h.b16 %v968
    %v4601 = vunpack.c.l.b16 %v969
    %v4602 = vunpack.c.h.b16 %v969
    %v4603 = vunpack.c.l.b16 %v970
    %v4604 = vunpack.c.h.b16 %v970
    %v4605 = vunpack.c.l.b16 %v971
    %v4606 = vunpack.c.h.b16 %v971
    %v4607 = vunpack.c.l.b16 %v972
    %v4608 = vunpack.c.h.b16 %v972
    %v4609 = vunpack.c.l.b16 %v973
    %v4610 = vunpack.c.h.b16 %v973
    %v4611 = vunpack.c.l.b16 %v974
    %v4612 = vunpack.c.l.b16 %v975
    %v4613 = vunpack.c.h.b16 %v975
    %v4614 = vunpack.c.l.b16 %v976
    %v4615 = vunpack.c.h.b16 %v976
    %v4616 = vunpack.c.l.b16 %v977
    %v4617 = vunpack.c.h.b16 %v977
    %v4618 = vunpack.c.l.b16 %v978
    %v4619 = vunpack.c.h.b16 %v978
    %v4620 = vunpack.c.l.b16 %v979
    %v4621 = vunpack.c.h.b16 %v979
    %v4622 = vunpack.c.l.b16 %v980
    %v4623 = vunpack.c.h.b16 %v980
    %v4624 = vunpack.c.l.b16 %v981
    %v4625 = vunpack.c.l.b16 %v982
    %v4626 = vunpack.c.h.b16 %v982
    %v4627 = vunpack.c.l.b16 %v983
    %v4628 = vunpack.c.h.b16 %v983
    %v4629 = vunpack.c.l.b16 %v984
    %v4630 = vunpack.c.h.b16 %v984
    %v4631 = vunpack.c.l.b16 %v985
    %v4632 = vunpack.c.h.b16 %v985
    %v4633 = vunpack.c.l.b16 %v986
    %v4634 = vunpack.c.h.b16 %v986
    %v4635 = vunpack.c.l.b16 %v987
    %v4636 = vunpack.c.h.b16 %v987
    %v4637 = vunpack.c.l.b16 %v988
    %v4638 = vunpack.c.l.b16 %v989
    %v4639 = vunpack.c.h.b16 %v989
    %v4640 = vunpack.c.l.b16 %v990
    %v4641 = vunpack.c.h.b16 %v990
    %v4642 = vunpack.c.l.b16 %v991
    %v4643 = vunpack.c.h.b16 %v991
    %v4644 = vunpack.c.l.b16 %v992
    %v4645 = vunpack.c.h.b16 %v992
    %v4646 = vunpack.c.l.b16 %v993
    %v4647 = vunpack.c.h.b16 %v993
    %v4648 = vunpack.c.l.b16 %v994
    %v4649 = vunpack.c.h.b16 %v994
    %v4650 = vunpack.c.l.b16 %v995
    %v4651 = vunpack.c.l.b16 %v996
    %v4652 = vunpack.c.h.b16 %v996
    %v4653 = vunpack.c.l.b16 %v997
    %v4654 = vunpack.c.h.b16 %v997
    %v4655 = vunpack.c.l.b16 %v998
    %v4656 = vunpack.c.h.b16 %v998
    %v4657 = vunpack.c.l.b16 %v999
    %v4658 = vunpack.c.h.b16 %v999
    %v4659 = vunpack.c.l.b16 %v1000
    %v4660 = vunpack.c.h.b16 %v1000
    %v4661 = vunpack.c.l.b16 %v1001
    %v4662 = vunpack.c.h.b16 %v1001
    %v4663 = vunpack.c.l.b16 %v1002
    %v4664 = vunpack.c.l.b16 %v1003
    %v4665 = vunpack.c.h.b16 %v1003
    %v4666 = vunpack.c.l.b16 %v1004
    %v4667 = vunpack.c.h.b16 %v1004
    %v4668 = vunpack.c.l.b16 %v1005
    %v4669 = vunpack.c.h.b16 %v1005
    %v4670 = vunpack.c.l.b16 %v1006
    %v4671 = vunpack.c.h.b16 %v1006
    %v4672 = vunpack.c.l.b16 %v1007
    %v4673 = vunpack.c.h.b16 %v1007
    %v4674 = vunpack.c.l.b16 %v1008
    %v4675 = vunpack.c.h.b16 %v1008
    %v4676 = vunpack.c.l.b16 %v1009
    %v4677 = vunpack.c.l.b16 %v1010
    %v4678 = vunpack.c.h.b16 %v1010
    %v4679 = vunpack.c.l.b16 %v1011
    %v4680 = vunpack.c.h.b16 %v1011
    %v4681 = vunpack.c.l.b16 %v1012
    %v4682 = vunpack.c.h.b16 %v1012
    %v4683 = vunpack.c.l.b16 %v1013
    %v4684 = vunpack.c.h.b16 %v1013
    %v4685 = vunpack.c.l.b16 %v1014
    %v4686 = vunpack.c.h.b16 %v1014
    %v4687 = vunpack.c.l.b16 %v1015
    %v4688 = vunpack.c.h.b16 %v1015
    %v4689 = vunpack.c.l.b16 %v1016
    %v4690 = vunpack.c.l.b16 %v1017
    %v4691 = vunpack.c.h.b16 %v1017
    %v4692 = vunpack.c.l.b16 %v1018
    %v4693 = vunpack.c.h.b16 %v1018
    %v4694 = vunpack.c.l.b16 %v1019
    %v4695 = vunpack.c.h.b16 %v1019
    %v4696 = vunpack.c.l.b16 %v1020
    %v4697 = vunpack.c.h.b16 %v1020
    %v4698 = vunpack.c.l.b16 %v1021
    %v4699 = vunpack.c.h.b16 %v1021
    %v4700 = vunpack.c.l.b16 %v1022
    %v4701 = vunpack.c.h.b16 %v1022
    %v4702 = vunpack.c.l.b16 %v1023
    %v4703 = vunpack.c.l.b16 %v1024
    %v4704 = vunpack.c.h.b16 %v1024
    %v4705 = vunpack.c.l.b16 %v1025
    %v4706 = vunpack.c.h.b16 %v1025
    %v4707 = vunpack.c.l.b16 %v1026
    %v4708 = vunpack.c.h.b16 %v1026
    %v4709 = vunpack.c.l.b16 %v1027
    %v4710 = vunpack.c.h.b16 %v1027
    %v4711 = vunpack.c.l.b16 %v1028
    %v4712 = vunpack.c.h.b16 %v1028
    %v4713 = vunpack.c.l.b16 %v1029
    %v4714 = vunpack.c.h.b16 %v1029
    %v4715 = vunpack.c.l.b16 %v1030
    %v4716 = vunpack.c.l.b16 %v1031
    %v4717 = vunpack.c.h.b16 %v1031
    %v4718 = vunpack.c.l.b16 %v1032
    %v4719 = vunpack.c.h.b16 %v1032
    %v4720 = vunpack.c.l.b16 %v1033
    %v4721 = vunpack.c.h.b16 %v1033
    %v4722 = vunpack.c.l.b16 %v1034
    %v4723 = vunpack.c.h.b16 %v1034
    %v4724 = vunpack.c.l.b16 %v1035
    %v4725 = vunpack.c.h.b16 %v1035
    %v4726 = vunpack.c.l.b16 %v1036
    %v4727 = vunpack.c.h.b16 %v1036
    %v4728 = vunpack.c.l.b16 %v1037
    %v4729 = vunpack.c.l.b16 %v1038
    %v4730 = vunpack.c.h.b16 %v1038
    %v4731 = vunpack.c.l.b16 %v1039
    %v4732 = vunpack.c.h.b16 %v1039
    %v4733 = vunpack.c.l.b16 %v1040
    %v4734 = vunpack.c.h.b16 %v1040
    %v4735 = vunpack.c.l.b16 %v1041
    %v4736 = vunpack.c.h.b16 %v1041
    %v4737 = vunpack.c.l.b16 %v1042
    %v4738 = vunpack.c.h.b16 %v1042
    %v4739 = vunpack.c.l.b16 %v1043
    %v4740 = vunpack.c.h.b16 %v1043
    %v4741 = vunpack.c.l.b16 %v1044
    %v4742 = vunpack.c.l.b16 %v1045
    %v4743 = vunpack.c.h.b16 %v1045
    %v4744 = vunpack.c.l.b16 %v1046
    %v4745 = vunpack.c.h.b16 %v1046
    %v4746 = vunpack.c.l.b16 %v1047
    %v4747 = vunpack.c.h.b16 %v1047
    %v4748 = vunpack.c.l.b16 %v1048
    %v4749 = vunpack.c.h.b16 %v1048
    %v4750 = vunpack.c.l.b16 %v1049
    %v4751 = vunpack.c.h.b16 %v1049
    %v4752 = vunpack.c.l.b16 %v1050
    %v4753 = vunpack.c.h.b16 %v1050
    %v4754 = vunpack.c.l.b16 %v1051
    %v4755 = vunpack.c.l.b16 %v1052
    %v4756 = vunpack.c.h.b16 %v1052
    %v4757 = vunpack.c.l.b16 %v1053
    %v4758 = vunpack.c.h.b16 %v1053
    %v4759 = vunpack.c.l.b16 %v1054
    %v4760 = vunpack.c.h.b16 %v1054
    %v4761 = vunpack.c.l.b16 %v1055
    %v4762 = vunpack.c.h.b16 %v1055
    %v4763 = vunpack.c.l.b16 %v1056
    %v4764 = vunpack.c.h.b16 %v1056
    %v4765 = vunpack.c.l.b16 %v1057
    %v4766 = vunpack.c.h.b16 %v1057
    %v4767 = vunpack.c.l.b16 %v1058
    %v4768 = vunpack.c.l.b16 %v1059
    %v4769 = vunpack.c.h.b16 %v1059
    %v4770 = vunpack.c.l.b16 %v1060
    %v4771 = vunpack.c.h.b16 %v1060
    %v4772 = vunpack.c.l.b16 %v1061
    %v4773 = vunpack.c.h.b16 %v1061
    %v4774 = vunpack.c.l.b16 %v1062
    %v4775 = vunpack.c.h.b16 %v1062
    %v4776 = vunpack.c.l.b16 %v1063
    %v4777 = vunpack.c.h.b16 %v1063
    %v4778 = vunpack.c.l.b16 %v1064
    %v4779 = vunpack.c.h.b16 %v1064
    %v4780 = vunpack.c.l.b16 %v1065
    %v4781 = vunpack.c.l.b16 %v1066
    %v4782 = vunpack.c.h.b16 %v1066
    %v4783 = vunpack.c.l.b16 %v1067
    %v4784 = vunpack.c.h.b16 %v1067
    %v4785 = vunpack.c.l.b16 %v1068
    %v4786 = vunpack.c.h.b16 %v1068
    %v4787 = vunpack.c.l.b16 %v1069
    %v4788 = vunpack.c.h.b16 %v1069
    %v4789 = vunpack.c.l.b16 %v1070
    %v4790 = vunpack.c.h.b16 %v1070
    %v4791 = vunpack.c.l.b16 %v1071
    %v4792 = vunpack.c.h.b16 %v1071
    %v4793 = vunpack.c.l.b16 %v1072
    %v4794 = vunpack.c.l.b16 %v1073
    %v4795 = vunpack.c.h.b16 %v1073
    %v4796 = vunpack.c.l.b16 %v1074
    %v4797 = vunpack.c.h.b16 %v1074
    %v4798 = vunpack.c.l.b16 %v1075
    %v4799 = vunpack.c.h.b16 %v1075
    %v4800 = vunpack.c.l.b16 %v1076
    %v4801 = vunpack.c.h.b16 %v1076
    %v4802 = vunpack.c.l.b16 %v1077
    %v4803 = vunpack.c.h.b16 %v1077
    %v4804 = vunpack.c.l.b16 %v1078
    %v4805 = vunpack.c.h.b16 %v1078
    %v4806 = vunpack.c.l.b16 %v1079
    %v4807 = vunpack.c.l.b16 %v1080
    %v4808 = vunpack.c.h.b16 %v1080
    %v4809 = vunpack.c.l.b16 %v1081
    %v4810 = vunpack.c.h.b16 %v1081
    %v4811 = vunpack.c.l.b16 %v1082
    %v4812 = vunpack.c.h.b16 %v1082
    %v4813 = vunpack.c.l.b16 %v1083
    %v4814 = vunpack.c.h.b16 %v1083
    %v4815 = vunpack.c.l.b16 %v1084
    %v4816 = vunpack.c.h.b16 %v1084
    %v4817 = vunpack.c.l.b16 %v1085
    %v4818 = vunpack.c.h.b16 %v1085
    %v4819 = vunpack.c.l.b16 %v1086
    %v4820 = vunpack.c.l.b16 %v1087
    %v4821 = vunpack.c.h.b16 %v1087
    %v4822 = vunpack.c.l.b16 %v1088
    %v4823 = vunpack.c.h.b16 %v1088
    %v4824 = vunpack.c.l.b16 %v1089
    %v4825 = vunpack.c.h.b16 %v1089
    %v4826 = vunpack.c.l.b16 %v1090
    %v4827 = vunpack.c.h.b16 %v1090
    %v4828 = vunpack.c.l.b16 %v1091
    %v4829 = vunpack.c.h.b16 %v1091
    %v4830 = vunpack.c.l.b16 %v1092
    %v4831 = vunpack.c.h.b16 %v1092
    %v4832 = vunpack.c.l.b16 %v1093
    %v4833 = vunpack.c.l.b16 %v1094
    %v4834 = vunpack.c.h.b16 %v1094
    %v4835 = vunpack.c.l.b16 %v1095
    %v4836 = vunpack.c.h.b16 %v1095
    %v4837 = vunpack.c.l.b16 %v1096
    %v4838 = vunpack.c.h.b16 %v1096
    %v4839 = vunpack.c.l.b16 %v1097
    %v4840 = vunpack.c.h.b16 %v1097
    %v4841 = vunpack.c.l.b16 %v1098
    %v4842 = vunpack.c.h.b16 %v1098
    %v4843 = vunpack.c.l.b16 %v1099
    %v4844 = vunpack.c.h.b16 %v1099
    %v4845 = vunpack.c.l.b16 %v1100
    %v4846 = vunpack.c.l.b16 %v1101
    %v4847 = vunpack.c.h.b16 %v1101
    %v4848 = vunpack.c.l.b16 %v1102
    %v4849 = vunpack.c.h.b16 %v1102
    %v4850 = vunpack.c.l.b16 %v1103
    %v4851 = vunpack.c.h.b16 %v1103
    %v4852 = vunpack.c.l.b16 %v1104
    %v4853 = vunpack.c.h.b16 %v1104
    %v4854 = vunpack.c.l.b16 %v1105
    %v4855 = vunpack.c.h.b16 %v1105
    %v4856 = vunpack.c.l.b16 %v1106
    %v4857 = vunpack.c.h.b16 %v1106
    %v4858 = vunpack.c.l.b16 %v1107
    %v4859 = vunpack.c.l.b16 %v1108
    %v4860 = vunpack.c.h.b16 %v1108
    %v4861 = vunpack.c.l.b16 %v1109
    %v4862 = vunpack.c.h.b16 %v1109
    %v4863 = vunpack.c.l.b16 %v1110
    %v4864 = vunpack.c.h.b16 %v1110
    %v4865 = vunpack.c.l.b16 %v1111
    %v4866 = vunpack.c.h.b16 %v1111
    %v4867 = vunpack.c.l.b16 %v1112
    %v4868 = vunpack.c.h.b16 %v1112
    %v4869 = vunpack.c.l.b16 %v1113
    %v4870 = vunpack.c.h.b16 %v1113
    %v4871 = vunpack.c.l.b16 %v1114
    %v4872 = vunpack.c.l.b16 %v1115
    %v4873 = vunpack.c.h.b16 %v1115
    %v4874 = vunpack.c.l.b16 %v1116
    %v4875 = vunpack.c.h.b16 %v1116
    %v4876 = vunpack.c.l.b16 %v1117
    %v4877 = vunpack.c.h.b16 %v1117
    %v4878 = vunpack.c.l.b16 %v1118
    %v4879 = vunpack.c.h.b16 %v1118
    %v4880 = vunpack.c.l.b16 %v1119
    %v4881 = vunpack.c.h.b16 %v1119
    %v4882 = vunpack.c.l.b16 %v1120
    %v4883 = vunpack.c.h.b16 %v1120
    %v4884 = vunpack.c.l.b16 %v1121
    %v4885 = vunpack.c.l.b16 %v1122
    %v4886 = vunpack.c.h.b16 %v1122
    %v4887 = vunpack.c.l.b16 %v1123
    %v4888 = vunpack.c.h.b16 %v1123
    %v4889 = vunpack.c.l.b16 %v1124
    %v4890 = vunpack.c.h.b16 %v1124
    %v4891 = vunpack.c.l.b16 %v1125
    %v4892 = vunpack.c.h.b16 %v1125
    %v4893 = vunpack.c.l.b16 %v1126
    %v4894 = vunpack.c.h.b16 %v1126
    %v4895 = vunpack.c.l.b16 %v1127
    %v4896 = vunpack.c.h.b16 %v1127
    %v4897 = vunpack.c.l.b16 %v1128
    %v4898 = vunpack.c.l.b16 %v1129
    %v4899 = vunpack.c.h.b16 %v1129
    %v4900 = vunpack.c.l.b16 %v1130
    %v4901 = vunpack.c.h.b16 %v1130
    %v4902 = vunpack.c.l.b16 %v1131
    %v4903 = vunpack.c.h.b16 %v1131
    %v4904 = vunpack.c.l.b16 %v1132
    %v4905 = vunpack.c.h.b16 %v1132
    %v4906 = vunpack.c.l.b16 %v1133
    %v4907 = vunpack.c.h.b16 %v1133
    %v4908 = vunpack.c.l.b16 %v1134
    %v4909 = vunpack.c.h.b16 %v1134
    %v4910 = vunpack.c.l.b16 %v1135
    %v4911 = vunpack.c.l.b16 %v1136
    %v4912 = vunpack.c.h.b16 %v1136
    %v4913 = vunpack.c.l.b16 %v1137
    %v4914 = vunpack.c.h.b16 %v1137
    %v4915 = vunpack.c.l.b16 %v1138
    %v4916 = vunpack.c.h.b16 %v1138
    %v4917 = vunpack.c.l.b16 %v1139
    %v4918 = vunpack.c.h.b16 %v1139
    %v4919 = vunpack.c.l.b16 %v1140
    %v4920 = vunpack.c.h.b16 %v1140
    %v4921 = vunpack.c.l.b16 %v1141
    %v4922 = vunpack.c.h.b16 %v1141
    %v4923 = vunpack.c.l.b16 %v1142
    %v4924 = vunpack.c.l.b16 %v1143
    %v4925 = vunpack.c.h.b16 %v1143
    %v4926 = vunpack.c.l.b16 %v1144
    %v4927 = vunpack.c.h.b16 %v1144
    %v4928 = vunpack.c.l.b16 %v1145
    %v4929 = vunpack.c.h.b16 %v1145
    %v4930 = vunpack.c.l.b16 %v1146
    %v4931 = vunpack.c.h.b16 %v1146
    %v4932 = vunpack.c.l.b16 %v1147
    %v4933 = vunpack.c.h.b16 %v1147
    %v4934 = vunpack.c.l.b16 %v1148
    %v4935 = vunpack.c.h.b16 %v1148
    %v4936 = vunpack.c.l.b16 %v1149
    %v4937 = vunpack.c.l.b16 %v1150
    %v4938 = vunpack.c.h.b16 %v1150
    %v4939 = vunpack.c.l.b16 %v1151
    %v4940 = vunpack.c.h.b16 %v1151
    %v4941 = vunpack.c.l.b16 %v1152
    %v4942 = vunpack.c.h.b16 %v1152
    %v4943 = vunpack.c.l.b16 %v1153
    %v4944 = vunpack.c.h.b16 %v1153
    %v4945 = vunpack.c.l.b16 %v1154
    %v4946 = vunpack.c.h.b16 %v1154
    %v4947 = vunpack.c.l.b16 %v1155
    %v4948 = vunpack.c.h.b16 %v1155
    %v4949 = vunpack.c.l.b16 %v1156
    %v4950 = vunpack.c.l.b16 %v1157
    %v4951 = vunpack.c.h.b16 %v1157
    %v4952 = vunpack.c.l.b16 %v1158
    %v4953 = vunpack.c.h.b16 %v1158
    %v4954 = vunpack.c.l.b16 %v1159
    %v4955 = vunpack.c.h.b16 %v1159
    %v4956 = vunpack.c.l.b16 %v1160
    %v4957 = vunpack.c.h.b16 %v1160
    %v4958 = vunpack.c.l.b16 %v1161
    %v4959 = vunpack.c.h.b16 %v1161
    %v4960 = vunpack.c.l.b16 %v1162
    %v4961 = vunpack.c.h.b16 %v1162
    %v4962 = vunpack.c.l.b16 %v1163
    %v4963 = vunpack.c.l.b16 %v1164
    %v4964 = vunpack.c.h.b16 %v1164
    %v4965 = vunpack.c.l.b16 %v1165
    %v4966 = vunpack.c.h.b16 %v1165
    %v4967 = vunpack.c.l.b16 %v1166
    %v4968 = vunpack.c.h.b16 %v1166
    %v4969 = vunpack.c.l.b16 %v1167
    %v4970 = vunpack.c.h.b16 %v1167
    %v4971 = vunpack.c.l.b16 %v1168
    %v4972 = vunpack.c.h.b16 %v1168
    %v4973 = vunpack.c.l.b16 %v1169
    %v4974 = vunpack.c.h.b16 %v1169
    %v4975 = vunpack.c.l.b16 %v1170
    %v4976 = vunpack.c.l.b16 %v1171
    %v4977 = vunpack.c.h.b16 %v1171
    %v4978 = vunpack.c.l.b16 %v1172
    %v4979 = vunpack.c.h.b16 %v1172
    %v4980 = vunpack.c.l.b16 %v1173
    %v4981 = vunpack.c.h.b16 %v1173
    %v4982 = vunpack.c.l.b16 %v1174
    %v4983 = vunpack.c.h.b16 %v1174
    %v4984 = vunpack.c.l.b16 %v1175
    %v4985 = vunpack.c.h.b16 %v1175
    %v4986 = vunpack.c.l.b16 %v1176
    %v4987 = vunpack.c.h.b16 %v1176
    %v4988 = vunpack.c.l.b16 %v1177
    %v4989 = vunpack.c.l.b16 %v1178
    %v4990 = vunpack.c.h.b16 %v1178
    %v4991 = vunpack.c.l.b16 %v1179
    %v4992 = vunpack.c.h.b16 %v1179
    %v4993 = vunpack.c.l.b16 %v1180
    %v4994 = vunpack.c.h.b16 %v1180
    %v4995 = vunpack.c.l.b16 %v1181
    %v4996 = vunpack.c.h.b16 %v1181
    %v4997 = vunpack.c.l.b16 %v1182
    %v4998 = vunpack.c.h.b16 %v1182
    %v4999 = vunpack.c.l.b16 %v1183
    %v5000 = vunpack.c.h.b16 %v1183
    %v5001 = vunpack.c.l.b16 %v1184
    %v5002 = vunpack.c.l.b16 %v1185
    %v5003 = vunpack.c.h.b16 %v1185
    %v5004 = vunpack.c.l.b16 %v1186
    %v5005 = vunpack.c.h.b16 %v1186
    %v5006 = vunpack.c.l.b16 %v1187
    %v5007 = vunpack.c.h.b16 %v1187
    %v5008 = vunpack.c.l.b16 %v1188
    %v5009 = vunpack.c.h.b16 %v1188
    %v5010 = vunpack.c.l.b16 %v1189
    %v5011 = vunpack.c.h.b16 %v1189
    %v5012 = vunpack.c.l.b16 %v1190
    %v5013 = vunpack.c.h.b16 %v1190
    %v5014 = vunpack.c.l.b16 %v1191
    %v5015 = vunpack.c.l.b16 %v1192
    %v5016 = vunpack.c.h.b16 %v1192
    %v5017 = vunpack.c.l.b16 %v1193
    %v5018 = vunpack.c.h.b16 %v1193
    %v5019 = vunpack.c.l.b16 %v1194
    %v5020 = vunpack.c.h.b16 %v1194
    %v5021 = vunpack.c.l.b16 %v1195
    %v5022 = vunpack.c.h.b16 %v1195
    %v5023 = vunpack.c.l.b16 %v1196
    %v5024 = vunpack.c.h.b16 %v1196
    %v5025 = vunpack.c.l.b16 %v1197
    %v5026 = vunpack.c.h.b16 %v1197
    %v5027 = vunpack.c.l.b16 %v1198
    %v5028 = vunpack.c.l.b16 %v1199
    %v5029 = vunpack.c.h.b16 %v1199
    %v5030 = vunpack.c.l.b16 %v1200
    %v5031 = vunpack.c.h.b16 %v1200
    %v5032 = vunpack.c.l.b16 %v1201
    %v5033 = vunpack.c.h.b16 %v1201
    %v5034 = vunpack.c.l.b16 %v1202
    %v5035 = vunpack.c.h.b16 %v1202
    %v5036 = vunpack.c.l.b16 %v1203
    %v5037 = vunpack.c.h.b16 %v1203
    %v5038 = vunpack.c.l.b16 %v1204
    %v5039 = vunpack.c.h.b16 %v1204
    %v5040 = vunpack.c.l.b16 %v1205
    %v5041 = vunpack.c.l.b16 %v1206
    %v5042 = vunpack.c.h.b16 %v1206
    %v5043 = vunpack.c.l.b16 %v1207
    %v5044 = vunpack.c.h.b16 %v1207
    %v5045 = vunpack.c.l.b16 %v1208
    %v5046 = vunpack.c.h.b16 %v1208
    %v5047 = vunpack.c.l.b16 %v1209
    %v5048 = vunpack.c.h.b16 %v1209
    %v5049 = vunpack.c.l.b16 %v1210
    %v5050 = vunpack.c.h.b16 %v1210
    %v5051 = vunpack.c.l.b16 %v1211
    %v5052 = vunpack.c.h.b16 %v1211
    %v5053 = vunpack.c.l.b16 %v1212
    %v5054 = vunpack.c.l.b16 %v1213
    %v5055 = vunpack.c.h.b16 %v1213
    %v5056 = vunpack.c.l.b16 %v1214
    %v5057 = vunpack.c.h.b16 %v1214
    %v5058 = vunpack.c.l.b16 %v1215
    %v5059 = vunpack.c.h.b16 %v1215
    %v5060 = vunpack.c.l.b16 %v1216
    %v5061 = vunpack.c.h.b16 %v1216
    %v5062 = vunpack.c.l.b16 %v1217
    %v5063 = vunpack.c.h.b16 %v1217
    %v5064 = vunpack.c.l.b16 %v1218
    %v5065 = vunpack.c.h.b16 %v1218
    %v5066 = vunpack.c.l.b16 %v1219
    %v5067 = vunpack.c.l.b16 %v1220
    %v5068 = vunpack.c.h.b16 %v1220
    %v5069 = vunpack.c.l.b16 %v1221
    %v5070 = vunpack.c.h.b16 %v1221
    %v5071 = vunpack.c.l.b16 %v1222
    %v5072 = vunpack.c.h.b16 %v1222
    %v5073 = vunpack.c.l.b16 %v1223
    %v5074 = vunpack.c.h.b16 %v1223
    %v5075 = vunpack.c.l.b16 %v1224
    %v5076 = vunpack.c.h.b16 %v1224
    %v5077 = vunpack.c.l.b16 %v1225
    %v5078 = vunpack.c.h.b16 %v1225
    %v5079 = vunpack.c.l.b16 %v1226
    %v5080 = vunpack.c.l.b16 %v1227
    %v5081 = vunpack.c.h.b16 %v1227
    %v5082 = vunpack.c.l.b16 %v1228
    %v5083 = vunpack.c.h.b16 %v1228
    %v5084 = vunpack.c.l.b16 %v1229
    %v5085 = vunpack.c.h.b16 %v1229
    %v5086 = vunpack.c.l.b16 %v1230
    %v5087 = vunpack.c.h.b16 %v1230
    %v5088 = vunpack.c.l.b16 %v1231
    %v5089 = vunpack.c.h.b16 %v1231
    %v5090 = vunpack.c.l.b16 %v1232
    %v5091 = vunpack.c.h.b16 %v1232
    %v5092 = vunpack.c.l.b16 %v1233
    %v5093 = vunpack.c.l.b16 %v1234
    %v5094 = vunpack.c.h.b16 %v1234
    %v5095 = vunpack.c.l.b16 %v1235
    %v5096 = vunpack.c.h.b16 %v1235
    %v5097 = vunpack.c.l.b16 %v1236
    %v5098 = vunpack.c.h.b16 %v1236
    %v5099 = vunpack.c.l.b16 %v1237
    %v5100 = vunpack.c.h.b16 %v1237
    %v5101 = vunpack.c.l.b16 %v1238
    %v5102 = vunpack.c.h.b16 %v1238
    %v5103 = vunpack.c.l.b16 %v1239
    %v5104 = vunpack.c.h.b16 %v1239
    %v5105 = vunpack.c.l.b16 %v1240
    %v5106 = vunpack.c.l.b16 %v1241
    %v5107 = vunpack.c.h.b16 %v1241
    %v5108 = vunpack.c.l.b16 %v1242
    %v5109 = vunpack.c.h.b16 %v1242
    %v5110 = vunpack.c.l.b16 %v1243
    %v5111 = vunpack.c.h.b16 %v1243
    %v5112 = vunpack.c.l.b16 %v1244
    %v5113 = vunpack.c.h.b16 %v1244
    %v5114 = vunpack.c.l.b16 %v1245
    %v5115 = vunpack.c.h.b16 %v1245
    %v5116 = vunpack.c.l.b16 %v1246
    %v5117 = vunpack.c.h.b16 %v1246
    %v5118 = vunpack.c.l.b16 %v1247
    %v5119 = vunpack.c.l.b16 %v1248
    %v5120 = vunpack.c.h.b16 %v1248
    %v5121 = vunpack.c.l.b16 %v1249
    %v5122 = vunpack.c.h.b16 %v1249
    %v5123 = vunpack.c.l.b16 %v1250
    %v5124 = vunpack.c.h.b16 %v1250
    %v5125 = vunpack.c.l.b16 %v1251
    %v5126 = vunpack.c.h.b16 %v1251
    %v5127 = vunpack.c.l.b16 %v1252
    %v5128 = vunpack.c.h.b16 %v1252
    %v5129 = vunpack.c.l.b16 %v1253
    %v5130 = vunpack.c.h.b16 %v1253
    %v5131 = vunpack.c.l.b16 %v1254
    %v5132 = vunpack.c.l.b16 %v1255
    %v5133 = vunpack.c.h.b16 %v1255
    %v5134 = vunpack.c.l.b16 %v1256
    %v5135 = vunpack.c.h.b16 %v1256
    %v5136 = vunpack.c.l.b16 %v1257
    %v5137 = vunpack.c.h.b16 %v1257
    %v5138 = vunpack.c.l.b16 %v1258
    %v5139 = vunpack.c.h.b16 %v1258
    %v5140 = vunpack.c.l.b16 %v1259
    %v5141 = vunpack.c.h.b16 %v1259
    %v5142 = vunpack.c.l.b16 %v1260
    %v5143 = vunpack.c.h.b16 %v1260
    %v5144 = vunpack.c.l.b16 %v1261
    %v5145 = vunpack.c.l.b16 %v1262
    %v5146 = vunpack.c.h.b16 %v1262
    %v5147 = vunpack.c.l.b16 %v1263
    %v5148 = vunpack.c.h.b16 %v1263
    %v5149 = vunpack.c.l.b16 %v1264
    %v5150 = vunpack.c.h.b16 %v1264
    %v5151 = vunpack.c.l.b16 %v1265
    %v5152 = vunpack.c.h.b16 %v1265
    %v5153 = vunpack.c.l.b16 %v1266
    %v5154 = vunpack.c.h.b16 %v1266
    %v5155 = vunpack.c.l.b16 %v1267
    %v5156 = vunpack.c.h.b16 %v1267
    %v5157 = vunpack.c.l.b16 %v1268
    %v5158 = vunpack.c.l.b16 %v1269
    %v5159 = vunpack.c.h.b16 %v1269
    %v5160 = vunpack.c.l.b16 %v1270
    %v5161 = vunpack.c.h.b16 %v1270
    %v5162 = vunpack.c.l.b16 %v1271
    %v5163 = vunpack.c.h.b16 %v1271
    %v5164 = vunpack.c.l.b16 %v1272
    %v5165 = vunpack.c.h.b16 %v1272
    %v5166 = vunpack.c.l.b16 %v1273
    %v5167 = vunpack.c.h.b16 %v1273
    %v5168 = vunpack.c.l.b16 %v1274
    %v5169 = vunpack.c.h.b16 %v1274
    %v5170 = vunpack.c.l.b16 %v1275
    %v5171 = vunpack.c.l.b16 %v1276
    %v5172 = vunpack.c.h.b16 %v1276
    %v5173 = vunpack.c.l.b16 %v1277
    %v5174 = vunpack.c.h.b16 %v1277
    %v5175 = vunpack.c.l.b16 %v1278
    %v5176 = vunpack.c.h.b16 %v1278
    %v5177 = vunpack.c.l.b16 %v1279
    %v5178 = vunpack.c.h.b16 %v1279
    %v5179 = vunpack.c.l.b16 %v1280
    %v5180 = vunpack.c.h.b16 %v1280
    %v5181 = vunpack.c.l.b16 %v1281
    %v5182 = vunpack.c.h.b16 %v1281
    %v5183 = vunpack.c.l.b16 %v1282
    %v5184 = vunpack.c.l.b16 %v1283
    %v5185 = vunpack.c.h.b16 %v1283
    %v5186 = vunpack.c.l.b16 %v1284
    %v5187 = vunpack.c.h.b16 %v1284
    %v5188 = vunpack.c.l.b16 %v1285
    %v5189 = vunpack.c.h.b16 %v1285
    %v5190 = vunpack.c.l.b16 %v1286
    %v5191 = vunpack.c.h.b16 %v1286
    %v5192 = vunpack.c.l.b16 %v1287
    %v5193 = vunpack.c.h.b16 %v1287
    %v5194 = vunpack.c.l.b16 %v1288
    %v5195 = vunpack.c.h.b16 %v1288
    %v5196 = vunpack.c.l.b16 %v1289
    %v5197 = vunpack.c.l.b16 %v1290
    %v5198 = vunpack.c.h.b16 %v1290
    %v5199 = vunpack.c.l.b16 %v1291
    %v5200 = vunpack.c.h.b16 %v1291
    %v5201 = vunpack.c.l.b16 %v1292
    %v5202 = vunpack.c.h.b16 %v1292
    %v5203 = vunpack.c.l.b16 %v1293
    %v5204 = vunpack.c.h.b16 %v1293
    %v5205 = vunpack.c.l.b16 %v1294
    %v5206 = vunpack.c.h.b16 %v1294
    %v5207 = vunpack.c.l.b16 %v1295
    %v5208 = vunpack.c.h.b16 %v1295
    %v5209 = vunpack.c.l.b16 %v1296
    %v5210 = vunpack.c.l.b16 %v1297
    %v5211 = vunpack.c.h.b16 %v1297
    %v5212 = vunpack.c.l.b16 %v1298
    %v5213 = vunpack.c.h.b16 %v1298
    %v5214 = vunpack.c.l.b16 %v1299
    %v5215 = vunpack.c.h.b16 %v1299
    %v5216 = vunpack.c.l.b16 %v1300
    %v5217 = vunpack.c.h.b16 %v1300
    %v5218 = vunpack.c.l.b16 %v1301
    %v5219 = vunpack.c.h.b16 %v1301
    %v5220 = vunpack.c.l.b16 %v1302
    %v5221 = vunpack.c.h.b16 %v1302
    %v5222 = vunpack.c.l.b16 %v1303
    %v5223 = vunpack.c.l.b16 %v1304
    %v5224 = vunpack.c.h.b16 %v1304
    %v5225 = vunpack.c.l.b16 %v1305
    %v5226 = vunpack.c.h.b16 %v1305
    %v5227 = vunpack.c.l.b16 %v1306
    %v5228 = vunpack.c.h.b16 %v1306
    %v5229 = vunpack.c.l.b16 %v1307
    %v5230 = vunpack.c.h.b16 %v1307
    %v5231 = vunpack.c.l.b16 %v1308
    %v5232 = vunpack.c.h.b16 %v1308
    %v5233 = vunpack.c.l.b16 %v1309
    %v5234 = vunpack.c.h.b16 %v1309
    %v5235 = vunpack.c.l.b16 %v1310
    %v5236 = vunpack.c.l.b16 %v1311
    %v5237 = vunpack.c.h.b16 %v1311
    %v5238 = vunpack.c.l.b16 %v1312
    %v5239 = vunpack.c.h.b16 %v1312
    %v5240 = vunpack.c.l.b16 %v1313
    %v5241 = vunpack.c.h.b16 %v1313
    %v5242 = vunpack.c.l.b16 %v1314
    %v5243 = vunpack.c.h.b16 %v1314
    %v5244 = vunpack.c.l.b16 %v1315
    %v5245 = vunpack.c.h.b16 %v1315
    %v5246 = vunpack.c.l.b16 %v1316
    %v5247 = vunpack.c.h.b16 %v1316
    %v5248 = vunpack.c.l.b16 %v1317
    %v5249 = vunpack.c.l.b16 %v1318
    %v5250 = vunpack.c.h.b16 %v1318
    %v5251 = vunpack.c.l.b16 %v1319
    %v5252 = vunpack.c.h.b16 %v1319
    %v5253 = vunpack.c.l.b16 %v1320
    %v5254 = vunpack.c.h.b16 %v1320
    %v5255 = vunpack.c.l.b16 %v1321
    %v5256 = vunpack.c.h.b16 %v1321
    %v5257 = vunpack.c.l.b16 %v1322
    %v5258 = vunpack.c.h.b16 %v1322
    %v5259 = vunpack.c.l.b16 %v1323
    %v5260 = vunpack.c.h.b16 %v1323
    %v5261 = vunpack.c.l.b16 %v1324
    %v5262 = vunpack.c.l.b16 %v1325
    %v5263 = vunpack.c.h.b16 %v1325
    %v5264 = vunpack.c.l.b16 %v1326
    %v5265 = vunpack.c.h.b16 %v1326
    %v5266 = vunpack.c.l.b16 %v1327
    %v5267 = vunpack.c.h.b16 %v1327
    %v5268 = vunpack.c.l.b16 %v1328
    %v5269 = vunpack.c.h.b16 %v1328
    %v5270 = vunpack.c.l.b16 %v1329
    %v5271 = vunpack.c.h.b16 %v1329
    %v5272 = vunpack.c.l.b16 %v1330
    %v5273 = vunpack.c.h.b16 %v1330
    %v5274 = vunpack.c.l.b16 %v1331
    %v5275 = vunpack.c.l.b16 %v1332
    %v5276 = vunpack.c.h.b16 %v1332
    %v5277 = vunpack.c.l.b16 %v1333
    %v5278 = vunpack.c.h.b16 %v1333
    %v5279 = vunpack.c.l.b16 %v1334
    %v5280 = vunpack.c.h.b16 %v1334
    %v5281 = vunpack.c.l.b16 %v1335
    %v5282 = vunpack.c.h.b16 %v1335
    %v5283 = vunpack.c.l.b16 %v1336
    %v5284 = vunpack.c.h.b16 %v1336
    %v5285 = vunpack.c.l.b16 %v1337
    %v5286 = vunpack.c.h.b16 %v1337
    %v5287 = vunpack.c.l.b16 %v1338
    %v5288 = vunpack.c.l.b16 %v1339
    %v5289 = vunpack.c.h.b16 %v1339
    %v5290 = vunpack.c.l.b16 %v1340
    %v5291 = vunpack.c.h.b16 %v1340
    %v5292 = vunpack.c.l.b16 %v1341
    %v5293 = vunpack.c.h.b16 %v1341
    %v5294 = vunpack.c.l.b16 %v1342
    %v5295 = vunpack.c.h.b16 %v1342
    %v5296 = vunpack.c.l.b16 %v1343
    %v5297 = vunpack.c.h.b16 %v1343
    %v5298 = vunpack.c.l.b16 %v1344
    %v5299 = vunpack.c.h.b16 %v1344
    %v5300 = vunpack.c.l.b16 %v1345
    %v5301 = vunpack.c.l.b16 %v1346
    %v5302 = vunpack.c.h.b16 %v1346
    %v5303 = vunpack.c.l.b16 %v1347
    %v5304 = vunpack.c.h.b16 %v1347
    %v5305 = vunpack.c.l.b16 %v1348
    %v5306 = vunpack.c.h.b16 %v1348
    %v5307 = vunpack.c.l.b16 %v1349
    %v5308 = vunpack.c.h.b16 %v1349
    %v5309 = vunpack.c.l.b16 %v1350
    %v5310 = vunpack.c.h.b16 %v1350
    %v5311 = vunpack.c.l.b16 %v1351
    %v5312 = vunpack.c.h.b16 %v1351
    %v5313 = vunpack.c.l.b16 %v1352
    %v5314 = vunpack.c.l.b16 %v1353
    %v5315 = vunpack.c.h.b16 %v1353
    %v5316 = vunpack.c.l.b16 %v1354
    %v5317 = vunpack.c.h.b16 %v1354
    %v5318 = vunpack.c.l.b16 %v1355
    %v5319 = vunpack.c.h.b16 %v1355
    %v5320 = vunpack.c.l.b16 %v1356
    %v5321 = vunpack.c.h.b16 %v1356
    %v5322 = vunpack.c.l.b16 %v1357
    %v5323 = vunpack.c.h.b16 %v1357
    %v5324 = vunpack.c.l.b16 %v1358
    %v5325 = vunpack.c.h.b16 %v1358
    %v5326 = vunpack.c.l.b16 %v1359
    %v5327 = vunpack.c.l.b16 %v1360
    %v5328 = vunpack.c.h.b16 %v1360
    %v5329 = vunpack.c.l.b16 %v1361
    %v5330 = vunpack.c.h.b16 %v1361
    %v5331 = vunpack.c.l.b16 %v1362
    %v5332 = vunpack.c.h.b16 %v1362
    %v5333 = vunpack.c.l.b16 %v1363
    %v5334 = vunpack.c.h.b16 %v1363
    %v5335 = vunpack.c.l.b16 %v1364
    %v5336 = vunpack.c.h.b16 %v1364
    %v5337 = vunpack.c.l.b16 %v1365
    %v5338 = vunpack.c.h.b16 %v1365
    %v5339 = vunpack.c.l.b16 %v1366
    %v5340 = vunpack.c.l.b16 %v1367
    %v5341 = vunpack.c.h.b16 %v1367
    %v5342 = vunpack.c.l.b16 %v1368
    %v5343 = vunpack.c.h.b16 %v1368
    %v5344 = vunpack.c.l.b16 %v1369
    %v5345 = vunpack.c.h.b16 %v1369
    %v5346 = vunpack.c.l.b16 %v1370
    %v5347 = vunpack.c.h.b16 %v1370
    %v5348 = vunpack.c.l.b16 %v1371
    %v5349 = vunpack.c.h.b16 %v1371
    %v5350 = vunpack.c.l.b16 %v1372
    %v5351 = vunpack.c.h.b16 %v1372
    %v5352 = vunpack.c.l.b16 %v1373
    %v5353 = vunpack.c.l.b16 %v1374
    %v5354 = vunpack.c.h.b16 %v1374
    %v5355 = vunpack.c.l.b16 %v1375
    %v5356 = vunpack.c.h.b16 %v1375
    %v5357 = vunpack.c.l.b16 %v1376
    %v5358 = vunpack.c.h.b16 %v1376
    %v5359 = vunpack.c.l.b16 %v1377
    %v5360 = vunpack.c.h.b16 %v1377
    %v5361 = vunpack.c.l.b16 %v1378
    %v5362 = vunpack.c.h.b16 %v1378
    %v5363 = vunpack.c.l.b16 %v1379
    %v5364 = vunpack.c.h.b16 %v1379
    %v5365 = vunpack.c.l.b16 %v1380
    %v5366 = vunpack.c.l.b16 %v1381
    %v5367 = vunpack.c.h.b16 %v1381
    %v5368 = vunpack.c.l.b16 %v1382
    %v5369 = vunpack.c.h.b16 %v1382
    %v5370 = vunpack.c.l.b16 %v1383
    %v5371 = vunpack.c.h.b16 %v1383
    %v5372 = vunpack.c.l.b16 %v1384
    %v5373 = vunpack.c.h.b16 %v1384
    %v5374 = vunpack.c.l.b16 %v1385
    %v5375 = vunpack.c.h.b16 %v1385
    %v5376 = vunpack.c.l.b16 %v1386
    %v5377 = vunpack.c.h.b16 %v1386
    %v5378 = vunpack.c.l.b16 %v1387
    %v5379 = vunpack.c.l.b16 %v1388
    %v5380 = vunpack.c.h.b16 %v1388
    %v5381 = vunpack.c.l.b16 %v1389
    %v5382 = vunpack.c.h.b16 %v1389
    %v5383 = vunpack.c.l.b16 %v1390
    %v5384 = vunpack.c.h.b16 %v1390
    %v5385 = vunpack.c.l.b16 %v1391
    %v5386 = vunpack.c.h.b16 %v1391
    %v5387 = vunpack.c.l.b16 %v1392
    %v5388 = vunpack.c.h.b16 %v1392
    %v5389 = vunpack.c.l.b16 %v1393
    %v5390 = vunpack.c.h.b16 %v1393
    %v5391 = vunpack.c.l.b16 %v1394
    %v5392 = vunpack.c.l.b16 %v1395
    %v5393 = vunpack.c.h.b16 %v1395
    %v5394 = vunpack.c.l.b16 %v1396
    %v5395 = vunpack.c.h.b16 %v1396
    %v5396 = vunpack.c.l.b16 %v1397
    %v5397 = vunpack.c.h.b16 %v1397
    %v5398 = vunpack.c.l.b16 %v1398
    %v5399 = vunpack.c.h.b16 %v1398
    %v5400 = vunpack.c.l.b16 %v1399
    %v5401 = vunpack.c.h.b16 %v1399
    %v5402 = vunpack.c.l.b16 %v1400
    %v5403 = vunpack.c.h.b16 %v1400
    %v5404 = vunpack.c.l.b16 %v1401
    %v5405 = vunpack.c.l.b16 %v1402
    %v5406 = vunpack.c.h.b16 %v1402
    %v5407 = vunpack.c.l.b16 %v1403
    %v5408 = vunpack.c.h.b16 %v1403
    %v5409 = vunpack.c.l.b16 %v1404
    %v5410 = vunpack.c.h.b16 %v1404
    %v5411 = vunpack.c.l.b16 %v1405
    %v5412 = vunpack.c.h.b16 %v1405
    %v5413 = vunpack.c.l.b16 %v1406
    %v5414 = vunpack.c.h.b16 %v1406
    %v5415 = vunpack.c.l.b16 %v1407
    %v5416 = vunpack.c.h.b16 %v1407
    %v5417 = vunpack.c.l.b16 %v1408
    %v5418 = vunpack.c.l.b16 %v1409
    %v5419 = vunpack.c.h.b16 %v1409
    %v5420 = vunpack.c.l.b16 %v1410
    %v5421 = vunpack.c.h.b16 %v1410
    %v5422 = vunpack.c.l.b16 %v1411
    %v5423 = vunpack.c.h.b16 %v1411
    %v5424 = vunpack.c.l.b16 %v1412
    %v5425 = vunpack.c.h.b16 %v1412
    %v5426 = vunpack.c.l.b16 %v1413
    %v5427 = vunpack.c.h.b16 %v1413
    %v5428 = vunpack.c.l.b16 %v1414
    %v5429 = vunpack.c.h.b16 %v1414
    %v5430 = vunpack.c.l.b16 %v1415
    %v5431 = vunpack.c.l.b16 %v1416
    %v5432 = vunpack.c.h.b16 %v1416
    %v5433 = vunpack.c.l.b16 %v1417
    %v5434 = vunpack.c.h.b16 %v1417
    %v5435 = vunpack.c.l.b16 %v1418
    %v5436 = vunpack.c.h.b16 %v1418
    %v5437 = vunpack.c.l.b16 %v1419
    %v5438 = vunpack.c.h.b16 %v1419
    %v5439 = vunpack.c.l.b16 %v1420
    %v5440 = vunpack.c.h.b16 %v1420
    %v5441 = vunpack.c.l.b16 %v1421
    %v5442 = vunpack.c.h.b16 %v1421
    %v5443 = vunpack.c.l.b16 %v1422
    %v5444 = vunpack.c.l.b16 %v1423
    %v5445 = vunpack.c.h.b16 %v1423
    %v5446 = vunpack.c.l.b16 %v1424
    %v5447 = vunpack.c.h.b16 %v1424
    %v5448 = vunpack.c.l.b16 %v1425
    %v5449 = vunpack.c.h.b16 %v1425
    %v5450 = vunpack.c.l.b16 %v1426
    %v5451 = vunpack.c.h.b16 %v1426
    %v5452 = vunpack.c.l.b16 %v1427
    %v5453 = vunpack.c.h.b16 %v1427
    %v5454 = vunpack.c.l.b16 %v1428
    %v5455 = vunpack.c.h.b16 %v1428
    %v5456 = vunpack.c.l.b16 %v1429
    %v5457 = vunpack.c.l.b16 %v1430
    %v5458 = vunpack.c.h.b16 %v1430
    %v5459 = vunpack.c.l.b16 %v1431
    %v5460 = vunpack.c.h.b16 %v1431
    %v5461 = vunpack.c.l.b16 %v1432
    %v5462 = vunpack.c.h.b16 %v1432
    %v5463 = vunpack.c.l.b16 %v1433
    %v5464 = vunpack.c.h.b16 %v1433
    %v5465 = vunpack.c.l.b16 %v1434
    %v5466 = vunpack.c.h.b16 %v1434
    %v5467 = vunpack.c.l.b16 %v1435
    %v5468 = vunpack.c.h.b16 %v1435
    %v5469 = vunpack.c.l.b16 %v1436
    %v5470 = vunpack.c.l.b16 %v1437
    %v5471 = vunpack.c.h.b16 %v1437
    %v5472 = vunpack.c.l.b16 %v1438
    %v5473 = vunpack.c.h.b16 %v1438
    %v5474 = vunpack.c.l.b16 %v1439
    %v5475 = vunpack.c.h.b16 %v1439
    %v5476 = vunpack.c.l.b16 %v1440
    %v5477 = vunpack.c.h.b16 %v1440
    %v5478 = vunpack.c.l.b16 %v1441
    %v5479 = vunpack.c.h.b16 %v1441
    %v5480 = vunpack.c.l.b16 %v1442
    %v5481 = vunpack.c.h.b16 %v1442
    %v5482 = vunpack.c.l.b16 %v1443
    %v5483 = vunpack.c.l.b16 %v1444
    %v5484 = vunpack.c.h.b16 %v1444
    %v5485 = vunpack.c.l.b16 %v1445
    %v5486 = vunpack.c.h.b16 %v1445
    %v5487 = vunpack.c.l.b16 %v1446
    %v5488 = vunpack.c.h.b16 %v1446
    %v5489 = vunpack.c.l.b16 %v1447
    %v5490 = vunpack.c.h.b16 %v1447
    %v5491 = vunpack.c.l.b16 %v1448
    %v5492 = vunpack.c.h.b16 %v1448
    %v5493 = vunpack.c.l.b16 %v1449
    %v5494 = vunpack.c.h.b16 %v1449
    %v5495 = vunpack.c.l.b16 %v1450
    %v5496 = vunpack.c.l.b16 %v1451
    %v5497 = vunpack.c.h.b16 %v1451
    %v5498 = vunpack.c.l.b16 %v1452
    %v5499 = vunpack.c.h.b16 %v1452
    %v5500 = vunpack.c.l.b16 %v1453
    %v5501 = vunpack.c.h.b16 %v1453
    %v5502 = vunpack.c.l.b16 %v1454
    %v5503 = vunpack.c.h.b16 %v1454
    %v5504 = vunpack.c.l.b16 %v1455
    %v5505 = vunpack.c.h.b16 %v1455
    %v5506 = vunpack.c.l.b16 %v1456
    %v5507 = vunpack.c.h.b16 %v1456
    %v5508 = vunpack.c.l.b16 %v1457
    %v5509 = vunpack.c.l.b16 %v1458
    %v5510 = vunpack.c.h.b16 %v1458
    %v5511 = vunpack.c.l.b16 %v1459
    %v5512 = vunpack.c.h.b16 %v1459
    %v5513 = vunpack.c.l.b16 %v1460
    %v5514 = vunpack.c.h.b16 %v1460
    %v5515 = vunpack.c.l.b16 %v1461
    %v5516 = vunpack.c.h.b16 %v1461
    %v5517 = vunpack.c.l.b16 %v1462
    %v5518 = vunpack.c.h.b16 %v1462
    %v5519 = vunpack.c.l.b16 %v1463
    %v5520 = vunpack.c.h.b16 %v1463
    %v5521 = vunpack.c.l.b16 %v1464
    %v5522 = vunpack.c.l.b16 %v1465
    %v5523 = vunpack.c.h.b16 %v1465
    %v5524 = vunpack.c.l.b16 %v1466
    %v5525 = vunpack.c.h.b16 %v1466
    %v5526 = vunpack.c.l.b16 %v1467
    %v5527 = vunpack.c.h.b16 %v1467
    %v5528 = vunpack.c.l.b16 %v1468
    %v5529 = vunpack.c.h.b16 %v1468
    %v5530 = vunpack.c.l.b16 %v1469
    %v5531 = vunpack.c.h.b16 %v1469
    %v5532 = vunpack.c.l.b16 %v1470
    %v5533 = vunpack.c.h.b16 %v1470
    %v5534 = vunpack.c.l.b16 %v1471
    %v5535 = vunpack.c.l.b16 %v1472
    %v5536 = vunpack.c.h.b16 %v1472
    %v5537 = vunpack.c.l.b16 %v1473
    %v5538 = vunpack.c.h.b16 %v1473
    %v5539 = vunpack.c.l.b16 %v1474
    %v5540 = vunpack.c.h.b16 %v1474
    %v5541 = vunpack.c.l.b16 %v1475
    %v5542 = vunpack.c.h.b16 %v1475
    %v5543 = vunpack.c.l.b16 %v1476
    %v5544 = vunpack.c.h.b16 %v1476
    %v5545 = vunpack.c.l.b16 %v1477
    %v5546 = vunpack.c.h.b16 %v1477
    %v5547 = vunpack.c.l.b16 %v1478
    %v5548 = vpack.c.b16 %v2961, %v2948
    %v5549 = vpack.c.b16 %v2962, %v2949
    %v5550 = vpack.c.b16 %v2963, %v2950
    %v5551 = vpack.c.b16 %v2964, %v2951
    %v5552 = vpack.c.b16 %v2965, %v2952
    %v5553 = vpack.c.b16 %v2966, %v2953
    %v5554 = vpack.c.b16 %v2967, %v2954
    %v5555 = vpack.c.b16 %v2968, %v2955
    %v5556 = vpack.c.b16 %v2969, %v2956
    %v5557 = vpack.c.b16 %v2970, %v2957
    %v5558 = vpack.c.b16 %v2971, %v2958
    %v5559 = vpack.c.b16 %v2972, %v2959
    %v5560 = vpack.c.b16 %v2973, %v2960
    %v5561 = vpack.c.b16 %v2987, %v2974
    %v5562 = vpack.c.b16 %v2988, %v2975
    %v5563 = vpack.c.b16 %v2989, %v2976
    %v5564 = vpack.c.b16 %v2990, %v2977
    %v5565 = vpack.c.b16 %v2991, %v2978
    %v5566 = vpack.c.b16 %v2992, %v2979
    %v5567 = vpack.c.b16 %v2993, %v2980
    %v5568 = vpack.c.b16 %v2994, %v2981
    %v5569 = vpack.c.b16 %v2995, %v2982
    %v5570 = vpack.c.b16 %v2996, %v2983
    %v5571 = vpack.c.b16 %v2997, %v2984
    %v5572 = vpack.c.b16 %v2998, %v2985
    %v5573 = vpack.c.b16 %v2999, %v2986
    %v5574 = vpack.c.b16 %v3013, %v3000
    %v5575 = vpack.c.b16 %v3014, %v3001
    %v5576 = vpack.c.b16 %v3015, %v3002
    %v5577 = vpack.c.b16 %v3016, %v3003
    %v5578 = vpack.c.b16 %v3017, %v3004
    %v5579 = vpack.c.b16 %v3018, %v3005
    %v5580 = vpack.c.b16 %v3019, %v3006
    %v5581 = vpack.c.b16 %v3020, %v3007
    %v5582 = vpack.c.b16 %v3021, %v3008
    %v5583 = vpack.c.b16 %v3022, %v3009
    %v5584 = vpack.c.b16 %v3023, %v3010
    %v5585 = vpack.c.b16 %v3024, %v3011
    %v5586 = vpack.c.b16 %v3025, %v3012
    %v5587 = vpack.c.b16 %v3039, %v3026
    %v5588 = vpack.c.b16 %v3040, %v3027
    %v5589 = vpack.c.b16 %v3041, %v3028
    %v5590 = vpack.c.b16 %v3042, %v3029
    %v5591 = vpack.c.b16 %v3043, %v3030
    %v5592 = vpack.c.b16 %v3044, %v3031
    %v5593 = vpack.c.b16 %v3045, %v3032
    %v5594 = vpack.c.b16 %v3046, %v3033
    %v5595 = vpack.c.b16 %v3047, %v3034
    %v5596 = vpack.c.b16 %v3048, %v3035
    %v5597 = vpack.c.b16 %v3049, %v3036
    %v5598 = vpack.c.b16 %v3050, %v3037
    %v5599 = vpack.c.b16 %v3051, %v3038
    %v5600 = vpack.c.b16 %v3065, %v3052
    %v5601 = vpack.c.b16 %v3066, %v3053
    %v5602 = vpack.c.b16 %v3067, %v3054
    %v5603 = vpack.c.b16 %v3068, %v3055
    %v5604 = vpack.c.b16 %v3069, %v3056
    %v5605 = vpack.c.b16 %v3070, %v3057
    %v5606 = vpack.c.b16 %v3071, %v3058
    %v5607 = vpack.c.b16 %v3072, %v3059
    %v5608 = vpack.c.b16 %v3073, %v3060
    %v5609 = vpack.c.b16 %v3074, %v3061
    %v5610 = vpack.c.b16 %v3075, %v3062
    %v5611 = vpack.c.b16 %v3076, %v3063
    %v5612 = vpack.c.b16 %v3077, %v3064
    %v5613 = vpack.c.b16 %v3091, %v3078
    %v5614 = vpack.c.b16 %v3092, %v3079
    %v5615 = vpack.c.b16 %v3093, %v3080
    %v5616 = vpack.c.b16 %v3094, %v3081
    %v5617 = vpack.c.b16 %v3095, %v3082
    %v5618 = vpack.c.b16 %v3096, %v3083
    %v5619 = vpack.c.b16 %v3097, %v3084
    %v5620 = vpack.c.b16 %v3098, %v3085
    %v5621 = vpack.c.b16 %v3099, %v3086
    %v5622 = vpack.c.b16 %v3100, %v3087
    %v5623 = vpack.c.b16 %v3101, %v3088
    %v5624 = vpack.c.b16 %v3102, %v3089
    %v5625 = vpack.c.b16 %v3103, %v3090
    %v5626 = vpack.c.b16 %v3117, %v3104
    %v5627 = vpack.c.b16 %v3118, %v3105
    %v5628 = vpack.c.b16 %v3119, %v3106
    %v5629 = vpack.c.b16 %v3120, %v3107
    %v5630 = vpack.c.b16 %v3121, %v3108
    %v5631 = vpack.c.b16 %v3122, %v3109
    %v5632 = vpack.c.b16 %v3123, %v3110
    %v5633 = vpack.c.b16 %v3124, %v3111
    %v5634 = vpack.c.b16 %v3125, %v3112
    %v5635 = vpack.c.b16 %v3126, %v3113
    %v5636 = vpack.c.b16 %v3127, %v3114
    %v5637 = vpack.c.b16 %v3128, %v3115
    %v5638 = vpack.c.b16 %v3129, %v3116
    %v5639 = vpack.c.b16 %v3143, %v3130
    %v5640 = vpack.c.b16 %v3144, %v3131
    %v5641 = vpack.c.b16 %v3145, %v3132
    %v5642 = vpack.c.b16 %v3146, %v3133
    %v5643 = vpack.c.b16 %v3147, %v3134
    %v5644 = vpack.c.b16 %v3148, %v3135
    %v5645 = vpack.c.b16 %v3149, %v3136
    %v5646 = vpack.c.b16 %v3150, %v3137
    %v5647 = vpack.c.b16 %v3151, %v3138
    %v5648 = vpack.c.b16 %v3152, %v3139
    %v5649 = vpack.c.b16 %v3153, %v3140
    %v5650 = vpack.c.b16 %v3154, %v3141
    %v5651 = vpack.c.b16 %v3155, %v3142
    %v5652 = vpack.c.b16 %v3169, %v3156
    %v5653 = vpack.c.b16 %v3170, %v3157
    %v5654 = vpack.c.b16 %v3171, %v3158
    %v5655 = vpack.c.b16 %v3172, %v3159
    %v5656 = vpack.c.b16 %v3173, %v3160
    %v5657 = vpack.c.b16 %v3174, %v3161
    %v5658 = vpack.c.b16 %v3175, %v3162
    %v5659 = vpack.c.b16 %v3176, %v3163
    %v5660 = vpack.c.b16 %v3177, %v3164
    %v5661 = vpack.c.b16 %v3178, %v3165
    %v5662 = vpack.c.b16 %v3179, %v3166
    %v5663 = vpack.c.b16 %v3180, %v3167
    %v5664 = vpack.c.b16 %v3181, %v3168
    %v5665 = vpack.c.b16 %v3195, %v3182
    %v5666 = vpack.c.b16 %v3196, %v3183
    %v5667 = vpack.c.b16 %v3197, %v3184
    %v5668 = vpack.c.b16 %v3198, %v3185
    %v5669 = vpack.c.b16 %v3199, %v3186
    %v5670 = vpack.c.b16 %v3200, %v3187
    %v5671 = vpack.c.b16 %v3201, %v3188
    %v5672 = vpack.c.b16 %v3202, %v3189
    %v5673 = vpack.c.b16 %v3203, %v3190
    %v5674 = vpack.c.b16 %v3204, %v3191
    %v5675 = vpack.c.b16 %v3205, %v3192
    %v5676 = vpack.c.b16 %v3206, %v3193
    %v5677 = vpack.c.b16 %v3207, %v3194
    %v5678 = vpack.c.b16 %v3221, %v3208
    %v5679 = vpack.c.b16 %v3222, %v3209
    %v5680 = vpack.c.b16 %v3223, %v3210
    %v5681 = vpack.c.b16 %v3224, %v3211
    %v5682 = vpack.c.b16 %v3225, %v3212
    %v5683 = vpack.c.b16 %v3226, %v3213
    %v5684 = vpack.c.b16 %v3227, %v3214
    %v5685 = vpack.c.b16 %v3228, %v3215
    %v5686 = vpack.c.b16 %v3229, %v3216
    %v5687 = vpack.c.b16 %v3230, %v3217
    %v5688 = vpack.c.b16 %v3231, %v3218
    %v5689 = vpack.c.b16 %v3232, %v3219
    %v5690 = vpack.c.b16 %v3233, %v3220
    %v5691 = vpack.c.b16 %v3247, %v3234
    %v5692 = vpack.c.b16 %v3248, %v3235
    %v5693 = vpack.c.b16 %v3249, %v3236
    %v5694 = vpack.c.b16 %v3250, %v3237
    %v5695 = vpack.c.b16 %v3251, %v3238
    %v5696 = vpack.c.b16 %v3252, %v3239
    %v5697 = vpack.c.b16 %v3253, %v3240
    %v5698 = vpack.c.b16 %v3254, %v3241
    %v5699 = vpack.c.b16 %v3255, %v3242
    %v5700 = vpack.c.b16 %v3256, %v3243
    %v5701 = vpack.c.b16 %v3257, %v3244
    %v5702 = vpack.c.b16 %v3258, %v3245
    %v5703 = vpack.c.b16 %v3259, %v3246
    %v5704 = vpack.c.b16 %v3273, %v3260
    %v5705 = vpack.c.b16 %v3274, %v3261
    %v5706 = vpack.c.b16 %v3275, %v3262
    %v5707 = vpack.c.b16 %v3276, %v3263
    %v5708 = vpack.c.b16 %v3277, %v3264
    %v5709 = vpack.c.b16 %v3278, %v3265
    %v5710 = vpack.c.b16 %v3279, %v3266
    %v5711 = vpack.c.b16 %v3280, %v3267
    %v5712 = vpack.c.b16 %v3281, %v3268
    %v5713 = vpack.c.b16 %v3282, %v3269
    %v5714 = vpack.c.b16 %v3283, %v3270
    %v5715 = vpack.c.b16 %v3284, %v3271
    %v5716 = vpack.c.b16 %v3285, %v3272
    %v5717 = vpack.c.b16 %v3299, %v3286
    %v5718 = vpack.c.b16 %v3300, %v3287
    %v5719 = vpack.c.b16 %v3301, %v3288
    %v5720 = vpack.c.b16 %v3302, %v3289
    %v5721 = vpack.c.b16 %v3303, %v3290
    %v5722 = vpack.c.b16 %v3304, %v3291
    %v5723 = vpack.c.b16 %v3305, %v3292
    %v5724 = vpack.c.b16 %v3306, %v3293
    %v5725 = vpack.c.b16 %v3307, %v3294
    %v5726 = vpack.c.b16 %v3308, %v3295
    %v5727 = vpack.c.b16 %v3309, %v3296
    %v5728 = vpack.c.b16 %v3310, %v3297
    %v5729 = vpack.c.b16 %v3311, %v3298
    %v5730 = vpack.c.b16 %v3325, %v3312
    %v5731 = vpack.c.b16 %v3326, %v3313
    %v5732 = vpack.c.b16 %v3327, %v3314
    %v5733 = vpack.c.b16 %v3328, %v3315
    %v5734 = vpack.c.b16 %v3329, %v3316
    %v5735 = vpack.c.b16 %v3330, %v3317
    %v5736 = vpack.c.b16 %v3331, %v3318
    %v5737 = vpack.c.b16 %v3332, %v3319
    %v5738 = vpack.c.b16 %v3333, %v3320
    %v5739 = vpack.c.b16 %v3334, %v3321
    %v5740 = vpack.c.b16 %v3335, %v3322
    %v5741 = vpack.c.b16 %v3336, %v3323
    %v5742 = vpack.c.b16 %v3337, %v3324
    %v5743 = vpack.c.b16 %v3351, %v3338
    %v5744 = vpack.c.b16 %v3352, %v3339
    %v5745 = vpack.c.b16 %v3353, %v3340
    %v5746 = vpack.c.b16 %v3354, %v3341
    %v5747 = vpack.c.b16 %v3355, %v3342
    %v5748 = vpack.c.b16 %v3356, %v3343
    %v5749 = vpack.c.b16 %v3357, %v3344
    %v5750 = vpack.c.b16 %v3358, %v3345
    %v5751 = vpack.c.b16 %v3359, %v3346
    %v5752 = vpack.c.b16 %v3360, %v3347
    %v5753 = vpack.c.b16 %v3361, %v3348
    %v5754 = vpack.c.b16 %v3362, %v3349
    %v5755 = vpack.c.b16 %v3363, %v3350
    %v5756 = vpack.c.b16 %v3377, %v3364
    %v5757 = vpack.c.b16 %v3378, %v3365
    %v5758 = vpack.c.b16 %v3379, %v3366
    %v5759 = vpack.c.b16 %v3380, %v3367
    %v5760 = vpack.c.b16 %v3381, %v3368
    %v5761 = vpack.c.b16 %v3382, %v3369
    %v5762 = vpack.c.b16 %v3383, %v3370
    %v5763 = vpack.c.b16 %v3384, %v3371
    %v5764 = vpack.c.b16 %v3385, %v3372
    %v5765 = vpack.c.b16 %v3386, %v3373
    %v5766 = vpack.c.b16 %v3387, %v3374
    %v5767 = vpack.c.b16 %v3388, %v3375
    %v5768 = vpack.c.b16 %v3389, %v3376
    %v5769 = vpack.c.b16 %v3403, %v3390
    %v5770 = vpack.c.b16 %v3404, %v3391
    %v5771 = vpack.c.b16 %v3405, %v3392
    %v5772 = vpack.c.b16 %v3406, %v3393
    %v5773 = vpack.c.b16 %v3407, %v3394
    %v5774 = vpack.c.b16 %v3408, %v3395
    %v5775 = vpack.c.b16 %v3409, %v3396
    %v5776 = vpack.c.b16 %v3410, %v3397
    %v5777 = vpack.c.b16 %v3411, %v3398
    %v5778 = vpack.c.b16 %v3412, %v3399
    %v5779 = vpack.c.b16 %v3413, %v3400
    %v5780 = vpack.c.b16 %v3414, %v3401
    %v5781 = vpack.c.b16 %v3415, %v3402
    %v5782 = vpack.c.b16 %v3429, %v3416
    %v5783 = vpack.c.b16 %v3430, %v3417
    %v5784 = vpack.c.b16 %v3431, %v3418
    %v5785 = vpack.c.b16 %v3432, %v3419
    %v5786 = vpack.c.b16 %v3433, %v3420
    %v5787 = vpack.c.b16 %v3434, %v3421
    %v5788 = vpack.c.b16 %v3435, %v3422
    %v5789 = vpack.c.b16 %v3436, %v3423
    %v5790 = vpack.c.b16 %v3437, %v3424
    %v5791 = vpack.c.b16 %v3438, %v3425
    %v5792 = vpack.c.b16 %v3439, %v3426
    %v5793 = vpack.c.b16 %v3440, %v3427
    %v5794 = vpack.c.b16 %v3441, %v3428
    %v5795 = vpack.c.b16 %v3455, %v3442
    %v5796 = vpack.c.b16 %v3456, %v3443
    %v5797 = vpack.c.b16 %v3457, %v3444
    %v5798 = vpack.c.b16 %v3458, %v3445
    %v5799 = vpack.c.b16 %v3459, %v3446
    %v5800 = vpack.c.b16 %v3460, %v3447
    %v5801 = vpack.c.b16 %v3461, %v3448
    %v5802 = vpack.c.b16 %v3462, %v3449
    %v5803 = vpack.c.b16 %v3463, %v3450
    %v5804 = vpack.c.b16 %v3464, %v3451
    %v5805 = vpack.c.b16 %v3465, %v3452
    %v5806 = vpack.c.b16 %v3466, %v3453
    %v5807 = vpack.c.b16 %v3467, %v3454
    %v5808 = vpack.c.b16 %v3481, %v3468
    %v5809 = vpack.c.b16 %v3482, %v3469
    %v5810 = vpack.c.b16 %v3483, %v3470
    %v5811 = vpack.c.b16 %v3484, %v3471
    %v5812 = vpack.c.b16 %v3485, %v3472
    %v5813 = vpack.c.b16 %v3486, %v3473
    %v5814 = vpack.c.b16 %v3487, %v3474
    %v5815 = vpack.c.b16 %v3488, %v3475
    %v5816 = vpack.c.b16 %v3489, %v3476
    %v5817 = vpack.c.b16 %v3490, %v3477
    %v5818 = vpack.c.b16 %v3491, %v3478
    %v5819 = vpack.c.b16 %v3492, %v3479
    %v5820 = vpack.c.b16 %v3493, %v3480
    %v5821 = vpack.c.b16 %v3507, %v3494
    %v5822 = vpack.c.b16 %v3508, %v3495
    %v5823 = vpack.c.b16 %v3509, %v3496
    %v5824 = vpack.c.b16 %v3510, %v3497
    %v5825 = vpack.c.b16 %v3511, %v3498
    %v5826 = vpack.c.b16 %v3512, %v3499
    %v5827 = vpack.c.b16 %v3513, %v3500
    %v5828 = vpack.c.b16 %v3514, %v3501
    %v5829 = vpack.c.b16 %v3515, %v3502
    %v5830 = vpack.c.b16 %v3516, %v3503
    %v5831 = vpack.c.b16 %v3517, %v3504
    %v5832 = vpack.c.b16 %v3518, %v3505
    %v5833 = vpack.c.b16 %v3519, %v3506
    %v5834 = vpack.c.b16 %v3533, %v3520
    %v5835 = vpack.c.b16 %v3534, %v3521
    %v5836 = vpack.c.b16 %v3535, %v3522
    %v5837 = vpack.c.b16 %v3536, %v3523
    %v5838 = vpack.c.b16 %v3537, %v3524
    %v5839 = vpack.c.b16 %v3538, %v3525
    %v5840 = vpack.c.b16 %v3539, %v3526
    %v5841 = vpack.c.b16 %v3540, %v3527
    %v5842 = vpack.c.b16 %v3541, %v3528
    %v5843 = vpack.c.b16 %v3542, %v3529
    %v5844 = vpack.c.b16 %v3543, %v3530
    %v5845 = vpack.c.b16 %v3544, %v3531
    %v5846 = vpack.c.b16 %v3545, %v3532
    %v5847 = vpack.c.b16 %v3559, %v3546
    %v5848 = vpack.c.b16 %v3560, %v3547
    %v5849 = vpack.c.b16 %v3561, %v3548
    %v5850 = vpack.c.b16 %v3562, %v3549
    %v5851 = vpack.c.b16 %v3563, %v3550
    %v5852 = vpack.c.b16 %v3564, %v3551
    %v5853 = vpack.c.b16 %v3565, %v3552
    %v5854 = vpack.c.b16 %v3566, %v3553
    %v5855 = vpack.c.b16 %v3567, %v3554
    %v5856 = vpack.c.b16 %v3568, %v3555
    %v5857 = vpack.c.b16 %v3569, %v3556
    %v5858 = vpack.c.b16 %v3570, %v3557
    %v5859 = vpack.c.b16 %v3571, %v3558
    %v5860 = vpack.c.b16 %v3585, %v3572
    %v5861 = vpack.c.b16 %v3586, %v3573
    %v5862 = vpack.c.b16 %v3587, %v3574
    %v5863 = vpack.c.b16 %v3588, %v3575
    %v5864 = vpack.c.b16 %v3589, %v3576
    %v5865 = vpack.c.b16 %v3590, %v3577
    %v5866 = vpack.c.b16 %v3591, %v3578
    %v5867 = vpack.c.b16 %v3592, %v3579
    %v5868 = vpack.c.b16 %v3593, %v3580
    %v5869 = vpack.c.b16 %v3594, %v3581
    %v5870 = vpack.c.b16 %v3595, %v3582
    %v5871 = vpack.c.b16 %v3596, %v3583
    %v5872 = vpack.c.b16 %v3597, %v3584
    %v5873 = vpack.c.b16 %v3611, %v3598
    %v5874 = vpack.c.b16 %v3612, %v3599
    %v5875 = vpack.c.b16 %v3613, %v3600
    %v5876 = vpack.c.b16 %v3614, %v3601
    %v5877 = vpack.c.b16 %v3615, %v3602
    %v5878 = vpack.c.b16 %v3616, %v3603
    %v5879 = vpack.c.b16 %v3617, %v3604
    %v5880 = vpack.c.b16 %v3618, %v3605
    %v5881 = vpack.c.b16 %v3619, %v3606
    %v5882 = vpack.c.b16 %v3620, %v3607
    %v5883 = vpack.c.b16 %v3621, %v3608
    %v5884 = vpack.c.b16 %v3622, %v3609
    %v5885 = vpack.c.b16 %v3623, %v3610
    %v5886 = vpack.c.b16 %v3637, %v3624
    %v5887 = vpack.c.b16 %v3638, %v3625
    %v5888 = vpack.c.b16 %v3639, %v3626
    %v5889 = vpack.c.b16 %v3640, %v3627
    %v5890 = vpack.c.b16 %v3641, %v3628
    %v5891 = vpack.c.b16 %v3642, %v3629
    %v5892 = vpack.c.b16 %v3643, %v3630
    %v5893 = vpack.c.b16 %v3644, %v3631
    %v5894 = vpack.c.b16 %v3645, %v3632
    %v5895 = vpack.c.b16 %v3646, %v3633
    %v5896 = vpack.c.b16 %v3647, %v3634
    %v5897 = vpack.c.b16 %v3648, %v3635
    %v5898 = vpack.c.b16 %v3649, %v3636
    %v5899 = vpack.c.b16 %v3663, %v3650
    %v5900 = vpack.c.b16 %v3664, %v3651
    %v5901 = vpack.c.b16 %v3665, %v3652
    %v5902 = vpack.c.b16 %v3666, %v3653
    %v5903 = vpack.c.b16 %v3667, %v3654
    %v5904 = vpack.c.b16 %v3668, %v3655
    %v5905 = vpack.c.b16 %v3669, %v3656
    %v5906 = vpack.c.b16 %v3670, %v3657
    %v5907 = vpack.c.b16 %v3671, %v3658
    %v5908 = vpack.c.b16 %v3672, %v3659
    %v5909 = vpack.c.b16 %v3673, %v3660
    %v5910 = vpack.c.b16 %v3674, %v3661
    %v5911 = vpack.c.b16 %v3675, %v3662
    %v5912 = vpack.c.b16 %v3689, %v3676
    %v5913 = vpack.c.b16 %v3690, %v3677
    %v5914 = vpack.c.b16 %v3691, %v3678
    %v5915 = vpack.c.b16 %v3692, %v3679
    %v5916 = vpack.c.b16 %v3693, %v3680
    %v5917 = vpack.c.b16 %v3694, %v3681
    %v5918 = vpack.c.b16 %v3695, %v3682
    %v5919 = vpack.c.b16 %v3696, %v3683
    %v5920 = vpack.c.b16 %v3697, %v3684
    %v5921 = vpack.c.b16 %v3698, %v3685
    %v5922 = vpack.c.b16 %v3699, %v3686
    %v5923 = vpack.c.b16 %v3700, %v3687
    %v5924 = vpack.c.b16 %v3701, %v3688
    %v5925 = vpack.c.b16 %v3715, %v3702
    %v5926 = vpack.c.b16 %v3716, %v3703
    %v5927 = vpack.c.b16 %v3717, %v3704
    %v5928 = vpack.c.b16 %v3718, %v3705
    %v5929 = vpack.c.b16 %v3719, %v3706
    %v5930 = vpack.c.b16 %v3720, %v3707
    %v5931 = vpack.c.b16 %v3721, %v3708
    %v5932 = vpack.c.b16 %v3722, %v3709
    %v5933 = vpack.c.b16 %v3723, %v3710
    %v5934 = vpack.c.b16 %v3724, %v3711
    %v5935 = vpack.c.b16 %v3725, %v3712
    %v5936 = vpack.c.b16 %v3726, %v3713
    %v5937 = vpack.c.b16 %v3727, %v3714
    %v5938 = vpack.c.b16 %v3741, %v3728
    %v5939 = vpack.c.b16 %v3742, %v3729
    %v5940 = vpack.c.b16 %v3743, %v3730
    %v5941 = vpack.c.b16 %v3744, %v3731
    %v5942 = vpack.c.b16 %v3745, %v3732
    %v5943 = vpack.c.b16 %v3746, %v3733
    %v5944 = vpack.c.b16 %v3747, %v3734
    %v5945 = vpack.c.b16 %v3748, %v3735
    %v5946 = vpack.c.b16 %v3749, %v3736
    %v5947 = vpack.c.b16 %v3750, %v3737
    %v5948 = vpack.c.b16 %v3751, %v3738
    %v5949 = vpack.c.b16 %v3752, %v3739
    %v5950 = vpack.c.b16 %v3753, %v3740
    %v5951 = vpack.c.b16 %v3767, %v3754
    %v5952 = vpack.c.b16 %v3768, %v3755
    %v5953 = vpack.c.b16 %v3769, %v3756
    %v5954 = vpack.c.b16 %v3770, %v3757
    %v5955 = vpack.c.b16 %v3771, %v3758
    %v5956 = vpack.c.b16 %v3772, %v3759
    %v5957 = vpack.c.b16 %v3773, %v3760
    %v5958 = vpack.c.b16 %v3774, %v3761
    %v5959 = vpack.c.b16 %v3775, %v3762
    %v5960 = vpack.c.b16 %v3776, %v3763
    %v5961 = vpack.c.b16 %v3777, %v3764
    %v5962 = vpack.c.b16 %v3778, %v3765
    %v5963 = vpack.c.b16 %v3779, %v3766
    %v5964 = vpack.c.b16 %v3793, %v3780
    %v5965 = vpack.c.b16 %v3794, %v3781
    %v5966 = vpack.c.b16 %v3795, %v3782
    %v5967 = vpack.c.b16 %v3796, %v3783
    %v5968 = vpack.c.b16 %v3797, %v3784
    %v5969 = vpack.c.b16 %v3798, %v3785
    %v5970 = vpack.c.b16 %v3799, %v3786
    %v5971 = vpack.c.b16 %v3800, %v3787
    %v5972 = vpack.c.b16 %v3801, %v3788
    %v5973 = vpack.c.b16 %v3802, %v3789
    %v5974 = vpack.c.b16 %v3803, %v3790
    %v5975 = vpack.c.b16 %v3804, %v3791
    %v5976 = vpack.c.b16 %v3805, %v3792
    %v5977 = vpack.c.b16 %v3819, %v3806
    %v5978 = vpack.c.b16 %v3820, %v3807
    %v5979 = vpack.c.b16 %v3821, %v3808
    %v5980 = vpack.c.b16 %v3822, %v3809
    %v5981 = vpack.c.b16 %v3823, %v3810
    %v5982 = vpack.c.b16 %v3824, %v3811
    %v5983 = vpack.c.b16 %v3825, %v3812
    %v5984 = vpack.c.b16 %v3826, %v3813
    %v5985 = vpack.c.b16 %v3827, %v3814
    %v5986 = vpack.c.b16 %v3828, %v3815
    %v5987 = vpack.c.b16 %v3829, %v3816
    %v5988 = vpack.c.b16 %v3830, %v3817
    %v5989 = vpack.c.b16 %v3831, %v3818
    %v5990 = vpack.c.b16 %v3845, %v3832
    %v5991 = vpack.c.b16 %v3846, %v3833
    %v5992 = vpack.c.b16 %v3847, %v3834
    %v5993 = vpack.c.b16 %v3848, %v3835
    %v5994 = vpack.c.b16 %v3849, %v3836
    %v5995 = vpack.c.b16 %v3850, %v3837
    %v5996 = vpack.c.b16 %v3851, %v3838
    %v5997 = vpack.c.b16 %v3852, %v3839
    %v5998 = vpack.c.b16 %v3853, %v3840
    %v5999 = vpack.c.b16 %v3854, %v3841
    %v6000 = vpack.c.b16 %v3855, %v3842
    %v6001 = vpack.c.b16 %v3856, %v3843
    %v6002 = vpack.c.b16 %v3857, %v3844
    %v6003 = vpack.c.b16 %v3871, %v3858
    %v6004 = vpack.c.b16 %v3872, %v3859
    %v6005 = vpack.c.b16 %v3873, %v3860
    %v6006 = vpack.c.b16 %v3874, %v3861
    %v6007 = vpack.c.b16 %v3875, %v3862
    %v6008 = vpack.c.b16 %v3876, %v3863
    %v6009 = vpack.c.b16 %v3877, %v3864
    %v6010 = vpack.c.b16 %v3878, %v3865
    %v6011 = vpack.c.b16 %v3879, %v3866
    %v6012 = vpack.c.b16 %v3880, %v3867
    %v6013 = vpack.c.b16 %v3881, %v3868
    %v6014 = vpack.c.b16 %v3882, %v3869
    %v6015 = vpack.c.b16 %v3883, %v3870
    %v6016 = vpack.c.b16 %v3897, %v3884
    %v6017 = vpack.c.b16 %v3898, %v3885
    %v6018 = vpack.c.b16 %v3899, %v3886
    %v6019 = vpack.c.b16 %v3900, %v3887
    %v6020 = vpack.c.b16 %v3901, %v3888
    %v6021 = vpack.c.b16 %v3902, %v3889
    %v6022 = vpack.c.b16 %v3903, %v3890
    %v6023 = vpack.c.b16 %v3904, %v3891
    %v6024 = vpack.c.b16 %v3905, %v3892
    %v6025 = vpack.c.b16 %v3906, %v3893
    %v6026 = vpack.c.b16 %v3907, %v3894
    %v6027 = vpack.c.b16 %v3908, %v3895
    %v6028 = vpack.c.b16 %v3909, %v3896
    %v6029 = vpack.c.b16 %v3923, %v3910
    %v6030 = vpack.c.b16 %v3924, %v3911
    %v6031 = vpack.c.b16 %v3925, %v3912
    %v6032 = vpack.c.b16 %v3926, %v3913
    %v6033 = vpack.c.b16 %v3927, %v3914
    %v6034 = vpack.c.b16 %v3928, %v3915
    %v6035 = vpack.c.b16 %v3929, %v3916
    %v6036 = vpack.c.b16 %v3930, %v3917
    %v6037 = vpack.c.b16 %v3931, %v3918
    %v6038 = vpack.c.b16 %v3932, %v3919
    %v6039 = vpack.c.b16 %v3933, %v3920
    %v6040 = vpack.c.b16 %v3934, %v3921
    %v6041 = vpack.c.b16 %v3935, %v3922
    %v6042 = vpack.c.b16 %v3949, %v3936
    %v6043 = vpack.c.b16 %v3950, %v3937
    %v6044 = vpack.c.b16 %v3951, %v3938
    %v6045 = vpack.c.b16 %v3952, %v3939
    %v6046 = vpack.c.b16 %v3953, %v3940
    %v6047 = vpack.c.b16 %v3954, %v3941
    %v6048 = vpack.c.b16 %v3955, %v3942
    %v6049 = vpack.c.b16 %v3956, %v3943
    %v6050 = vpack.c.b16 %v3957, %v3944
    %v6051 = vpack.c.b16 %v3958, %v3945
    %v6052 = vpack.c.b16 %v3959, %v3946
    %v6053 = vpack.c.b16 %v3960, %v3947
    %v6054 = vpack.c.b16 %v3961, %v3948
    %v6055 = vpack.c.b16 %v3975, %v3962
    %v6056 = vpack.c.b16 %v3976, %v3963
    %v6057 = vpack.c.b16 %v3977, %v3964
    %v6058 = vpack.c.b16 %v3978, %v3965
    %v6059 = vpack.c.b16 %v3979, %v3966
    %v6060 = vpack.c.b16 %v3980, %v3967
    %v6061 = vpack.c.b16 %v3981, %v3968
    %v6062 = vpack.c.b16 %v3982, %v3969
    %v6063 = vpack.c.b16 %v3983, %v3970
    %v6064 = vpack.c.b16 %v3984, %v3971
    %v6065 = vpack.c.b16 %v3985, %v3972
    %v6066 = vpack.c.b16 %v3986, %v3973
    %v6067 = vpack.c.b16 %v3987, %v3974
    %v6068 = vpack.c.b16 %v4001, %v3988
    %v6069 = vpack.c.b16 %v4002, %v3989
    %v6070 = vpack.c.b16 %v4003, %v3990
    %v6071 = vpack.c.b16 %v4004, %v3991
    %v6072 = vpack.c.b16 %v4005, %v3992
    %v6073 = vpack.c.b16 %v4006, %v3993
    %v6074 = vpack.c.b16 %v4007, %v3994
    %v6075 = vpack.c.b16 %v4008, %v3995
    %v6076 = vpack.c.b16 %v4009, %v3996
    %v6077 = vpack.c.b16 %v4010, %v3997
    %v6078 = vpack.c.b16 %v4011, %v3998
    %v6079 = vpack.c.b16 %v4012, %v3999
    %v6080 = vpack.c.b16 %v4013, %v4000
    %v6081 = vpack.c.b16 %v4027, %v4014
    %v6082 = vpack.c.b16 %v4028, %v4015
    %v6083 = vpack.c.b16 %v4029, %v4016
    %v6084 = vpack.c.b16 %v4030, %v4017
    %v6085 = vpack.c.b16 %v4031, %v4018
    %v6086 = vpack.c.b16 %v4032, %v4019
    %v6087 = vpack.c.b16 %v4033, %v4020
    %v6088 = vpack.c.b16 %v4034, %v4021
    %v6089 = vpack.c.b16 %v4035, %v4022
    %v6090 = vpack.c.b16 %v4036, %v4023
    %v6091 = vpack.c.b16 %v4037, %v4024
    %v6092 = vpack.c.b16 %v4038, %v4025
    %v6093 = vpack.c.b16 %v4039, %v4026
    %v6094 = vpack.c.b16 %v4053, %v4040
    %v6095 = vpack.c.b16 %v4054, %v4041
    %v6096 = vpack.c.b16 %v4055, %v4042
    %v6097 = vpack.c.b16 %v4056, %v4043
    %v6098 = vpack.c.b16 %v4057, %v4044
    %v6099 = vpack.c.b16 %v4058, %v4045
    %v6100 = vpack.c.b16 %v4059, %v4046
    %v6101 = vpack.c.b16 %v4060, %v4047
    %v6102 = vpack.c.b16 %v4061, %v4048
    %v6103 = vpack.c.b16 %v4062, %v4049
    %v6104 = vpack.c.b16 %v4063, %v4050
    %v6105 = vpack.c.b16 %v4064, %v4051
    %v6106 = vpack.c.b16 %v4065, %v4052
    %v6107 = vpack.c.b16 %v4079, %v4066
    %v6108 = vpack.c.b16 %v4080, %v4067
    %v6109 = vpack.c.b16 %v4081, %v4068
    %v6110 = vpack.c.b16 %v4082, %v4069
    %v6111 = vpack.c.b16 %v4083, %v4070
    %v6112 = vpack.c.b16 %v4084, %v4071
    %v6113 = vpack.c.b16 %v4085, %v4072
    %v6114 = vpack.c.b16 %v4086, %v4073
    %v6115 = vpack.c.b16 %v4087, %v4074
    %v6116 = vpack.c.b16 %v4088, %v4075
    %v6117 = vpack.c.b16 %v4089, %v4076
    %v6118 = vpack.c.b16 %v4090, %v4077
    %v6119 = vpack.c.b16 %v4091, %v4078
    %v6120 = vpack.c.b16 %v4105, %v4092
    %v6121 = vpack.c.b16 %v4106, %v4093
    %v6122 = vpack.c.b16 %v4107, %v4094
    %v6123 = vpack.c.b16 %v4108, %v4095
    %v6124 = vpack.c.b16 %v4109, %v4096
    %v6125 = vpack.c.b16 %v4110, %v4097
    %v6126 = vpack.c.b16 %v4111, %v4098
    %v6127 = vpack.c.b16 %v4112, %v4099
    %v6128 = vpack.c.b16 %v4113, %v4100
    %v6129 = vpack.c.b16 %v4114, %v4101
    %v6130 = vpack.c.b16 %v4115, %v4102
    %v6131 = vpack.c.b16 %v4116, %v4103
    %v6132 = vpack.c.b16 %v4117, %v4104
    %v6133 = vpack.c.b16 %v4131, %v4118
    %v6134 = vpack.c.b16 %v4132, %v4119
    %v6135 = vpack.c.b16 %v4133, %v4120
    %v6136 = vpack.c.b16 %v4134, %v4121
    %v6137 = vpack.c.b16 %v4135, %v4122
    %v6138 = vpack.c.b16 %v4136, %v4123
    %v6139 = vpack.c.b16 %v4137, %v4124
    %v6140 = vpack.c.b16 %v4138, %v4125
    %v6141 = vpack.c.b16 %v4139, %v4126
    %v6142 = vpack.c.b16 %v4140, %v4127
    %v6143 = vpack.c.b16 %v4141, %v4128
    %v6144 = vpack.c.b16 %v4142, %v4129
    %v6145 = vpack.c.b16 %v4143, %v4130
    %v6146 = vpack.c.b16 %v4157, %v4144
    %v6147 = vpack.c.b16 %v4158, %v4145
    %v6148 = vpack.c.b16 %v4159, %v4146
    %v6149 = vpack.c.b16 %v4160, %v4147
    %v6150 = vpack.c.b16 %v4161, %v4148
    %v6151 = vpack.c.b16 %v4162, %v4149
    %v6152 = vpack.c.b16 %v4163, %v4150
    %v6153 = vpack.c.b16 %v4164, %v4151
    %v6154 = vpack.c.b16 %v4165, %v4152
    %v6155 = vpack.c.b16 %v4166, %v4153
    %v6156 = vpack.c.b16 %v4167, %v4154
    %v6157 = vpack.c.b16 %v4168, %v4155
    %v6158 = vpack.c.b16 %v4169, %v4156
    %v6159 = vpack.c.b16 %v4183, %v4170
    %v6160 = vpack.c.b16 %v4184, %v4171
    %v6161 = vpack.c.b16 %v4185, %v4172
    %v6162 = vpack.c.b16 %v4186, %v4173
    %v6163 = vpack.c.b16 %v4187, %v4174
    %v6164 = vpack.c.b16 %v4188, %v4175
    %v6165 = vpack.c.b16 %v4189, %v4176
    %v6166 = vpack.c.b16 %v4190, %v4177
    %v6167 = vpack.c.b16 %v4191, %v4178
    %v6168 = vpack.c.b16 %v4192, %v4179
    %v6169 = vpack.c.b16 %v4193, %v4180
    %v6170 = vpack.c.b16 %v4194, %v4181
    %v6171 = vpack.c.b16 %v4195, %v4182
    %v6172 = vpack.c.b16 %v4209, %v4196
    %v6173 = vpack.c.b16 %v4210, %v4197
    %v6174 = vpack.c.b16 %v4211, %v4198
    %v6175 = vpack.c.b16 %v4212, %v4199
    %v6176 = vpack.c.b16 %v4213, %v4200
    %v6177 = vpack.c.b16 %v4214, %v4201
    %v6178 = vpack.c.b16 %v4215, %v4202
    %v6179 = vpack.c.b16 %v4216, %v4203
    %v6180 = vpack.c.b16 %v4217, %v4204
    %v6181 = vpack.c.b16 %v4218, %v4205
    %v6182 = vpack.c.b16 %v4219, %v4206
    %v6183 = vpack.c.b16 %v4220, %v4207
    %v6184 = vpack.c.b16 %v4221, %v4208
    %v6185 = vpack.c.b16 %v4235, %v4222
    %v6186 = vpack.c.b16 %v4236, %v4223
    %v6187 = vpack.c.b16 %v4237, %v4224
    %v6188 = vpack.c.b16 %v4238, %v4225
    %v6189 = vpack.c.b16 %v4239, %v4226
    %v6190 = vpack.c.b16 %v4240, %v4227
    %v6191 = vpack.c.b16 %v4241, %v4228
    %v6192 = vpack.c.b16 %v4242, %v4229
    %v6193 = vpack.c.b16 %v4243, %v4230
    %v6194 = vpack.c.b16 %v4244, %v4231
    %v6195 = vpack.c.b16 %v4245, %v4232
    %v6196 = vpack.c.b16 %v4246, %v4233
    %v6197 = vpack.c.b16 %v4247, %v4234
    %v6198 = vpack.c.b16 %v4261, %v4248
    %v6199 = vpack.c.b16 %v4262, %v4249
    %v6200 = vpack.c.b16 %v4263, %v4250
    %v6201 = vpack.c.b16 %v4264, %v4251
    %v6202 = vpack.c.b16 %v4265, %v4252
    %v6203 = vpack.c.b16 %v4266, %v4253
    %v6204 = vpack.c.b16 %v4267, %v4254
    %v6205 = vpack.c.b16 %v4268, %v4255
    %v6206 = vpack.c.b16 %v4269, %v4256
    %v6207 = vpack.c.b16 %v4270, %v4257
    %v6208 = vpack.c.b16 %v4271, %v4258
    %v6209 = vpack.c.b16 %v4272, %v4259
    %v6210 = vpack.c.b16 %v4273, %v4260
    %v6211 = vpack.c.b16 %v4287, %v4274
    %v6212 = vpack.c.b16 %v4288, %v4275
    %v6213 = vpack.c.b16 %v4289, %v4276
    %v6214 = vpack.c.b16 %v4290, %v4277
    %v6215 = vpack.c.b16 %v4291, %v4278
    %v6216 = vpack.c.b16 %v4292, %v4279
    %v6217 = vpack.c.b16 %v4293, %v4280
    %v6218 = vpack.c.b16 %v4294, %v4281
    %v6219 = vpack.c.b16 %v4295, %v4282
    %v6220 = vpack.c.b16 %v4296, %v4283
    %v6221 = vpack.c.b16 %v4297, %v4284
    %v6222 = vpack.c.b16 %v4298, %v4285
    %v6223 = vpack.c.b16 %v4299, %v4286
    %v6224 = vpack.c.b16 %v4313, %v4300
    %v6225 = vpack.c.b16 %v4314, %v4301
    %v6226 = vpack.c.b16 %v4315, %v4302
    %v6227 = vpack.c.b16 %v4316, %v4303
    %v6228 = vpack.c.b16 %v4317, %v4304
    %v6229 = vpack.c.b16 %v4318, %v4305
    %v6230 = vpack.c.b16 %v4319, %v4306
    %v6231 = vpack.c.b16 %v4320, %v4307
    %v6232 = vpack.c.b16 %v4321, %v4308
    %v6233 = vpack.c.b16 %v4322, %v4309
    %v6234 = vpack.c.b16 %v4323, %v4310
    %v6235 = vpack.c.b16 %v4324, %v4311
    %v6236 = vpack.c.b16 %v4325, %v4312
    %v6237 = vpack.c.b16 %v4339, %v4326
    %v6238 = vpack.c.b16 %v4340, %v4327
    %v6239 = vpack.c.b16 %v4341, %v4328
    %v6240 = vpack.c.b16 %v4342, %v4329
    %v6241 = vpack.c.b16 %v4343, %v4330
    %v6242 = vpack.c.b16 %v4344, %v4331
    %v6243 = vpack.c.b16 %v4345, %v4332
    %v6244 = vpack.c.b16 %v4346, %v4333
    %v6245 = vpack.c.b16 %v4347, %v4334
    %v6246 = vpack.c.b16 %v4348, %v4335
    %v6247 = vpack.c.b16 %v4349, %v4336
    %v6248 = vpack.c.b16 %v4350, %v4337
    %v6249 = vpack.c.b16 %v4351, %v4338
    %v6250 = vpack.c.b16 %v4365, %v4352
    %v6251 = vpack.c.b16 %v4366, %v4353
    %v6252 = vpack.c.b16 %v4367, %v4354
    %v6253 = vpack.c.b16 %v4368, %v4355
    %v6254 = vpack.c.b16 %v4369, %v4356
    %v6255 = vpack.c.b16 %v4370, %v4357
    %v6256 = vpack.c.b16 %v4371, %v4358
    %v6257 = vpack.c.b16 %v4372, %v4359
    %v6258 = vpack.c.b16 %v4373, %v4360
    %v6259 = vpack.c.b16 %v4374, %v4361
    %v6260 = vpack.c.b16 %v4375, %v4362
    %v6261 = vpack.c.b16 %v4376, %v4363
    %v6262 = vpack.c.b16 %v4377, %v4364
    %v6263 = vpack.c.b16 %v4391, %v4378
    %v6264 = vpack.c.b16 %v4392, %v4379
    %v6265 = vpack.c.b16 %v4393, %v4380
    %v6266 = vpack.c.b16 %v4394, %v4381
    %v6267 = vpack.c.b16 %v4395, %v4382
    %v6268 = vpack.c.b16 %v4396, %v4383
    %v6269 = vpack.c.b16 %v4397, %v4384
    %v6270 = vpack.c.b16 %v4398, %v4385
    %v6271 = vpack.c.b16 %v4399, %v4386
    %v6272 = vpack.c.b16 %v4400, %v4387
    %v6273 = vpack.c.b16 %v4401, %v4388
    %v6274 = vpack.c.b16 %v4402, %v4389
    %v6275 = vpack.c.b16 %v4403, %v4390
    %v6276 = vpack.c.b16 %v4417, %v4404
    %v6277 = vpack.c.b16 %v4418, %v4405
    %v6278 = vpack.c.b16 %v4419, %v4406
    %v6279 = vpack.c.b16 %v4420, %v4407
    %v6280 = vpack.c.b16 %v4421, %v4408
    %v6281 = vpack.c.b16 %v4422, %v4409
    %v6282 = vpack.c.b16 %v4423, %v4410
    %v6283 = vpack.c.b16 %v4424, %v4411
    %v6284 = vpack.c.b16 %v4425, %v4412
    %v6285 = vpack.c.b16 %v4426, %v4413
    %v6286 = vpack.c.b16 %v4427, %v4414
    %v6287 = vpack.c.b16 %v4428, %v4415
    %v6288 = vpack.c.b16 %v4429, %v4416
    %v6289 = vpack.c.b16 %v4443, %v4430
    %v6290 = vpack.c.b16 %v4444, %v4431
    %v6291 = vpack.c.b16 %v4445, %v4432
    %v6292 = vpack.c.b16 %v4446, %v4433
    %v6293 = vpack.c.b16 %v4447, %v4434
    %v6294 = vpack.c.b16 %v4448, %v4435
    %v6295 = vpack.c.b16 %v4449, %v4436
    %v6296 = vpack.c.b16 %v4450, %v4437
    %v6297 = vpack.c.b16 %v4451, %v4438
    %v6298 = vpack.c.b16 %v4452, %v4439
    %v6299 = vpack.c.b16 %v4453, %v4440
    %v6300 = vpack.c.b16 %v4454, %v4441
    %v6301 = vpack.c.b16 %v4455, %v4442
    %v6302 = vpack.c.b16 %v4469, %v4456
    %v6303 = vpack.c.b16 %v4470, %v4457
    %v6304 = vpack.c.b16 %v4471, %v4458
    %v6305 = vpack.c.b16 %v4472, %v4459
    %v6306 = vpack.c.b16 %v4473, %v4460
    %v6307 = vpack.c.b16 %v4474, %v4461
    %v6308 = vpack.c.b16 %v4475, %v4462
    %v6309 = vpack.c.b16 %v4476, %v4463
    %v6310 = vpack.c.b16 %v4477, %v4464
    %v6311 = vpack.c.b16 %v4478, %v4465
    %v6312 = vpack.c.b16 %v4479, %v4466
    %v6313 = vpack.c.b16 %v4480, %v4467
    %v6314 = vpack.c.b16 %v4481, %v4468
    %v6315 = vpack.c.b16 %v4495, %v4482
    %v6316 = vpack.c.b16 %v4496, %v4483
    %v6317 = vpack.c.b16 %v4497, %v4484
    %v6318 = vpack.c.b16 %v4498, %v4485
    %v6319 = vpack.c.b16 %v4499, %v4486
    %v6320 = vpack.c.b16 %v4500, %v4487
    %v6321 = vpack.c.b16 %v4501, %v4488
    %v6322 = vpack.c.b16 %v4502, %v4489
    %v6323 = vpack.c.b16 %v4503, %v4490
    %v6324 = vpack.c.b16 %v4504, %v4491
    %v6325 = vpack.c.b16 %v4505, %v4492
    %v6326 = vpack.c.b16 %v4506, %v4493
    %v6327 = vpack.c.b16 %v4507, %v4494
    %v6328 = vpack.c.b16 %v4521, %v4508
    %v6329 = vpack.c.b16 %v4522, %v4509
    %v6330 = vpack.c.b16 %v4523, %v4510
    %v6331 = vpack.c.b16 %v4524, %v4511
    %v6332 = vpack.c.b16 %v4525, %v4512
    %v6333 = vpack.c.b16 %v4526, %v4513
    %v6334 = vpack.c.b16 %v4527, %v4514
    %v6335 = vpack.c.b16 %v4528, %v4515
    %v6336 = vpack.c.b16 %v4529, %v4516
    %v6337 = vpack.c.b16 %v4530, %v4517
    %v6338 = vpack.c.b16 %v4531, %v4518
    %v6339 = vpack.c.b16 %v4532, %v4519
    %v6340 = vpack.c.b16 %v4533, %v4520
    %v6341 = vpack.c.b16 %v4547, %v4534
    %v6342 = vpack.c.b16 %v4548, %v4535
    %v6343 = vpack.c.b16 %v4549, %v4536
    %v6344 = vpack.c.b16 %v4550, %v4537
    %v6345 = vpack.c.b16 %v4551, %v4538
    %v6346 = vpack.c.b16 %v4552, %v4539
    %v6347 = vpack.c.b16 %v4553, %v4540
    %v6348 = vpack.c.b16 %v4554, %v4541
    %v6349 = vpack.c.b16 %v4555, %v4542
    %v6350 = vpack.c.b16 %v4556, %v4543
    %v6351 = vpack.c.b16 %v4557, %v4544
    %v6352 = vpack.c.b16 %v4558, %v4545
    %v6353 = vpack.c.b16 %v4559, %v4546
    %v6354 = vpack.c.b16 %v4573, %v4560
    %v6355 = vpack.c.b16 %v4574, %v4561
    %v6356 = vpack.c.b16 %v4575, %v4562
    %v6357 = vpack.c.b16 %v4576, %v4563
    %v6358 = vpack.c.b16 %v4577, %v4564
    %v6359 = vpack.c.b16 %v4578, %v4565
    %v6360 = vpack.c.b16 %v4579, %v4566
    %v6361 = vpack.c.b16 %v4580, %v4567
    %v6362 = vpack.c.b16 %v4581, %v4568
    %v6363 = vpack.c.b16 %v4582, %v4569
    %v6364 = vpack.c.b16 %v4583, %v4570
    %v6365 = vpack.c.b16 %v4584, %v4571
    %v6366 = vpack.c.b16 %v4585, %v4572
    %v6367 = vpack.c.b16 %v4599, %v4586
    %v6368 = vpack.c.b16 %v4600, %v4587
    %v6369 = vpack.c.b16 %v4601, %v4588
    %v6370 = vpack.c.b16 %v4602, %v4589
    %v6371 = vpack.c.b16 %v4603, %v4590
    %v6372 = vpack.c.b16 %v4604, %v4591
    %v6373 = vpack.c.b16 %v4605, %v4592
    %v6374 = vpack.c.b16 %v4606, %v4593
    %v6375 = vpack.c.b16 %v4607, %v4594
    %v6376 = vpack.c.b16 %v4608, %v4595
    %v6377 = vpack.c.b16 %v4609, %v4596
    %v6378 = vpack.c.b16 %v4610, %v4597
    %v6379 = vpack.c.b16 %v4611, %v4598
    %v6380 = vpack.c.b16 %v4625, %v4612
    %v6381 = vpack.c.b16 %v4626, %v4613
    %v6382 = vpack.c.b16 %v4627, %v4614
    %v6383 = vpack.c.b16 %v4628, %v4615
    %v6384 = vpack.c.b16 %v4629, %v4616
    %v6385 = vpack.c.b16 %v4630, %v4617
    %v6386 = vpack.c.b16 %v4631, %v4618
    %v6387 = vpack.c.b16 %v4632, %v4619
    %v6388 = vpack.c.b16 %v4633, %v4620
    %v6389 = vpack.c.b16 %v4634, %v4621
    %v6390 = vpack.c.b16 %v4635, %v4622
    %v6391 = vpack.c.b16 %v4636, %v4623
    %v6392 = vpack.c.b16 %v4637, %v4624
    %v6393 = vpack.c.b16 %v4651, %v4638
    %v6394 = vpack.c.b16 %v4652, %v4639
    %v6395 = vpack.c.b16 %v4653, %v4640
    %v6396 = vpack.c.b16 %v4654, %v4641
    %v6397 = vpack.c.b16 %v4655, %v4642
    %v6398 = vpack.c.b16 %v4656, %v4643
    %v6399 = vpack.c.b16 %v4657, %v4644
    %v6400 = vpack.c.b16 %v4658, %v4645
    %v6401 = vpack.c.b16 %v4659, %v4646
    %v6402 = vpack.c.b16 %v4660, %v4647
    %v6403 = vpack.c.b16 %v4661, %v4648
    %v6404 = vpack.c.b16 %v4662, %v4649
    %v6405 = vpack.c.b16 %v4663, %v4650
    %v6406 = vpack.c.b16 %v4677, %v4664
    %v6407 = vpack.c.b16 %v4678, %v4665
    %v6408 = vpack.c.b16 %v4679, %v4666
    %v6409 = vpack.c.b16 %v4680, %v4667
    %v6410 = vpack.c.b16 %v4681, %v4668
    %v6411 = vpack.c.b16 %v4682, %v4669
    %v6412 = vpack.c.b16 %v4683, %v4670
    %v6413 = vpack.c.b16 %v4684, %v4671
    %v6414 = vpack.c.b16 %v4685, %v4672
    %v6415 = vpack.c.b16 %v4686, %v4673
    %v6416 = vpack.c.b16 %v4687, %v4674
    %v6417 = vpack.c.b16 %v4688, %v4675
    %v6418 = vpack.c.b16 %v4689, %v4676
    %v6419 = vpack.c.b16 %v4703, %v4690
    %v6420 = vpack.c.b16 %v4704, %v4691
    %v6421 = vpack.c.b16 %v4705, %v4692
    %v6422 = vpack.c.b16 %v4706, %v4693
    %v6423 = vpack.c.b16 %v4707, %v4694
    %v6424 = vpack.c.b16 %v4708, %v4695
    %v6425 = vpack.c.b16 %v4709, %v4696
    %v6426 = vpack.c.b16 %v4710, %v4697
    %v6427 = vpack.c.b16 %v4711, %v4698
    %v6428 = vpack.c.b16 %v4712, %v4699
    %v6429 = vpack.c.b16 %v4713, %v4700
    %v6430 = vpack.c.b16 %v4714, %v4701
    %v6431 = vpack.c.b16 %v4715, %v4702
    %v6432 = vpack.c.b16 %v4729, %v4716
    %v6433 = vpack.c.b16 %v4730, %v4717
    %v6434 = vpack.c.b16 %v4731, %v4718
    %v6435 = vpack.c.b16 %v4732, %v4719
    %v6436 = vpack.c.b16 %v4733, %v4720
    %v6437 = vpack.c.b16 %v4734, %v4721
    %v6438 = vpack.c.b16 %v4735, %v4722
    %v6439 = vpack.c.b16 %v4736, %v4723
    %v6440 = vpack.c.b16 %v4737, %v4724
    %v6441 = vpack.c.b16 %v4738, %v4725
    %v6442 = vpack.c.b16 %v4739, %v4726
    %v6443 = vpack.c.b16 %v4740, %v4727
    %v6444 = vpack.c.b16 %v4741, %v4728
    %v6445 = vpack.c.b16 %v4755, %v4742
    %v6446 = vpack.c.b16 %v4756, %v4743
    %v6447 = vpack.c.b16 %v4757, %v4744
    %v6448 = vpack.c.b16 %v4758, %v4745
    %v6449 = vpack.c.b16 %v4759, %v4746
    %v6450 = vpack.c.b16 %v4760, %v4747
    %v6451 = vpack.c.b16 %v4761, %v4748
    %v6452 = vpack.c.b16 %v4762, %v4749
    %v6453 = vpack.c.b16 %v4763, %v4750
    %v6454 = vpack.c.b16 %v4764, %v4751
    %v6455 = vpack.c.b16 %v4765, %v4752
    %v6456 = vpack.c.b16 %v4766, %v4753
    %v6457 = vpack.c.b16 %v4767, %v4754
    %v6458 = vpack.c.b16 %v4781, %v4768
    %v6459 = vpack.c.b16 %v4782, %v4769
    %v6460 = vpack.c.b16 %v4783, %v4770
    %v6461 = vpack.c.b16 %v4784, %v4771
    %v6462 = vpack.c.b16 %v4785, %v4772
    %v6463 = vpack.c.b16 %v4786, %v4773
    %v6464 = vpack.c.b16 %v4787, %v4774
    %v6465 = vpack.c.b16 %v4788, %v4775
    %v6466 = vpack.c.b16 %v4789, %v4776
    %v6467 = vpack.c.b16 %v4790, %v4777
    %v6468 = vpack.c.b16 %v4791, %v4778
    %v6469 = vpack.c.b16 %v4792, %v4779
    %v6470 = vpack.c.b16 %v4793, %v4780
    %v6471 = vpack.c.b16 %v4807, %v4794
    %v6472 = vpack.c.b16 %v4808, %v4795
    %v6473 = vpack.c.b16 %v4809, %v4796
    %v6474 = vpack.c.b16 %v4810, %v4797
    %v6475 = vpack.c.b16 %v4811, %v4798
    %v6476 = vpack.c.b16 %v4812, %v4799
    %v6477 = vpack.c.b16 %v4813, %v4800
    %v6478 = vpack.c.b16 %v4814, %v4801
    %v6479 = vpack.c.b16 %v4815, %v4802
    %v6480 = vpack.c.b16 %v4816, %v4803
    %v6481 = vpack.c.b16 %v4817, %v4804
    %v6482 = vpack.c.b16 %v4818, %v4805
    %v6483 = vpack.c.b16 %v4819, %v4806
    %v6484 = vpack.c.b16 %v4833, %v4820
    %v6485 = vpack.c.b16 %v4834, %v4821
    %v6486 = vpack.c.b16 %v4835, %v4822
    %v6487 = vpack.c.b16 %v4836, %v4823
    %v6488 = vpack.c.b16 %v4837, %v4824
    %v6489 = vpack.c.b16 %v4838, %v4825
    %v6490 = vpack.c.b16 %v4839, %v4826
    %v6491 = vpack.c.b16 %v4840, %v4827
    %v6492 = vpack.c.b16 %v4841, %v4828
    %v6493 = vpack.c.b16 %v4842, %v4829
    %v6494 = vpack.c.b16 %v4843, %v4830
    %v6495 = vpack.c.b16 %v4844, %v4831
    %v6496 = vpack.c.b16 %v4845, %v4832
    %v6497 = vpack.c.b16 %v4859, %v4846
    %v6498 = vpack.c.b16 %v4860, %v4847
    %v6499 = vpack.c.b16 %v4861, %v4848
    %v6500 = vpack.c.b16 %v4862, %v4849
    %v6501 = vpack.c.b16 %v4863, %v4850
    %v6502 = vpack.c.b16 %v4864, %v4851
    %v6503 = vpack.c.b16 %v4865, %v4852
    %v6504 = vpack.c.b16 %v4866, %v4853
    %v6505 = vpack.c.b16 %v4867, %v4854
    %v6506 = vpack.c.b16 %v4868, %v4855
    %v6507 = vpack.c.b16 %v4869, %v4856
    %v6508 = vpack.c.b16 %v4870, %v4857
    %v6509 = vpack.c.b16 %v4871, %v4858
    %v6510 = vpack.c.b16 %v4885, %v4872
    %v6511 = vpack.c.b16 %v4886, %v4873
    %v6512 = vpack.c.b16 %v4887, %v4874
    %v6513 = vpack.c.b16 %v4888, %v4875
    %v6514 = vpack.c.b16 %v4889, %v4876
    %v6515 = vpack.c.b16 %v4890, %v4877
    %v6516 = vpack.c.b16 %v4891, %v4878
    %v6517 = vpack.c.b16 %v4892, %v4879
    %v6518 = vpack.c.b16 %v4893, %v4880
    %v6519 = vpack.c.b16 %v4894, %v4881
    %v6520 = vpack.c.b16 %v4895, %v4882
    %v6521 = vpack.c.b16 %v4896, %v4883
    %v6522 = vpack.c.b16 %v4897, %v4884
    %v6523 = vpack.c.b16 %v4911, %v4898
    %v6524 = vpack.c.b16 %v4912, %v4899
    %v6525 = vpack.c.b16 %v4913, %v4900
    %v6526 = vpack.c.b16 %v4914, %v4901
    %v6527 = vpack.c.b16 %v4915, %v4902
    %v6528 = vpack.c.b16 %v4916, %v4903
    %v6529 = vpack.c.b16 %v4917, %v4904
    %v6530 = vpack.c.b16 %v4918, %v4905
    %v6531 = vpack.c.b16 %v4919, %v4906
    %v6532 = vpack.c.b16 %v4920, %v4907
    %v6533 = vpack.c.b16 %v4921, %v4908
    %v6534 = vpack.c.b16 %v4922, %v4909
    %v6535 = vpack.c.b16 %v4923, %v4910
    %v6536 = vpack.c.b16 %v4937, %v4924
    %v6537 = vpack.c.b16 %v4938, %v4925
    %v6538 = vpack.c.b16 %v4939, %v4926
    %v6539 = vpack.c.b16 %v4940, %v4927
    %v6540 = vpack.c.b16 %v4941, %v4928
    %v6541 = vpack.c.b16 %v4942, %v4929
    %v6542 = vpack.c.b16 %v4943, %v4930
    %v6543 = vpack.c.b16 %v4944, %v4931
    %v6544 = vpack.c.b16 %v4945, %v4932
    %v6545 = vpack.c.b16 %v4946, %v4933
    %v6546 = vpack.c.b16 %v4947, %v4934
    %v6547 = vpack.c.b16 %v4948, %v4935
    %v6548 = vpack.c.b16 %v4949, %v4936
    %v6549 = vpack.c.b16 %v4963, %v4950
    %v6550 = vpack.c.b16 %v4964, %v4951
    %v6551 = vpack.c.b16 %v4965, %v4952
    %v6552 = vpack.c.b16 %v4966, %v4953
    %v6553 = vpack.c.b16 %v4967, %v4954
    %v6554 = vpack.c.b16 %v4968, %v4955
    %v6555 = vpack.c.b16 %v4969, %v4956
    %v6556 = vpack.c.b16 %v4970, %v4957
    %v6557 = vpack.c.b16 %v4971, %v4958
    %v6558 = vpack.c.b16 %v4972, %v4959
    %v6559 = vpack.c.b16 %v4973, %v4960
    %v6560 = vpack.c.b16 %v4974, %v4961
    %v6561 = vpack.c.b16 %v4975, %v4962
    %v6562 = vpack.c.b16 %v4989, %v4976
    %v6563 = vpack.c.b16 %v4990, %v4977
    %v6564 = vpack.c.b16 %v4991, %v4978
    %v6565 = vpack.c.b16 %v4992, %v4979
    %v6566 = vpack.c.b16 %v4993, %v4980
    %v6567 = vpack.c.b16 %v4994, %v4981
    %v6568 = vpack.c.b16 %v4995, %v4982
    %v6569 = vpack.c.b16 %v4996, %v4983
    %v6570 = vpack.c.b16 %v4997, %v4984
    %v6571 = vpack.c.b16 %v4998, %v4985
    %v6572 = vpack.c.b16 %v4999, %v4986
    %v6573 = vpack.c.b16 %v5000, %v4987
    %v6574 = vpack.c.b16 %v5001, %v4988
    %v6575 = vpack.c.b16 %v5015, %v5002
    %v6576 = vpack.c.b16 %v5016, %v5003
    %v6577 = vpack.c.b16 %v5017, %v5004
    %v6578 = vpack.c.b16 %v5018, %v5005
    %v6579 = vpack.c.b16 %v5019, %v5006
    %v6580 = vpack.c.b16 %v5020, %v5007
    %v6581 = vpack.c.b16 %v5021, %v5008
    %v6582 = vpack.c.b16 %v5022, %v5009
    %v6583 = vpack.c.b16 %v5023, %v5010
    %v6584 = vpack.c.b16 %v5024, %v5011
    %v6585 = vpack.c.b16 %v5025, %v5012
    %v6586 = vpack.c.b16 %v5026, %v5013
    %v6587 = vpack.c.b16 %v5027, %v5014
    %v6588 = vpack.c.b16 %v5041, %v5028
    %v6589 = vpack.c.b16 %v5042, %v5029
    %v6590 = vpack.c.b16 %v5043, %v5030
    %v6591 = vpack.c.b16 %v5044, %v5031
    %v6592 = vpack.c.b16 %v5045, %v5032
    %v6593 = vpack.c.b16 %v5046, %v5033
    %v6594 = vpack.c.b16 %v5047, %v5034
    %v6595 = vpack.c.b16 %v5048, %v5035
    %v6596 = vpack.c.b16 %v5049, %v5036
    %v6597 = vpack.c.b16 %v5050, %v5037
    %v6598 = vpack.c.b16 %v5051, %v5038
    %v6599 = vpack.c.b16 %v5052, %v5039
    %v6600 = vpack.c.b16 %v5053, %v5040
    %v6601 = vpack.c.b16 %v5067, %v5054
    %v6602 = vpack.c.b16 %v5068, %v5055
    %v6603 = vpack.c.b16 %v5069, %v5056
    %v6604 = vpack.c.b16 %v5070, %v5057
    %v6605 = vpack.c.b16 %v5071, %v5058
    %v6606 = vpack.c.b16 %v5072, %v5059
    %v6607 = vpack.c.b16 %v5073, %v5060
    %v6608 = vpack.c.b16 %v5074, %v5061
    %v6609 = vpack.c.b16 %v5075, %v5062
    %v6610 = vpack.c.b16 %v5076, %v5063
    %v6611 = vpack.c.b16 %v5077, %v5064
    %v6612 = vpack.c.b16 %v5078, %v5065
    %v6613 = vpack.c.b16 %v5079, %v5066
    %v6614 = vpack.c.b16 %v5093, %v5080
    %v6615 = vpack.c.b16 %v5094, %v5081
    %v6616 = vpack.c.b16 %v5095, %v5082
    %v6617 = vpack.c.b16 %v5096, %v5083
    %v6618 = vpack.c.b16 %v5097, %v5084
    %v6619 = vpack.c.b16 %v5098, %v5085
    %v6620 = vpack.c.b16 %v5099, %v5086
    %v6621 = vpack.c.b16 %v5100, %v5087
    %v6622 = vpack.c.b16 %v5101, %v5088
    %v6623 = vpack.c.b16 %v5102, %v5089
    %v6624 = vpack.c.b16 %v5103, %v5090
    %v6625 = vpack.c.b16 %v5104, %v5091
    %v6626 = vpack.c.b16 %v5105, %v5092
    %v6627 = vpack.c.b16 %v5119, %v5106
    %v6628 = vpack.c.b16 %v5120, %v5107
    %v6629 = vpack.c.b16 %v5121, %v5108
    %v6630 = vpack.c.b16 %v5122, %v5109
    %v6631 = vpack.c.b16 %v5123, %v5110
    %v6632 = vpack.c.b16 %v5124, %v5111
    %v6633 = vpack.c.b16 %v5125, %v5112
    %v6634 = vpack.c.b16 %v5126, %v5113
    %v6635 = vpack.c.b16 %v5127, %v5114
    %v6636 = vpack.c.b16 %v5128, %v5115
    %v6637 = vpack.c.b16 %v5129, %v5116
    %v6638 = vpack.c.b16 %v5130, %v5117
    %v6639 = vpack.c.b16 %v5131, %v5118
    %v6640 = vpack.c.b16 %v5145, %v5132
    %v6641 = vpack.c.b16 %v5146, %v5133
    %v6642 = vpack.c.b16 %v5147, %v5134
    %v6643 = vpack.c.b16 %v5148, %v5135
    %v6644 = vpack.c.b16 %v5149, %v5136
    %v6645 = vpack.c.b16 %v5150, %v5137
    %v6646 = vpack.c.b16 %v5151, %v5138
    %v6647 = vpack.c.b16 %v5152, %v5139
    %v6648 = vpack.c.b16 %v5153, %v5140
    %v6649 = vpack.c.b16 %v5154, %v5141
    %v6650 = vpack.c.b16 %v5155, %v5142
    %v6651 = vpack.c.b16 %v5156, %v5143
    %v6652 = vpack.c.b16 %v5157, %v5144
    %v6653 = vpack.c.b16 %v5171, %v5158
    %v6654 = vpack.c.b16 %v5172, %v5159
    %v6655 = vpack.c.b16 %v5173, %v5160
    %v6656 = vpack.c.b16 %v5174, %v5161
    %v6657 = vpack.c.b16 %v5175, %v5162
    %v6658 = vpack.c.b16 %v5176, %v5163
    %v6659 = vpack.c.b16 %v5177, %v5164
    %v6660 = vpack.c.b16 %v5178, %v5165
    %v6661 = vpack.c.b16 %v5179, %v5166
    %v6662 = vpack.c.b16 %v5180, %v5167
    %v6663 = vpack.c.b16 %v5181, %v5168
    %v6664 = vpack.c.b16 %v5182, %v5169
    %v6665 = vpack.c.b16 %v5183, %v5170
    %v6666 = vpack.c.b16 %v5197, %v5184
    %v6667 = vpack.c.b16 %v5198, %v5185
    %v6668 = vpack.c.b16 %v5199, %v5186
    %v6669 = vpack.c.b16 %v5200, %v5187
    %v6670 = vpack.c.b16 %v5201, %v5188
    %v6671 = vpack.c.b16 %v5202, %v5189
    %v6672 = vpack.c.b16 %v5203, %v5190
    %v6673 = vpack.c.b16 %v5204, %v5191
    %v6674 = vpack.c.b16 %v5205, %v5192
    %v6675 = vpack.c.b16 %v5206, %v5193
    %v6676 = vpack.c.b16 %v5207, %v5194
    %v6677 = vpack.c.b16 %v5208, %v5195
    %v6678 = vpack.c.b16 %v5209, %v5196
    %v6679 = vpack.c.b16 %v5223, %v5210
    %v6680 = vpack.c.b16 %v5224, %v5211
    %v6681 = vpack.c.b16 %v5225, %v5212
    %v6682 = vpack.c.b16 %v5226, %v5213
    %v6683 = vpack.c.b16 %v5227, %v5214
    %v6684 = vpack.c.b16 %v5228, %v5215
    %v6685 = vpack.c.b16 %v5229, %v5216
    %v6686 = vpack.c.b16 %v5230, %v5217
    %v6687 = vpack.c.b16 %v5231, %v5218
    %v6688 = vpack.c.b16 %v5232, %v5219
    %v6689 = vpack.c.b16 %v5233, %v5220
    %v6690 = vpack.c.b16 %v5234, %v5221
    %v6691 = vpack.c.b16 %v5235, %v5222
    %v6692 = vpack.c.b16 %v5249, %v5236
    %v6693 = vpack.c.b16 %v5250, %v5237
    %v6694 = vpack.c.b16 %v5251, %v5238
    %v6695 = vpack.c.b16 %v5252, %v5239
    %v6696 = vpack.c.b16 %v5253, %v5240
    %v6697 = vpack.c.b16 %v5254, %v5241
    %v6698 = vpack.c.b16 %v5255, %v5242
    %v6699 = vpack.c.b16 %v5256, %v5243
    %v6700 = vpack.c.b16 %v5257, %v5244
    %v6701 = vpack.c.b16 %v5258, %v5245
    %v6702 = vpack.c.b16 %v5259, %v5246
    %v6703 = vpack.c.b16 %v5260, %v5247
    %v6704 = vpack.c.b16 %v5261, %v5248
    %v6705 = vpack.c.b16 %v5275, %v5262
    %v6706 = vpack.c.b16 %v5276, %v5263
    %v6707 = vpack.c.b16 %v5277, %v5264
    %v6708 = vpack.c.b16 %v5278, %v5265
    %v6709 = vpack.c.b16 %v5279, %v5266
    %v6710 = vpack.c.b16 %v5280, %v5267
    %v6711 = vpack.c.b16 %v5281, %v5268
    %v6712 = vpack.c.b16 %v5282, %v5269
    %v6713 = vpack.c.b16 %v5283, %v5270
    %v6714 = vpack.c.b16 %v5284, %v5271
    %v6715 = vpack.c.b16 %v5285, %v5272
    %v6716 = vpack.c.b16 %v5286, %v5273
    %v6717 = vpack.c.b16 %v5287, %v5274
    %v6718 = vpack.c.b16 %v5301, %v5288
    %v6719 = vpack.c.b16 %v5302, %v5289
    %v6720 = vpack.c.b16 %v5303, %v5290
    %v6721 = vpack.c.b16 %v5304, %v5291
    %v6722 = vpack.c.b16 %v5305, %v5292
    %v6723 = vpack.c.b16 %v5306, %v5293
    %v6724 = vpack.c.b16 %v5307, %v5294
    %v6725 = vpack.c.b16 %v5308, %v5295
    %v6726 = vpack.c.b16 %v5309, %v5296
    %v6727 = vpack.c.b16 %v5310, %v5297
    %v6728 = vpack.c.b16 %v5311, %v5298
    %v6729 = vpack.c.b16 %v5312, %v5299
    %v6730 = vpack.c.b16 %v5313, %v5300
    %v6731 = vpack.c.b16 %v5327, %v5314
    %v6732 = vpack.c.b16 %v5328, %v5315
    %v6733 = vpack.c.b16 %v5329, %v5316
    %v6734 = vpack.c.b16 %v5330, %v5317
    %v6735 = vpack.c.b16 %v5331, %v5318
    %v6736 = vpack.c.b16 %v5332, %v5319
    %v6737 = vpack.c.b16 %v5333, %v5320
    %v6738 = vpack.c.b16 %v5334, %v5321
    %v6739 = vpack.c.b16 %v5335, %v5322
    %v6740 = vpack.c.b16 %v5336, %v5323
    %v6741 = vpack.c.b16 %v5337, %v5324
    %v6742 = vpack.c.b16 %v5338, %v5325
    %v6743 = vpack.c.b16 %v5339, %v5326
    %v6744 = vpack.c.b16 %v5353, %v5340
    %v6745 = vpack.c.b16 %v5354, %v5341
    %v6746 = vpack.c.b16 %v5355, %v5342
    %v6747 = vpack.c.b16 %v5356, %v5343
    %v6748 = vpack.c.b16 %v5357, %v5344
    %v6749 = vpack.c.b16 %v5358, %v5345
    %v6750 = vpack.c.b16 %v5359, %v5346
    %v6751 = vpack.c.b16 %v5360, %v5347
    %v6752 = vpack.c.b16 %v5361, %v5348
    %v6753 = vpack.c.b16 %v5362, %v5349
    %v6754 = vpack.c.b16 %v5363, %v5350
    %v6755 = vpack.c.b16 %v5364, %v5351
    %v6756 = vpack.c.b16 %v5365, %v5352
    %v6757 = vpack.c.b16 %v5379, %v5366
    %v6758 = vpack.c.b16 %v5380, %v5367
    %v6759 = vpack.c.b16 %v5381, %v5368
    %v6760 = vpack.c.b16 %v5382, %v5369
    %v6761 = vpack.c.b16 %v5383, %v5370
    %v6762 = vpack.c.b16 %v5384, %v5371
    %v6763 = vpack.c.b16 %v5385, %v5372
    %v6764 = vpack.c.b16 %v5386, %v5373
    %v6765 = vpack.c.b16 %v5387, %v5374
    %v6766 = vpack.c.b16 %v5388, %v5375
    %v6767 = vpack.c.b16 %v5389, %v5376
    %v6768 = vpack.c.b16 %v5390, %v5377
    %v6769 = vpack.c.b16 %v5391, %v5378
    %v6770 = vpack.c.b16 %v5405, %v5392
    %v6771 = vpack.c.b16 %v5406, %v5393
    %v6772 = vpack.c.b16 %v5407, %v5394
    %v6773 = vpack.c.b16 %v5408, %v5395
    %v6774 = vpack.c.b16 %v5409, %v5396
    %v6775 = vpack.c.b16 %v5410, %v5397
    %v6776 = vpack.c.b16 %v5411, %v5398
    %v6777 = vpack.c.b16 %v5412, %v5399
    %v6778 = vpack.c.b16 %v5413, %v5400
    %v6779 = vpack.c.b16 %v5414, %v5401
    %v6780 = vpack.c.b16 %v5415, %v5402
    %v6781 = vpack.c.b16 %v5416, %v5403
    %v6782 = vpack.c.b16 %v5417, %v5404
    %v6783 = vpack.c.b16 %v5431, %v5418
    %v6784 = vpack.c.b16 %v5432, %v5419
    %v6785 = vpack.c.b16 %v5433, %v5420
    %v6786 = vpack.c.b16 %v5434, %v5421
    %v6787 = vpack.c.b16 %v5435, %v5422
    %v6788 = vpack.c.b16 %v5436, %v5423
    %v6789 = vpack.c.b16 %v5437, %v5424
    %v6790 = vpack.c.b16 %v5438, %v5425
    %v6791 = vpack.c.b16 %v5439, %v5426
    %v6792 = vpack.c.b16 %v5440, %v5427
    %v6793 = vpack.c.b16 %v5441, %v5428
    %v6794 = vpack.c.b16 %v5442, %v5429
    %v6795 = vpack.c.b16 %v5443, %v5430
    %v6796 = vpack.c.b16 %v5457, %v5444
    %v6797 = vpack.c.b16 %v5458, %v5445
    %v6798 = vpack.c.b16 %v5459, %v5446
    %v6799 = vpack.c.b16 %v5460, %v5447
    %v6800 = vpack.c.b16 %v5461, %v5448
    %v6801 = vpack.c.b16 %v5462, %v5449
    %v6802 = vpack.c.b16 %v5463, %v5450
    %v6803 = vpack.c.b16 %v5464, %v5451
    %v6804 = vpack.c.b16 %v5465, %v5452
    %v6805 = vpack.c.b16 %v5466, %v5453
    %v6806 = vpack.c.b16 %v5467, %v5454
    %v6807 = vpack.c.b16 %v5468, %v5455
    %v6808 = vpack.c.b16 %v5469, %v5456
    %v6809 = vpack.c.b16 %v5483, %v5470
    %v6810 = vpack.c.b16 %v5484, %v5471
    %v6811 = vpack.c.b16 %v5485, %v5472
    %v6812 = vpack.c.b16 %v5486, %v5473
    %v6813 = vpack.c.b16 %v5487, %v5474
    %v6814 = vpack.c.b16 %v5488, %v5475
    %v6815 = vpack.c.b16 %v5489, %v5476
    %v6816 = vpack.c.b16 %v5490, %v5477
    %v6817 = vpack.c.b16 %v5491, %v5478
    %v6818 = vpack.c.b16 %v5492, %v5479
    %v6819 = vpack.c.b16 %v5493, %v5480
    %v6820 = vpack.c.b16 %v5494, %v5481
    %v6821 = vpack.c.b16 %v5495, %v5482
    %v6822 = vpack.c.b16 %v5509, %v5496
    %v6823 = vpack.c.b16 %v5510, %v5497
    %v6824 = vpack.c.b16 %v5511, %v5498
    %v6825 = vpack.c.b16 %v5512, %v5499
    %v6826 = vpack.c.b16 %v5513, %v5500
    %v6827 = vpack.c.b16 %v5514, %v5501
    %v6828 = vpack.c.b16 %v5515, %v5502
    %v6829 = vpack.c.b16 %v5516, %v5503
    %v6830 = vpack.c.b16 %v5517, %v5504
    %v6831 = vpack.c.b16 %v5518, %v5505
    %v6832 = vpack.c.b16 %v5519, %v5506
    %v6833 = vpack.c.b16 %v5520, %v5507
    %v6834 = vpack.c.b16 %v5521, %v5508
    %v6835 = vpack.c.b16 %v5535, %v5522
    %v6836 = vpack.c.b16 %v5536, %v5523
    %v6837 = vpack.c.b16 %v5537, %v5524
    %v6838 = vpack.c.b16 %v5538, %v5525
    %v6839 = vpack.c.b16 %v5539, %v5526
    %v6840 = vpack.c.b16 %v5540, %v5527
    %v6841 = vpack.c.b16 %v5541, %v5528
    %v6842 = vpack.c.b16 %v5542, %v5529
    %v6843 = vpack.c.b16 %v5543, %v5530
    %v6844 = vpack.c.b16 %v5544, %v5531
    %v6845 = vpack.c.b16 %v5545, %v5532
    %v6846 = vpack.c.b16 %v5546, %v5533
    %v6847 = vpack.c.b16 %v5547, %v5534
    %vm8148 = vcmask 523264
    %v8150 = vsel %vm8148, %v78, 0
    %8152 = vmatprep.subr.bf16.mxu0 %v5549
    %8153 = vmatpush1.bf16.msra.mxu0 %v5548
    %8154 = vmatprep.subr.bf16.mxu0 %v5562
    %8155 = vmatpush1.bf16.msra.mxu0 %v5561
    %8156 = vmatprep.subr.bf16.mxu0 %v5575
    %8157 = vmatpush1.bf16.msra.mxu0 %v5574
    %8158 = vmatprep.subr.bf16.mxu0 %v5588
    %8159 = vmatpush1.bf16.msra.mxu0 %v5587
    %8160 = vmatprep.subr.bf16.mxu0 %v5601
    %8161 = vmatpush1.bf16.msra.mxu0 %v5600
    %8162 = vmatprep.subr.bf16.mxu0 %v5614
    %8163 = vmatpush1.bf16.msra.mxu0 %v5613
    %8164 = vmatprep.subr.bf16.mxu0 %v5627
    %8165 = vmatpush1.bf16.msra.mxu0 %v5626
    %8166 = vmatprep.subr.bf16.mxu0 %v5640
    %8167 = vmatpush1.bf16.msra.mxu0 %v5639
    %8168 = vmatprep.subr.bf16.mxu0 %v5653
    %8169 = vmatpush1.bf16.msra.mxu0 %v5652
    %8170 = vmatprep.subr.bf16.mxu0 %v5666
    %8171 = vmatpush1.bf16.msra.mxu0 %v5665
    %8172 = vmatprep.subr.bf16.mxu0 %v5679
    %8173 = vmatpush1.bf16.msra.mxu0 %v5678
    %8174 = vmatprep.subr.bf16.mxu0 %v5692
    %8175 = vmatpush1.bf16.msra.mxu0 %v5691
    %8176 = vmatprep.subr.bf16.mxu0 %v5705
    %8177 = vmatpush1.bf16.msra.mxu0 %v5704
    %8178 = vmatprep.subr.bf16.mxu0 %v5718
    %8179 = vmatpush1.bf16.msra.mxu0 %v5717
    %8180 = vmatprep.subr.bf16.mxu0 %v5731
    %8181 = vmatpush1.bf16.msra.mxu0 %v5730
    %8182 = vmatprep.subr.bf16.mxu0 %v5744
    %8183 = vmatpush1.bf16.msra.mxu0 %v5743
    %8184 = vmatprep.mubr.bf16.mxu0 %v67
    %8185 = vmatmul.mubr.bf16.gmra.mrb[0].mxu0 %v66
    %v8186 = vpop.f32.mrb[0].mxu0
    %v8187 = vadd.f32 %v1486, %v8186
    %v8188 = vpop.f32.mrb[0].mxu0
    %v8189 = vadd.f32 %v1490, %v8188
    %v8190 = vpop.f32.mrb[0].mxu0
    %v8191 = vpop.f32.mrb[0].mxu0
    %8192 = vdwg.mxu0
    %8193 = vmatprep.subr.bf16.mxu0 %v5757
    %8194 = vmatpush1.bf16.msra.mxu0 %v5756
    %8195 = vmatprep.subr.bf16.mxu0 %v5770
    %8196 = vmatpush1.bf16.msra.mxu0 %v5769
    %8197 = vmatprep.subr.bf16.mxu0 %v5783
    %8198 = vmatpush1.bf16.msra.mxu0 %v5782
    %8199 = vmatprep.subr.bf16.mxu0 %v5796
    %8200 = vmatpush1.bf16.msra.mxu0 %v5795
    %8201 = vmatprep.subr.bf16.mxu0 %v5809
    %8202 = vmatpush1.bf16.msra.mxu0 %v5808
    %8203 = vmatprep.subr.bf16.mxu0 %v5822
    %8204 = vmatpush1.bf16.msra.mxu0 %v5821
    %8205 = vmatprep.subr.bf16.mxu0 %v5835
    %8206 = vmatpush1.bf16.msra.mxu0 %v5834
    %8207 = vmatprep.subr.bf16.mxu0 %v5848
    %8208 = vmatpush1.bf16.msra.mxu0 %v5847
    %8209 = vmatprep.subr.bf16.mxu0 %v5861
    %8210 = vmatpush1.bf16.msra.mxu0 %v5860
    %8211 = vmatprep.subr.bf16.mxu0 %v5874
    %8212 = vmatpush1.bf16.msra.mxu0 %v5873
    %8213 = vmatprep.subr.bf16.mxu0 %v5887
    %8214 = vmatpush1.bf16.msra.mxu0 %v5886
    %8215 = vmatprep.subr.bf16.mxu0 %v5900
    %8216 = vmatpush1.bf16.msra.mxu0 %v5899
    %8217 = vmatprep.subr.bf16.mxu0 %v5913
    %8218 = vmatpush1.bf16.msra.mxu0 %v5912
    %8219 = vmatprep.subr.bf16.mxu0 %v5926
    %8220 = vmatpush1.bf16.msra.mxu0 %v5925
    %8221 = vmatprep.subr.bf16.mxu0 %v5939
    %8222 = vmatpush1.bf16.msra.mxu0 %v5938
    %8223 = vmatprep.subr.bf16.mxu0 %v5952
    %8224 = vmatpush1.bf16.msra.mxu0 %v5951
    %8225 = vmatprep.mubr.bf16.mxu0 %v69
    %8226 = vmatmul.mubr.bf16.gmra.mrb[0].mxu0 %v68
    %v8227 = vpop.f32.mrb[0].mxu0
    %v8228 = vadd.f32 %v8187, %v8227
    %v8229 = vpop.f32.mrb[0].mxu0
    %v8230 = vadd.f32 %v8189, %v8229
    %v8231 = vpop.f32.mrb[0].mxu0
    %v8232 = vpop.f32.mrb[0].mxu0
    %8233 = vdwg.mxu0
    %8234 = vmatprep.subr.bf16.mxu0 %v5965
    %8235 = vmatpush1.bf16.msra.mxu0 %v5964
    %8236 = vmatprep.subr.bf16.mxu0 %v5978
    %8237 = vmatpush1.bf16.msra.mxu0 %v5977
    %8238 = vmatprep.subr.bf16.mxu0 %v5991
    %8239 = vmatpush1.bf16.msra.mxu0 %v5990
    %8240 = vmatprep.subr.bf16.mxu0 %v6004
    %8241 = vmatpush1.bf16.msra.mxu0 %v6003
    %8242 = vmatprep.subr.bf16.mxu0 %v6017
    %8243 = vmatpush1.bf16.msra.mxu0 %v6016
    %8244 = vmatprep.subr.bf16.mxu0 %v6030
    %8245 = vmatpush1.bf16.msra.mxu0 %v6029
    %8246 = vmatprep.subr.bf16.mxu0 %v6043
    %8247 = vmatpush1.bf16.msra.mxu0 %v6042
    %8248 = vmatprep.subr.bf16.mxu0 %v6056
    %8249 = vmatpush1.bf16.msra.mxu0 %v6055
    %8250 = vmatprep.subr.bf16.mxu0 %v6069
    %8251 = vmatpush1.bf16.msra.mxu0 %v6068
    %8252 = vmatprep.subr.bf16.mxu0 %v6082
    %8253 = vmatpush1.bf16.msra.mxu0 %v6081
    %8254 = vmatprep.subr.bf16.mxu0 %v6095
    %8255 = vmatpush1.bf16.msra.mxu0 %v6094
    %8256 = vmatprep.subr.bf16.mxu0 %v6108
    %8257 = vmatpush1.bf16.msra.mxu0 %v6107
    %8258 = vmatprep.subr.bf16.mxu0 %v6121
    %8259 = vmatpush1.bf16.msra.mxu0 %v6120
    %8260 = vmatprep.subr.bf16.mxu0 %v6134
    %8261 = vmatpush1.bf16.msra.mxu0 %v6133
    %8262 = vmatprep.subr.bf16.mxu0 %v6147
    %8263 = vmatpush1.bf16.msra.mxu0 %v6146
    %8264 = vmatprep.subr.bf16.mxu0 %v6160
    %8265 = vmatpush1.bf16.msra.mxu0 %v6159
    %8266 = vmatprep.mubr.bf16.mxu0 %v71
    %8267 = vmatmul.mubr.bf16.gmra.mrb[0].mxu0 %v70
    %v8268 = vpop.f32.mrb[0].mxu0
    %v8269 = vadd.f32 %v8228, %v8268
    %v8270 = vpop.f32.mrb[0].mxu0
    %v8271 = vadd.f32 %v8230, %v8270
    %v8272 = vpop.f32.mrb[0].mxu0
    %v8273 = vpop.f32.mrb[0].mxu0
    %8274 = vdwg.mxu0
    %8275 = vmatprep.subr.bf16.mxu0 %v6173
    %8276 = vmatpush1.bf16.msra.mxu0 %v6172
    %8277 = vmatprep.subr.bf16.mxu0 %v6186
    %8278 = vmatpush1.bf16.msra.mxu0 %v6185
    %8279 = vmatprep.subr.bf16.mxu0 %v6199
    %8280 = vmatpush1.bf16.msra.mxu0 %v6198
    %8281 = vmatprep.subr.bf16.mxu0 %v6212
    %8282 = vmatpush1.bf16.msra.mxu0 %v6211
    %8283 = vmatprep.subr.bf16.mxu0 %v6225
    %8284 = vmatpush1.bf16.msra.mxu0 %v6224
    %8285 = vmatprep.subr.bf16.mxu0 %v6238
    %8286 = vmatpush1.bf16.msra.mxu0 %v6237
    %8287 = vmatprep.subr.bf16.mxu0 %v6251
    %8288 = vmatpush1.bf16.msra.mxu0 %v6250
    %8289 = vmatprep.subr.bf16.mxu0 %v6264
    %8290 = vmatpush1.bf16.msra.mxu0 %v6263
    %8291 = vmatprep.subr.bf16.mxu0 %v6277
    %8292 = vmatpush1.bf16.msra.mxu0 %v6276
    %8293 = vmatprep.subr.bf16.mxu0 %v6290
    %8294 = vmatpush1.bf16.msra.mxu0 %v6289
    %8295 = vmatprep.subr.bf16.mxu0 %v6303
    %8296 = vmatpush1.bf16.msra.mxu0 %v6302
    %8297 = vmatprep.subr.bf16.mxu0 %v6316
    %8298 = vmatpush1.bf16.msra.mxu0 %v6315
    %8299 = vmatprep.subr.bf16.mxu0 %v6329
    %8300 = vmatpush1.bf16.msra.mxu0 %v6328
    %8301 = vmatprep.subr.bf16.mxu0 %v6342
    %8302 = vmatpush1.bf16.msra.mxu0 %v6341
    %8303 = vmatprep.subr.bf16.mxu0 %v6355
    %8304 = vmatpush1.bf16.msra.mxu0 %v6354
    %8305 = vmatprep.subr.bf16.mxu0 %v6368
    %8306 = vmatpush1.bf16.msra.mxu0 %v6367
    %8307 = vmatprep.mubr.bf16.mxu0 %v73
    %8308 = vmatmul.mubr.bf16.gmra.mrb[0].mxu0 %v72
    %v8309 = vpop.f32.mrb[0].mxu0
    %v8310 = vadd.f32 %v8269, %v8309
    %v8311 = vpop.f32.mrb[0].mxu0
    %v8312 = vadd.f32 %v8271, %v8311
    %v8313 = vpop.f32.mrb[0].mxu0
    %v8314 = vpop.f32.mrb[0].mxu0
    %8315 = vdwg.mxu0
    %8316 = vmatprep.subr.bf16.mxu0 %v6381
    %8317 = vmatpush1.bf16.msra.mxu0 %v6380
    %8318 = vmatprep.subr.bf16.mxu0 %v6394
    %8319 = vmatpush1.bf16.msra.mxu0 %v6393
    %8320 = vmatprep.subr.bf16.mxu0 %v6407
    %8321 = vmatpush1.bf16.msra.mxu0 %v6406
    %8322 = vmatprep.subr.bf16.mxu0 %v6420
    %8323 = vmatpush1.bf16.msra.mxu0 %v6419
    %8324 = vmatprep.subr.bf16.mxu0 %v6433
    %8325 = vmatpush1.bf16.msra.mxu0 %v6432
    %8326 = vmatprep.subr.bf16.mxu0 %v6446
    %8327 = vmatpush1.bf16.msra.mxu0 %v6445
    %8328 = vmatprep.subr.bf16.mxu0 %v6459
    %8329 = vmatpush1.bf16.msra.mxu0 %v6458
    %8330 = vmatprep.subr.bf16.mxu0 %v6472
    %8331 = vmatpush1.bf16.msra.mxu0 %v6471
    %8332 = vmatprep.subr.bf16.mxu0 %v6485
    %8333 = vmatpush1.bf16.msra.mxu0 %v6484
    %8334 = vmatprep.subr.bf16.mxu0 %v6498
    %8335 = vmatpush1.bf16.msra.mxu0 %v6497
    %8336 = vmatprep.subr.bf16.mxu0 %v6511
    %8337 = vmatpush1.bf16.msra.mxu0 %v6510
    %8338 = vmatprep.subr.bf16.mxu0 %v6524
    %8339 = vmatpush1.bf16.msra.mxu0 %v6523
    %8340 = vmatprep.subr.bf16.mxu0 %v6537
    %8341 = vmatpush1.bf16.msra.mxu0 %v6536
    %8342 = vmatprep.subr.bf16.mxu0 %v6550
    %8343 = vmatpush1.bf16.msra.mxu0 %v6549
    %8344 = vmatprep.subr.bf16.mxu0 %v6563
    %8345 = vmatpush1.bf16.msra.mxu0 %v6562
    %8346 = vmatprep.subr.bf16.mxu0 %v6576
    %8347 = vmatpush1.bf16.msra.mxu0 %v6575
    %8348 = vmatprep.mubr.bf16.mxu0 %v75
    %8349 = vmatmul.mubr.bf16.gmra.mrb[0].mxu0 %v74
    %v8350 = vpop.f32.mrb[0].mxu0
    %v8351 = vadd.f32 %v8310, %v8350
    %v8352 = vpop.f32.mrb[0].mxu0
    %v8353 = vadd.f32 %v8312, %v8352
    %v8354 = vpop.f32.mrb[0].mxu0
    %v8355 = vpop.f32.mrb[0].mxu0
    %8356 = vdwg.mxu0
    %8357 = vmatprep.subr.bf16.mxu0 %v6589
    %8358 = vmatpush1.bf16.msra.mxu0 %v6588
    %8359 = vmatprep.subr.bf16.mxu0 %v6602
    %8360 = vmatpush1.bf16.msra.mxu0 %v6601
    %8361 = vmatprep.subr.bf16.mxu0 %v6615
    %8362 = vmatpush1.bf16.msra.mxu0 %v6614
    %8363 = vmatprep.subr.bf16.mxu0 %v6628
    %8364 = vmatpush1.bf16.msra.mxu0 %v6627
    %8365 = vmatprep.subr.bf16.mxu0 %v6641
    %8366 = vmatpush1.bf16.msra.mxu0 %v6640
    %8367 = vmatprep.subr.bf16.mxu0 %v6654
    %8368 = vmatpush1.bf16.msra.mxu0 %v6653
    %8369 = vmatprep.subr.bf16.mxu0 %v6667
    %8370 = vmatpush1.bf16.msra.mxu0 %v6666
    %8371 = vmatprep.subr.bf16.mxu0 %v6680
    %8372 = vmatpush1.bf16.msra.mxu0 %v6679
    %8373 = vmatprep.subr.bf16.mxu0 %v6693
    %8374 = vmatpush1.bf16.msra.mxu0 %v6692
    %8375 = vmatprep.subr.bf16.mxu0 %v6706
    %8376 = vmatpush1.bf16.msra.mxu0 %v6705
    %8377 = vmatprep.subr.bf16.mxu0 %v6719
    %8378 = vmatpush1.bf16.msra.mxu0 %v6718
    %8379 = vmatprep.subr.bf16.mxu0 %v6732
    %8380 = vmatpush1.bf16.msra.mxu0 %v6731
    %8381 = vmatprep.subr.bf16.mxu0 %v6745
    %8382 = vmatpush1.bf16.msra.mxu0 %v6744
    %8383 = vmatprep.subr.bf16.mxu0 %v6758
    %8384 = vmatpush1.bf16.msra.mxu0 %v6757
    %8385 = vmatprep.subr.bf16.mxu0 %v6771
    %8386 = vmatpush1.bf16.msra.mxu0 %v6770
    %8387 = vmatprep.subr.bf16.mxu0 %v6784
    %8388 = vmatpush1.bf16.msra.mxu0 %v6783
    %8389 = vmatprep.mubr.bf16.mxu0 %v77
    %8390 = vmatmul.mubr.bf16.gmra.mrb[0].mxu0 %v76
    %v8391 = vpop.f32.mrb[0].mxu0
    %v8392 = vadd.f32 %v8351, %v8391
    %v8393 = vpop.f32.mrb[0].mxu0
    %v8394 = vadd.f32 %v8353, %v8393
    %v8395 = vpop.f32.mrb[0].mxu0
    %v8396 = vpop.f32.mrb[0].mxu0
    %8397 = vdwg.mxu0
    %8398 = vmatprep.subr.bf16.mxu0 %v6797
    %8399 = vmatpush1.bf16.msra.mxu0 %v6796
    %8400 = vmatprep.subr.bf16.mxu0 %v6810
    %8401 = vmatpush1.bf16.msra.mxu0 %v6809
    %8402 = vmatprep.subr.bf16.mxu0 %v6823
    %8403 = vmatpush1.bf16.msra.mxu0 %v6822
    %8404 = vmatprep.subr.bf16.mxu0 %v6836
    %8405 = vmatpush1.bf16.msra.mxu0 %v6835
    %8406 = vmatprep.subr.bf16.mxu0 0
    %8407 = vmatpush1.bf16.msra.mxu0 0
    %8408 = vmatprep.subr.bf16.mxu0 0
    %8409 = vmatpush1.bf16.msra.mxu0 0
    %8410 = vmatprep.subr.bf16.mxu0 0
    %8411 = vmatpush1.bf16.msra.mxu0 0
    %8412 = vmatprep.subr.bf16.mxu0 0
    %8413 = vmatpush1.bf16.msra.mxu0 0
    %8414 = vmatprep.subr.bf16.mxu0 0
    %8415 = vmatpush1.bf16.msra.mxu0 0
    %8416 = vmatprep.subr.bf16.mxu0 0
    %8417 = vmatpush1.bf16.msra.mxu0 0
    %8418 = vmatprep.subr.bf16.mxu0 0
    %8419 = vmatpush1.bf16.msra.mxu0 0
    %8420 = vmatprep.subr.bf16.mxu0 0
    %8421 = vmatpush1.bf16.msra.mxu0 0
    %8422 = vmatprep.subr.bf16.mxu0 0
    %8423 = vmatpush1.bf16.msra.mxu0 0
    %8424 = vmatprep.subr.bf16.mxu0 0
    %8425 = vmatpush1.bf16.msra.mxu0 0
    %8426 = vmatprep.subr.bf16.mxu0 0
    %8427 = vmatpush1.bf16.msra.mxu0 0
    %8428 = vmatprep.subr.bf16.mxu0 0
    %8429 = vmatpush1.bf16.msra.mxu0 0
    %8430 = vmatprep.mubr.bf16.mxu0 0
    %8431 = vmatmul.mubr.bf16.gmra.mrb[0].mxu0 %v8150
    %v8432 = vpop.f32.mrb[0].mxu0
    %v8433 = vadd.f32 %v8392, %v8432
    %v8434 = vpop.f32.mrb[0].mxu0
    %v8435 = vadd.f32 %v8394, %v8434
    %v8436 = vpop.f32.mrb[0].mxu0
    %v8437 = vpop.f32.mrb[0].mxu0
    %8438 = vdwg.mxu0
    %8439 = vmatprep.subr.bf16.mxu0 %v5551
    %8440 = vmatpush1.bf16.msra.mxu0 %v5550
    %8441 = vmatprep.subr.bf16.mxu0 %v5564
    %8442 = vmatpush1.bf16.msra.mxu0 %v5563
    %8443 = vmatprep.subr.bf16.mxu0 %v5577
    %8444 = vmatpush1.bf16.msra.mxu0 %v5576
    %8445 = vmatprep.subr.bf16.mxu0 %v5590
    %8446 = vmatpush1.bf16.msra.mxu0 %v5589
    %8447 = vmatprep.subr.bf16.mxu0 %v5603
    %8448 = vmatpush1.bf16.msra.mxu0 %v5602
    %8449 = vmatprep.subr.bf16.mxu0 %v5616
    %8450 = vmatpush1.bf16.msra.mxu0 %v5615
    %8451 = vmatprep.subr.bf16.mxu0 %v5629
    %8452 = vmatpush1.bf16.msra.mxu0 %v5628
    %8453 = vmatprep.subr.bf16.mxu0 %v5642
    %8454 = vmatpush1.bf16.msra.mxu0 %v5641
    %8455 = vmatprep.subr.bf16.mxu0 %v5655
    %8456 = vmatpush1.bf16.msra.mxu0 %v5654
    %8457 = vmatprep.subr.bf16.mxu0 %v5668
    %8458 = vmatpush1.bf16.msra.mxu0 %v5667
    %8459 = vmatprep.subr.bf16.mxu0 %v5681
    %8460 = vmatpush1.bf16.msra.mxu0 %v5680
    %8461 = vmatprep.subr.bf16.mxu0 %v5694
    %8462 = vmatpush1.bf16.msra.mxu0 %v5693
    %8463 = vmatprep.subr.bf16.mxu0 %v5707
    %8464 = vmatpush1.bf16.msra.mxu0 %v5706
    %8465 = vmatprep.subr.bf16.mxu0 %v5720
    %8466 = vmatpush1.bf16.msra.mxu0 %v5719
    %8467 = vmatprep.subr.bf16.mxu0 %v5733
    %8468 = vmatpush1.bf16.msra.mxu0 %v5732
    %8469 = vmatprep.subr.bf16.mxu0 %v5746
    %8470 = vmatpush1.bf16.msra.mxu0 %v5745
    %8471 = vmatprep.mubr.bf16.mxu0 %v67
    %8472 = vmatmul.mubr.bf16.gmra.mrb[0].mxu0 %v66
    %v8473 = vpop.f32.mrb[0].mxu0
    %v8474 = vadd.f32 %v1494, %v8473
    %v8475 = vpop.f32.mrb[0].mxu0
    %v8476 = vadd.f32 %v1498, %v8475
    %v8477 = vpop.f32.mrb[0].mxu0
    %v8478 = vpop.f32.mrb[0].mxu0
    %8479 = vdwg.mxu0
    %8480 = vmatprep.subr.bf16.mxu0 %v5759
    %8481 = vmatpush1.bf16.msra.mxu0 %v5758
    %8482 = vmatprep.subr.bf16.mxu0 %v5772
    %8483 = vmatpush1.bf16.msra.mxu0 %v5771
    %8484 = vmatprep.subr.bf16.mxu0 %v5785
    %8485 = vmatpush1.bf16.msra.mxu0 %v5784
    %8486 = vmatprep.subr.bf16.mxu0 %v5798
    %8487 = vmatpush1.bf16.msra.mxu0 %v5797
    %8488 = vmatprep.subr.bf16.mxu0 %v5811
    %8489 = vmatpush1.bf16.msra.mxu0 %v5810
    %8490 = vmatprep.subr.bf16.mxu0 %v5824
    %8491 = vmatpush1.bf16.msra.mxu0 %v5823
    %8492 = vmatprep.subr.bf16.mxu0 %v5837
    %8493 = vmatpush1.bf16.msra.mxu0 %v5836
    %8494 = vmatprep.subr.bf16.mxu0 %v5850
    %8495 = vmatpush1.bf16.msra.mxu0 %v5849
    %8496 = vmatprep.subr.bf16.mxu0 %v5863
    %8497 = vmatpush1.bf16.msra.mxu0 %v5862
    %8498 = vmatprep.subr.bf16.mxu0 %v5876
    %8499 = vmatpush1.bf16.msra.mxu0 %v5875
    %8500 = vmatprep.subr.bf16.mxu0 %v5889
    %8501 = vmatpush1.bf16.msra.mxu0 %v5888
    %8502 = vmatprep.subr.bf16.mxu0 %v5902
    %8503 = vmatpush1.bf16.msra.mxu0 %v5901
    %8504 = vmatprep.subr.bf16.mxu0 %v5915
    %8505 = vmatpush1.bf16.msra.mxu0 %v5914
    %8506 = vmatprep.subr.bf16.mxu0 %v5928
    %8507 = vmatpush1.bf16.msra.mxu0 %v5927
    %8508 = vmatprep.subr.bf16.mxu0 %v5941
    %8509 = vmatpush1.bf16.msra.mxu0 %v5940
    %8510 = vmatprep.subr.bf16.mxu0 %v5954
    %8511 = vmatpush1.bf16.msra.mxu0 %v5953
    %8512 = vmatprep.mubr.bf16.mxu0 %v69
    %8513 = vmatmul.mubr.bf16.gmra.mrb[0].mxu0 %v68
    %v8514 = vpop.f32.mrb[0].mxu0
    %v8515 = vadd.f32 %v8474, %v8514
    %v8516 = vpop.f32.mrb[0].mxu0
    %v8517 = vadd.f32 %v8476, %v8516
    %v8518 = vpop.f32.mrb[0].mxu0
    %v8519 = vpop.f32.mrb[0].mxu0
    %8520 = vdwg.mxu0
    %8521 = vmatprep.subr.bf16.mxu0 %v5967
    %8522 = vmatpush1.bf16.msra.mxu0 %v5966
    %8523 = vmatprep.subr.bf16.mxu0 %v5980
    %8524 = vmatpush1.bf16.msra.mxu0 %v5979
    %8525 = vmatprep.subr.bf16.mxu0 %v5993
    %8526 = vmatpush1.bf16.msra.mxu0 %v5992
    %8527 = vmatprep.subr.bf16.mxu0 %v6006
    %8528 = vmatpush1.bf16.msra.mxu0 %v6005
    %8529 = vmatprep.subr.bf16.mxu0 %v6019
    %8530 = vmatpush1.bf16.msra.mxu0 %v6018
    %8531 = vmatprep.subr.bf16.mxu0 %v6032
    %8532 = vmatpush1.bf16.msra.mxu0 %v6031
    %8533 = vmatprep.subr.bf16.mxu0 %v6045
    %8534 = vmatpush1.bf16.msra.mxu0 %v6044
    %8535 = vmatprep.subr.bf16.mxu0 %v6058
    %8536 = vmatpush1.bf16.msra.mxu0 %v6057
    %8537 = vmatprep.subr.bf16.mxu0 %v6071
    %8538 = vmatpush1.bf16.msra.mxu0 %v6070
    %8539 = vmatprep.subr.bf16.mxu0 %v6084
    %8540 = vmatpush1.bf16.msra.mxu0 %v6083
    %8541 = vmatprep.subr.bf16.mxu0 %v6097
    %8542 = vmatpush1.bf16.msra.mxu0 %v6096
    %8543 = vmatprep.subr.bf16.mxu0 %v6110
    %8544 = vmatpush1.bf16.msra.mxu0 %v6109
    %8545 = vmatprep.subr.bf16.mxu0 %v6123
    %8546 = vmatpush1.bf16.msra.mxu0 %v6122
    %8547 = vmatprep.subr.bf16.mxu0 %v6136
    %8548 = vmatpush1.bf16.msra.mxu0 %v6135
    %8549 = vmatprep.subr.bf16.mxu0 %v6149
    %8550 = vmatpush1.bf16.msra.mxu0 %v6148
    %8551 = vmatprep.subr.bf16.mxu0 %v6162
    %8552 = vmatpush1.bf16.msra.mxu0 %v6161
    %8553 = vmatprep.mubr.bf16.mxu0 %v71
    %8554 = vmatmul.mubr.bf16.gmra.mrb[0].mxu0 %v70
    %v8555 = vpop.f32.mrb[0].mxu0
    %v8556 = vadd.f32 %v8515, %v8555
    %v8557 = vpop.f32.mrb[0].mxu0
    %v8558 = vadd.f32 %v8517, %v8557
    %v8559 = vpop.f32.mrb[0].mxu0
    %v8560 = vpop.f32.mrb[0].mxu0
    %8561 = vdwg.mxu0
    %8562 = vmatprep.subr.bf16.mxu0 %v6175
    %8563 = vmatpush1.bf16.msra.mxu0 %v6174
    %8564 = vmatprep.subr.bf16.mxu0 %v6188
    %8565 = vmatpush1.bf16.msra.mxu0 %v6187
    %8566 = vmatprep.subr.bf16.mxu0 %v6201
    %8567 = vmatpush1.bf16.msra.mxu0 %v6200
    %8568 = vmatprep.subr.bf16.mxu0 %v6214
    %8569 = vmatpush1.bf16.msra.mxu0 %v6213
    %8570 = vmatprep.subr.bf16.mxu0 %v6227
    %8571 = vmatpush1.bf16.msra.mxu0 %v6226
    %8572 = vmatprep.subr.bf16.mxu0 %v6240
    %8573 = vmatpush1.bf16.msra.mxu0 %v6239
    %8574 = vmatprep.subr.bf16.mxu0 %v6253
    %8575 = vmatpush1.bf16.msra.mxu0 %v6252
    %8576 = vmatprep.subr.bf16.mxu0 %v6266
    %8577 = vmatpush1.bf16.msra.mxu0 %v6265
    %8578 = vmatprep.subr.bf16.mxu0 %v6279
    %8579 = vmatpush1.bf16.msra.mxu0 %v6278
    %8580 = vmatprep.subr.bf16.mxu0 %v6292
    %8581 = vmatpush1.bf16.msra.mxu0 %v6291
    %8582 = vmatprep.subr.bf16.mxu0 %v6305
    %8583 = vmatpush1.bf16.msra.mxu0 %v6304
    %8584 = vmatprep.subr.bf16.mxu0 %v6318
    %8585 = vmatpush1.bf16.msra.mxu0 %v6317
    %8586 = vmatprep.subr.bf16.mxu0 %v6331
    %8587 = vmatpush1.bf16.msra.mxu0 %v6330
    %8588 = vmatprep.subr.bf16.mxu0 %v6344
    %8589 = vmatpush1.bf16.msra.mxu0 %v6343
    %8590 = vmatprep.subr.bf16.mxu0 %v6357
    %8591 = vmatpush1.bf16.msra.mxu0 %v6356
    %8592 = vmatprep.subr.bf16.mxu0 %v6370
    %8593 = vmatpush1.bf16.msra.mxu0 %v6369
    %8594 = vmatprep.mubr.bf16.mxu0 %v73
    %8595 = vmatmul.mubr.bf16.gmra.mrb[0].mxu0 %v72
    %v8596 = vpop.f32.mrb[0].mxu0
    %v8597 = vadd.f32 %v8556, %v8596
    %v8598 = vpop.f32.mrb[0].mxu0
    %v8599 = vadd.f32 %v8558, %v8598
    %v8600 = vpop.f32.mrb[0].mxu0
    %v8601 = vpop.f32.mrb[0].mxu0
    %8602 = vdwg.mxu0
    %8603 = vmatprep.subr.bf16.mxu0 %v6383
    %8604 = vmatpush1.bf16.msra.mxu0 %v6382
    %8605 = vmatprep.subr.bf16.mxu0 %v6396
    %8606 = vmatpush1.bf16.msra.mxu0 %v6395
    %8607 = vmatprep.subr.bf16.mxu0 %v6409
    %8608 = vmatpush1.bf16.msra.mxu0 %v6408
    %8609 = vmatprep.subr.bf16.mxu0 %v6422
    %8610 = vmatpush1.bf16.msra.mxu0 %v6421
    %8611 = vmatprep.subr.bf16.mxu0 %v6435
    %8612 = vmatpush1.bf16.msra.mxu0 %v6434
    %8613 = vmatprep.subr.bf16.mxu0 %v6448
    %8614 = vmatpush1.bf16.msra.mxu0 %v6447
    %8615 = vmatprep.subr.bf16.mxu0 %v6461
    %8616 = vmatpush1.bf16.msra.mxu0 %v6460
    %8617 = vmatprep.subr.bf16.mxu0 %v6474
    %8618 = vmatpush1.bf16.msra.mxu0 %v6473
    %8619 = vmatprep.subr.bf16.mxu0 %v6487
    %8620 = vmatpush1.bf16.msra.mxu0 %v6486
    %8621 = vmatprep.subr.bf16.mxu0 %v6500
    %8622 = vmatpush1.bf16.msra.mxu0 %v6499
    %8623 = vmatprep.subr.bf16.mxu0 %v6513
    %8624 = vmatpush1.bf16.msra.mxu0 %v6512
    %8625 = vmatprep.subr.bf16.mxu0 %v6526
    %8626 = vmatpush1.bf16.msra.mxu0 %v6525
    %8627 = vmatprep.subr.bf16.mxu0 %v6539
    %8628 = vmatpush1.bf16.msra.mxu0 %v6538
    %8629 = vmatprep.subr.bf16.mxu0 %v6552
    %8630 = vmatpush1.bf16.msra.mxu0 %v6551
    %8631 = vmatprep.subr.bf16.mxu0 %v6565
    %8632 = vmatpush1.bf16.msra.mxu0 %v6564
    %8633 = vmatprep.subr.bf16.mxu0 %v6578
    %8634 = vmatpush1.bf16.msra.mxu0 %v6577
    %8635 = vmatprep.mubr.bf16.mxu0 %v75
    %8636 = vmatmul.mubr.bf16.gmra.mrb[0].mxu0 %v74
    %v8637 = vpop.f32.mrb[0].mxu0
    %v8638 = vadd.f32 %v8597, %v8637
    %v8639 = vpop.f32.mrb[0].mxu0
    %v8640 = vadd.f32 %v8599, %v8639
    %v8641 = vpop.f32.mrb[0].mxu0
    %v8642 = vpop.f32.mrb[0].mxu0
    %8643 = vdwg.mxu0
    %8644 = vmatprep.subr.bf16.mxu0 %v6591
    %8645 = vmatpush1.bf16.msra.mxu0 %v6590
    %8646 = vmatprep.subr.bf16.mxu0 %v6604
    %8647 = vmatpush1.bf16.msra.mxu0 %v6603
    %8648 = vmatprep.subr.bf16.mxu0 %v6617
    %8649 = vmatpush1.bf16.msra.mxu0 %v6616
    %8650 = vmatprep.subr.bf16.mxu0 %v6630
    %8651 = vmatpush1.bf16.msra.mxu0 %v6629
    %8652 = vmatprep.subr.bf16.mxu0 %v6643
    %8653 = vmatpush1.bf16.msra.mxu0 %v6642
    %8654 = vmatprep.subr.bf16.mxu0 %v6656
    %8655 = vmatpush1.bf16.msra.mxu0 %v6655
    %8656 = vmatprep.subr.bf16.mxu0 %v6669
    %8657 = vmatpush1.bf16.msra.mxu0 %v6668
    %8658 = vmatprep.subr.bf16.mxu0 %v6682
    %8659 = vmatpush1.bf16.msra.mxu0 %v6681
    %8660 = vmatprep.subr.bf16.mxu0 %v6695
    %8661 = vmatpush1.bf16.msra.mxu0 %v6694
    %8662 = vmatprep.subr.bf16.mxu0 %v6708
    %8663 = vmatpush1.bf16.msra.mxu0 %v6707
    %8664 = vmatprep.subr.bf16.mxu0 %v6721
    %8665 = vmatpush1.bf16.msra.mxu0 %v6720
    %8666 = vmatprep.subr.bf16.mxu0 %v6734
    %8667 = vmatpush1.bf16.msra.mxu0 %v6733
    %8668 = vmatprep.subr.bf16.mxu0 %v6747
    %8669 = vmatpush1.bf16.msra.mxu0 %v6746
    %8670 = vmatprep.subr.bf16.mxu0 %v6760
    %8671 = vmatpush1.bf16.msra.mxu0 %v6759
    %8672 = vmatprep.subr.bf16.mxu0 %v6773
    %8673 = vmatpush1.bf16.msra.mxu0 %v6772
    %8674 = vmatprep.subr.bf16.mxu0 %v6786
    %8675 = vmatpush1.bf16.msra.mxu0 %v6785
    %8676 = vmatprep.mubr.bf16.mxu0 %v77
    %8677 = vmatmul.mubr.bf16.gmra.mrb[0].mxu0 %v76
    %v8678 = vpop.f32.mrb[0].mxu0
    %v8679 = vadd.f32 %v8638, %v8678
    %v8680 = vpop.f32.mrb[0].mxu0
    %v8681 = vadd.f32 %v8640, %v8680
    %v8682 = vpop.f32.mrb[0].mxu0
    %v8683 = vpop.f32.mrb[0].mxu0
    %8684 = vdwg.mxu0
    %8685 = vmatprep.subr.bf16.mxu0 %v6799
    %8686 = vmatpush1.bf16.msra.mxu0 %v6798
    %8687 = vmatprep.subr.bf16.mxu0 %v6812
    %8688 = vmatpush1.bf16.msra.mxu0 %v6811
    %8689 = vmatprep.subr.bf16.mxu0 %v6825
    %8690 = vmatpush1.bf16.msra.mxu0 %v6824
    %8691 = vmatprep.subr.bf16.mxu0 %v6838
    %8692 = vmatpush1.bf16.msra.mxu0 %v6837
    %8693 = vmatprep.subr.bf16.mxu0 0
    %8694 = vmatpush1.bf16.msra.mxu0 0
    %8695 = vmatprep.subr.bf16.mxu0 0
    %8696 = vmatpush1.bf16.msra.mxu0 0
    %8697 = vmatprep.subr.bf16.mxu0 0
    %8698 = vmatpush1.bf16.msra.mxu0 0
    %8699 = vmatprep.subr.bf16.mxu0 0
    %8700 = vmatpush1.bf16.msra.mxu0 0
    %8701 = vmatprep.subr.bf16.mxu0 0
    %8702 = vmatpush1.bf16.msra.mxu0 0
    %8703 = vmatprep.subr.bf16.mxu0 0
    %8704 = vmatpush1.bf16.msra.mxu0 0
    %8705 = vmatprep.subr.bf16.mxu0 0
    %8706 = vmatpush1.bf16.msra.mxu0 0
    %8707 = vmatprep.subr.bf16.mxu0 0
    %8708 = vmatpush1.bf16.msra.mxu0 0
    %8709 = vmatprep.subr.bf16.mxu0 0
    %8710 = vmatpush1.bf16.msra.mxu0 0
    %8711 = vmatprep.subr.bf16.mxu0 0
    %8712 = vmatpush1.bf16.msra.mxu0 0
    %8713 = vmatprep.subr.bf16.mxu0 0
    %8714 = vmatpush1.bf16.msra.mxu0 0
    %8715 = vmatprep.subr.bf16.mxu0 0
    %8716 = vmatpush1.bf16.msra.mxu0 0
    %8717 = vmatprep.mubr.bf16.mxu0 0
    %8718 = vmatmul.mubr.bf16.gmra.mrb[0].mxu0 %v8150
    %v8719 = vpop.f32.mrb[0].mxu0
    %v8720 = vadd.f32 %v8679, %v8719
    %v8721 = vpop.f32.mrb[0].mxu0
    %v8722 = vadd.f32 %v8681, %v8721
    %v8723 = vpop.f32.mrb[0].mxu0
    %v8724 = vpop.f32.mrb[0].mxu0
    %8725 = vdwg.mxu0
    %8726 = vmatprep.subr.bf16.mxu0 %v5553
    %8727 = vmatpush1.bf16.msra.mxu0 %v5552
    %8728 = vmatprep.subr.bf16.mxu0 %v5566
    %8729 = vmatpush1.bf16.msra.mxu0 %v5565
    %8730 = vmatprep.subr.bf16.mxu0 %v5579
    %8731 = vmatpush1.bf16.msra.mxu0 %v5578
    %8732 = vmatprep.subr.bf16.mxu0 %v5592
    %8733 = vmatpush1.bf16.msra.mxu0 %v5591
    %8734 = vmatprep.subr.bf16.mxu0 %v5605
    %8735 = vmatpush1.bf16.msra.mxu0 %v5604
    %8736 = vmatprep.subr.bf16.mxu0 %v5618
    %8737 = vmatpush1.bf16.msra.mxu0 %v5617
    %8738 = vmatprep.subr.bf16.mxu0 %v5631
    %8739 = vmatpush1.bf16.msra.mxu0 %v5630
    %8740 = vmatprep.subr.bf16.mxu0 %v5644
    %8741 = vmatpush1.bf16.msra.mxu0 %v5643
    %8742 = vmatprep.subr.bf16.mxu0 %v5657
    %8743 = vmatpush1.bf16.msra.mxu0 %v5656
    %8744 = vmatprep.subr.bf16.mxu0 %v5670
    %8745 = vmatpush1.bf16.msra.mxu0 %v5669
    %8746 = vmatprep.subr.bf16.mxu0 %v5683
    %8747 = vmatpush1.bf16.msra.mxu0 %v5682
    %8748 = vmatprep.subr.bf16.mxu0 %v5696
    %8749 = vmatpush1.bf16.msra.mxu0 %v5695
    %8750 = vmatprep.subr.bf16.mxu0 %v5709
    %8751 = vmatpush1.bf16.msra.mxu0 %v5708
    %8752 = vmatprep.subr.bf16.mxu0 %v5722
    %8753 = vmatpush1.bf16.msra.mxu0 %v5721
    %8754 = vmatprep.subr.bf16.mxu0 %v5735
    %8755 = vmatpush1.bf16.msra.mxu0 %v5734
    %8756 = vmatprep.subr.bf16.mxu0 %v5748
    %8757 = vmatpush1.bf16.msra.mxu0 %v5747
    %8758 = vmatprep.mubr.bf16.mxu0 %v67
    %8759 = vmatmul.mubr.bf16.gmra.mrb[0].mxu0 %v66
    %v8760 = vpop.f32.mrb[0].mxu0
    %v8761 = vadd.f32 %v1502, %v8760
    %v8762 = vpop.f32.mrb[0].mxu0
    %v8763 = vadd.f32 %v1506, %v8762
    %v8764 = vpop.f32.mrb[0].mxu0
    %v8765 = vpop.f32.mrb[0].mxu0
    %8766 = vdwg.mxu0
    %8767 = vmatprep.subr.bf16.mxu0 %v5761
    %8768 = vmatpush1.bf16.msra.mxu0 %v5760
    %8769 = vmatprep.subr.bf16.mxu0 %v5774
    %8770 = vmatpush1.bf16.msra.mxu0 %v5773
    %8771 = vmatprep.subr.bf16.mxu0 %v5787
    %8772 = vmatpush1.bf16.msra.mxu0 %v5786
    %8773 = vmatprep.subr.bf16.mxu0 %v5800
    %8774 = vmatpush1.bf16.msra.mxu0 %v5799
    %8775 = vmatprep.subr.bf16.mxu0 %v5813
    %8776 = vmatpush1.bf16.msra.mxu0 %v5812
    %8777 = vmatprep.subr.bf16.mxu0 %v5826
    %8778 = vmatpush1.bf16.msra.mxu0 %v5825
    %8779 = vmatprep.subr.bf16.mxu0 %v5839
    %8780 = vmatpush1.bf16.msra.mxu0 %v5838
    %8781 = vmatprep.subr.bf16.mxu0 %v5852
    %8782 = vmatpush1.bf16.msra.mxu0 %v5851
    %8783 = vmatprep.subr.bf16.mxu0 %v5865
    %8784 = vmatpush1.bf16.msra.mxu0 %v5864
    %8785 = vmatprep.subr.bf16.mxu0 %v5878
    %8786 = vmatpush1.bf16.msra.mxu0 %v5877
    %8787 = vmatprep.subr.bf16.mxu0 %v5891
    %8788 = vmatpush1.bf16.msra.mxu0 %v5890
    %8789 = vmatprep.subr.bf16.mxu0 %v5904
    %8790 = vmatpush1.bf16.msra.mxu0 %v5903
    %8791 = vmatprep.subr.bf16.mxu0 %v5917
    %8792 = vmatpush1.bf16.msra.mxu0 %v5916
    %8793 = vmatprep.subr.bf16.mxu0 %v5930
    %8794 = vmatpush1.bf16.msra.mxu0 %v5929
    %8795 = vmatprep.subr.bf16.mxu0 %v5943
    %8796 = vmatpush1.bf16.msra.mxu0 %v5942
    %8797 = vmatprep.subr.bf16.mxu0 %v5956
    %8798 = vmatpush1.bf16.msra.mxu0 %v5955
    %8799 = vmatprep.mubr.bf16.mxu0 %v69
    %8800 = vmatmul.mubr.bf16.gmra.mrb[0].mxu0 %v68
    %v8801 = vpop.f32.mrb[0].mxu0
    %v8802 = vadd.f32 %v8761, %v8801
    %v8803 = vpop.f32.mrb[0].mxu0
    %v8804 = vadd.f32 %v8763, %v8803
    %v8805 = vpop.f32.mrb[0].mxu0
    %v8806 = vpop.f32.mrb[0].mxu0
    %8807 = vdwg.mxu0
    %8808 = vmatprep.subr.bf16.mxu0 %v5969
    %8809 = vmatpush1.bf16.msra.mxu0 %v5968
    %8810 = vmatprep.subr.bf16.mxu0 %v5982
    %8811 = vmatpush1.bf16.msra.mxu0 %v5981
    %8812 = vmatprep.subr.bf16.mxu0 %v5995
    %8813 = vmatpush1.bf16.msra.mxu0 %v5994
    %8814 = vmatprep.subr.bf16.mxu0 %v6008
    %8815 = vmatpush1.bf16.msra.mxu0 %v6007
    %8816 = vmatprep.subr.bf16.mxu0 %v6021
    %8817 = vmatpush1.bf16.msra.mxu0 %v6020
    %8818 = vmatprep.subr.bf16.mxu0 %v6034
    %8819 = vmatpush1.bf16.msra.mxu0 %v6033
    %8820 = vmatprep.subr.bf16.mxu0 %v6047
    %8821 = vmatpush1.bf16.msra.mxu0 %v6046
    %8822 = vmatprep.subr.bf16.mxu0 %v6060
    %8823 = vmatpush1.bf16.msra.mxu0 %v6059
    %8824 = vmatprep.subr.bf16.mxu0 %v6073
    %8825 = vmatpush1.bf16.msra.mxu0 %v6072
    %8826 = vmatprep.subr.bf16.mxu0 %v6086
    %8827 = vmatpush1.bf16.msra.mxu0 %v6085
    %8828 = vmatprep.subr.bf16.mxu0 %v6099
    %8829 = vmatpush1.bf16.msra.mxu0 %v6098
    %8830 = vmatprep.subr.bf16.mxu0 %v6112
    %8831 = vmatpush1.bf16.msra.mxu0 %v6111
    %8832 = vmatprep.subr.bf16.mxu0 %v6125
    %8833 = vmatpush1.bf16.msra.mxu0 %v6124
    %8834 = vmatprep.subr.bf16.mxu0 %v6138
    %8835 = vmatpush1.bf16.msra.mxu0 %v6137
    %8836 = vmatprep.subr.bf16.mxu0 %v6151
    %8837 = vmatpush1.bf16.msra.mxu0 %v6150
    %8838 = vmatprep.subr.bf16.mxu0 %v6164
    %8839 = vmatpush1.bf16.msra.mxu0 %v6163
    %8840 = vmatprep.mubr.bf16.mxu0 %v71
    %8841 = vmatmul.mubr.bf16.gmra.mrb[0].mxu0 %v70
    %v8842 = vpop.f32.mrb[0].mxu0
    %v8843 = vadd.f32 %v8802, %v8842
    %v8844 = vpop.f32.mrb[0].mxu0
    %v8845 = vadd.f32 %v8804, %v8844
    %v8846 = vpop.f32.mrb[0].mxu0
    %v8847 = vpop.f32.mrb[0].mxu0
    %8848 = vdwg.mxu0
    %8849 = vmatprep.subr.bf16.mxu0 %v6177
    %8850 = vmatpush1.bf16.msra.mxu0 %v6176
    %8851 = vmatprep.subr.bf16.mxu0 %v6190
    %8852 = vmatpush1.bf16.msra.mxu0 %v6189
    %8853 = vmatprep.subr.bf16.mxu0 %v6203
    %8854 = vmatpush1.bf16.msra.mxu0 %v6202
    %8855 = vmatprep.subr.bf16.mxu0 %v6216
    %8856 = vmatpush1.bf16.msra.mxu0 %v6215
    %8857 = vmatprep.subr.bf16.mxu0 %v6229
    %8858 = vmatpush1.bf16.msra.mxu0 %v6228
    %8859 = vmatprep.subr.bf16.mxu0 %v6242
    %8860 = vmatpush1.bf16.msra.mxu0 %v6241
    %8861 = vmatprep.subr.bf16.mxu0 %v6255
    %8862 = vmatpush1.bf16.msra.mxu0 %v6254
    %8863 = vmatprep.subr.bf16.mxu0 %v6268
    %8864 = vmatpush1.bf16.msra.mxu0 %v6267
    %8865 = vmatprep.subr.bf16.mxu0 %v6281
    %8866 = vmatpush1.bf16.msra.mxu0 %v6280
    %8867 = vmatprep.subr.bf16.mxu0 %v6294
    %8868 = vmatpush1.bf16.msra.mxu0 %v6293
    %8869 = vmatprep.subr.bf16.mxu0 %v6307
    %8870 = vmatpush1.bf16.msra.mxu0 %v6306
    %8871 = vmatprep.subr.bf16.mxu0 %v6320
    %8872 = vmatpush1.bf16.msra.mxu0 %v6319
    %8873 = vmatprep.subr.bf16.mxu0 %v6333
    %8874 = vmatpush1.bf16.msra.mxu0 %v6332
    %8875 = vmatprep.subr.bf16.mxu0 %v6346
    %8876 = vmatpush1.bf16.msra.mxu0 %v6345
    %8877 = vmatprep.subr.bf16.mxu0 %v6359
    %8878 = vmatpush1.bf16.msra.mxu0 %v6358
    %8879 = vmatprep.subr.bf16.mxu0 %v6372
    %8880 = vmatpush1.bf16.msra.mxu0 %v6371
    %8881 = vmatprep.mubr.bf16.mxu0 %v73
    %8882 = vmatmul.mubr.bf16.gmra.mrb[0].mxu0 %v72
    %v8883 = vpop.f32.mrb[0].mxu0
    %v8884 = vadd.f32 %v8843, %v8883
    %v8885 = vpop.f32.mrb[0].mxu0
    %v8886 = vadd.f32 %v8845, %v8885
    %v8887 = vpop.f32.mrb[0].mxu0
    %v8888 = vpop.f32.mrb[0].mxu0
    %8889 = vdwg.mxu0
    %8890 = vmatprep.subr.bf16.mxu0 %v6385
    %8891 = vmatpush1.bf16.msra.mxu0 %v6384
    %8892 = vmatprep.subr.bf16.mxu0 %v6398
    %8893 = vmatpush1.bf16.msra.mxu0 %v6397
    %8894 = vmatprep.subr.bf16.mxu0 %v6411
    %8895 = vmatpush1.bf16.msra.mxu0 %v6410
    %8896 = vmatprep.subr.bf16.mxu0 %v6424
    %8897 = vmatpush1.bf16.msra.mxu0 %v6423
    %8898 = vmatprep.subr.bf16.mxu0 %v6437
    %8899 = vmatpush1.bf16.msra.mxu0 %v6436
    %8900 = vmatprep.subr.bf16.mxu0 %v6450
    %8901 = vmatpush1.bf16.msra.mxu0 %v6449
    %8902 = vmatprep.subr.bf16.mxu0 %v6463
    %8903 = vmatpush1.bf16.msra.mxu0 %v6462
    %8904 = vmatprep.subr.bf16.mxu0 %v6476
    %8905 = vmatpush1.bf16.msra.mxu0 %v6475
    %8906 = vmatprep.subr.bf16.mxu0 %v6489
    %8907 = vmatpush1.bf16.msra.mxu0 %v6488
    %8908 = vmatprep.subr.bf16.mxu0 %v6502
    %8909 = vmatpush1.bf16.msra.mxu0 %v6501
    %8910 = vmatprep.subr.bf16.mxu0 %v6515
    %8911 = vmatpush1.bf16.msra.mxu0 %v6514
    %8912 = vmatprep.subr.bf16.mxu0 %v6528
    %8913 = vmatpush1.bf16.msra.mxu0 %v6527
    %8914 = vmatprep.subr.bf16.mxu0 %v6541
    %8915 = vmatpush1.bf16.msra.mxu0 %v6540
    %8916 = vmatprep.subr.bf16.mxu0 %v6554
    %8917 = vmatpush1.bf16.msra.mxu0 %v6553
    %8918 = vmatprep.subr.bf16.mxu0 %v6567
    %8919 = vmatpush1.bf16.msra.mxu0 %v6566
    %8920 = vmatprep.subr.bf16.mxu0 %v6580
    %8921 = vmatpush1.bf16.msra.mxu0 %v6579
    %8922 = vmatprep.mubr.bf16.mxu0 %v75
    %8923 = vmatmul.mubr.bf16.gmra.mrb[0].mxu0 %v74
    %v8924 = vpop.f32.mrb[0].mxu0
    %v8925 = vadd.f32 %v8884, %v8924
    %v8926 = vpop.f32.mrb[0].mxu0
    %v8927 = vadd.f32 %v8886, %v8926
    %v8928 = vpop.f32.mrb[0].mxu0
    %v8929 = vpop.f32.mrb[0].mxu0
    %8930 = vdwg.mxu0
    %8931 = vmatprep.subr.bf16.mxu0 %v6593
    %8932 = vmatpush1.bf16.msra.mxu0 %v6592
    %8933 = vmatprep.subr.bf16.mxu0 %v6606
    %8934 = vmatpush1.bf16.msra.mxu0 %v6605
    %8935 = vmatprep.subr.bf16.mxu0 %v6619
    %8936 = vmatpush1.bf16.msra.mxu0 %v6618
    %8937 = vmatprep.subr.bf16.mxu0 %v6632
    %8938 = vmatpush1.bf16.msra.mxu0 %v6631
    %8939 = vmatprep.subr.bf16.mxu0 %v6645
    %8940 = vmatpush1.bf16.msra.mxu0 %v6644
    %8941 = vmatprep.subr.bf16.mxu0 %v6658
    %8942 = vmatpush1.bf16.msra.mxu0 %v6657
    %8943 = vmatprep.subr.bf16.mxu0 %v6671
    %8944 = vmatpush1.bf16.msra.mxu0 %v6670
    %8945 = vmatprep.subr.bf16.mxu0 %v6684
    %8946 = vmatpush1.bf16.msra.mxu0 %v6683
    %8947 = vmatprep.subr.bf16.mxu0 %v6697
    %8948 = vmatpush1.bf16.msra.mxu0 %v6696
    %8949 = vmatprep.subr.bf16.mxu0 %v6710
    %8950 = vmatpush1.bf16.msra.mxu0 %v6709
    %8951 = vmatprep.subr.bf16.mxu0 %v6723
    %8952 = vmatpush1.bf16.msra.mxu0 %v6722
    %8953 = vmatprep.subr.bf16.mxu0 %v6736
    %8954 = vmatpush1.bf16.msra.mxu0 %v6735
    %8955 = vmatprep.subr.bf16.mxu0 %v6749
    %8956 = vmatpush1.bf16.msra.mxu0 %v6748
    %8957 = vmatprep.subr.bf16.mxu0 %v6762
    %8958 = vmatpush1.bf16.msra.mxu0 %v6761
    %8959 = vmatprep.subr.bf16.mxu0 %v6775
    %8960 = vmatpush1.bf16.msra.mxu0 %v6774
    %8961 = vmatprep.subr.bf16.mxu0 %v6788
    %8962 = vmatpush1.bf16.msra.mxu0 %v6787
    %8963 = vmatprep.mubr.bf16.mxu0 %v77
    %8964 = vmatmul.mubr.bf16.gmra.mrb[0].mxu0 %v76
    %v8965 = vpop.f32.mrb[0].mxu0
    %v8966 = vadd.f32 %v8925, %v8965
    %v8967 = vpop.f32.mrb[0].mxu0
    %v8968 = vadd.f32 %v8927, %v8967
    %v8969 = vpop.f32.mrb[0].mxu0
    %v8970 = vpop.f32.mrb[0].mxu0
    %8971 = vdwg.mxu0
    %8972 = vmatprep.subr.bf16.mxu0 %v6801
    %8973 = vmatpush1.bf16.msra.mxu0 %v6800
    %8974 = vmatprep.subr.bf16.mxu0 %v6814
    %8975 = vmatpush1.bf16.msra.mxu0 %v6813
    %8976 = vmatprep.subr.bf16.mxu0 %v6827
    %8977 = vmatpush1.bf16.msra.mxu0 %v6826
    %8978 = vmatprep.subr.bf16.mxu0 %v6840
    %8979 = vmatpush1.bf16.msra.mxu0 %v6839
    %8980 = vmatprep.subr.bf16.mxu0 0
    %8981 = vmatpush1.bf16.msra.mxu0 0
    %8982 = vmatprep.subr.bf16.mxu0 0
    %8983 = vmatpush1.bf16.msra.mxu0 0
    %8984 = vmatprep.subr.bf16.mxu0 0
    %8985 = vmatpush1.bf16.msra.mxu0 0
    %8986 = vmatprep.subr.bf16.mxu0 0
    %8987 = vmatpush1.bf16.msra.mxu0 0
    %8988 = vmatprep.subr.bf16.mxu0 0
    %8989 = vmatpush1.bf16.msra.mxu0 0
    %8990 = vmatprep.subr.bf16.mxu0 0
    %8991 = vmatpush1.bf16.msra.mxu0 0
    %8992 = vmatprep.subr.bf16.mxu0 0
    %8993 = vmatpush1.bf16.msra.mxu0 0
    %8994 = vmatprep.subr.bf16.mxu0 0
    %8995 = vmatpush1.bf16.msra.mxu0 0
    %8996 = vmatprep.subr.bf16.mxu0 0
    %8997 = vmatpush1.bf16.msra.mxu0 0
    %8998 = vmatprep.subr.bf16.mxu0 0
    %8999 = vmatpush1.bf16.msra.mxu0 0
    %9000 = vmatprep.subr.bf16.mxu0 0
    %9001 = vmatpush1.bf16.msra.mxu0 0
    %9002 = vmatprep.subr.bf16.mxu0 0
    %9003 = vmatpush1.bf16.msra.mxu0 0
    %9004 = vmatprep.mubr.bf16.mxu0 0
    %9005 = vmatmul.mubr.bf16.gmra.mrb[0].mxu0 %v8150
    %v9006 = vpop.f32.mrb[0].mxu0
    %v9007 = vadd.f32 %v8966, %v9006
    %v9008 = vpop.f32.mrb[0].mxu0
    %v9009 = vadd.f32 %v8968, %v9008
    %v9010 = vpop.f32.mrb[0].mxu0
    %v9011 = vpop.f32.mrb[0].mxu0
    %9012 = vdwg.mxu0
    %9013 = vmatprep.subr.bf16.mxu0 %v5555
    %9014 = vmatpush1.bf16.msra.mxu0 %v5554
    %9015 = vmatprep.subr.bf16.mxu0 %v5568
    %9016 = vmatpush1.bf16.msra.mxu0 %v5567
    %9017 = vmatprep.subr.bf16.mxu0 %v5581
    %9018 = vmatpush1.bf16.msra.mxu0 %v5580
    %9019 = vmatprep.subr.bf16.mxu0 %v5594
    %9020 = vmatpush1.bf16.msra.mxu0 %v5593
    %9021 = vmatprep.subr.bf16.mxu0 %v5607
    %9022 = vmatpush1.bf16.msra.mxu0 %v5606
    %9023 = vmatprep.subr.bf16.mxu0 %v5620
    %9024 = vmatpush1.bf16.msra.mxu0 %v5619
    %9025 = vmatprep.subr.bf16.mxu0 %v5633
    %9026 = vmatpush1.bf16.msra.mxu0 %v5632
    %9027 = vmatprep.subr.bf16.mxu0 %v5646
    %9028 = vmatpush1.bf16.msra.mxu0 %v5645
    %9029 = vmatprep.subr.bf16.mxu0 %v5659
    %9030 = vmatpush1.bf16.msra.mxu0 %v5658
    %9031 = vmatprep.subr.bf16.mxu0 %v5672
    %9032 = vmatpush1.bf16.msra.mxu0 %v5671
    %9033 = vmatprep.subr.bf16.mxu0 %v5685
    %9034 = vmatpush1.bf16.msra.mxu0 %v5684
    %9035 = vmatprep.subr.bf16.mxu0 %v5698
    %9036 = vmatpush1.bf16.msra.mxu0 %v5697
    %9037 = vmatprep.subr.bf16.mxu0 %v5711
    %9038 = vmatpush1.bf16.msra.mxu0 %v5710
    %9039 = vmatprep.subr.bf16.mxu0 %v5724
    %9040 = vmatpush1.bf16.msra.mxu0 %v5723
    %9041 = vmatprep.subr.bf16.mxu0 %v5737
    %9042 = vmatpush1.bf16.msra.mxu0 %v5736
    %9043 = vmatprep.subr.bf16.mxu0 %v5750
    %9044 = vmatpush1.bf16.msra.mxu0 %v5749
    %9045 = vmatprep.mubr.bf16.mxu0 %v67
    %9046 = vmatmul.mubr.bf16.gmra.mrb[0].mxu0 %v66
    %v9047 = vpop.f32.mrb[0].mxu0
    %v9048 = vadd.f32 %v1510, %v9047
    %v9049 = vpop.f32.mrb[0].mxu0
    %v9050 = vadd.f32 %v1514, %v9049
    %v9051 = vpop.f32.mrb[0].mxu0
    %v9052 = vpop.f32.mrb[0].mxu0
    %9053 = vdwg.mxu0
    %9054 = vmatprep.subr.bf16.mxu0 %v5763
    %9055 = vmatpush1.bf16.msra.mxu0 %v5762
    %9056 = vmatprep.subr.bf16.mxu0 %v5776
    %9057 = vmatpush1.bf16.msra.mxu0 %v5775
    %9058 = vmatprep.subr.bf16.mxu0 %v5789
    %9059 = vmatpush1.bf16.msra.mxu0 %v5788
    %9060 = vmatprep.subr.bf16.mxu0 %v5802
    %9061 = vmatpush1.bf16.msra.mxu0 %v5801
    %9062 = vmatprep.subr.bf16.mxu0 %v5815
    %9063 = vmatpush1.bf16.msra.mxu0 %v5814
    %9064 = vmatprep.subr.bf16.mxu0 %v5828
    %9065 = vmatpush1.bf16.msra.mxu0 %v5827
    %9066 = vmatprep.subr.bf16.mxu0 %v5841
    %9067 = vmatpush1.bf16.msra.mxu0 %v5840
    %9068 = vmatprep.subr.bf16.mxu0 %v5854
    %9069 = vmatpush1.bf16.msra.mxu0 %v5853
    %9070 = vmatprep.subr.bf16.mxu0 %v5867
    %9071 = vmatpush1.bf16.msra.mxu0 %v5866
    %9072 = vmatprep.subr.bf16.mxu0 %v5880
    %9073 = vmatpush1.bf16.msra.mxu0 %v5879
    %9074 = vmatprep.subr.bf16.mxu0 %v5893
    %9075 = vmatpush1.bf16.msra.mxu0 %v5892
    %9076 = vmatprep.subr.bf16.mxu0 %v5906
    %9077 = vmatpush1.bf16.msra.mxu0 %v5905
    %9078 = vmatprep.subr.bf16.mxu0 %v5919
    %9079 = vmatpush1.bf16.msra.mxu0 %v5918
    %9080 = vmatprep.subr.bf16.mxu0 %v5932
    %9081 = vmatpush1.bf16.msra.mxu0 %v5931
    %9082 = vmatprep.subr.bf16.mxu0 %v5945
    %9083 = vmatpush1.bf16.msra.mxu0 %v5944
    %9084 = vmatprep.subr.bf16.mxu0 %v5958
    %9085 = vmatpush1.bf16.msra.mxu0 %v5957
    %9086 = vmatprep.mubr.bf16.mxu0 %v69
    %9087 = vmatmul.mubr.bf16.gmra.mrb[0].mxu0 %v68
    %v9088 = vpop.f32.mrb[0].mxu0
    %v9089 = vadd.f32 %v9048, %v9088
    %v9090 = vpop.f32.mrb[0].mxu0
    %v9091 = vadd.f32 %v9050, %v9090
    %v9092 = vpop.f32.mrb[0].mxu0
    %v9093 = vpop.f32.mrb[0].mxu0
    %9094 = vdwg.mxu0
    %9095 = vmatprep.subr.bf16.mxu0 %v5971
    %9096 = vmatpush1.bf16.msra.mxu0 %v5970
    %9097 = vmatprep.subr.bf16.mxu0 %v5984
    %9098 = vmatpush1.bf16.msra.mxu0 %v5983
    %9099 = vmatprep.subr.bf16.mxu0 %v5997
    %9100 = vmatpush1.bf16.msra.mxu0 %v5996
    %9101 = vmatprep.subr.bf16.mxu0 %v6010
    %9102 = vmatpush1.bf16.msra.mxu0 %v6009
    %9103 = vmatprep.subr.bf16.mxu0 %v6023
    %9104 = vmatpush1.bf16.msra.mxu0 %v6022
    %9105 = vmatprep.subr.bf16.mxu0 %v6036
    %9106 = vmatpush1.bf16.msra.mxu0 %v6035
    %9107 = vmatprep.subr.bf16.mxu0 %v6049
    %9108 = vmatpush1.bf16.msra.mxu0 %v6048
    %9109 = vmatprep.subr.bf16.mxu0 %v6062
    %9110 = vmatpush1.bf16.msra.mxu0 %v6061
    %9111 = vmatprep.subr.bf16.mxu0 %v6075
    %9112 = vmatpush1.bf16.msra.mxu0 %v6074
    %9113 = vmatprep.subr.bf16.mxu0 %v6088
    %9114 = vmatpush1.bf16.msra.mxu0 %v6087
    %9115 = vmatprep.subr.bf16.mxu0 %v6101
    %9116 = vmatpush1.bf16.msra.mxu0 %v6100
    %9117 = vmatprep.subr.bf16.mxu0 %v6114
    %9118 = vmatpush1.bf16.msra.mxu0 %v6113
    %9119 = vmatprep.subr.bf16.mxu0 %v6127
    %9120 = vmatpush1.bf16.msra.mxu0 %v6126
    %9121 = vmatprep.subr.bf16.mxu0 %v6140
    %9122 = vmatpush1.bf16.msra.mxu0 %v6139
    %9123 = vmatprep.subr.bf16.mxu0 %v6153
    %9124 = vmatpush1.bf16.msra.mxu0 %v6152
    %9125 = vmatprep.subr.bf16.mxu0 %v6166
    %9126 = vmatpush1.bf16.msra.mxu0 %v6165
    %9127 = vmatprep.mubr.bf16.mxu0 %v71
    %9128 = vmatmul.mubr.bf16.gmra.mrb[0].mxu0 %v70
    %v9129 = vpop.f32.mrb[0].mxu0
    %v9130 = vadd.f32 %v9089, %v9129
    %v9131 = vpop.f32.mrb[0].mxu0
    %v9132 = vadd.f32 %v9091, %v9131
    %v9133 = vpop.f32.mrb[0].mxu0
    %v9134 = vpop.f32.mrb[0].mxu0
    %9135 = vdwg.mxu0
    %9136 = vmatprep.subr.bf16.mxu0 %v6179
    %9137 = vmatpush1.bf16.msra.mxu0 %v6178
    %9138 = vmatprep.subr.bf16.mxu0 %v6192
    %9139 = vmatpush1.bf16.msra.mxu0 %v6191
    %9140 = vmatprep.subr.bf16.mxu0 %v6205
    %9141 = vmatpush1.bf16.msra.mxu0 %v6204
    %9142 = vmatprep.subr.bf16.mxu0 %v6218
    %9143 = vmatpush1.bf16.msra.mxu0 %v6217
    %9144 = vmatprep.subr.bf16.mxu0 %v6231
    %9145 = vmatpush1.bf16.msra.mxu0 %v6230
    %9146 = vmatprep.subr.bf16.mxu0 %v6244
    %9147 = vmatpush1.bf16.msra.mxu0 %v6243
    %9148 = vmatprep.subr.bf16.mxu0 %v6257
    %9149 = vmatpush1.bf16.msra.mxu0 %v6256
    %9150 = vmatprep.subr.bf16.mxu0 %v6270
    %9151 = vmatpush1.bf16.msra.mxu0 %v6269
    %9152 = vmatprep.subr.bf16.mxu0 %v6283
    %9153 = vmatpush1.bf16.msra.mxu0 %v6282
    %9154 = vmatprep.subr.bf16.mxu0 %v6296
    %9155 = vmatpush1.bf16.msra.mxu0 %v6295
    %9156 = vmatprep.subr.bf16.mxu0 %v6309
    %9157 = vmatpush1.bf16.msra.mxu0 %v6308
    %9158 = vmatprep.subr.bf16.mxu0 %v6322
    %9159 = vmatpush1.bf16.msra.mxu0 %v6321
    %9160 = vmatprep.subr.bf16.mxu0 %v6335
    %9161 = vmatpush1.bf16.msra.mxu0 %v6334
    %9162 = vmatprep.subr.bf16.mxu0 %v6348
    %9163 = vmatpush1.bf16.msra.mxu0 %v6347
    %9164 = vmatprep.subr.bf16.mxu0 %v6361
    %9165 = vmatpush1.bf16.msra.mxu0 %v6360
    %9166 = vmatprep.subr.bf16.mxu0 %v6374
    %9167 = vmatpush1.bf16.msra.mxu0 %v6373
    %9168 = vmatprep.mubr.bf16.mxu0 %v73
    %9169 = vmatmul.mubr.bf16.gmra.mrb[0].mxu0 %v72
    %v9170 = vpop.f32.mrb[0].mxu0
    %v9171 = vadd.f32 %v9130, %v9170
    %v9172 = vpop.f32.mrb[0].mxu0
    %v9173 = vadd.f32 %v9132, %v9172
    %v9174 = vpop.f32.mrb[0].mxu0
    %v9175 = vpop.f32.mrb[0].mxu0
    %9176 = vdwg.mxu0
    %9177 = vmatprep.subr.bf16.mxu0 %v6387
    %9178 = vmatpush1.bf16.msra.mxu0 %v6386
    %9179 = vmatprep.subr.bf16.mxu0 %v6400
    %9180 = vmatpush1.bf16.msra.mxu0 %v6399
    %9181 = vmatprep.subr.bf16.mxu0 %v6413
    %9182 = vmatpush1.bf16.msra.mxu0 %v6412
    %9183 = vmatprep.subr.bf16.mxu0 %v6426
    %9184 = vmatpush1.bf16.msra.mxu0 %v6425
    %9185 = vmatprep.subr.bf16.mxu0 %v6439
    %9186 = vmatpush1.bf16.msra.mxu0 %v6438
    %9187 = vmatprep.subr.bf16.mxu0 %v6452
    %9188 = vmatpush1.bf16.msra.mxu0 %v6451
    %9189 = vmatprep.subr.bf16.mxu0 %v6465
    %9190 = vmatpush1.bf16.msra.mxu0 %v6464
    %9191 = vmatprep.subr.bf16.mxu0 %v6478
    %9192 = vmatpush1.bf16.msra.mxu0 %v6477
    %9193 = vmatprep.subr.bf16.mxu0 %v6491
    %9194 = vmatpush1.bf16.msra.mxu0 %v6490
    %9195 = vmatprep.subr.bf16.mxu0 %v6504
    %9196 = vmatpush1.bf16.msra.mxu0 %v6503
    %9197 = vmatprep.subr.bf16.mxu0 %v6517
    %9198 = vmatpush1.bf16.msra.mxu0 %v6516
    %9199 = vmatprep.subr.bf16.mxu0 %v6530
    %9200 = vmatpush1.bf16.msra.mxu0 %v6529
    %9201 = vmatprep.subr.bf16.mxu0 %v6543
    %9202 = vmatpush1.bf16.msra.mxu0 %v6542
    %9203 = vmatprep.subr.bf16.mxu0 %v6556
    %9204 = vmatpush1.bf16.msra.mxu0 %v6555
    %9205 = vmatprep.subr.bf16.mxu0 %v6569
    %9206 = vmatpush1.bf16.msra.mxu0 %v6568
    %9207 = vmatprep.subr.bf16.mxu0 %v6582
    %9208 = vmatpush1.bf16.msra.mxu0 %v6581
    %9209 = vmatprep.mubr.bf16.mxu0 %v75
    %9210 = vmatmul.mubr.bf16.gmra.mrb[0].mxu0 %v74
    %v9211 = vpop.f32.mrb[0].mxu0
    %v9212 = vadd.f32 %v9171, %v9211
    %v9213 = vpop.f32.mrb[0].mxu0
    %v9214 = vadd.f32 %v9173, %v9213
    %v9215 = vpop.f32.mrb[0].mxu0
    %v9216 = vpop.f32.mrb[0].mxu0
    %9217 = vdwg.mxu0
    %9218 = vmatprep.subr.bf16.mxu0 %v6595
    %9219 = vmatpush1.bf16.msra.mxu0 %v6594
    %9220 = vmatprep.subr.bf16.mxu0 %v6608
    %9221 = vmatpush1.bf16.msra.mxu0 %v6607
    %9222 = vmatprep.subr.bf16.mxu0 %v6621
    %9223 = vmatpush1.bf16.msra.mxu0 %v6620
    %9224 = vmatprep.subr.bf16.mxu0 %v6634
    %9225 = vmatpush1.bf16.msra.mxu0 %v6633
    %9226 = vmatprep.subr.bf16.mxu0 %v6647
    %9227 = vmatpush1.bf16.msra.mxu0 %v6646
    %9228 = vmatprep.subr.bf16.mxu0 %v6660
    %9229 = vmatpush1.bf16.msra.mxu0 %v6659
    %9230 = vmatprep.subr.bf16.mxu0 %v6673
    %9231 = vmatpush1.bf16.msra.mxu0 %v6672
    %9232 = vmatprep.subr.bf16.mxu0 %v6686
    %9233 = vmatpush1.bf16.msra.mxu0 %v6685
    %9234 = vmatprep.subr.bf16.mxu0 %v6699
    %9235 = vmatpush1.bf16.msra.mxu0 %v6698
    %9236 = vmatprep.subr.bf16.mxu0 %v6712
    %9237 = vmatpush1.bf16.msra.mxu0 %v6711
    %9238 = vmatprep.subr.bf16.mxu0 %v6725
    %9239 = vmatpush1.bf16.msra.mxu0 %v6724
    %9240 = vmatprep.subr.bf16.mxu0 %v6738
    %9241 = vmatpush1.bf16.msra.mxu0 %v6737
    %9242 = vmatprep.subr.bf16.mxu0 %v6751
    %9243 = vmatpush1.bf16.msra.mxu0 %v6750
    %9244 = vmatprep.subr.bf16.mxu0 %v6764
    %9245 = vmatpush1.bf16.msra.mxu0 %v6763
    %9246 = vmatprep.subr.bf16.mxu0 %v6777
    %9247 = vmatpush1.bf16.msra.mxu0 %v6776
    %9248 = vmatprep.subr.bf16.mxu0 %v6790
    %9249 = vmatpush1.bf16.msra.mxu0 %v6789
    %9250 = vmatprep.mubr.bf16.mxu0 %v77
    %9251 = vmatmul.mubr.bf16.gmra.mrb[0].mxu0 %v76
    %v9252 = vpop.f32.mrb[0].mxu0
    %v9253 = vadd.f32 %v9212, %v9252
    %v9254 = vpop.f32.mrb[0].mxu0
    %v9255 = vadd.f32 %v9214, %v9254
    %v9256 = vpop.f32.mrb[0].mxu0
    %v9257 = vpop.f32.mrb[0].mxu0
    %9258 = vdwg.mxu0
    %9259 = vmatprep.subr.bf16.mxu0 %v6803
    %9260 = vmatpush1.bf16.msra.mxu0 %v6802
    %9261 = vmatprep.subr.bf16.mxu0 %v6816
    %9262 = vmatpush1.bf16.msra.mxu0 %v6815
    %9263 = vmatprep.subr.bf16.mxu0 %v6829
    %9264 = vmatpush1.bf16.msra.mxu0 %v6828
    %9265 = vmatprep.subr.bf16.mxu0 %v6842
    %9266 = vmatpush1.bf16.msra.mxu0 %v6841
    %9267 = vmatprep.subr.bf16.mxu0 0
    %9268 = vmatpush1.bf16.msra.mxu0 0
    %9269 = vmatprep.subr.bf16.mxu0 0
    %9270 = vmatpush1.bf16.msra.mxu0 0
    %9271 = vmatprep.subr.bf16.mxu0 0
    %9272 = vmatpush1.bf16.msra.mxu0 0
    %9273 = vmatprep.subr.bf16.mxu0 0
    %9274 = vmatpush1.bf16.msra.mxu0 0
    %9275 = vmatprep.subr.bf16.mxu0 0
    %9276 = vmatpush1.bf16.msra.mxu0 0
    %9277 = vmatprep.subr.bf16.mxu0 0
    %9278 = vmatpush1.bf16.msra.mxu0 0
    %9279 = vmatprep.subr.bf16.mxu0 0
    %9280 = vmatpush1.bf16.msra.mxu0 0
    %9281 = vmatprep.subr.bf16.mxu0 0
    %9282 = vmatpush1.bf16.msra.mxu0 0
    %9283 = vmatprep.subr.bf16.mxu0 0
    %9284 = vmatpush1.bf16.msra.mxu0 0
    %9285 = vmatprep.subr.bf16.mxu0 0
    %9286 = vmatpush1.bf16.msra.mxu0 0
    %9287 = vmatprep.subr.bf16.mxu0 0
    %9288 = vmatpush1.bf16.msra.mxu0 0
    %9289 = vmatprep.subr.bf16.mxu0 0
    %9290 = vmatpush1.bf16.msra.mxu0 0
    %9291 = vmatprep.mubr.bf16.mxu0 0
    %9292 = vmatmul.mubr.bf16.gmra.mrb[0].mxu0 %v8150
    %v9293 = vpop.f32.mrb[0].mxu0
    %v9294 = vadd.f32 %v9253, %v9293
    %v9295 = vpop.f32.mrb[0].mxu0
    %v9296 = vadd.f32 %v9255, %v9295
    %v9297 = vpop.f32.mrb[0].mxu0
    %v9298 = vpop.f32.mrb[0].mxu0
    %9299 = vdwg.mxu0
    %9300 = vmatprep.subr.bf16.mxu0 %v5557
    %9301 = vmatpush1.bf16.msra.mxu0 %v5556
    %9302 = vmatprep.subr.bf16.mxu0 %v5570
    %9303 = vmatpush1.bf16.msra.mxu0 %v5569
    %9304 = vmatprep.subr.bf16.mxu0 %v5583
    %9305 = vmatpush1.bf16.msra.mxu0 %v5582
    %9306 = vmatprep.subr.bf16.mxu0 %v5596
    %9307 = vmatpush1.bf16.msra.mxu0 %v5595
    %9308 = vmatprep.subr.bf16.mxu0 %v5609
    %9309 = vmatpush1.bf16.msra.mxu0 %v5608
    %9310 = vmatprep.subr.bf16.mxu0 %v5622
    %9311 = vmatpush1.bf16.msra.mxu0 %v5621
    %9312 = vmatprep.subr.bf16.mxu0 %v5635
    %9313 = vmatpush1.bf16.msra.mxu0 %v5634
    %9314 = vmatprep.subr.bf16.mxu0 %v5648
    %9315 = vmatpush1.bf16.msra.mxu0 %v5647
    %9316 = vmatprep.subr.bf16.mxu0 %v5661
    %9317 = vmatpush1.bf16.msra.mxu0 %v5660
    %9318 = vmatprep.subr.bf16.mxu0 %v5674
    %9319 = vmatpush1.bf16.msra.mxu0 %v5673
    %9320 = vmatprep.subr.bf16.mxu0 %v5687
    %9321 = vmatpush1.bf16.msra.mxu0 %v5686
    %9322 = vmatprep.subr.bf16.mxu0 %v5700
    %9323 = vmatpush1.bf16.msra.mxu0 %v5699
    %9324 = vmatprep.subr.bf16.mxu0 %v5713
    %9325 = vmatpush1.bf16.msra.mxu0 %v5712
    %9326 = vmatprep.subr.bf16.mxu0 %v5726
    %9327 = vmatpush1.bf16.msra.mxu0 %v5725
    %9328 = vmatprep.subr.bf16.mxu0 %v5739
    %9329 = vmatpush1.bf16.msra.mxu0 %v5738
    %9330 = vmatprep.subr.bf16.mxu0 %v5752
    %9331 = vmatpush1.bf16.msra.mxu0 %v5751
    %9332 = vmatprep.mubr.bf16.mxu0 %v67
    %9333 = vmatmul.mubr.bf16.gmra.mrb[0].mxu0 %v66
    %v9334 = vpop.f32.mrb[0].mxu0
    %v9335 = vadd.f32 %v1518, %v9334
    %v9336 = vpop.f32.mrb[0].mxu0
    %v9337 = vadd.f32 %v1522, %v9336
    %v9338 = vpop.f32.mrb[0].mxu0
    %v9339 = vpop.f32.mrb[0].mxu0
    %9340 = vdwg.mxu0
    %9341 = vmatprep.subr.bf16.mxu0 %v5765
    %9342 = vmatpush1.bf16.msra.mxu0 %v5764
    %9343 = vmatprep.subr.bf16.mxu0 %v5778
    %9344 = vmatpush1.bf16.msra.mxu0 %v5777
    %9345 = vmatprep.subr.bf16.mxu0 %v5791
    %9346 = vmatpush1.bf16.msra.mxu0 %v5790
    %9347 = vmatprep.subr.bf16.mxu0 %v5804
    %9348 = vmatpush1.bf16.msra.mxu0 %v5803
    %9349 = vmatprep.subr.bf16.mxu0 %v5817
    %9350 = vmatpush1.bf16.msra.mxu0 %v5816
    %9351 = vmatprep.subr.bf16.mxu0 %v5830
    %9352 = vmatpush1.bf16.msra.mxu0 %v5829
    %9353 = vmatprep.subr.bf16.mxu0 %v5843
    %9354 = vmatpush1.bf16.msra.mxu0 %v5842
    %9355 = vmatprep.subr.bf16.mxu0 %v5856
    %9356 = vmatpush1.bf16.msra.mxu0 %v5855
    %9357 = vmatprep.subr.bf16.mxu0 %v5869
    %9358 = vmatpush1.bf16.msra.mxu0 %v5868
    %9359 = vmatprep.subr.bf16.mxu0 %v5882
    %9360 = vmatpush1.bf16.msra.mxu0 %v5881
    %9361 = vmatprep.subr.bf16.mxu0 %v5895
    %9362 = vmatpush1.bf16.msra.mxu0 %v5894
    %9363 = vmatprep.subr.bf16.mxu0 %v5908
    %9364 = vmatpush1.bf16.msra.mxu0 %v5907
    %9365 = vmatprep.subr.bf16.mxu0 %v5921
    %9366 = vmatpush1.bf16.msra.mxu0 %v5920
    %9367 = vmatprep.subr.bf16.mxu0 %v5934
    %9368 = vmatpush1.bf16.msra.mxu0 %v5933
    %9369 = vmatprep.subr.bf16.mxu0 %v5947
    %9370 = vmatpush1.bf16.msra.mxu0 %v5946
    %9371 = vmatprep.subr.bf16.mxu0 %v5960
    %9372 = vmatpush1.bf16.msra.mxu0 %v5959
    %9373 = vmatprep.mubr.bf16.mxu0 %v69
    %9374 = vmatmul.mubr.bf16.gmra.mrb[0].mxu0 %v68
    %v9375 = vpop.f32.mrb[0].mxu0
    %v9376 = vadd.f32 %v9335, %v9375
    %v9377 = vpop.f32.mrb[0].mxu0
    %v9378 = vadd.f32 %v9337, %v9377
    %v9379 = vpop.f32.mrb[0].mxu0
    %v9380 = vpop.f32.mrb[0].mxu0
    %9381 = vdwg.mxu0
    %9382 = vmatprep.subr.bf16.mxu0 %v5973
    %9383 = vmatpush1.bf16.msra.mxu0 %v5972
    %9384 = vmatprep.subr.bf16.mxu0 %v5986
    %9385 = vmatpush1.bf16.msra.mxu0 %v5985
    %9386 = vmatprep.subr.bf16.mxu0 %v5999
    %9387 = vmatpush1.bf16.msra.mxu0 %v5998
    %9388 = vmatprep.subr.bf16.mxu0 %v6012
    %9389 = vmatpush1.bf16.msra.mxu0 %v6011
    %9390 = vmatprep.subr.bf16.mxu0 %v6025
    %9391 = vmatpush1.bf16.msra.mxu0 %v6024
    %9392 = vmatprep.subr.bf16.mxu0 %v6038
    %9393 = vmatpush1.bf16.msra.mxu0 %v6037
    %9394 = vmatprep.subr.bf16.mxu0 %v6051
    %9395 = vmatpush1.bf16.msra.mxu0 %v6050
    %9396 = vmatprep.subr.bf16.mxu0 %v6064
    %9397 = vmatpush1.bf16.msra.mxu0 %v6063
    %9398 = vmatprep.subr.bf16.mxu0 %v6077
    %9399 = vmatpush1.bf16.msra.mxu0 %v6076
    %9400 = vmatprep.subr.bf16.mxu0 %v6090
    %9401 = vmatpush1.bf16.msra.mxu0 %v6089
    %9402 = vmatprep.subr.bf16.mxu0 %v6103
    %9403 = vmatpush1.bf16.msra.mxu0 %v6102
    %9404 = vmatprep.subr.bf16.mxu0 %v6116
    %9405 = vmatpush1.bf16.msra.mxu0 %v6115
    %9406 = vmatprep.subr.bf16.mxu0 %v6129
    %9407 = vmatpush1.bf16.msra.mxu0 %v6128
    %9408 = vmatprep.subr.bf16.mxu0 %v6142
    %9409 = vmatpush1.bf16.msra.mxu0 %v6141
    %9410 = vmatprep.subr.bf16.mxu0 %v6155
    %9411 = vmatpush1.bf16.msra.mxu0 %v6154
    %9412 = vmatprep.subr.bf16.mxu0 %v6168
    %9413 = vmatpush1.bf16.msra.mxu0 %v6167
    %9414 = vmatprep.mubr.bf16.mxu0 %v71
    %9415 = vmatmul.mubr.bf16.gmra.mrb[0].mxu0 %v70
    %v9416 = vpop.f32.mrb[0].mxu0
    %v9417 = vadd.f32 %v9376, %v9416
    %v9418 = vpop.f32.mrb[0].mxu0
    %v9419 = vadd.f32 %v9378, %v9418
    %v9420 = vpop.f32.mrb[0].mxu0
    %v9421 = vpop.f32.mrb[0].mxu0
    %9422 = vdwg.mxu0
    %9423 = vmatprep.subr.bf16.mxu0 %v6181
    %9424 = vmatpush1.bf16.msra.mxu0 %v6180
    %9425 = vmatprep.subr.bf16.mxu0 %v6194
    %9426 = vmatpush1.bf16.msra.mxu0 %v6193
    %9427 = vmatprep.subr.bf16.mxu0 %v6207
    %9428 = vmatpush1.bf16.msra.mxu0 %v6206
    %9429 = vmatprep.subr.bf16.mxu0 %v6220
    %9430 = vmatpush1.bf16.msra.mxu0 %v6219
    %9431 = vmatprep.subr.bf16.mxu0 %v6233
    %9432 = vmatpush1.bf16.msra.mxu0 %v6232
    %9433 = vmatprep.subr.bf16.mxu0 %v6246
    %9434 = vmatpush1.bf16.msra.mxu0 %v6245
    %9435 = vmatprep.subr.bf16.mxu0 %v6259
    %9436 = vmatpush1.bf16.msra.mxu0 %v6258
    %9437 = vmatprep.subr.bf16.mxu0 %v6272
    %9438 = vmatpush1.bf16.msra.mxu0 %v6271
    %9439 = vmatprep.subr.bf16.mxu0 %v6285
    %9440 = vmatpush1.bf16.msra.mxu0 %v6284
    %9441 = vmatprep.subr.bf16.mxu0 %v6298
    %9442 = vmatpush1.bf16.msra.mxu0 %v6297
    %9443 = vmatprep.subr.bf16.mxu0 %v6311
    %9444 = vmatpush1.bf16.msra.mxu0 %v6310
    %9445 = vmatprep.subr.bf16.mxu0 %v6324
    %9446 = vmatpush1.bf16.msra.mxu0 %v6323
    %9447 = vmatprep.subr.bf16.mxu0 %v6337
    %9448 = vmatpush1.bf16.msra.mxu0 %v6336
    %9449 = vmatprep.subr.bf16.mxu0 %v6350
    %9450 = vmatpush1.bf16.msra.mxu0 %v6349
    %9451 = vmatprep.subr.bf16.mxu0 %v6363
    %9452 = vmatpush1.bf16.msra.mxu0 %v6362
    %9453 = vmatprep.subr.bf16.mxu0 %v6376
    %9454 = vmatpush1.bf16.msra.mxu0 %v6375
    %9455 = vmatprep.mubr.bf16.mxu0 %v73
    %9456 = vmatmul.mubr.bf16.gmra.mrb[0].mxu0 %v72
    %v9457 = vpop.f32.mrb[0].mxu0
    %v9458 = vadd.f32 %v9417, %v9457
    %v9459 = vpop.f32.mrb[0].mxu0
    %v9460 = vadd.f32 %v9419, %v9459
    %v9461 = vpop.f32.mrb[0].mxu0
    %v9462 = vpop.f32.mrb[0].mxu0
    %9463 = vdwg.mxu0
    %9464 = vmatprep.subr.bf16.mxu0 %v6389
    %9465 = vmatpush1.bf16.msra.mxu0 %v6388
    %9466 = vmatprep.subr.bf16.mxu0 %v6402
    %9467 = vmatpush1.bf16.msra.mxu0 %v6401
    %9468 = vmatprep.subr.bf16.mxu0 %v6415
    %9469 = vmatpush1.bf16.msra.mxu0 %v6414
    %9470 = vmatprep.subr.bf16.mxu0 %v6428
    %9471 = vmatpush1.bf16.msra.mxu0 %v6427
    %9472 = vmatprep.subr.bf16.mxu0 %v6441
    %9473 = vmatpush1.bf16.msra.mxu0 %v6440
    %9474 = vmatprep.subr.bf16.mxu0 %v6454
    %9475 = vmatpush1.bf16.msra.mxu0 %v6453
    %9476 = vmatprep.subr.bf16.mxu0 %v6467
    %9477 = vmatpush1.bf16.msra.mxu0 %v6466
    %9478 = vmatprep.subr.bf16.mxu0 %v6480
    %9479 = vmatpush1.bf16.msra.mxu0 %v6479
    %9480 = vmatprep.subr.bf16.mxu0 %v6493
    %9481 = vmatpush1.bf16.msra.mxu0 %v6492
    %9482 = vmatprep.subr.bf16.mxu0 %v6506
    %9483 = vmatpush1.bf16.msra.mxu0 %v6505
    %9484 = vmatprep.subr.bf16.mxu0 %v6519
    %9485 = vmatpush1.bf16.msra.mxu0 %v6518
    %9486 = vmatprep.subr.bf16.mxu0 %v6532
    %9487 = vmatpush1.bf16.msra.mxu0 %v6531
    %9488 = vmatprep.subr.bf16.mxu0 %v6545
    %9489 = vmatpush1.bf16.msra.mxu0 %v6544
    %9490 = vmatprep.subr.bf16.mxu0 %v6558
    %9491 = vmatpush1.bf16.msra.mxu0 %v6557
    %9492 = vmatprep.subr.bf16.mxu0 %v6571
    %9493 = vmatpush1.bf16.msra.mxu0 %v6570
    %9494 = vmatprep.subr.bf16.mxu0 %v6584
    %9495 = vmatpush1.bf16.msra.mxu0 %v6583
    %9496 = vmatprep.mubr.bf16.mxu0 %v75
    %9497 = vmatmul.mubr.bf16.gmra.mrb[0].mxu0 %v74
    %v9498 = vpop.f32.mrb[0].mxu0
    %v9499 = vadd.f32 %v9458, %v9498
    %v9500 = vpop.f32.mrb[0].mxu0
    %v9501 = vadd.f32 %v9460, %v9500
    %v9502 = vpop.f32.mrb[0].mxu0
    %v9503 = vpop.f32.mrb[0].mxu0
    %9504 = vdwg.mxu0
    %9505 = vmatprep.subr.bf16.mxu0 %v6597
    %9506 = vmatpush1.bf16.msra.mxu0 %v6596
    %9507 = vmatprep.subr.bf16.mxu0 %v6610
    %9508 = vmatpush1.bf16.msra.mxu0 %v6609
    %9509 = vmatprep.subr.bf16.mxu0 %v6623
    %9510 = vmatpush1.bf16.msra.mxu0 %v6622
    %9511 = vmatprep.subr.bf16.mxu0 %v6636
    %9512 = vmatpush1.bf16.msra.mxu0 %v6635
    %9513 = vmatprep.subr.bf16.mxu0 %v6649
    %9514 = vmatpush1.bf16.msra.mxu0 %v6648
    %9515 = vmatprep.subr.bf16.mxu0 %v6662
    %9516 = vmatpush1.bf16.msra.mxu0 %v6661
    %9517 = vmatprep.subr.bf16.mxu0 %v6675
    %9518 = vmatpush1.bf16.msra.mxu0 %v6674
    %9519 = vmatprep.subr.bf16.mxu0 %v6688
    %9520 = vmatpush1.bf16.msra.mxu0 %v6687
    %9521 = vmatprep.subr.bf16.mxu0 %v6701
    %9522 = vmatpush1.bf16.msra.mxu0 %v6700
    %9523 = vmatprep.subr.bf16.mxu0 %v6714
    %9524 = vmatpush1.bf16.msra.mxu0 %v6713
    %9525 = vmatprep.subr.bf16.mxu0 %v6727
    %9526 = vmatpush1.bf16.msra.mxu0 %v6726
    %9527 = vmatprep.subr.bf16.mxu0 %v6740
    %9528 = vmatpush1.bf16.msra.mxu0 %v6739
    %9529 = vmatprep.subr.bf16.mxu0 %v6753
    %9530 = vmatpush1.bf16.msra.mxu0 %v6752
    %9531 = vmatprep.subr.bf16.mxu0 %v6766
    %9532 = vmatpush1.bf16.msra.mxu0 %v6765
    %9533 = vmatprep.subr.bf16.mxu0 %v6779
    %9534 = vmatpush1.bf16.msra.mxu0 %v6778
    %9535 = vmatprep.subr.bf16.mxu0 %v6792
    %9536 = vmatpush1.bf16.msra.mxu0 %v6791
    %9537 = vmatprep.mubr.bf16.mxu0 %v77
    %9538 = vmatmul.mubr.bf16.gmra.mrb[0].mxu0 %v76
    %v9539 = vpop.f32.mrb[0].mxu0
    %v9540 = vadd.f32 %v9499, %v9539
    %v9541 = vpop.f32.mrb[0].mxu0
    %v9542 = vadd.f32 %v9501, %v9541
    %v9543 = vpop.f32.mrb[0].mxu0
    %v9544 = vpop.f32.mrb[0].mxu0
    %9545 = vdwg.mxu0
    %9546 = vmatprep.subr.bf16.mxu0 %v6805
    %9547 = vmatpush1.bf16.msra.mxu0 %v6804
    %9548 = vmatprep.subr.bf16.mxu0 %v6818
    %9549 = vmatpush1.bf16.msra.mxu0 %v6817
    %9550 = vmatprep.subr.bf16.mxu0 %v6831
    %9551 = vmatpush1.bf16.msra.mxu0 %v6830
    %9552 = vmatprep.subr.bf16.mxu0 %v6844
    %9553 = vmatpush1.bf16.msra.mxu0 %v6843
    %9554 = vmatprep.subr.bf16.mxu0 0
    %9555 = vmatpush1.bf16.msra.mxu0 0
    %9556 = vmatprep.subr.bf16.mxu0 0
    %9557 = vmatpush1.bf16.msra.mxu0 0
    %9558 = vmatprep.subr.bf16.mxu0 0
    %9559 = vmatpush1.bf16.msra.mxu0 0
    %9560 = vmatprep.subr.bf16.mxu0 0
    %9561 = vmatpush1.bf16.msra.mxu0 0
    %9562 = vmatprep.subr.bf16.mxu0 0
    %9563 = vmatpush1.bf16.msra.mxu0 0
    %9564 = vmatprep.subr.bf16.mxu0 0
    %9565 = vmatpush1.bf16.msra.mxu0 0
    %9566 = vmatprep.subr.bf16.mxu0 0
    %9567 = vmatpush1.bf16.msra.mxu0 0
    %9568 = vmatprep.subr.bf16.mxu0 0
    %9569 = vmatpush1.bf16.msra.mxu0 0
    %9570 = vmatprep.subr.bf16.mxu0 0
    %9571 = vmatpush1.bf16.msra.mxu0 0
    %9572 = vmatprep.subr.bf16.mxu0 0
    %9573 = vmatpush1.bf16.msra.mxu0 0
    %9574 = vmatprep.subr.bf16.mxu0 0
    %9575 = vmatpush1.bf16.msra.mxu0 0
    %9576 = vmatprep.subr.bf16.mxu0 0
    %9577 = vmatpush1.bf16.msra.mxu0 0
    %9578 = vmatprep.mubr.bf16.mxu0 0
    %9579 = vmatmul.mubr.bf16.gmra.mrb[0].mxu0 %v8150
    %v9580 = vpop.f32.mrb[0].mxu0
    %v9581 = vadd.f32 %v9540, %v9580
    %v9582 = vpop.f32.mrb[0].mxu0
    %v9583 = vadd.f32 %v9542, %v9582
    %v9584 = vpop.f32.mrb[0].mxu0
    %v9585 = vpop.f32.mrb[0].mxu0
    %9586 = vdwg.mxu0
    %9587 = vmatprep.subr.bf16.mxu0 %v5559
    %9588 = vmatpush1.bf16.msra.mxu0 %v5558
    %9589 = vmatprep.subr.bf16.mxu0 %v5572
    %9590 = vmatpush1.bf16.msra.mxu0 %v5571
    %9591 = vmatprep.subr.bf16.mxu0 %v5585
    %9592 = vmatpush1.bf16.msra.mxu0 %v5584
    %9593 = vmatprep.subr.bf16.mxu0 %v5598
    %9594 = vmatpush1.bf16.msra.mxu0 %v5597
    %9595 = vmatprep.subr.bf16.mxu0 %v5611
    %9596 = vmatpush1.bf16.msra.mxu0 %v5610
    %9597 = vmatprep.subr.bf16.mxu0 %v5624
    %9598 = vmatpush1.bf16.msra.mxu0 %v5623
    %9599 = vmatprep.subr.bf16.mxu0 %v5637
    %9600 = vmatpush1.bf16.msra.mxu0 %v5636
    %9601 = vmatprep.subr.bf16.mxu0 %v5650
    %9602 = vmatpush1.bf16.msra.mxu0 %v5649
    %9603 = vmatprep.subr.bf16.mxu0 %v5663
    %9604 = vmatpush1.bf16.msra.mxu0 %v5662
    %9605 = vmatprep.subr.bf16.mxu0 %v5676
    %9606 = vmatpush1.bf16.msra.mxu0 %v5675
    %9607 = vmatprep.subr.bf16.mxu0 %v5689
    %9608 = vmatpush1.bf16.msra.mxu0 %v5688
    %9609 = vmatprep.subr.bf16.mxu0 %v5702
    %9610 = vmatpush1.bf16.msra.mxu0 %v5701
    %9611 = vmatprep.subr.bf16.mxu0 %v5715
    %9612 = vmatpush1.bf16.msra.mxu0 %v5714
    %9613 = vmatprep.subr.bf16.mxu0 %v5728
    %9614 = vmatpush1.bf16.msra.mxu0 %v5727
    %9615 = vmatprep.subr.bf16.mxu0 %v5741
    %9616 = vmatpush1.bf16.msra.mxu0 %v5740
    %9617 = vmatprep.subr.bf16.mxu0 %v5754
    %9618 = vmatpush1.bf16.msra.mxu0 %v5753
    %9619 = vmatprep.mubr.bf16.mxu0 %v67
    %9620 = vmatmul.mubr.bf16.gmra.mrb[0].mxu0 %v66
    %v9621 = vpop.f32.mrb[0].mxu0
    %v9622 = vadd.f32 %v1526, %v9621
    %v9623 = vpop.f32.mrb[0].mxu0
    %v9624 = vadd.f32 %v1530, %v9623
    %v9625 = vpop.f32.mrb[0].mxu0
    %v9626 = vpop.f32.mrb[0].mxu0
    %9627 = vdwg.mxu0
    %9628 = vmatprep.subr.bf16.mxu0 %v5767
    %9629 = vmatpush1.bf16.msra.mxu0 %v5766
    %9630 = vmatprep.subr.bf16.mxu0 %v5780
    %9631 = vmatpush1.bf16.msra.mxu0 %v5779
    %9632 = vmatprep.subr.bf16.mxu0 %v5793
    %9633 = vmatpush1.bf16.msra.mxu0 %v5792
    %9634 = vmatprep.subr.bf16.mxu0 %v5806
    %9635 = vmatpush1.bf16.msra.mxu0 %v5805
    %9636 = vmatprep.subr.bf16.mxu0 %v5819
    %9637 = vmatpush1.bf16.msra.mxu0 %v5818
    %9638 = vmatprep.subr.bf16.mxu0 %v5832
    %9639 = vmatpush1.bf16.msra.mxu0 %v5831
    %9640 = vmatprep.subr.bf16.mxu0 %v5845
    %9641 = vmatpush1.bf16.msra.mxu0 %v5844
    %9642 = vmatprep.subr.bf16.mxu0 %v5858
    %9643 = vmatpush1.bf16.msra.mxu0 %v5857
    %9644 = vmatprep.subr.bf16.mxu0 %v5871
    %9645 = vmatpush1.bf16.msra.mxu0 %v5870
    %9646 = vmatprep.subr.bf16.mxu0 %v5884
    %9647 = vmatpush1.bf16.msra.mxu0 %v5883
    %9648 = vmatprep.subr.bf16.mxu0 %v5897
    %9649 = vmatpush1.bf16.msra.mxu0 %v5896
    %9650 = vmatprep.subr.bf16.mxu0 %v5910
    %9651 = vmatpush1.bf16.msra.mxu0 %v5909
    %9652 = vmatprep.subr.bf16.mxu0 %v5923
    %9653 = vmatpush1.bf16.msra.mxu0 %v5922
    %9654 = vmatprep.subr.bf16.mxu0 %v5936
    %9655 = vmatpush1.bf16.msra.mxu0 %v5935
    %9656 = vmatprep.subr.bf16.mxu0 %v5949
    %9657 = vmatpush1.bf16.msra.mxu0 %v5948
    %9658 = vmatprep.subr.bf16.mxu0 %v5962
    %9659 = vmatpush1.bf16.msra.mxu0 %v5961
    %9660 = vmatprep.mubr.bf16.mxu0 %v69
    %9661 = vmatmul.mubr.bf16.gmra.mrb[0].mxu0 %v68
    %v9662 = vpop.f32.mrb[0].mxu0
    %v9663 = vadd.f32 %v9622, %v9662
    %v9664 = vpop.f32.mrb[0].mxu0
    %v9665 = vadd.f32 %v9624, %v9664
    %v9666 = vpop.f32.mrb[0].mxu0
    %v9667 = vpop.f32.mrb[0].mxu0
    %9668 = vdwg.mxu0
    %9669 = vmatprep.subr.bf16.mxu0 %v5975
    %9670 = vmatpush1.bf16.msra.mxu0 %v5974
    %9671 = vmatprep.subr.bf16.mxu0 %v5988
    %9672 = vmatpush1.bf16.msra.mxu0 %v5987
    %9673 = vmatprep.subr.bf16.mxu0 %v6001
    %9674 = vmatpush1.bf16.msra.mxu0 %v6000
    %9675 = vmatprep.subr.bf16.mxu0 %v6014
    %9676 = vmatpush1.bf16.msra.mxu0 %v6013
    %9677 = vmatprep.subr.bf16.mxu0 %v6027
    %9678 = vmatpush1.bf16.msra.mxu0 %v6026
    %9679 = vmatprep.subr.bf16.mxu0 %v6040
    %9680 = vmatpush1.bf16.msra.mxu0 %v6039
    %9681 = vmatprep.subr.bf16.mxu0 %v6053
    %9682 = vmatpush1.bf16.msra.mxu0 %v6052
    %9683 = vmatprep.subr.bf16.mxu0 %v6066
    %9684 = vmatpush1.bf16.msra.mxu0 %v6065
    %9685 = vmatprep.subr.bf16.mxu0 %v6079
    %9686 = vmatpush1.bf16.msra.mxu0 %v6078
    %9687 = vmatprep.subr.bf16.mxu0 %v6092
    %9688 = vmatpush1.bf16.msra.mxu0 %v6091
    %9689 = vmatprep.subr.bf16.mxu0 %v6105
    %9690 = vmatpush1.bf16.msra.mxu0 %v6104
    %9691 = vmatprep.subr.bf16.mxu0 %v6118
    %9692 = vmatpush1.bf16.msra.mxu0 %v6117
    %9693 = vmatprep.subr.bf16.mxu0 %v6131
    %9694 = vmatpush1.bf16.msra.mxu0 %v6130
    %9695 = vmatprep.subr.bf16.mxu0 %v6144
    %9696 = vmatpush1.bf16.msra.mxu0 %v6143
    %9697 = vmatprep.subr.bf16.mxu0 %v6157
    %9698 = vmatpush1.bf16.msra.mxu0 %v6156
    %9699 = vmatprep.subr.bf16.mxu0 %v6170
    %9700 = vmatpush1.bf16.msra.mxu0 %v6169
    %9701 = vmatprep.mubr.bf16.mxu0 %v71
    %9702 = vmatmul.mubr.bf16.gmra.mrb[0].mxu0 %v70
    %v9703 = vpop.f32.mrb[0].mxu0
    %v9704 = vadd.f32 %v9663, %v9703
    %v9705 = vpop.f32.mrb[0].mxu0
    %v9706 = vadd.f32 %v9665, %v9705
    %v9707 = vpop.f32.mrb[0].mxu0
    %v9708 = vpop.f32.mrb[0].mxu0
    %9709 = vdwg.mxu0
    %9710 = vmatprep.subr.bf16.mxu0 %v6183
    %9711 = vmatpush1.bf16.msra.mxu0 %v6182
    %9712 = vmatprep.subr.bf16.mxu0 %v6196
    %9713 = vmatpush1.bf16.msra.mxu0 %v6195
    %9714 = vmatprep.subr.bf16.mxu0 %v6209
    %9715 = vmatpush1.bf16.msra.mxu0 %v6208
    %9716 = vmatprep.subr.bf16.mxu0 %v6222
    %9717 = vmatpush1.bf16.msra.mxu0 %v6221
    %9718 = vmatprep.subr.bf16.mxu0 %v6235
    %9719 = vmatpush1.bf16.msra.mxu0 %v6234
    %9720 = vmatprep.subr.bf16.mxu0 %v6248
    %9721 = vmatpush1.bf16.msra.mxu0 %v6247
    %9722 = vmatprep.subr.bf16.mxu0 %v6261
    %9723 = vmatpush1.bf16.msra.mxu0 %v6260
    %9724 = vmatprep.subr.bf16.mxu0 %v6274
    %9725 = vmatpush1.bf16.msra.mxu0 %v6273
    %9726 = vmatprep.subr.bf16.mxu0 %v6287
    %9727 = vmatpush1.bf16.msra.mxu0 %v6286
    %9728 = vmatprep.subr.bf16.mxu0 %v6300
    %9729 = vmatpush1.bf16.msra.mxu0 %v6299
    %9730 = vmatprep.subr.bf16.mxu0 %v6313
    %9731 = vmatpush1.bf16.msra.mxu0 %v6312
    %9732 = vmatprep.subr.bf16.mxu0 %v6326
    %9733 = vmatpush1.bf16.msra.mxu0 %v6325
    %9734 = vmatprep.subr.bf16.mxu0 %v6339
    %9735 = vmatpush1.bf16.msra.mxu0 %v6338
    %9736 = vmatprep.subr.bf16.mxu0 %v6352
    %9737 = vmatpush1.bf16.msra.mxu0 %v6351
    %9738 = vmatprep.subr.bf16.mxu0 %v6365
    %9739 = vmatpush1.bf16.msra.mxu0 %v6364
    %9740 = vmatprep.subr.bf16.mxu0 %v6378
    %9741 = vmatpush1.bf16.msra.mxu0 %v6377
    %9742 = vmatprep.mubr.bf16.mxu0 %v73
    %9743 = vmatmul.mubr.bf16.gmra.mrb[0].mxu0 %v72
    %v9744 = vpop.f32.mrb[0].mxu0
    %v9745 = vadd.f32 %v9704, %v9744
    %v9746 = vpop.f32.mrb[0].mxu0
    %v9747 = vadd.f32 %v9706, %v9746
    %v9748 = vpop.f32.mrb[0].mxu0
    %v9749 = vpop.f32.mrb[0].mxu0
    %9750 = vdwg.mxu0
    %9751 = vmatprep.subr.bf16.mxu0 %v6391
    %9752 = vmatpush1.bf16.msra.mxu0 %v6390
    %9753 = vmatprep.subr.bf16.mxu0 %v6404
    %9754 = vmatpush1.bf16.msra.mxu0 %v6403
    %9755 = vmatprep.subr.bf16.mxu0 %v6417
    %9756 = vmatpush1.bf16.msra.mxu0 %v6416
    %9757 = vmatprep.subr.bf16.mxu0 %v6430
    %9758 = vmatpush1.bf16.msra.mxu0 %v6429
    %9759 = vmatprep.subr.bf16.mxu0 %v6443
    %9760 = vmatpush1.bf16.msra.mxu0 %v6442
    %9761 = vmatprep.subr.bf16.mxu0 %v6456
    %9762 = vmatpush1.bf16.msra.mxu0 %v6455
    %9763 = vmatprep.subr.bf16.mxu0 %v6469
    %9764 = vmatpush1.bf16.msra.mxu0 %v6468
    %9765 = vmatprep.subr.bf16.mxu0 %v6482
    %9766 = vmatpush1.bf16.msra.mxu0 %v6481
    %9767 = vmatprep.subr.bf16.mxu0 %v6495
    %9768 = vmatpush1.bf16.msra.mxu0 %v6494
    %9769 = vmatprep.subr.bf16.mxu0 %v6508
    %9770 = vmatpush1.bf16.msra.mxu0 %v6507
    %9771 = vmatprep.subr.bf16.mxu0 %v6521
    %9772 = vmatpush1.bf16.msra.mxu0 %v6520
    %9773 = vmatprep.subr.bf16.mxu0 %v6534
    %9774 = vmatpush1.bf16.msra.mxu0 %v6533
    %9775 = vmatprep.subr.bf16.mxu0 %v6547
    %9776 = vmatpush1.bf16.msra.mxu0 %v6546
    %9777 = vmatprep.subr.bf16.mxu0 %v6560
    %9778 = vmatpush1.bf16.msra.mxu0 %v6559
    %9779 = vmatprep.subr.bf16.mxu0 %v6573
    %9780 = vmatpush1.bf16.msra.mxu0 %v6572
    %9781 = vmatprep.subr.bf16.mxu0 %v6586
    %9782 = vmatpush1.bf16.msra.mxu0 %v6585
    %9783 = vmatprep.mubr.bf16.mxu0 %v75
    %9784 = vmatmul.mubr.bf16.gmra.mrb[0].mxu0 %v74
    %v9785 = vpop.f32.mrb[0].mxu0
    %v9786 = vadd.f32 %v9745, %v9785
    %v9787 = vpop.f32.mrb[0].mxu0
    %v9788 = vadd.f32 %v9747, %v9787
    %v9789 = vpop.f32.mrb[0].mxu0
    %v9790 = vpop.f32.mrb[0].mxu0
    %9791 = vdwg.mxu0
    %9792 = vmatprep.subr.bf16.mxu0 %v6599
    %9793 = vmatpush1.bf16.msra.mxu0 %v6598
    %9794 = vmatprep.subr.bf16.mxu0 %v6612
    %9795 = vmatpush1.bf16.msra.mxu0 %v6611
    %9796 = vmatprep.subr.bf16.mxu0 %v6625
    %9797 = vmatpush1.bf16.msra.mxu0 %v6624
    %9798 = vmatprep.subr.bf16.mxu0 %v6638
    %9799 = vmatpush1.bf16.msra.mxu0 %v6637
    %9800 = vmatprep.subr.bf16.mxu0 %v6651
    %9801 = vmatpush1.bf16.msra.mxu0 %v6650
    %9802 = vmatprep.subr.bf16.mxu0 %v6664
    %9803 = vmatpush1.bf16.msra.mxu0 %v6663
    %9804 = vmatprep.subr.bf16.mxu0 %v6677
    %9805 = vmatpush1.bf16.msra.mxu0 %v6676
    %9806 = vmatprep.subr.bf16.mxu0 %v6690
    %9807 = vmatpush1.bf16.msra.mxu0 %v6689
    %9808 = vmatprep.subr.bf16.mxu0 %v6703
    %9809 = vmatpush1.bf16.msra.mxu0 %v6702
    %9810 = vmatprep.subr.bf16.mxu0 %v6716
    %9811 = vmatpush1.bf16.msra.mxu0 %v6715
    %9812 = vmatprep.subr.bf16.mxu0 %v6729
    %9813 = vmatpush1.bf16.msra.mxu0 %v6728
    %9814 = vmatprep.subr.bf16.mxu0 %v6742
    %9815 = vmatpush1.bf16.msra.mxu0 %v6741
    %9816 = vmatprep.subr.bf16.mxu0 %v6755
    %9817 = vmatpush1.bf16.msra.mxu0 %v6754
    %9818 = vmatprep.subr.bf16.mxu0 %v6768
    %9819 = vmatpush1.bf16.msra.mxu0 %v6767
    %9820 = vmatprep.subr.bf16.mxu0 %v6781
    %9821 = vmatpush1.bf16.msra.mxu0 %v6780
    %9822 = vmatprep.subr.bf16.mxu0 %v6794
    %9823 = vmatpush1.bf16.msra.mxu0 %v6793
    %9824 = vmatprep.mubr.bf16.mxu0 %v77
    %9825 = vmatmul.mubr.bf16.gmra.mrb[0].mxu0 %v76
    %v9826 = vpop.f32.mrb[0].mxu0
    %v9827 = vadd.f32 %v9786, %v9826
    %v9828 = vpop.f32.mrb[0].mxu0
    %v9829 = vadd.f32 %v9788, %v9828
    %v9830 = vpop.f32.mrb[0].mxu0
    %v9831 = vpop.f32.mrb[0].mxu0
    %9832 = vdwg.mxu0
    %9833 = vmatprep.subr.bf16.mxu0 %v6807
    %9834 = vmatpush1.bf16.msra.mxu0 %v6806
    %9835 = vmatprep.subr.bf16.mxu0 %v6820
    %9836 = vmatpush1.bf16.msra.mxu0 %v6819
    %9837 = vmatprep.subr.bf16.mxu0 %v6833
    %9838 = vmatpush1.bf16.msra.mxu0 %v6832
    %9839 = vmatprep.subr.bf16.mxu0 %v6846
    %9840 = vmatpush1.bf16.msra.mxu0 %v6845
    %9841 = vmatprep.subr.bf16.mxu0 0
    %9842 = vmatpush1.bf16.msra.mxu0 0
    %9843 = vmatprep.subr.bf16.mxu0 0
    %9844 = vmatpush1.bf16.msra.mxu0 0
    %9845 = vmatprep.subr.bf16.mxu0 0
    %9846 = vmatpush1.bf16.msra.mxu0 0
    %9847 = vmatprep.subr.bf16.mxu0 0
    %9848 = vmatpush1.bf16.msra.mxu0 0
    %9849 = vmatprep.subr.bf16.mxu0 0
    %9850 = vmatpush1.bf16.msra.mxu0 0
    %9851 = vmatprep.subr.bf16.mxu0 0
    %9852 = vmatpush1.bf16.msra.mxu0 0
    %9853 = vmatprep.subr.bf16.mxu0 0
    %9854 = vmatpush1.bf16.msra.mxu0 0
    %9855 = vmatprep.subr.bf16.mxu0 0
    %9856 = vmatpush1.bf16.msra.mxu0 0
    %9857 = vmatprep.subr.bf16.mxu0 0
    %9858 = vmatpush1.bf16.msra.mxu0 0
    %9859 = vmatprep.subr.bf16.mxu0 0
    %9860 = vmatpush1.bf16.msra.mxu0 0
    %9861 = vmatprep.subr.bf16.mxu0 0
    %9862 = vmatpush1.bf16.msra.mxu0 0
    %9863 = vmatprep.subr.bf16.mxu0 0
    %9864 = vmatpush1.bf16.msra.mxu0 0
    %9865 = vmatprep.mubr.bf16.mxu0 0
    %9866 = vmatmul.mubr.bf16.gmra.mrb[0].mxu0 %v8150
    %v9867 = vpop.f32.mrb[0].mxu0
    %v9868 = vadd.f32 %v9827, %v9867
    %v9869 = vpop.f32.mrb[0].mxu0
    %v9870 = vadd.f32 %v9829, %v9869
    %v9871 = vpop.f32.mrb[0].mxu0
    %v9872 = vpop.f32.mrb[0].mxu0
    %9873 = vdwg.mxu0
    %9874 = vmatprep.subr.bf16.mxu0 0
    %9875 = vmatpush1.bf16.msra.mxu0 %v5560
    %9876 = vmatprep.subr.bf16.mxu0 0
    %9877 = vmatpush1.bf16.msra.mxu0 %v5573
    %9878 = vmatprep.subr.bf16.mxu0 0
    %9879 = vmatpush1.bf16.msra.mxu0 %v5586
    %9880 = vmatprep.subr.bf16.mxu0 0
    %9881 = vmatpush1.bf16.msra.mxu0 %v5599
    %9882 = vmatprep.subr.bf16.mxu0 0
    %9883 = vmatpush1.bf16.msra.mxu0 %v5612
    %9884 = vmatprep.subr.bf16.mxu0 0
    %9885 = vmatpush1.bf16.msra.mxu0 %v5625
    %9886 = vmatprep.subr.bf16.mxu0 0
    %9887 = vmatpush1.bf16.msra.mxu0 %v5638
    %9888 = vmatprep.subr.bf16.mxu0 0
    %9889 = vmatpush1.bf16.msra.mxu0 %v5651
    %9890 = vmatprep.subr.bf16.mxu0 0
    %9891 = vmatpush1.bf16.msra.mxu0 %v5664
    %9892 = vmatprep.subr.bf16.mxu0 0
    %9893 = vmatpush1.bf16.msra.mxu0 %v5677
    %9894 = vmatprep.subr.bf16.mxu0 0
    %9895 = vmatpush1.bf16.msra.mxu0 %v5690
    %9896 = vmatprep.subr.bf16.mxu0 0
    %9897 = vmatpush1.bf16.msra.mxu0 %v5703
    %9898 = vmatprep.subr.bf16.mxu0 0
    %9899 = vmatpush1.bf16.msra.mxu0 %v5716
    %9900 = vmatprep.subr.bf16.mxu0 0
    %9901 = vmatpush1.bf16.msra.mxu0 %v5729
    %9902 = vmatprep.subr.bf16.mxu0 0
    %9903 = vmatpush1.bf16.msra.mxu0 %v5742
    %9904 = vmatprep.subr.bf16.mxu0 0
    %9905 = vmatpush1.bf16.msra.mxu0 %v5755
    %9906 = vmatprep.mubr.bf16.mxu0 %v67
    %9907 = vmatmul.mubr.bf16.gmra.mrb[0].mxu0 %v66
    %v9908 = vpop.f32.mrb[0].mxu0
    %v9909 = vadd.f32 %v1534, %v9908
    %v9910 = vpop.f32.mrb[0].mxu0
    %v9911 = vpop.f32.mrb[0].mxu0
    %v9912 = vpop.f32.mrb[0].mxu0
    %9913 = vdwg.mxu0
    %9914 = vmatprep.subr.bf16.mxu0 0
    %9915 = vmatpush1.bf16.msra.mxu0 %v5768
    %9916 = vmatprep.subr.bf16.mxu0 0
    %9917 = vmatpush1.bf16.msra.mxu0 %v5781
    %9918 = vmatprep.subr.bf16.mxu0 0
    %9919 = vmatpush1.bf16.msra.mxu0 %v5794
    %9920 = vmatprep.subr.bf16.mxu0 0
    %9921 = vmatpush1.bf16.msra.mxu0 %v5807
    %9922 = vmatprep.subr.bf16.mxu0 0
    %9923 = vmatpush1.bf16.msra.mxu0 %v5820
    %9924 = vmatprep.subr.bf16.mxu0 0
    %9925 = vmatpush1.bf16.msra.mxu0 %v5833
    %9926 = vmatprep.subr.bf16.mxu0 0
    %9927 = vmatpush1.bf16.msra.mxu0 %v5846
    %9928 = vmatprep.subr.bf16.mxu0 0
    %9929 = vmatpush1.bf16.msra.mxu0 %v5859
    %9930 = vmatprep.subr.bf16.mxu0 0
    %9931 = vmatpush1.bf16.msra.mxu0 %v5872
    %9932 = vmatprep.subr.bf16.mxu0 0
    %9933 = vmatpush1.bf16.msra.mxu0 %v5885
    %9934 = vmatprep.subr.bf16.mxu0 0
    %9935 = vmatpush1.bf16.msra.mxu0 %v5898
    %9936 = vmatprep.subr.bf16.mxu0 0
    %9937 = vmatpush1.bf16.msra.mxu0 %v5911
    %9938 = vmatprep.subr.bf16.mxu0 0
    %9939 = vmatpush1.bf16.msra.mxu0 %v5924
    %9940 = vmatprep.subr.bf16.mxu0 0
    %9941 = vmatpush1.bf16.msra.mxu0 %v5937
    %9942 = vmatprep.subr.bf16.mxu0 0
    %9943 = vmatpush1.bf16.msra.mxu0 %v5950
    %9944 = vmatprep.subr.bf16.mxu0 0
    %9945 = vmatpush1.bf16.msra.mxu0 %v5963
    %9946 = vmatprep.mubr.bf16.mxu0 %v69
    %9947 = vmatmul.mubr.bf16.gmra.mrb[0].mxu0 %v68
    %v9948 = vpop.f32.mrb[0].mxu0
    %v9949 = vadd.f32 %v9909, %v9948
    %v9950 = vpop.f32.mrb[0].mxu0
    %v9951 = vpop.f32.mrb[0].mxu0
    %v9952 = vpop.f32.mrb[0].mxu0
    %9953 = vdwg.mxu0
    %9954 = vmatprep.subr.bf16.mxu0 0
    %9955 = vmatpush1.bf16.msra.mxu0 %v5976
    %9956 = vmatprep.subr.bf16.mxu0 0
    %9957 = vmatpush1.bf16.msra.mxu0 %v5989
    %9958 = vmatprep.subr.bf16.mxu0 0
    %9959 = vmatpush1.bf16.msra.mxu0 %v6002
    %9960 = vmatprep.subr.bf16.mxu0 0
    %9961 = vmatpush1.bf16.msra.mxu0 %v6015
    %9962 = vmatprep.subr.bf16.mxu0 0
    %9963 = vmatpush1.bf16.msra.mxu0 %v6028
    %9964 = vmatprep.subr.bf16.mxu0 0
    %9965 = vmatpush1.bf16.msra.mxu0 %v6041
    %9966 = vmatprep.subr.bf16.mxu0 0
    %9967 = vmatpush1.bf16.msra.mxu0 %v6054
    %9968 = vmatprep.subr.bf16.mxu0 0
    %9969 = vmatpush1.bf16.msra.mxu0 %v6067
    %9970 = vmatprep.subr.bf16.mxu0 0
    %9971 = vmatpush1.bf16.msra.mxu0 %v6080
    %9972 = vmatprep.subr.bf16.mxu0 0
    %9973 = vmatpush1.bf16.msra.mxu0 %v6093
    %9974 = vmatprep.subr.bf16.mxu0 0
    %9975 = vmatpush1.bf16.msra.mxu0 %v6106
    %9976 = vmatprep.subr.bf16.mxu0 0
    %9977 = vmatpush1.bf16.msra.mxu0 %v6119
    %9978 = vmatprep.subr.bf16.mxu0 0
    %9979 = vmatpush1.bf16.msra.mxu0 %v6132
    %9980 = vmatprep.subr.bf16.mxu0 0
    %9981 = vmatpush1.bf16.msra.mxu0 %v6145
    %9982 = vmatprep.subr.bf16.mxu0 0
    %9983 = vmatpush1.bf16.msra.mxu0 %v6158
    %9984 = vmatprep.subr.bf16.mxu0 0
    %9985 = vmatpush1.bf16.msra.mxu0 %v6171
    %9986 = vmatprep.mubr.bf16.mxu0 %v71
    %9987 = vmatmul.mubr.bf16.gmra.mrb[0].mxu0 %v70
    %v9988 = vpop.f32.mrb[0].mxu0
    %v9989 = vadd.f32 %v9949, %v9988
    %v9990 = vpop.f32.mrb[0].mxu0
    %v9991 = vpop.f32.mrb[0].mxu0
    %v9992 = vpop.f32.mrb[0].mxu0
    %9993 = vdwg.mxu0
    %9994 = vmatprep.subr.bf16.mxu0 0
    %9995 = vmatpush1.bf16.msra.mxu0 %v6184
    %9996 = vmatprep.subr.bf16.mxu0 0
    %9997 = vmatpush1.bf16.msra.mxu0 %v6197
    %9998 = vmatprep.subr.bf16.mxu0 0
    %9999 = vmatpush1.bf16.msra.mxu0 %v6210
    %10000 = vmatprep.subr.bf16.mxu0 0
    %10001 = vmatpush1.bf16.msra.mxu0 %v6223
    %10002 = vmatprep.subr.bf16.mxu0 0
    %10003 = vmatpush1.bf16.msra.mxu0 %v6236
    %10004 = vmatprep.subr.bf16.mxu0 0
    %10005 = vmatpush1.bf16.msra.mxu0 %v6249
    %10006 = vmatprep.subr.bf16.mxu0 0
    %10007 = vmatpush1.bf16.msra.mxu0 %v6262
    %10008 = vmatprep.subr.bf16.mxu0 0
    %10009 = vmatpush1.bf16.msra.mxu0 %v6275
    %10010 = vmatprep.subr.bf16.mxu0 0
    %10011 = vmatpush1.bf16.msra.mxu0 %v6288
    %10012 = vmatprep.subr.bf16.mxu0 0
    %10013 = vmatpush1.bf16.msra.mxu0 %v6301
    %10014 = vmatprep.subr.bf16.mxu0 0
    %10015 = vmatpush1.bf16.msra.mxu0 %v6314
    %10016 = vmatprep.subr.bf16.mxu0 0
    %10017 = vmatpush1.bf16.msra.mxu0 %v6327
    %10018 = vmatprep.subr.bf16.mxu0 0
    %10019 = vmatpush1.bf16.msra.mxu0 %v6340
    %10020 = vmatprep.subr.bf16.mxu0 0
    %10021 = vmatpush1.bf16.msra.mxu0 %v6353
    %10022 = vmatprep.subr.bf16.mxu0 0
    %10023 = vmatpush1.bf16.msra.mxu0 %v6366
    %10024 = vmatprep.subr.bf16.mxu0 0
    %10025 = vmatpush1.bf16.msra.mxu0 %v6379
    %10026 = vmatprep.mubr.bf16.mxu0 %v73
    %10027 = vmatmul.mubr.bf16.gmra.mrb[0].mxu0 %v72
    %v10028 = vpop.f32.mrb[0].mxu0
    %v10029 = vadd.f32 %v9989, %v10028
    %v10030 = vpop.f32.mrb[0].mxu0
    %v10031 = vpop.f32.mrb[0].mxu0
    %v10032 = vpop.f32.mrb[0].mxu0
    %10033 = vdwg.mxu0
    %10034 = vmatprep.subr.bf16.mxu0 0
    %10035 = vmatpush1.bf16.msra.mxu0 %v6392
    %10036 = vmatprep.subr.bf16.mxu0 0
    %10037 = vmatpush1.bf16.msra.mxu0 %v6405
    %10038 = vmatprep.subr.bf16.mxu0 0
    %10039 = vmatpush1.bf16.msra.mxu0 %v6418
    %10040 = vmatprep.subr.bf16.mxu0 0
    %10041 = vmatpush1.bf16.msra.mxu0 %v6431
    %10042 = vmatprep.subr.bf16.mxu0 0
    %10043 = vmatpush1.bf16.msra.mxu0 %v6444
    %10044 = vmatprep.subr.bf16.mxu0 0
    %10045 = vmatpush1.bf16.msra.mxu0 %v6457
    %10046 = vmatprep.subr.bf16.mxu0 0
    %10047 = vmatpush1.bf16.msra.mxu0 %v6470
    %10048 = vmatprep.subr.bf16.mxu0 0
    %10049 = vmatpush1.bf16.msra.mxu0 %v6483
    %10050 = vmatprep.subr.bf16.mxu0 0
    %10051 = vmatpush1.bf16.msra.mxu0 %v6496
    %10052 = vmatprep.subr.bf16.mxu0 0
    %10053 = vmatpush1.bf16.msra.mxu0 %v6509
    %10054 = vmatprep.subr.bf16.mxu0 0
    %10055 = vmatpush1.bf16.msra.mxu0 %v6522
    %10056 = vmatprep.subr.bf16.mxu0 0
    %10057 = vmatpush1.bf16.msra.mxu0 %v6535
    %10058 = vmatprep.subr.bf16.mxu0 0
    %10059 = vmatpush1.bf16.msra.mxu0 %v6548
    %10060 = vmatprep.subr.bf16.mxu0 0
    %10061 = vmatpush1.bf16.msra.mxu0 %v6561
    %10062 = vmatprep.subr.bf16.mxu0 0
    %10063 = vmatpush1.bf16.msra.mxu0 %v6574
    %10064 = vmatprep.subr.bf16.mxu0 0
    %10065 = vmatpush1.bf16.msra.mxu0 %v6587
    %10066 = vmatprep.mubr.bf16.mxu0 %v75
    %10067 = vmatmul.mubr.bf16.gmra.mrb[0].mxu0 %v74
    %v10068 = vpop.f32.mrb[0].mxu0
    %v10069 = vadd.f32 %v10029, %v10068
    %v10070 = vpop.f32.mrb[0].mxu0
    %v10071 = vpop.f32.mrb[0].mxu0
    %v10072 = vpop.f32.mrb[0].mxu0
    %10073 = vdwg.mxu0
    %10074 = vmatprep.subr.bf16.mxu0 0
    %10075 = vmatpush1.bf16.msra.mxu0 %v6600
    %10076 = vmatprep.subr.bf16.mxu0 0
    %10077 = vmatpush1.bf16.msra.mxu0 %v6613
    %10078 = vmatprep.subr.bf16.mxu0 0
    %10079 = vmatpush1.bf16.msra.mxu0 %v6626
    %10080 = vmatprep.subr.bf16.mxu0 0
    %10081 = vmatpush1.bf16.msra.mxu0 %v6639
    %10082 = vmatprep.subr.bf16.mxu0 0
    %10083 = vmatpush1.bf16.msra.mxu0 %v6652
    %10084 = vmatprep.subr.bf16.mxu0 0
    %10085 = vmatpush1.bf16.msra.mxu0 %v6665
    %10086 = vmatprep.subr.bf16.mxu0 0
    %10087 = vmatpush1.bf16.msra.mxu0 %v6678
    %10088 = vmatprep.subr.bf16.mxu0 0
    %10089 = vmatpush1.bf16.msra.mxu0 %v6691
    %10090 = vmatprep.subr.bf16.mxu0 0
    %10091 = vmatpush1.bf16.msra.mxu0 %v6704
    %10092 = vmatprep.subr.bf16.mxu0 0
    %10093 = vmatpush1.bf16.msra.mxu0 %v6717
    %10094 = vmatprep.subr.bf16.mxu0 0
    %10095 = vmatpush1.bf16.msra.mxu0 %v6730
    %10096 = vmatprep.subr.bf16.mxu0 0
    %10097 = vmatpush1.bf16.msra.mxu0 %v6743
    %10098 = vmatprep.subr.bf16.mxu0 0
    %10099 = vmatpush1.bf16.msra.mxu0 %v6756
    %10100 = vmatprep.subr.bf16.mxu0 0
    %10101 = vmatpush1.bf16.msra.mxu0 %v6769
    %10102 = vmatprep.subr.bf16.mxu0 0
    %10103 = vmatpush1.bf16.msra.mxu0 %v6782
    %10104 = vmatprep.subr.bf16.mxu0 0
    %10105 = vmatpush1.bf16.msra.mxu0 %v6795
    %10106 = vmatprep.mubr.bf16.mxu0 %v77
    %10107 = vmatmul.mubr.bf16.gmra.mrb[0].mxu0 %v76
    %v10108 = vpop.f32.mrb[0].mxu0
    %v10109 = vadd.f32 %v10069, %v10108
    %v10110 = vpop.f32.mrb[0].mxu0
    %v10111 = vpop.f32.mrb[0].mxu0
    %v10112 = vpop.f32.mrb[0].mxu0
    %10113 = vdwg.mxu0
    %10114 = vmatprep.subr.bf16.mxu0 0
    %10115 = vmatpush1.bf16.msra.mxu0 %v6808
    %10116 = vmatprep.subr.bf16.mxu0 0
    %10117 = vmatpush1.bf16.msra.mxu0 %v6821
    %10118 = vmatprep.subr.bf16.mxu0 0
    %10119 = vmatpush1.bf16.msra.mxu0 %v6834
    %10120 = vmatprep.subr.bf16.mxu0 0
    %10121 = vmatpush1.bf16.msra.mxu0 %v6847
    %10122 = vmatprep.subr.bf16.mxu0 0
    %10123 = vmatpush1.bf16.msra.mxu0 0
    %10124 = vmatprep.subr.bf16.mxu0 0
    %10125 = vmatpush1.bf16.msra.mxu0 0
    %10126 = vmatprep.subr.bf16.mxu0 0
    %10127 = vmatpush1.bf16.msra.mxu0 0
    %10128 = vmatprep.subr.bf16.mxu0 0
    %10129 = vmatpush1.bf16.msra.mxu0 0
    %10130 = vmatprep.subr.bf16.mxu0 0
    %10131 = vmatpush1.bf16.msra.mxu0 0
    %10132 = vmatprep.subr.bf16.mxu0 0
    %10133 = vmatpush1.bf16.msra.mxu0 0
    %10134 = vmatprep.subr.bf16.mxu0 0
    %10135 = vmatpush1.bf16.msra.mxu0 0
    %10136 = vmatprep.subr.bf16.mxu0 0
    %10137 = vmatpush1.bf16.msra.mxu0 0
    %10138 = vmatprep.subr.bf16.mxu0 0
    %10139 = vmatpush1.bf16.msra.mxu0 0
    %10140 = vmatprep.subr.bf16.mxu0 0
    %10141 = vmatpush1.bf16.msra.mxu0 0
    %10142 = vmatprep.subr.bf16.mxu0 0
    %10143 = vmatpush1.bf16.msra.mxu0 0
    %10144 = vmatprep.subr.bf16.mxu0 0
    %10145 = vmatpush1.bf16.msra.mxu0 0
    %10146 = vmatprep.mubr.bf16.mxu0 0
    %10147 = vmatmul.mubr.bf16.gmra.mrb[0].mxu0 %v8150
    %v10148 = vpop.f32.mrb[0].mxu0
    %v10149 = vadd.f32 %v10109, %v10148
    %v10150 = vpop.f32.mrb[0].mxu0
    %v10151 = vpop.f32.mrb[0].mxu0
    %v10152 = vpop.f32.mrb[0].mxu0
    %10153 = vdwg.mxu0
    %10154 = vst [vmem:[#allocation8] sm:$0xff] %v8433
    %10155 = vst [vmem:[#allocation8 + $0x8] sm:$0xff] %v8435
    %10156 = vst [vmem:[#allocation8 + $0x10] sm:$0xff] %v8720
    %10157 = vst [vmem:[#allocation8 + $0x18] sm:$0xff] %v8722
    %10158 = vst [vmem:[#allocation8 + $0x20] sm:$0xff] %v9007
    %10159 = vst [vmem:[#allocation8 + $0x28] sm:$0xff] %v9009
    %10160 = vst [vmem:[#allocation8 + $0x30] sm:$0xff] %v9294
    %10161 = vst [vmem:[#allocation8 + $0x38] sm:$0xff] %v9296
    %10162 = vst [vmem:[#allocation8 + $0x40] sm:$0xff] %v9581
    %10163 = vst [vmem:[#allocation8 + $0x48] sm:$0xff] %v9583
    %10164 = vst [vmem:[#allocation8 + $0x50] sm:$0xff] %v9868
    %10165 = vst [vmem:[#allocation8 + $0x58] sm:$0xff] %v9870
    %10166 = vst [vmem:[#allocation8 + $0x60] sm:$0xff] %v10149
    // Predicated region
    $region26: #{tpu_custom_call.1} parent=1 // pred_check
      _
    $region27: #{tpu_custom_call.1} parent=1 // pred_check_branch
      %10168 = sbr.rel (0) target = $region29
    $region28: #{tpu_custom_call.1} parent=1 // pred_region
      %s10170 = ssub.s32 1664, 1664
      %10171 = vsyncadd [#allocation4], %s10170
      %s10173 = sshll.u32 [#allocation8], 4
      %s10174 = int_to_ptr.vmem [resolvable:$true] %s10173
      %10176 = dma.vmem_to_hbm [thread:$0]  %s10174, 1664, %s3, [#allocation4]
    $region29: #{tpu_custom_call.1} parent=1 // pred_fallthru
      _
    // Predicated region
    $region30: #{tpu_custom_call.1} parent=1 // pred_check
      _
    $region31: #{tpu_custom_call.1} parent=1 // pred_check_branch
      %10178 = sbr.rel (0) target = $region33
    $region32: #{tpu_custom_call.1} parent=1 // pred_region
      %10179 = dma.done [#allocation4], 1664
    $region33: #{tpu_custom_call.1} parent=1 // pred_fallthru
      _
    %10180 = vsyncpa [#allocation3], 1
    %10181 = vsyncpa [#allocation6], 1
    %10182 = vsyncpa [#allocation4], 1

</llo_original>
